<compile_context>
chip_gen: v5e
topology: v5e:2x2
jax: 0.10.0
libtpu: 0.0.40
codegen_flags: <defaults>
</compile_context>

<pallas_src>
import jax
import jax.numpy as jnp
import numpy as np
from jax.experimental import pallas as pl
from jax.experimental.pallas import tpu as pltpu

EPS = 1e-5


def _downsample_kernel(feats_ref, idx_ref, gamma_ref, beta_ref, w_ref, b_ref,
                       o_ref):
    """Fused gather + LayerNorm + Linear + max-over-k for one tile of points.

    feats_ref : (N, C_in)      bf16, source features, resident across grid
    idx_ref   : (TILE_N, K)    int32 neighbour indices for this tile
    gamma_ref : (1, C_in)      f32 LayerNorm scale
    beta_ref  : (1, C_in)      f32 LayerNorm shift
    w_ref     : (C_in, C_pad)  bf16 Linear weight (lane-padded)
    b_ref     : (1, C_pad)     f32 Linear bias (lane-padded)
    o_ref     : (TILE_N, C_pad) f32 pooled output features
    """
    n_src = feats_ref.shape[0]
    tile_n, k = idx_ref.shape
    c_pad = o_ref.shape[1]

    # ---- k-NN gather via exact one-hot MXU matmul -------------------------
    idx = idx_ref[...]                                              # (tn, k)
    iota = jax.lax.broadcasted_iota(jnp.int32, (tile_n, k, n_src), 2)
    onehot = (idx[:, :, None] == iota).astype(jnp.bfloat16)         # (tn,k,N)
    onehot2 = onehot.reshape(tile_n * k, n_src)      # layout-preserving (k%8==0)
    gx = jnp.dot(onehot2, feats_ref[...],
                 preferred_element_type=jnp.float32)                # (tn*k, Cin) f32

    # ---- LayerNorm over channels (f32, biased variance, eps=1e-5) ---------
    mean = jnp.mean(gx, axis=-1, keepdims=True)
    centered = gx - mean
    var = jnp.mean(centered * centered, axis=-1, keepdims=True)
    xn = centered * jax.lax.rsqrt(var + EPS)
    xn = xn * gamma_ref[...] + beta_ref[...]

    # ---- Linear on the MXU (bf16 operands, f32 accumulate) ----------------
    y = jnp.dot(xn.astype(jnp.bfloat16), w_ref[...],
                preferred_element_type=jnp.float32)                 # (tn*k, Cpad)

    # ---- GroupedMaxPool over k; bias added after the max ------------------
    y = y.reshape(tile_n, k, c_pad)                  # layout-preserving split
    pooled = jnp.max(y, axis=1) + b_ref[...]                        # (tn, Cpad)
    o_ref[...] = pooled.astype(o_ref.dtype)


def downsample_block_pallas(feats, knn_idx, gamma, beta, weight, bias,
                            *, tile_n=256):
    """feats (N, C_in) f32, knn_idx (N_down, K) int32 -> (N_down, C_out) f32."""
    n_src, c_in = feats.shape
    n_down, k = knn_idx.shape
    c_out = weight.shape[1]
    assert k % 8 == 0, "k must be a multiple of 8 (sublane tile)"

    # Lane-dense output: pad C_out up to a multiple of 128 lanes.
    c_out_pad = ((c_out + 127) // 128) * 128

    # VMEM-aware tile clamp: dominant per-tile buffer is the bf16 one-hot
    # (tile_n * k * roundup(N,128) * 2 bytes).  Keep it under ~8 MiB so the
    # whole kernel stays well inside the 32 MiB scoped limit (v7x-safe).
    n_lanes = ((n_src + 127) // 128) * 128
    tile_cap = max(8, (8 * 1024 * 1024) // (k * n_lanes * 2))
    tile_n = int(min(tile_n, tile_cap, ((n_down + 7) // 8) * 8))
    tile_n = max(8, (tile_n // 8) * 8)

    # cdiv grid via padding (no divisibility assert); padded rows use index 0
    # and are sliced away after the call.
    n_pad = ((n_down + tile_n - 1) // tile_n) * tile_n
    grid = (n_pad // tile_n,)

    feats_bf = feats.astype(jnp.bfloat16)
    idx_pad = jnp.pad(knn_idx.astype(jnp.int32), ((0, n_pad - n_down), (0, 0)))
    w_bf = jnp.pad(weight.astype(jnp.bfloat16),
                   ((0, 0), (0, c_out_pad - c_out)))
    b_pad = jnp.pad(bias.astype(jnp.float32),
                    (0, c_out_pad - c_out)).reshape(1, c_out_pad)
    gamma2 = gamma.astype(jnp.float32).reshape(1, c_in)
    beta2 = beta.astype(jnp.float32).reshape(1, c_in)

    out = pl.pallas_call(
        _downsample_kernel,
        out_shape=jax.ShapeDtypeStruct((n_pad, c_out_pad), jnp.float32),
        grid_spec=pltpu.PrefetchScalarGridSpec(
            num_scalar_prefetch=0,
            grid=grid,
            in_specs=[
                pl.BlockSpec((n_src, c_in), lambda i: (0, 0)),       # feats, VMEM-resident
                pl.BlockSpec((tile_n, k), lambda i: (i, 0)),         # per-tile kNN idx
                pl.BlockSpec((1, c_in), lambda i: (0, 0)),           # LN gamma
                pl.BlockSpec((1, c_in), lambda i: (0, 0)),           # LN beta
                pl.BlockSpec((c_in, c_out_pad), lambda i: (0, 0)),   # Linear weight
                pl.BlockSpec((1, c_out_pad), lambda i: (0, 0)),      # Linear bias
            ],
            out_specs=pl.BlockSpec((tile_n, c_out_pad), lambda i: (i, 0)),
        ),
        compiler_params=pltpu.CompilerParams(
            dimension_semantics=("parallel",),
            vmem_limit_bytes=32 * 1024 * 1024),
    )(feats_bf, idx_pad, gamma2, beta2, w_bf, b_pad)

    return out[:n_down, :c_out]


# ---------------------------------------------------------------------------
# Plain-JAX glue: downsample indices + k-NN index query.
# ---------------------------------------------------------------------------
def downsample_indices(n_points, ratio):
    n_down = int(n_points * ratio)
    stride = n_points // n_down
    return jnp.arange(n_down) * stride


def knn_indices(coords, coords_down, k):
    """Indices of the k nearest source points for each downsampled point."""
    d2 = (jnp.sum(coords_down ** 2, axis=-1, keepdims=True)
          - 2.0 * coords_down @ coords.T
          + jnp.sum(coords ** 2, axis=-1)[None, :])          # (N_down, N)
    _, idx = jax.lax.top_k(-d2, k)                           # (N_down, k)
    return idx


def reference_forward(feats, knn_idx, gamma, beta, weight, bias):
    gx = feats[knn_idx]                                      # (N_down, k, C_in)
    mean = jnp.mean(gx, axis=-1, keepdims=True)
    var = jnp.mean((gx - mean) ** 2, axis=-1, keepdims=True)
    xn = (gx - mean) / jnp.sqrt(var + EPS) * gamma + beta
    y = xn @ weight + bias
    return jnp.max(y, axis=1)


if __name__ == "__main__":
    key = jax.random.PRNGKey(0)
    k_coord, k_feat, k_w, k_b = jax.random.split(key, 4)

    # Small, module-consistent shapes (N_down = 150: exercises padding;
    # tile_n=64 -> 3 grid steps: exercises the pipelined multi-tile path).
    N, C_IN, C_OUT, K, RATIO = 600, 32, 64, 16, 0.25

    coords = jax.random.normal(k_coord, (N, 3), dtype=jnp.float32)
    feats = jax.random.normal(k_feat, (N, C_IN), dtype=jnp.float32)

    gamma = jnp.ones((C_IN,), jnp.float32)                   # LayerNorm weight
    beta = jnp.zeros((C_IN,), jnp.float32)                   # LayerNorm bias
    weight = (jax.random.normal(k_w, (C_IN, C_OUT), jnp.float32)
              / jnp.sqrt(C_IN))                              # Linear weight^T
    bias = 0.01 * jax.random.normal(k_b, (C_OUT,), jnp.float32)

    # 1) downsample + 2) k-NN query (glue); the gather itself is in-kernel.
    idx_down = downsample_indices(N, RATIO)
    coords_down = coords[idx_down]
    knn_idx = knn_indices(coords, coords_down, K)            # (150, 16)

    # 2-5) fused gather -> LayerNorm -> Linear -> GroupedMaxPool in Pallas
    out = downsample_block_pallas(feats, knn_idx, gamma, beta, weight, bias,
                                  tile_n=64)
    out = jax.block_until_ready(out)
    assert out.shape == (knn_idx.shape[0], C_OUT)

    # Reference uses the same bf16-rounded feats/weight the kernel consumes;
    # remaining difference is the bf16 MXU operand cast (f32 accumulation).
    feats_r = feats.astype(jnp.bfloat16).astype(jnp.float32)
    weight_r = weight.astype(jnp.bfloat16).astype(jnp.float32)
    ref = reference_forward(feats_r, knn_idx, gamma.reshape(1, 1, -1),
                            beta.reshape(1, 1, -1), weight_r, bias)
    np.testing.assert_allclose(np.asarray(out), np.asarray(ref),
                               rtol=2e-2, atol=2e-2)

    print("KERNEL_OK")
</pallas_src>

<mosaic_0001>
module attributes {stable_mosaic.version = 11 : i64} {
  func.func @_downsample_kernel(%arg0: i32, %arg1: memref<600x32xbf16, #tpu.memory_space<vmem>>, %arg2: memref<64x16xi32, #tpu.memory_space<vmem>>, %arg3: memref<1x32xf32, #tpu.memory_space<vmem>>, %arg4: memref<1x32xf32, #tpu.memory_space<vmem>>, %arg5: memref<32x128xbf16, #tpu.memory_space<vmem>>, %arg6: memref<1x128xf32, #tpu.memory_space<vmem>>, %arg7: memref<64x128xf32, #tpu.memory_space<vmem>>) attributes {dimension_semantics = [#tpu.dimension_semantics<parallel>], iteration_bounds = array<i64: 3>, scalar_prefetch = 0 : i64, scratch_operands = 0 : i64, tpu.core_type = #tpu.core_type<tc>, window_params = [{pipeline_mode = #tpu.pipeline_mode<synchronous>, transform_indices = @transform_0, window_bounds = array<i64: 600, 32>}, {transform_indices = @transform_1, window_bounds = array<i64: 64, 16>}, {pipeline_mode = #tpu.pipeline_mode<synchronous>, transform_indices = @transform_2, window_bounds = array<i64: 1, 32>}, {pipeline_mode = #tpu.pipeline_mode<synchronous>, transform_indices = @transform_3, window_bounds = array<i64: 1, 32>}, {pipeline_mode = #tpu.pipeline_mode<synchronous>, transform_indices = @transform_4, window_bounds = array<i64: 32, 128>}, {pipeline_mode = #tpu.pipeline_mode<synchronous>, transform_indices = @transform_5, window_bounds = array<i64: 1, 128>}, {transform_indices = @transform_6, window_bounds = array<i64: 64, 128>}]} {
    %c0 = arith.constant 0 : index
    %c0_0 = arith.constant 0 : index
    %0 = vector.load %arg2[%c0, %c0_0] : memref<64x16xi32, #tpu.memory_space<vmem>>, vector<64x16xi32>
    %1 = tpu.iota {dimensions = array<i32: 2>} : vector<64x16x600xi32>
    %2 = vector.shape_cast %0 : vector<64x16xi32> to vector<64x16x1xi32>
    %3 = vector.broadcast %2 : vector<64x16x1xi32> to vector<64x16x600xi32>
    %4 = arith.cmpi eq, %3, %1 : vector<64x16x600xi32>
    %5 = arith.extui %4 : vector<64x16x600xi1> to vector<64x16x600xi32>
    %6 = arith.sitofp %5 : vector<64x16x600xi32> to vector<64x16x600xf32>
    %7 = arith.truncf %6 : vector<64x16x600xf32> to vector<64x16x600xbf16>
    %8 = vector.shape_cast %7 : vector<64x16x600xbf16> to vector<1024x600xbf16>
    %c0_1 = arith.constant 0 : index
    %c0_2 = arith.constant 0 : index
    %9 = vector.load %arg1[%c0_1, %c0_2] : memref<600x32xbf16, #tpu.memory_space<vmem>>, vector<600x32xbf16>
    %cst = arith.constant dense<0.000000e+00> : vector<1024x32xf32>
    %10 = tpu.matmul %8, %9, %cst {dimension_numbers = #tpu.dot_dimension_numbers<[1], [0], [0], [1], [0, 0, 1, 1], [], []>} : vector<1024x600xbf16>, vector<600x32xbf16>, vector<1024x32xf32> -> vector<1024x32xf32>
    %cst_3 = arith.constant dense<0.000000e+00> : vector<1024xf32>
    %11 = vector.multi_reduction <add>, %10, %cst_3 [1] : vector<1024x32xf32> to vector<1024xf32>
    %12 = vector.shape_cast %11 : vector<1024xf32> to vector<1024x1xf32>
    %cst_4 = arith.constant 3.200000e+01 : f32
    %13 = vector.broadcast %cst_4 : f32 to vector<1024x1xf32>
    %14 = arith.divf %12, %13 : vector<1024x1xf32>
    %15 = vector.broadcast %14 : vector<1024x1xf32> to vector<1024x32xf32>
    %16 = arith.subf %10, %15 : vector<1024x32xf32>
    %17 = arith.mulf %16, %16 : vector<1024x32xf32>
    %cst_5 = arith.constant dense<0.000000e+00> : vector<1024xf32>
    %18 = vector.multi_reduction <add>, %17, %cst_5 [1] : vector<1024x32xf32> to vector<1024xf32>
    %19 = vector.shape_cast %18 : vector<1024xf32> to vector<1024x1xf32>
    %cst_6 = arith.constant 3.200000e+01 : f32
    %20 = vector.broadcast %cst_6 : f32 to vector<1024x1xf32>
    %21 = arith.divf %19, %20 : vector<1024x1xf32>
    %cst_7 = arith.constant 9.99999974E-6 : f32
    %22 = vector.broadcast %cst_7 : f32 to vector<1024x1xf32>
    %23 = arith.addf %21, %22 : vector<1024x1xf32>
    %24 = math.rsqrt %23 : vector<1024x1xf32>
    %25 = vector.broadcast %24 : vector<1024x1xf32> to vector<1024x32xf32>
    %26 = arith.mulf %16, %25 : vector<1024x32xf32>
    %c0_8 = arith.constant 0 : index
    %c0_9 = arith.constant 0 : index
    %27 = vector.load %arg3[%c0_8, %c0_9] : memref<1x32xf32, #tpu.memory_space<vmem>>, vector<1x32xf32>
    %28 = vector.broadcast %27 : vector<1x32xf32> to vector<1024x32xf32>
    %29 = arith.mulf %26, %28 : vector<1024x32xf32>
    %c0_10 = arith.constant 0 : index
    %c0_11 = arith.constant 0 : index
    %30 = vector.load %arg4[%c0_10, %c0_11] : memref<1x32xf32, #tpu.memory_space<vmem>>, vector<1x32xf32>
    %31 = vector.broadcast %30 : vector<1x32xf32> to vector<1024x32xf32>
    %32 = arith.addf %29, %31 : vector<1024x32xf32>
    %33 = arith.truncf %32 : vector<1024x32xf32> to vector<1024x32xbf16>
    %c0_12 = arith.constant 0 : index
    %c0_13 = arith.constant 0 : index
    %34 = vector.load %arg5[%c0_12, %c0_13] : memref<32x128xbf16, #tpu.memory_space<vmem>>, vector<32x128xbf16>
    %cst_14 = arith.constant dense<0.000000e+00> : vector<1024x128xf32>
    %35 = tpu.matmul %33, %34, %cst_14 {dimension_numbers = #tpu.dot_dimension_numbers<[1], [0], [0], [1], [0, 0, 1, 1], [], []>} : vector<1024x32xbf16>, vector<32x128xbf16>, vector<1024x128xf32> -> vector<1024x128xf32>
    %36 = vector.shape_cast %35 : vector<1024x128xf32> to vector<64x16x128xf32>
    %cst_15 = arith.constant dense<0xFF800000> : vector<64x128xf32>
    %37 = vector.multi_reduction <maximumf>, %36, %cst_15 [1] : vector<64x16x128xf32> to vector<64x128xf32>
    %c0_16 = arith.constant 0 : index
    %c0_17 = arith.constant 0 : index
    %38 = vector.load %arg6[%c0_16, %c0_17] : memref<1x128xf32, #tpu.memory_space<vmem>>, vector<1x128xf32>
    %39 = vector.broadcast %38 : vector<1x128xf32> to vector<64x128xf32>
    %40 = arith.addf %37, %39 : vector<64x128xf32>
    %c0_18 = arith.constant 0 : index
    %c0_19 = arith.constant 0 : index
    %41 = vector.load %arg7[%c0_18, %c0_19] : memref<64x128xf32, #tpu.memory_space<vmem>>, vector<64x128xf32>
    tpu.vector_store %arg7[%c0_18, %c0_19], %40 {strides = array<i32>} : memref<64x128xf32, #tpu.memory_space<vmem>>, vector<64x128xf32>,
    return
  }
  func.func @transform_0(%arg0: i32) -> (i32, i32) {
    %c0_i32 = arith.constant 0 : i32
    %c0_i32_0 = arith.constant 0 : i32
    %c0_i32_1 = arith.constant 0 : i32
    return %c0_i32, %c0_i32_0 : i32, i32
  }
  func.func @transform_1(%arg0: i32) -> (i32, i32) {
    %c0_i32 = arith.constant 0 : i32
    %c0_i32_0 = arith.constant 0 : i32
    return %arg0, %c0_i32 : i32, i32
  }
  func.func @transform_2(%arg0: i32) -> (i32, i32) {
    %c0_i32 = arith.constant 0 : i32
    %c0_i32_0 = arith.constant 0 : i32
    %c0_i32_1 = arith.constant 0 : i32
    return %c0_i32, %c0_i32_0 : i32, i32
  }
  func.func @transform_3(%arg0: i32) -> (i32, i32) {
    %c0_i32 = arith.constant 0 : i32
    %c0_i32_0 = arith.constant 0 : i32
    %c0_i32_1 = arith.constant 0 : i32
    return %c0_i32, %c0_i32_0 : i32, i32
  }
  func.func @transform_4(%arg0: i32) -> (i32, i32) {
    %c0_i32 = arith.constant 0 : i32
    %c0_i32_0 = arith.constant 0 : i32
    %c0_i32_1 = arith.constant 0 : i32
    return %c0_i32, %c0_i32_0 : i32, i32
  }
  func.func @transform_5(%arg0: i32) -> (i32, i32) {
    %c0_i32 = arith.constant 0 : i32
    %c0_i32_0 = arith.constant 0 : i32
    %c0_i32_1 = arith.constant 0 : i32
    return %c0_i32, %c0_i32_0 : i32, i32
  }
  func.func @transform_6(%arg0: i32) -> (i32, i32) {
    %c0_i32 = arith.constant 0 : i32
    %c0_i32_0 = arith.constant 0 : i32
    return %arg0, %c0_i32 : i32, i32
  }
}

</mosaic_0001>

<llo_original>
// kernel: tpu_custom_call.1
$region0: #{tpu_custom_call.1}
  #allocation0 [shape = 'u32[]', space=smem, size = 0x4, offset = 0x4, fixed_abs, tag = 'smem constant byte address 0x4 - core index']
  #allocation1 [shape = 'u32[72,128]{1,0:T(1,128)}', space=vmem, size = 0x9000, scoped, tag = 'internal scratch']
  %s0 = inlined_call_operand.vmem [shape: bf16[600,32], index: 0, kind: input, shape index: {}]
  %s1 = inlined_call_operand.vmem [shape: s32[192,16], index: 1, kind: input, shape index: {}]
  %s2 = inlined_call_operand.vmem [shape: f32[1,32], index: 2, kind: input, shape index: {}]
  %s3 = inlined_call_operand.vmem [shape: f32[1,32], index: 3, kind: input, shape index: {}]
  %s4 = inlined_call_operand.vmem [shape: bf16[32,128], index: 4, kind: input, shape index: {}]
  %s5 = inlined_call_operand.vmem [shape: f32[1,128], index: 5, kind: input, shape index: {}]
  %s6 = inlined_call_operand.hbm [shape: f32[192,128], index: 6, kind: output, shape index: {}]
  %s7 = sld [smem:[#allocation0]]
  $region57: #{tpu_custom_call.1} parent=0
    _
  %s9 = ssub.s32 1, %s7
  %s10 = scalar_select 0, %s9, %s7
  $region1: #{tpu_custom_call.1} parent=0
    #allocation2 [shape = 'u8[65536]{0}', space=vmem, size = 0x10000, scoped, tag = 'output window, operand 0']
    #allocation3 [shape = 's32[2]{0}', space=sflag, size = 0x8, scoped, tag = 'scoped memory for tpu_custom_call.1']
    %11 = vsyncpa [#allocation3], 0
    %s12 = scalar_lea.sflag [#allocation3], 1
    %13 = vsyncpa %s12, 0
    loop: start=0, step=1, limit=5
    $region2: #{tpu_custom_call.1} parent=1 // loop_pre_header
      _
    $region3: #{tpu_custom_call.1} parent=1 // loop_header
      %s15 = sphi 0, %s19
      %p16 = scmp.ge.s32.totalorder %s15, 5
      %s23 = sphi 0, %s23
      %s25 = sphi 0, %s23
      %s26 = sphi 0, %s25
      %s40 = sphi 0, %s26
      %s46 = sphi 0, %s48
      %s49 = sphi 0, %s46
      %s50 = sphi 0, %s49
      %s66 = sphi 0, %s50
      %s70 = sphi 0, %s70
      %s72 = sphi 0, %s70
      %s73 = sphi 0, %s72
      %s87 = sphi 0, %s73
      %s91 = sphi 0, %s91
      %s93 = sphi 0, %s91
      %s94 = sphi 0, %s93
      %s108 = sphi 0, %s94
      %s112 = sphi 0, %s112
      %s114 = sphi 0, %s112
      %s115 = sphi 0, %s114
      %s129 = sphi 0, %s115
      %s133 = sphi 0, %s133
      %s135 = sphi 0, %s133
      %s136 = sphi 0, %s135
      %s150 = sphi 0, %s136
      %s156 = sphi 0, %s158
      %s159 = sphi 0, %s156
      %s160 = sphi 0, %s159
      %s176 = sphi 0, %s160
    $region4: #{tpu_custom_call.1} parent=1 // loop_header_branch
      %18 = sbr.rel (%p16) target = $region8
    $region5: #{tpu_custom_call.1} parent=1 // loop_body
      %s20 = ssub.s32 %s15, 1
      %s21 = ssub.s32 %s15, 2
      %s22 = sadd.s32 %s15, 1
      %s24 = sadd.s32 %s23, 1
      %p27 = scmp.eq.s32.totalorder %s15, 2
      %p28 = scmp.ne.s32.totalorder %s23, %s25
      %p29 = scmp.eq.s32.totalorder %s15, 0
      %p30 = por %p28, %p29
      %p31 = scmp.ne.s32.totalorder %s23, %s25
      %p32 = scmp.eq.s32.totalorder %s20, 2
      %p33 = por %p31, %p32
      %p34 = scmp.ne.s32.totalorder %s25, %s26
      %p35 = scmp.eq.s32.totalorder %s20, 0
      %p36 = por %p34, %p35
      %p37 = scmp.ne.s32.totalorder %s25, %s26
      %p38 = scmp.eq.s32.totalorder %s21, 2
      %p39 = por %p37, %p38
      %p41 = scmp.ne.s32.totalorder %s26, %s40
      %p42 = scmp.eq.s32.totalorder %s21, 0
      %p43 = por %p41, %p42
      %s44 = ssub.s32 %s15, %s22
      %p45 = scmp.eq.s32.totalorder %s44, 0
      %s47 = sadd.s32 %s46, 1
      %s48 = scalar_select %p45, %s46, %s47
      %p51 = pneg %p45
      %p52 = scmp.eq.s32.totalorder %s15, 2
      %p53 = por %p51, %p52
      %p54 = scmp.ne.s32.totalorder %s46, %s49
      %p55 = scmp.eq.s32.totalorder %s15, 0
      %p56 = por %p54, %p55
      %p57 = scmp.ne.s32.totalorder %s46, %s49
      %p58 = scmp.eq.s32.totalorder %s20, 2
      %p59 = por %p57, %p58
      %p60 = scmp.ne.s32.totalorder %s49, %s50
      %p61 = scmp.eq.s32.totalorder %s20, 0
      %p62 = por %p60, %p61
      %p63 = scmp.ne.s32.totalorder %s49, %s50
      %p64 = scmp.eq.s32.totalorder %s21, 2
      %p65 = por %p63, %p64
      %p67 = scmp.ne.s32.totalorder %s50, %s66
      %p68 = scmp.eq.s32.totalorder %s21, 0
      %p69 = por %p67, %p68
      %s71 = sadd.s32 %s70, 1
      %p74 = scmp.eq.s32.totalorder %s15, 2
      %p75 = scmp.ne.s32.totalorder %s70, %s72
      %p76 = scmp.eq.s32.totalorder %s15, 0
      %p77 = por %p75, %p76
      %p78 = scmp.ne.s32.totalorder %s70, %s72
      %p79 = scmp.eq.s32.totalorder %s20, 2
      %p80 = por %p78, %p79
      %p81 = scmp.ne.s32.totalorder %s72, %s73
      %p82 = scmp.eq.s32.totalorder %s20, 0
      %p83 = por %p81, %p82
      %p84 = scmp.ne.s32.totalorder %s72, %s73
      %p85 = scmp.eq.s32.totalorder %s21, 2
      %p86 = por %p84, %p85
      %p88 = scmp.ne.s32.totalorder %s73, %s87
      %p89 = scmp.eq.s32.totalorder %s21, 0
      %p90 = por %p88, %p89
      %s92 = sadd.s32 %s91, 1
      %p95 = scmp.eq.s32.totalorder %s15, 2
      %p96 = scmp.ne.s32.totalorder %s91, %s93
      %p97 = scmp.eq.s32.totalorder %s15, 0
      %p98 = por %p96, %p97
      %p99 = scmp.ne.s32.totalorder %s91, %s93
      %p100 = scmp.eq.s32.totalorder %s20, 2
      %p101 = por %p99, %p100
      %p102 = scmp.ne.s32.totalorder %s93, %s94
      %p103 = scmp.eq.s32.totalorder %s20, 0
      %p104 = por %p102, %p103
      %p105 = scmp.ne.s32.totalorder %s93, %s94
      %p106 = scmp.eq.s32.totalorder %s21, 2
      %p107 = por %p105, %p106
      %p109 = scmp.ne.s32.totalorder %s94, %s108
      %p110 = scmp.eq.s32.totalorder %s21, 0
      %p111 = por %p109, %p110
      %s113 = sadd.s32 %s112, 1
      %p116 = scmp.eq.s32.totalorder %s15, 2
      %p117 = scmp.ne.s32.totalorder %s112, %s114
      %p118 = scmp.eq.s32.totalorder %s15, 0
      %p119 = por %p117, %p118
      %p120 = scmp.ne.s32.totalorder %s112, %s114
      %p121 = scmp.eq.s32.totalorder %s20, 2
      %p122 = por %p120, %p121
      %p123 = scmp.ne.s32.totalorder %s114, %s115
      %p124 = scmp.eq.s32.totalorder %s20, 0
      %p125 = por %p123, %p124
      %p126 = scmp.ne.s32.totalorder %s114, %s115
      %p127 = scmp.eq.s32.totalorder %s21, 2
      %p128 = por %p126, %p127
      %p130 = scmp.ne.s32.totalorder %s115, %s129
      %p131 = scmp.eq.s32.totalorder %s21, 0
      %p132 = por %p130, %p131
      %s134 = sadd.s32 %s133, 1
      %p137 = scmp.eq.s32.totalorder %s15, 2
      %p138 = scmp.ne.s32.totalorder %s133, %s135
      %p139 = scmp.eq.s32.totalorder %s15, 0
      %p140 = por %p138, %p139
      %p141 = scmp.ne.s32.totalorder %s133, %s135
      %p142 = scmp.eq.s32.totalorder %s20, 2
      %p143 = por %p141, %p142
      %p144 = scmp.ne.s32.totalorder %s135, %s136
      %p145 = scmp.eq.s32.totalorder %s20, 0
      %p146 = por %p144, %p145
      %p147 = scmp.ne.s32.totalorder %s135, %s136
      %p148 = scmp.eq.s32.totalorder %s21, 2
      %p149 = por %p147, %p148
      %p151 = scmp.ne.s32.totalorder %s136, %s150
      %p152 = scmp.eq.s32.totalorder %s21, 0
      %p153 = por %p151, %p152
      %s154 = ssub.s32 %s15, %s22
      %p155 = scmp.eq.s32.totalorder %s154, 0
      %s157 = sadd.s32 %s156, 1
      %s158 = scalar_select %p155, %s156, %s157
      %p161 = pneg %p155
      %p162 = scmp.eq.s32.totalorder %s15, 2
      %p163 = por %p161, %p162
      %p164 = scmp.ne.s32.totalorder %s156, %s159
      %p165 = scmp.eq.s32.totalorder %s15, 0
      %p166 = por %p164, %p165
      %p167 = scmp.ne.s32.totalorder %s156, %s159
      %p168 = scmp.eq.s32.totalorder %s20, 2
      %p169 = por %p167, %p168
      %p170 = scmp.ne.s32.totalorder %s159, %s160
      %p171 = scmp.eq.s32.totalorder %s20, 0
      %p172 = por %p170, %p171
      %p173 = scmp.ne.s32.totalorder %s159, %s160
      %p174 = scmp.eq.s32.totalorder %s21, 2
      %p175 = por %p173, %p174
      %p177 = scmp.ne.s32.totalorder %s160, %s176
      %p178 = scmp.eq.s32.totalorder %s21, 0
      %p179 = por %p177, %p178
      %p180 = scmp.le.s32.totalorder 1, %s15
      %p181 = scmp.lt.s32.totalorder %s15, 4
      %p182 = pnand %p180, %p181
      %p183 = pneg %p182
      // Predicated region
      $region9: #{tpu_custom_call.1} parent=5 // pred_check
        _
      $region10: #{tpu_custom_call.1} parent=5 // pred_check_branch
        %185 = sbr.rel (%p182) target = $region12
      $region11: #{tpu_custom_call.1} parent=5 // pred_region
        %s186 = ssub.s32 %s15, 1
        // Predicated region
        $region13: #{tpu_custom_call.1} parent=11 // pred_check
          %p187 = pneg %p36
        $region14: #{tpu_custom_call.1} parent=11 // pred_check_branch
          %189 = sbr.rel (%p187) target = $region16
        $region15: #{tpu_custom_call.1} parent=11 // pred_region
          _
        $region16: #{tpu_custom_call.1} parent=11 // pred_fallthru
          _
        // Predicated region
        $region17: #{tpu_custom_call.1} parent=11 // pred_check
          %p190 = pneg %p83
        $region18: #{tpu_custom_call.1} parent=11 // pred_check_branch
          %192 = sbr.rel (%p190) target = $region20
        $region19: #{tpu_custom_call.1} parent=11 // pred_region
          _
        $region20: #{tpu_custom_call.1} parent=11 // pred_fallthru
          _
        // Predicated region
        $region21: #{tpu_custom_call.1} parent=11 // pred_check
          %p193 = pneg %p104
        $region22: #{tpu_custom_call.1} parent=11 // pred_check_branch
          %195 = sbr.rel (%p193) target = $region24
        $region23: #{tpu_custom_call.1} parent=11 // pred_region
          _
        $region24: #{tpu_custom_call.1} parent=11 // pred_fallthru
          _
        // Predicated region
        $region25: #{tpu_custom_call.1} parent=11 // pred_check
          %p196 = pneg %p125
        $region26: #{tpu_custom_call.1} parent=11 // pred_check_branch
          %198 = sbr.rel (%p196) target = $region28
        $region27: #{tpu_custom_call.1} parent=11 // pred_region
          _
        $region28: #{tpu_custom_call.1} parent=11 // pred_fallthru
          _
        // Predicated region
        $region29: #{tpu_custom_call.1} parent=11 // pred_check
          %p199 = pneg %p146
        $region30: #{tpu_custom_call.1} parent=11 // pred_check_branch
          %201 = sbr.rel (%p199) target = $region32
        $region31: #{tpu_custom_call.1} parent=11 // pred_region
          _
        $region32: #{tpu_custom_call.1} parent=11 // pred_fallthru
          _
      $region12: #{tpu_custom_call.1} parent=5 // pred_fallthru
        _
      %p202 = scmp.lt.s32.totalorder %s15, 3
      // Predicated region
      $region33: #{tpu_custom_call.1} parent=5 // pred_check
        %p203 = pneg %p202
      $region34: #{tpu_custom_call.1} parent=5 // pred_check_branch
        %205 = sbr.rel (%p203) target = $region36
      $region35: #{tpu_custom_call.1} parent=5 // pred_region
        // Predicated region
        $region37: #{tpu_custom_call.1} parent=35 // pred_check
          %p206 = pneg %p56
        $region38: #{tpu_custom_call.1} parent=35 // pred_check_branch
          %208 = sbr.rel (%p206) target = $region40
        $region39: #{tpu_custom_call.1} parent=35 // pred_region
          %s209 = smul.u32 8, %s15
          %p210 = scmp.lt.s32.totalorder %s209, 23
          %s211 = scalar_select %p210, %s209, 23
          %s212 = smul.addr %s211, 8
          %s213 = scalar_lea.vmem %s1, %s212
          %s214 = smul.u32 8, %s15
        $region40: #{tpu_custom_call.1} parent=35 // pred_fallthru
          _
      $region36: #{tpu_custom_call.1} parent=5 // pred_fallthru
        _
      %p215 = scmp.le.s32.totalorder 1, %s15
      %p216 = scmp.lt.s32.totalorder %s15, 4
      %p217 = pnand %p215, %p216
      %p218 = pneg %p217
      // Predicated region
      $region41: #{tpu_custom_call.1} parent=5 // pred_check
        _
      $region42: #{tpu_custom_call.1} parent=5 // pred_check_branch
        %220 = sbr.rel (%p217) target = $region44
      $region43: #{tpu_custom_call.1} parent=5 // pred_region
        %s221 = ssub.s32 %s15, 1
        %p222 = pneg %p36
        %p223 = pneg %p33
        %s224 = smul.u32 8, %s20
        %p225 = scmp.lt.s32.totalorder %s224, 23
        %s226 = scalar_select %p225, %s224, 23
        %s227 = smul.addr %s226, 8
        %s228 = scalar_lea.vmem %s1, %s227
        %p229 = pneg %p62
        %p230 = pneg %p59
        %p231 = pneg %p83
        %p232 = pneg %p80
        %p233 = pneg %p104
        %p234 = pneg %p101
        %p235 = pneg %p125
        %p236 = pneg %p122
        %p237 = pneg %p146
        %p238 = pneg %p143
        %p239 = pneg %p172
        %p240 = pneg %p169
        %s241 = sand.u32 %s159, 1
        %s242 = scalar_lea.sflag [#allocation3], %s241
        %s243 = sand.u32 %s159, 1
        %s244 = smul.addr %s243, 64
        %s245 = scalar_lea.vmem [#allocation2], %s244
        %s246 = smul.u32 8, %s20
        %p247 = scmp.lt.s32.totalorder %s246, 23
        %s248 = scalar_select %p247, %s246, 23
        %s249 = smul.addr %s248, 8
        %s250 = scalar_lea.vmem %s1, %s249
        %s251 = smul.u32 8, %s20
        %s252 = smul.u32 8, %s20
        %v254 = vld [vmem:[%s250] sm:$0xff]
        %v255 = vld [vmem:[%s250 + $0x8] sm:$0xff]
        %v256 = vld [vmem:[%s250 + $0x10] sm:$0xff]
        %v257 = vld [vmem:[%s250 + $0x18] sm:$0xff]
        %v258 = vld [vmem:[%s250 + $0x20] sm:$0xff]
        %v259 = vld [vmem:[%s250 + $0x28] sm:$0xff]
        %v260 = vld [vmem:[%s250 + $0x30] sm:$0xff]
        %v261 = vld [vmem:[%s250 + $0x38] sm:$0xff]
        %v262 = vlaneseq
        %v263 = vand.u32 %v262, 127
        %v264 = vadd.s32 %v263, 128
        %v265 = vadd.s32 %v263, 256
        %v266 = vadd.s32 %v263, 384
        %v267 = vadd.s32 %v263, 512
        %v268 = vperm.slane %v254, 0
        %v269 = vlaneseq
        %v270 = vshrl.u32 %v269, 7
        %272 = vset.pattern.permute.xlu0 %v270
        %273 = vperm.xlu0 %272, %v268
        %v274 = vpop.permute.xlu0 %273
        %v275 = vlaneseq
        %v276 = vshrl.u32 %v275, 7
        %v277 = vadd.s32 %v276, 8
        %278 = vset.pattern.permute.xlu0 %v277
        %279 = vperm.xlu0 %278, %v268
        %v280 = vpop.permute.xlu0 %279
        %v281 = vperm.slane %v254, 1
        %v282 = vlaneseq
        %v283 = vshrl.u32 %v282, 7
        %285 = vset.pattern.permute.xlu0 %v283
        %286 = vperm.xlu0 %285, %v281
        %v287 = vpop.permute.xlu0 %286
        %v288 = vlaneseq
        %v289 = vshrl.u32 %v288, 7
        %v290 = vadd.s32 %v289, 8
        %291 = vset.pattern.permute.xlu0 %v290
        %292 = vperm.xlu0 %291, %v281
        %v293 = vpop.permute.xlu0 %292
        %v294 = vperm.slane %v254, 2
        %v295 = vlaneseq
        %v296 = vshrl.u32 %v295, 7
        %298 = vset.pattern.permute.xlu0 %v296
        %299 = vperm.xlu0 %298, %v294
        %v300 = vpop.permute.xlu0 %299
        %v301 = vlaneseq
        %v302 = vshrl.u32 %v301, 7
        %v303 = vadd.s32 %v302, 8
        %304 = vset.pattern.permute.xlu0 %v303
        %305 = vperm.xlu0 %304, %v294
        %v306 = vpop.permute.xlu0 %305
        %v307 = vperm.slane %v254, 3
        %v308 = vlaneseq
        %v309 = vshrl.u32 %v308, 7
        %311 = vset.pattern.permute.xlu0 %v309
        %312 = vperm.xlu0 %311, %v307
        %v313 = vpop.permute.xlu0 %312
        %v314 = vlaneseq
        %v315 = vshrl.u32 %v314, 7
        %v316 = vadd.s32 %v315, 8
        %317 = vset.pattern.permute.xlu0 %v316
        %318 = vperm.xlu0 %317, %v307
        %v319 = vpop.permute.xlu0 %318
        %v320 = vperm.slane %v254, 4
        %v321 = vlaneseq
        %v322 = vshrl.u32 %v321, 7
        %324 = vset.pattern.permute.xlu0 %v322
        %325 = vperm.xlu0 %324, %v320
        %v326 = vpop.permute.xlu0 %325
        %v327 = vlaneseq
        %v328 = vshrl.u32 %v327, 7
        %v329 = vadd.s32 %v328, 8
        %330 = vset.pattern.permute.xlu0 %v329
        %331 = vperm.xlu0 %330, %v320
        %v332 = vpop.permute.xlu0 %331
        %v333 = vperm.slane %v254, 5
        %v334 = vlaneseq
        %v335 = vshrl.u32 %v334, 7
        %337 = vset.pattern.permute.xlu0 %v335
        %338 = vperm.xlu0 %337, %v333
        %v339 = vpop.permute.xlu0 %338
        %v340 = vlaneseq
        %v341 = vshrl.u32 %v340, 7
        %v342 = vadd.s32 %v341, 8
        %343 = vset.pattern.permute.xlu0 %v342
        %344 = vperm.xlu0 %343, %v333
        %v345 = vpop.permute.xlu0 %344
        %v346 = vperm.slane %v254, 6
        %v347 = vlaneseq
        %v348 = vshrl.u32 %v347, 7
        %350 = vset.pattern.permute.xlu0 %v348
        %351 = vperm.xlu0 %350, %v346
        %v352 = vpop.permute.xlu0 %351
        %v353 = vlaneseq
        %v354 = vshrl.u32 %v353, 7
        %v355 = vadd.s32 %v354, 8
        %356 = vset.pattern.permute.xlu0 %v355
        %357 = vperm.xlu0 %356, %v346
        %v358 = vpop.permute.xlu0 %357
        %v359 = vperm.slane %v254, 7
        %v360 = vlaneseq
        %v361 = vshrl.u32 %v360, 7
        %363 = vset.pattern.permute.xlu0 %v361
        %364 = vperm.xlu0 %363, %v359
        %v365 = vpop.permute.xlu0 %364
        %v366 = vlaneseq
        %v367 = vshrl.u32 %v366, 7
        %v368 = vadd.s32 %v367, 8
        %369 = vset.pattern.permute.xlu0 %v368
        %370 = vperm.xlu0 %369, %v359
        %v371 = vpop.permute.xlu0 %370
        %v372 = vperm.slane %v255, 0
        %v373 = vlaneseq
        %v374 = vshrl.u32 %v373, 7
        %376 = vset.pattern.permute.xlu0 %v374
        %377 = vperm.xlu0 %376, %v372
        %v378 = vpop.permute.xlu0 %377
        %v379 = vlaneseq
        %v380 = vshrl.u32 %v379, 7
        %v381 = vadd.s32 %v380, 8
        %382 = vset.pattern.permute.xlu0 %v381
        %383 = vperm.xlu0 %382, %v372
        %v384 = vpop.permute.xlu0 %383
        %v385 = vperm.slane %v255, 1
        %v386 = vlaneseq
        %v387 = vshrl.u32 %v386, 7
        %389 = vset.pattern.permute.xlu0 %v387
        %390 = vperm.xlu0 %389, %v385
        %v391 = vpop.permute.xlu0 %390
        %v392 = vlaneseq
        %v393 = vshrl.u32 %v392, 7
        %v394 = vadd.s32 %v393, 8
        %395 = vset.pattern.permute.xlu0 %v394
        %396 = vperm.xlu0 %395, %v385
        %v397 = vpop.permute.xlu0 %396
        %v398 = vperm.slane %v255, 2
        %v399 = vlaneseq
        %v400 = vshrl.u32 %v399, 7
        %402 = vset.pattern.permute.xlu0 %v400
        %403 = vperm.xlu0 %402, %v398
        %v404 = vpop.permute.xlu0 %403
        %v405 = vlaneseq
        %v406 = vshrl.u32 %v405, 7
        %v407 = vadd.s32 %v406, 8
        %408 = vset.pattern.permute.xlu0 %v407
        %409 = vperm.xlu0 %408, %v398
        %v410 = vpop.permute.xlu0 %409
        %v411 = vperm.slane %v255, 3
        %v412 = vlaneseq
        %v413 = vshrl.u32 %v412, 7
        %415 = vset.pattern.permute.xlu0 %v413
        %416 = vperm.xlu0 %415, %v411
        %v417 = vpop.permute.xlu0 %416
        %v418 = vlaneseq
        %v419 = vshrl.u32 %v418, 7
        %v420 = vadd.s32 %v419, 8
        %421 = vset.pattern.permute.xlu0 %v420
        %422 = vperm.xlu0 %421, %v411
        %v423 = vpop.permute.xlu0 %422
        %v424 = vperm.slane %v255, 4
        %v425 = vlaneseq
        %v426 = vshrl.u32 %v425, 7
        %428 = vset.pattern.permute.xlu0 %v426
        %429 = vperm.xlu0 %428, %v424
        %v430 = vpop.permute.xlu0 %429
        %v431 = vlaneseq
        %v432 = vshrl.u32 %v431, 7
        %v433 = vadd.s32 %v432, 8
        %434 = vset.pattern.permute.xlu0 %v433
        %435 = vperm.xlu0 %434, %v424
        %v436 = vpop.permute.xlu0 %435
        %v437 = vperm.slane %v255, 5
        %v438 = vlaneseq
        %v439 = vshrl.u32 %v438, 7
        %441 = vset.pattern.permute.xlu0 %v439
        %442 = vperm.xlu0 %441, %v437
        %v443 = vpop.permute.xlu0 %442
        %v444 = vlaneseq
        %v445 = vshrl.u32 %v444, 7
        %v446 = vadd.s32 %v445, 8
        %447 = vset.pattern.permute.xlu0 %v446
        %448 = vperm.xlu0 %447, %v437
        %v449 = vpop.permute.xlu0 %448
        %v450 = vperm.slane %v255, 6
        %v451 = vlaneseq
        %v452 = vshrl.u32 %v451, 7
        %454 = vset.pattern.permute.xlu0 %v452
        %455 = vperm.xlu0 %454, %v450
        %v456 = vpop.permute.xlu0 %455
        %v457 = vlaneseq
        %v458 = vshrl.u32 %v457, 7
        %v459 = vadd.s32 %v458, 8
        %460 = vset.pattern.permute.xlu0 %v459
        %461 = vperm.xlu0 %460, %v450
        %v462 = vpop.permute.xlu0 %461
        %v463 = vperm.slane %v255, 7
        %v464 = vlaneseq
        %v465 = vshrl.u32 %v464, 7
        %467 = vset.pattern.permute.xlu0 %v465
        %468 = vperm.xlu0 %467, %v463
        %v469 = vpop.permute.xlu0 %468
        %v470 = vlaneseq
        %v471 = vshrl.u32 %v470, 7
        %v472 = vadd.s32 %v471, 8
        %473 = vset.pattern.permute.xlu0 %v472
        %474 = vperm.xlu0 %473, %v463
        %v475 = vpop.permute.xlu0 %474
        %v476 = vperm.slane %v256, 0
        %v477 = vlaneseq
        %v478 = vshrl.u32 %v477, 7
        %480 = vset.pattern.permute.xlu0 %v478
        %481 = vperm.xlu0 %480, %v476
        %v482 = vpop.permute.xlu0 %481
        %v483 = vlaneseq
        %v484 = vshrl.u32 %v483, 7
        %v485 = vadd.s32 %v484, 8
        %486 = vset.pattern.permute.xlu0 %v485
        %487 = vperm.xlu0 %486, %v476
        %v488 = vpop.permute.xlu0 %487
        %v489 = vperm.slane %v256, 1
        %v490 = vlaneseq
        %v491 = vshrl.u32 %v490, 7
        %493 = vset.pattern.permute.xlu0 %v491
        %494 = vperm.xlu0 %493, %v489
        %v495 = vpop.permute.xlu0 %494
        %v496 = vlaneseq
        %v497 = vshrl.u32 %v496, 7
        %v498 = vadd.s32 %v497, 8
        %499 = vset.pattern.permute.xlu0 %v498
        %500 = vperm.xlu0 %499, %v489
        %v501 = vpop.permute.xlu0 %500
        %v502 = vperm.slane %v256, 2
        %v503 = vlaneseq
        %v504 = vshrl.u32 %v503, 7
        %506 = vset.pattern.permute.xlu0 %v504
        %507 = vperm.xlu0 %506, %v502
        %v508 = vpop.permute.xlu0 %507
        %v509 = vlaneseq
        %v510 = vshrl.u32 %v509, 7
        %v511 = vadd.s32 %v510, 8
        %512 = vset.pattern.permute.xlu0 %v511
        %513 = vperm.xlu0 %512, %v502
        %v514 = vpop.permute.xlu0 %513
        %v515 = vperm.slane %v256, 3
        %v516 = vlaneseq
        %v517 = vshrl.u32 %v516, 7
        %519 = vset.pattern.permute.xlu0 %v517
        %520 = vperm.xlu0 %519, %v515
        %v521 = vpop.permute.xlu0 %520
        %v522 = vlaneseq
        %v523 = vshrl.u32 %v522, 7
        %v524 = vadd.s32 %v523, 8
        %525 = vset.pattern.permute.xlu0 %v524
        %526 = vperm.xlu0 %525, %v515
        %v527 = vpop.permute.xlu0 %526
        %v528 = vperm.slane %v256, 4
        %v529 = vlaneseq
        %v530 = vshrl.u32 %v529, 7
        %532 = vset.pattern.permute.xlu0 %v530
        %533 = vperm.xlu0 %532, %v528
        %v534 = vpop.permute.xlu0 %533
        %v535 = vlaneseq
        %v536 = vshrl.u32 %v535, 7
        %v537 = vadd.s32 %v536, 8
        %538 = vset.pattern.permute.xlu0 %v537
        %539 = vperm.xlu0 %538, %v528
        %v540 = vpop.permute.xlu0 %539
        %v541 = vperm.slane %v256, 5
        %v542 = vlaneseq
        %v543 = vshrl.u32 %v542, 7
        %545 = vset.pattern.permute.xlu0 %v543
        %546 = vperm.xlu0 %545, %v541
        %v547 = vpop.permute.xlu0 %546
        %v548 = vlaneseq
        %v549 = vshrl.u32 %v548, 7
        %v550 = vadd.s32 %v549, 8
        %551 = vset.pattern.permute.xlu0 %v550
        %552 = vperm.xlu0 %551, %v541
        %v553 = vpop.permute.xlu0 %552
        %v554 = vperm.slane %v256, 6
        %v555 = vlaneseq
        %v556 = vshrl.u32 %v555, 7
        %558 = vset.pattern.permute.xlu0 %v556
        %559 = vperm.xlu0 %558, %v554
        %v560 = vpop.permute.xlu0 %559
        %v561 = vlaneseq
        %v562 = vshrl.u32 %v561, 7
        %v563 = vadd.s32 %v562, 8
        %564 = vset.pattern.permute.xlu0 %v563
        %565 = vperm.xlu0 %564, %v554
        %v566 = vpop.permute.xlu0 %565
        %v567 = vperm.slane %v256, 7
        %v568 = vlaneseq
        %v569 = vshrl.u32 %v568, 7
        %571 = vset.pattern.permute.xlu0 %v569
        %572 = vperm.xlu0 %571, %v567
        %v573 = vpop.permute.xlu0 %572
        %v574 = vlaneseq
        %v575 = vshrl.u32 %v574, 7
        %v576 = vadd.s32 %v575, 8
        %577 = vset.pattern.permute.xlu0 %v576
        %578 = vperm.xlu0 %577, %v567
        %v579 = vpop.permute.xlu0 %578
        %v580 = vperm.slane %v257, 0
        %v581 = vlaneseq
        %v582 = vshrl.u32 %v581, 7
        %584 = vset.pattern.permute.xlu0 %v582
        %585 = vperm.xlu0 %584, %v580
        %v586 = vpop.permute.xlu0 %585
        %v587 = vlaneseq
        %v588 = vshrl.u32 %v587, 7
        %v589 = vadd.s32 %v588, 8
        %590 = vset.pattern.permute.xlu0 %v589
        %591 = vperm.xlu0 %590, %v580
        %v592 = vpop.permute.xlu0 %591
        %v593 = vperm.slane %v257, 1
        %v594 = vlaneseq
        %v595 = vshrl.u32 %v594, 7
        %597 = vset.pattern.permute.xlu0 %v595
        %598 = vperm.xlu0 %597, %v593
        %v599 = vpop.permute.xlu0 %598
        %v600 = vlaneseq
        %v601 = vshrl.u32 %v600, 7
        %v602 = vadd.s32 %v601, 8
        %603 = vset.pattern.permute.xlu0 %v602
        %604 = vperm.xlu0 %603, %v593
        %v605 = vpop.permute.xlu0 %604
        %v606 = vperm.slane %v257, 2
        %v607 = vlaneseq
        %v608 = vshrl.u32 %v607, 7
        %610 = vset.pattern.permute.xlu0 %v608
        %611 = vperm.xlu0 %610, %v606
        %v612 = vpop.permute.xlu0 %611
        %v613 = vlaneseq
        %v614 = vshrl.u32 %v613, 7
        %v615 = vadd.s32 %v614, 8
        %616 = vset.pattern.permute.xlu0 %v615
        %617 = vperm.xlu0 %616, %v606
        %v618 = vpop.permute.xlu0 %617
        %v619 = vperm.slane %v257, 3
        %v620 = vlaneseq
        %v621 = vshrl.u32 %v620, 7
        %623 = vset.pattern.permute.xlu0 %v621
        %624 = vperm.xlu0 %623, %v619
        %v625 = vpop.permute.xlu0 %624
        %v626 = vlaneseq
        %v627 = vshrl.u32 %v626, 7
        %v628 = vadd.s32 %v627, 8
        %629 = vset.pattern.permute.xlu0 %v628
        %630 = vperm.xlu0 %629, %v619
        %v631 = vpop.permute.xlu0 %630
        %v632 = vperm.slane %v257, 4
        %v633 = vlaneseq
        %v634 = vshrl.u32 %v633, 7
        %636 = vset.pattern.permute.xlu0 %v634
        %637 = vperm.xlu0 %636, %v632
        %v638 = vpop.permute.xlu0 %637
        %v639 = vlaneseq
        %v640 = vshrl.u32 %v639, 7
        %v641 = vadd.s32 %v640, 8
        %642 = vset.pattern.permute.xlu0 %v641
        %643 = vperm.xlu0 %642, %v632
        %v644 = vpop.permute.xlu0 %643
        %v645 = vperm.slane %v257, 5
        %v646 = vlaneseq
        %v647 = vshrl.u32 %v646, 7
        %649 = vset.pattern.permute.xlu0 %v647
        %650 = vperm.xlu0 %649, %v645
        %v651 = vpop.permute.xlu0 %650
        %v652 = vlaneseq
        %v653 = vshrl.u32 %v652, 7
        %v654 = vadd.s32 %v653, 8
        %655 = vset.pattern.permute.xlu0 %v654
        %656 = vperm.xlu0 %655, %v645
        %v657 = vpop.permute.xlu0 %656
        %v658 = vperm.slane %v257, 6
        %v659 = vlaneseq
        %v660 = vshrl.u32 %v659, 7
        %662 = vset.pattern.permute.xlu0 %v660
        %663 = vperm.xlu0 %662, %v658
        %v664 = vpop.permute.xlu0 %663
        %v665 = vlaneseq
        %v666 = vshrl.u32 %v665, 7
        %v667 = vadd.s32 %v666, 8
        %668 = vset.pattern.permute.xlu0 %v667
        %669 = vperm.xlu0 %668, %v658
        %v670 = vpop.permute.xlu0 %669
        %v671 = vperm.slane %v257, 7
        %v672 = vlaneseq
        %v673 = vshrl.u32 %v672, 7
        %675 = vset.pattern.permute.xlu0 %v673
        %676 = vperm.xlu0 %675, %v671
        %v677 = vpop.permute.xlu0 %676
        %v678 = vlaneseq
        %v679 = vshrl.u32 %v678, 7
        %v680 = vadd.s32 %v679, 8
        %681 = vset.pattern.permute.xlu0 %v680
        %682 = vperm.xlu0 %681, %v671
        %v683 = vpop.permute.xlu0 %682
        %v684 = vperm.slane %v258, 0
        %v685 = vlaneseq
        %v686 = vshrl.u32 %v685, 7
        %688 = vset.pattern.permute.xlu0 %v686
        %689 = vperm.xlu0 %688, %v684
        %v690 = vpop.permute.xlu0 %689
        %v691 = vlaneseq
        %v692 = vshrl.u32 %v691, 7
        %v693 = vadd.s32 %v692, 8
        %694 = vset.pattern.permute.xlu0 %v693
        %695 = vperm.xlu0 %694, %v684
        %v696 = vpop.permute.xlu0 %695
        %v697 = vperm.slane %v258, 1
        %v698 = vlaneseq
        %v699 = vshrl.u32 %v698, 7
        %701 = vset.pattern.permute.xlu0 %v699
        %702 = vperm.xlu0 %701, %v697
        %v703 = vpop.permute.xlu0 %702
        %v704 = vlaneseq
        %v705 = vshrl.u32 %v704, 7
        %v706 = vadd.s32 %v705, 8
        %707 = vset.pattern.permute.xlu0 %v706
        %708 = vperm.xlu0 %707, %v697
        %v709 = vpop.permute.xlu0 %708
        %v710 = vperm.slane %v258, 2
        %v711 = vlaneseq
        %v712 = vshrl.u32 %v711, 7
        %714 = vset.pattern.permute.xlu0 %v712
        %715 = vperm.xlu0 %714, %v710
        %v716 = vpop.permute.xlu0 %715
        %v717 = vlaneseq
        %v718 = vshrl.u32 %v717, 7
        %v719 = vadd.s32 %v718, 8
        %720 = vset.pattern.permute.xlu0 %v719
        %721 = vperm.xlu0 %720, %v710
        %v722 = vpop.permute.xlu0 %721
        %v723 = vperm.slane %v258, 3
        %v724 = vlaneseq
        %v725 = vshrl.u32 %v724, 7
        %727 = vset.pattern.permute.xlu0 %v725
        %728 = vperm.xlu0 %727, %v723
        %v729 = vpop.permute.xlu0 %728
        %v730 = vlaneseq
        %v731 = vshrl.u32 %v730, 7
        %v732 = vadd.s32 %v731, 8
        %733 = vset.pattern.permute.xlu0 %v732
        %734 = vperm.xlu0 %733, %v723
        %v735 = vpop.permute.xlu0 %734
        %v736 = vperm.slane %v258, 4
        %v737 = vlaneseq
        %v738 = vshrl.u32 %v737, 7
        %740 = vset.pattern.permute.xlu0 %v738
        %741 = vperm.xlu0 %740, %v736
        %v742 = vpop.permute.xlu0 %741
        %v743 = vlaneseq
        %v744 = vshrl.u32 %v743, 7
        %v745 = vadd.s32 %v744, 8
        %746 = vset.pattern.permute.xlu0 %v745
        %747 = vperm.xlu0 %746, %v736
        %v748 = vpop.permute.xlu0 %747
        %v749 = vperm.slane %v258, 5
        %v750 = vlaneseq
        %v751 = vshrl.u32 %v750, 7
        %753 = vset.pattern.permute.xlu0 %v751
        %754 = vperm.xlu0 %753, %v749
        %v755 = vpop.permute.xlu0 %754
        %v756 = vlaneseq
        %v757 = vshrl.u32 %v756, 7
        %v758 = vadd.s32 %v757, 8
        %759 = vset.pattern.permute.xlu0 %v758
        %760 = vperm.xlu0 %759, %v749
        %v761 = vpop.permute.xlu0 %760
        %v762 = vperm.slane %v258, 6
        %v763 = vlaneseq
        %v764 = vshrl.u32 %v763, 7
        %766 = vset.pattern.permute.xlu0 %v764
        %767 = vperm.xlu0 %766, %v762
        %v768 = vpop.permute.xlu0 %767
        %v769 = vlaneseq
        %v770 = vshrl.u32 %v769, 7
        %v771 = vadd.s32 %v770, 8
        %772 = vset.pattern.permute.xlu0 %v771
        %773 = vperm.xlu0 %772, %v762
        %v774 = vpop.permute.xlu0 %773
        %v775 = vperm.slane %v258, 7
        %v776 = vlaneseq
        %v777 = vshrl.u32 %v776, 7
        %779 = vset.pattern.permute.xlu0 %v777
        %780 = vperm.xlu0 %779, %v775
        %v781 = vpop.permute.xlu0 %780
        %v782 = vlaneseq
        %v783 = vshrl.u32 %v782, 7
        %v784 = vadd.s32 %v783, 8
        %785 = vset.pattern.permute.xlu0 %v784
        %786 = vperm.xlu0 %785, %v775
        %v787 = vpop.permute.xlu0 %786
        %v788 = vperm.slane %v259, 0
        %v789 = vlaneseq
        %v790 = vshrl.u32 %v789, 7
        %792 = vset.pattern.permute.xlu0 %v790
        %793 = vperm.xlu0 %792, %v788
        %v794 = vpop.permute.xlu0 %793
        %v795 = vlaneseq
        %v796 = vshrl.u32 %v795, 7
        %v797 = vadd.s32 %v796, 8
        %798 = vset.pattern.permute.xlu0 %v797
        %799 = vperm.xlu0 %798, %v788
        %v800 = vpop.permute.xlu0 %799
        %v801 = vperm.slane %v259, 1
        %v802 = vlaneseq
        %v803 = vshrl.u32 %v802, 7
        %805 = vset.pattern.permute.xlu0 %v803
        %806 = vperm.xlu0 %805, %v801
        %v807 = vpop.permute.xlu0 %806
        %v808 = vlaneseq
        %v809 = vshrl.u32 %v808, 7
        %v810 = vadd.s32 %v809, 8
        %811 = vset.pattern.permute.xlu0 %v810
        %812 = vperm.xlu0 %811, %v801
        %v813 = vpop.permute.xlu0 %812
        %v814 = vperm.slane %v259, 2
        %v815 = vlaneseq
        %v816 = vshrl.u32 %v815, 7
        %818 = vset.pattern.permute.xlu0 %v816
        %819 = vperm.xlu0 %818, %v814
        %v820 = vpop.permute.xlu0 %819
        %v821 = vlaneseq
        %v822 = vshrl.u32 %v821, 7
        %v823 = vadd.s32 %v822, 8
        %824 = vset.pattern.permute.xlu0 %v823
        %825 = vperm.xlu0 %824, %v814
        %v826 = vpop.permute.xlu0 %825
        %v827 = vperm.slane %v259, 3
        %v828 = vlaneseq
        %v829 = vshrl.u32 %v828, 7
        %831 = vset.pattern.permute.xlu0 %v829
        %832 = vperm.xlu0 %831, %v827
        %v833 = vpop.permute.xlu0 %832
        %v834 = vlaneseq
        %v835 = vshrl.u32 %v834, 7
        %v836 = vadd.s32 %v835, 8
        %837 = vset.pattern.permute.xlu0 %v836
        %838 = vperm.xlu0 %837, %v827
        %v839 = vpop.permute.xlu0 %838
        %v840 = vperm.slane %v259, 4
        %v841 = vlaneseq
        %v842 = vshrl.u32 %v841, 7
        %844 = vset.pattern.permute.xlu0 %v842
        %845 = vperm.xlu0 %844, %v840
        %v846 = vpop.permute.xlu0 %845
        %v847 = vlaneseq
        %v848 = vshrl.u32 %v847, 7
        %v849 = vadd.s32 %v848, 8
        %850 = vset.pattern.permute.xlu0 %v849
        %851 = vperm.xlu0 %850, %v840
        %v852 = vpop.permute.xlu0 %851
        %v853 = vperm.slane %v259, 5
        %v854 = vlaneseq
        %v855 = vshrl.u32 %v854, 7
        %857 = vset.pattern.permute.xlu0 %v855
        %858 = vperm.xlu0 %857, %v853
        %v859 = vpop.permute.xlu0 %858
        %v860 = vlaneseq
        %v861 = vshrl.u32 %v860, 7
        %v862 = vadd.s32 %v861, 8
        %863 = vset.pattern.permute.xlu0 %v862
        %864 = vperm.xlu0 %863, %v853
        %v865 = vpop.permute.xlu0 %864
        %v866 = vperm.slane %v259, 6
        %v867 = vlaneseq
        %v868 = vshrl.u32 %v867, 7
        %870 = vset.pattern.permute.xlu0 %v868
        %871 = vperm.xlu0 %870, %v866
        %v872 = vpop.permute.xlu0 %871
        %v873 = vlaneseq
        %v874 = vshrl.u32 %v873, 7
        %v875 = vadd.s32 %v874, 8
        %876 = vset.pattern.permute.xlu0 %v875
        %877 = vperm.xlu0 %876, %v866
        %v878 = vpop.permute.xlu0 %877
        %v879 = vperm.slane %v259, 7
        %v880 = vlaneseq
        %v881 = vshrl.u32 %v880, 7
        %883 = vset.pattern.permute.xlu0 %v881
        %884 = vperm.xlu0 %883, %v879
        %v885 = vpop.permute.xlu0 %884
        %v886 = vlaneseq
        %v887 = vshrl.u32 %v886, 7
        %v888 = vadd.s32 %v887, 8
        %889 = vset.pattern.permute.xlu0 %v888
        %890 = vperm.xlu0 %889, %v879
        %v891 = vpop.permute.xlu0 %890
        %v892 = vperm.slane %v260, 0
        %v893 = vlaneseq
        %v894 = vshrl.u32 %v893, 7
        %896 = vset.pattern.permute.xlu0 %v894
        %897 = vperm.xlu0 %896, %v892
        %v898 = vpop.permute.xlu0 %897
        %v899 = vlaneseq
        %v900 = vshrl.u32 %v899, 7
        %v901 = vadd.s32 %v900, 8
        %902 = vset.pattern.permute.xlu0 %v901
        %903 = vperm.xlu0 %902, %v892
        %v904 = vpop.permute.xlu0 %903
        %v905 = vperm.slane %v260, 1
        %v906 = vlaneseq
        %v907 = vshrl.u32 %v906, 7
        %909 = vset.pattern.permute.xlu0 %v907
        %910 = vperm.xlu0 %909, %v905
        %v911 = vpop.permute.xlu0 %910
        %v912 = vlaneseq
        %v913 = vshrl.u32 %v912, 7
        %v914 = vadd.s32 %v913, 8
        %915 = vset.pattern.permute.xlu0 %v914
        %916 = vperm.xlu0 %915, %v905
        %v917 = vpop.permute.xlu0 %916
        %v918 = vperm.slane %v260, 2
        %v919 = vlaneseq
        %v920 = vshrl.u32 %v919, 7
        %922 = vset.pattern.permute.xlu0 %v920
        %923 = vperm.xlu0 %922, %v918
        %v924 = vpop.permute.xlu0 %923
        %v925 = vlaneseq
        %v926 = vshrl.u32 %v925, 7
        %v927 = vadd.s32 %v926, 8
        %928 = vset.pattern.permute.xlu0 %v927
        %929 = vperm.xlu0 %928, %v918
        %v930 = vpop.permute.xlu0 %929
        %v931 = vperm.slane %v260, 3
        %v932 = vlaneseq
        %v933 = vshrl.u32 %v932, 7
        %935 = vset.pattern.permute.xlu0 %v933
        %936 = vperm.xlu0 %935, %v931
        %v937 = vpop.permute.xlu0 %936
        %v938 = vlaneseq
        %v939 = vshrl.u32 %v938, 7
        %v940 = vadd.s32 %v939, 8
        %941 = vset.pattern.permute.xlu0 %v940
        %942 = vperm.xlu0 %941, %v931
        %v943 = vpop.permute.xlu0 %942
        %v944 = vperm.slane %v260, 4
        %v945 = vlaneseq
        %v946 = vshrl.u32 %v945, 7
        %948 = vset.pattern.permute.xlu0 %v946
        %949 = vperm.xlu0 %948, %v944
        %v950 = vpop.permute.xlu0 %949
        %v951 = vlaneseq
        %v952 = vshrl.u32 %v951, 7
        %v953 = vadd.s32 %v952, 8
        %954 = vset.pattern.permute.xlu0 %v953
        %955 = vperm.xlu0 %954, %v944
        %v956 = vpop.permute.xlu0 %955
        %v957 = vperm.slane %v260, 5
        %v958 = vlaneseq
        %v959 = vshrl.u32 %v958, 7
        %961 = vset.pattern.permute.xlu0 %v959
        %962 = vperm.xlu0 %961, %v957
        %v963 = vpop.permute.xlu0 %962
        %v964 = vlaneseq
        %v965 = vshrl.u32 %v964, 7
        %v966 = vadd.s32 %v965, 8
        %967 = vset.pattern.permute.xlu0 %v966
        %968 = vperm.xlu0 %967, %v957
        %v969 = vpop.permute.xlu0 %968
        %v970 = vperm.slane %v260, 6
        %v971 = vlaneseq
        %v972 = vshrl.u32 %v971, 7
        %974 = vset.pattern.permute.xlu0 %v972
        %975 = vperm.xlu0 %974, %v970
        %v976 = vpop.permute.xlu0 %975
        %v977 = vlaneseq
        %v978 = vshrl.u32 %v977, 7
        %v979 = vadd.s32 %v978, 8
        %980 = vset.pattern.permute.xlu0 %v979
        %981 = vperm.xlu0 %980, %v970
        %v982 = vpop.permute.xlu0 %981
        %v983 = vperm.slane %v260, 7
        %v984 = vlaneseq
        %v985 = vshrl.u32 %v984, 7
        %987 = vset.pattern.permute.xlu0 %v985
        %988 = vperm.xlu0 %987, %v983
        %v989 = vpop.permute.xlu0 %988
        %v990 = vlaneseq
        %v991 = vshrl.u32 %v990, 7
        %v992 = vadd.s32 %v991, 8
        %993 = vset.pattern.permute.xlu0 %v992
        %994 = vperm.xlu0 %993, %v983
        %v995 = vpop.permute.xlu0 %994
        %v996 = vperm.slane %v261, 0
        %v997 = vlaneseq
        %v998 = vshrl.u32 %v997, 7
        %1000 = vset.pattern.permute.xlu0 %v998
        %1001 = vperm.xlu0 %1000, %v996
        %v1002 = vpop.permute.xlu0 %1001
        %v1003 = vlaneseq
        %v1004 = vshrl.u32 %v1003, 7
        %v1005 = vadd.s32 %v1004, 8
        %1006 = vset.pattern.permute.xlu0 %v1005
        %1007 = vperm.xlu0 %1006, %v996
        %v1008 = vpop.permute.xlu0 %1007
        %v1009 = vperm.slane %v261, 1
        %v1010 = vlaneseq
        %v1011 = vshrl.u32 %v1010, 7
        %1013 = vset.pattern.permute.xlu0 %v1011
        %1014 = vperm.xlu0 %1013, %v1009
        %v1015 = vpop.permute.xlu0 %1014
        %v1016 = vlaneseq
        %v1017 = vshrl.u32 %v1016, 7
        %v1018 = vadd.s32 %v1017, 8
        %1019 = vset.pattern.permute.xlu0 %v1018
        %1020 = vperm.xlu0 %1019, %v1009
        %v1021 = vpop.permute.xlu0 %1020
        %v1022 = vperm.slane %v261, 2
        %v1023 = vlaneseq
        %v1024 = vshrl.u32 %v1023, 7
        %1026 = vset.pattern.permute.xlu0 %v1024
        %1027 = vperm.xlu0 %1026, %v1022
        %v1028 = vpop.permute.xlu0 %1027
        %v1029 = vlaneseq
        %v1030 = vshrl.u32 %v1029, 7
        %v1031 = vadd.s32 %v1030, 8
        %1032 = vset.pattern.permute.xlu0 %v1031
        %1033 = vperm.xlu0 %1032, %v1022
        %v1034 = vpop.permute.xlu0 %1033
        %v1035 = vperm.slane %v261, 3
        %v1036 = vlaneseq
        %v1037 = vshrl.u32 %v1036, 7
        %1039 = vset.pattern.permute.xlu0 %v1037
        %1040 = vperm.xlu0 %1039, %v1035
        %v1041 = vpop.permute.xlu0 %1040
        %v1042 = vlaneseq
        %v1043 = vshrl.u32 %v1042, 7
        %v1044 = vadd.s32 %v1043, 8
        %1045 = vset.pattern.permute.xlu0 %v1044
        %1046 = vperm.xlu0 %1045, %v1035
        %v1047 = vpop.permute.xlu0 %1046
        %v1048 = vperm.slane %v261, 4
        %v1049 = vlaneseq
        %v1050 = vshrl.u32 %v1049, 7
        %1052 = vset.pattern.permute.xlu0 %v1050
        %1053 = vperm.xlu0 %1052, %v1048
        %v1054 = vpop.permute.xlu0 %1053
        %v1055 = vlaneseq
        %v1056 = vshrl.u32 %v1055, 7
        %v1057 = vadd.s32 %v1056, 8
        %1058 = vset.pattern.permute.xlu0 %v1057
        %1059 = vperm.xlu0 %1058, %v1048
        %v1060 = vpop.permute.xlu0 %1059
        %v1061 = vperm.slane %v261, 5
        %v1062 = vlaneseq
        %v1063 = vshrl.u32 %v1062, 7
        %1065 = vset.pattern.permute.xlu0 %v1063
        %1066 = vperm.xlu0 %1065, %v1061
        %v1067 = vpop.permute.xlu0 %1066
        %v1068 = vlaneseq
        %v1069 = vshrl.u32 %v1068, 7
        %v1070 = vadd.s32 %v1069, 8
        %1071 = vset.pattern.permute.xlu0 %v1070
        %1072 = vperm.xlu0 %1071, %v1061
        %v1073 = vpop.permute.xlu0 %1072
        %v1074 = vperm.slane %v261, 6
        %v1075 = vlaneseq
        %v1076 = vshrl.u32 %v1075, 7
        %1078 = vset.pattern.permute.xlu0 %v1076
        %1079 = vperm.xlu0 %1078, %v1074
        %v1080 = vpop.permute.xlu0 %1079
        %v1081 = vlaneseq
        %v1082 = vshrl.u32 %v1081, 7
        %v1083 = vadd.s32 %v1082, 8
        %1084 = vset.pattern.permute.xlu0 %v1083
        %1085 = vperm.xlu0 %1084, %v1074
        %v1086 = vpop.permute.xlu0 %1085
        %v1087 = vperm.slane %v261, 7
        %v1088 = vlaneseq
        %v1089 = vshrl.u32 %v1088, 7
        %1091 = vset.pattern.permute.xlu0 %v1089
        %1092 = vperm.xlu0 %1091, %v1087
        %v1093 = vpop.permute.xlu0 %1092
        %v1094 = vlaneseq
        %v1095 = vshrl.u32 %v1094, 7
        %v1096 = vadd.s32 %v1095, 8
        %1097 = vset.pattern.permute.xlu0 %v1096
        %1098 = vperm.xlu0 %1097, %v1087
        %v1099 = vpop.permute.xlu0 %1098
        %vm1100 = vcmp.eq.s32.totalorder %v274, %v263
        %vm1101 = vcmp.eq.s32.totalorder %v274, %v264
        %vm1102 = vcmp.eq.s32.totalorder %v274, %v265
        %vm1103 = vcmp.eq.s32.totalorder %v274, %v266
        %vm1104 = vcmp.eq.s32.totalorder %v274, %v267
        %vm1105 = vcmp.eq.s32.totalorder %v280, %v263
        %vm1106 = vcmp.eq.s32.totalorder %v280, %v264
        %vm1107 = vcmp.eq.s32.totalorder %v280, %v265
        %vm1108 = vcmp.eq.s32.totalorder %v280, %v266
        %vm1109 = vcmp.eq.s32.totalorder %v280, %v267
        %vm1110 = vcmp.eq.s32.totalorder %v287, %v263
        %vm1111 = vcmp.eq.s32.totalorder %v287, %v264
        %vm1112 = vcmp.eq.s32.totalorder %v287, %v265
        %vm1113 = vcmp.eq.s32.totalorder %v287, %v266
        %vm1114 = vcmp.eq.s32.totalorder %v287, %v267
        %vm1115 = vcmp.eq.s32.totalorder %v293, %v263
        %vm1116 = vcmp.eq.s32.totalorder %v293, %v264
        %vm1117 = vcmp.eq.s32.totalorder %v293, %v265
        %vm1118 = vcmp.eq.s32.totalorder %v293, %v266
        %vm1119 = vcmp.eq.s32.totalorder %v293, %v267
        %vm1120 = vcmp.eq.s32.totalorder %v300, %v263
        %vm1121 = vcmp.eq.s32.totalorder %v300, %v264
        %vm1122 = vcmp.eq.s32.totalorder %v300, %v265
        %vm1123 = vcmp.eq.s32.totalorder %v300, %v266
        %vm1124 = vcmp.eq.s32.totalorder %v300, %v267
        %vm1125 = vcmp.eq.s32.totalorder %v306, %v263
        %vm1126 = vcmp.eq.s32.totalorder %v306, %v264
        %vm1127 = vcmp.eq.s32.totalorder %v306, %v265
        %vm1128 = vcmp.eq.s32.totalorder %v306, %v266
        %vm1129 = vcmp.eq.s32.totalorder %v306, %v267
        %vm1130 = vcmp.eq.s32.totalorder %v313, %v263
        %vm1131 = vcmp.eq.s32.totalorder %v313, %v264
        %vm1132 = vcmp.eq.s32.totalorder %v313, %v265
        %vm1133 = vcmp.eq.s32.totalorder %v313, %v266
        %vm1134 = vcmp.eq.s32.totalorder %v313, %v267
        %vm1135 = vcmp.eq.s32.totalorder %v319, %v263
        %vm1136 = vcmp.eq.s32.totalorder %v319, %v264
        %vm1137 = vcmp.eq.s32.totalorder %v319, %v265
        %vm1138 = vcmp.eq.s32.totalorder %v319, %v266
        %vm1139 = vcmp.eq.s32.totalorder %v319, %v267
        %vm1140 = vcmp.eq.s32.totalorder %v326, %v263
        %vm1141 = vcmp.eq.s32.totalorder %v326, %v264
        %vm1142 = vcmp.eq.s32.totalorder %v326, %v265
        %vm1143 = vcmp.eq.s32.totalorder %v326, %v266
        %vm1144 = vcmp.eq.s32.totalorder %v326, %v267
        %vm1145 = vcmp.eq.s32.totalorder %v332, %v263
        %vm1146 = vcmp.eq.s32.totalorder %v332, %v264
        %vm1147 = vcmp.eq.s32.totalorder %v332, %v265
        %vm1148 = vcmp.eq.s32.totalorder %v332, %v266
        %vm1149 = vcmp.eq.s32.totalorder %v332, %v267
        %vm1150 = vcmp.eq.s32.totalorder %v339, %v263
        %vm1151 = vcmp.eq.s32.totalorder %v339, %v264
        %vm1152 = vcmp.eq.s32.totalorder %v339, %v265
        %vm1153 = vcmp.eq.s32.totalorder %v339, %v266
        %vm1154 = vcmp.eq.s32.totalorder %v339, %v267
        %vm1155 = vcmp.eq.s32.totalorder %v345, %v263
        %vm1156 = vcmp.eq.s32.totalorder %v345, %v264
        %vm1157 = vcmp.eq.s32.totalorder %v345, %v265
        %vm1158 = vcmp.eq.s32.totalorder %v345, %v266
        %vm1159 = vcmp.eq.s32.totalorder %v345, %v267
        %vm1160 = vcmp.eq.s32.totalorder %v352, %v263
        %vm1161 = vcmp.eq.s32.totalorder %v352, %v264
        %vm1162 = vcmp.eq.s32.totalorder %v352, %v265
        %vm1163 = vcmp.eq.s32.totalorder %v352, %v266
        %vm1164 = vcmp.eq.s32.totalorder %v352, %v267
        %vm1165 = vcmp.eq.s32.totalorder %v358, %v263
        %vm1166 = vcmp.eq.s32.totalorder %v358, %v264
        %vm1167 = vcmp.eq.s32.totalorder %v358, %v265
        %vm1168 = vcmp.eq.s32.totalorder %v358, %v266
        %vm1169 = vcmp.eq.s32.totalorder %v358, %v267
        %vm1170 = vcmp.eq.s32.totalorder %v365, %v263
        %vm1171 = vcmp.eq.s32.totalorder %v365, %v264
        %vm1172 = vcmp.eq.s32.totalorder %v365, %v265
        %vm1173 = vcmp.eq.s32.totalorder %v365, %v266
        %vm1174 = vcmp.eq.s32.totalorder %v365, %v267
        %vm1175 = vcmp.eq.s32.totalorder %v371, %v263
        %vm1176 = vcmp.eq.s32.totalorder %v371, %v264
        %vm1177 = vcmp.eq.s32.totalorder %v371, %v265
        %vm1178 = vcmp.eq.s32.totalorder %v371, %v266
        %vm1179 = vcmp.eq.s32.totalorder %v371, %v267
        %vm1180 = vcmp.eq.s32.totalorder %v378, %v263
        %vm1181 = vcmp.eq.s32.totalorder %v378, %v264
        %vm1182 = vcmp.eq.s32.totalorder %v378, %v265
        %vm1183 = vcmp.eq.s32.totalorder %v378, %v266
        %vm1184 = vcmp.eq.s32.totalorder %v378, %v267
        %vm1185 = vcmp.eq.s32.totalorder %v384, %v263
        %vm1186 = vcmp.eq.s32.totalorder %v384, %v264
        %vm1187 = vcmp.eq.s32.totalorder %v384, %v265
        %vm1188 = vcmp.eq.s32.totalorder %v384, %v266
        %vm1189 = vcmp.eq.s32.totalorder %v384, %v267
        %vm1190 = vcmp.eq.s32.totalorder %v391, %v263
        %vm1191 = vcmp.eq.s32.totalorder %v391, %v264
        %vm1192 = vcmp.eq.s32.totalorder %v391, %v265
        %vm1193 = vcmp.eq.s32.totalorder %v391, %v266
        %vm1194 = vcmp.eq.s32.totalorder %v391, %v267
        %vm1195 = vcmp.eq.s32.totalorder %v397, %v263
        %vm1196 = vcmp.eq.s32.totalorder %v397, %v264
        %vm1197 = vcmp.eq.s32.totalorder %v397, %v265
        %vm1198 = vcmp.eq.s32.totalorder %v397, %v266
        %vm1199 = vcmp.eq.s32.totalorder %v397, %v267
        %vm1200 = vcmp.eq.s32.totalorder %v404, %v263
        %vm1201 = vcmp.eq.s32.totalorder %v404, %v264
        %vm1202 = vcmp.eq.s32.totalorder %v404, %v265
        %vm1203 = vcmp.eq.s32.totalorder %v404, %v266
        %vm1204 = vcmp.eq.s32.totalorder %v404, %v267
        %vm1205 = vcmp.eq.s32.totalorder %v410, %v263
        %vm1206 = vcmp.eq.s32.totalorder %v410, %v264
        %vm1207 = vcmp.eq.s32.totalorder %v410, %v265
        %vm1208 = vcmp.eq.s32.totalorder %v410, %v266
        %vm1209 = vcmp.eq.s32.totalorder %v410, %v267
        %vm1210 = vcmp.eq.s32.totalorder %v417, %v263
        %vm1211 = vcmp.eq.s32.totalorder %v417, %v264
        %vm1212 = vcmp.eq.s32.totalorder %v417, %v265
        %vm1213 = vcmp.eq.s32.totalorder %v417, %v266
        %vm1214 = vcmp.eq.s32.totalorder %v417, %v267
        %vm1215 = vcmp.eq.s32.totalorder %v423, %v263
        %vm1216 = vcmp.eq.s32.totalorder %v423, %v264
        %vm1217 = vcmp.eq.s32.totalorder %v423, %v265
        %vm1218 = vcmp.eq.s32.totalorder %v423, %v266
        %vm1219 = vcmp.eq.s32.totalorder %v423, %v267
        %vm1220 = vcmp.eq.s32.totalorder %v430, %v263
        %vm1221 = vcmp.eq.s32.totalorder %v430, %v264
        %vm1222 = vcmp.eq.s32.totalorder %v430, %v265
        %vm1223 = vcmp.eq.s32.totalorder %v430, %v266
        %vm1224 = vcmp.eq.s32.totalorder %v430, %v267
        %vm1225 = vcmp.eq.s32.totalorder %v436, %v263
        %vm1226 = vcmp.eq.s32.totalorder %v436, %v264
        %vm1227 = vcmp.eq.s32.totalorder %v436, %v265
        %vm1228 = vcmp.eq.s32.totalorder %v436, %v266
        %vm1229 = vcmp.eq.s32.totalorder %v436, %v267
        %vm1230 = vcmp.eq.s32.totalorder %v443, %v263
        %vm1231 = vcmp.eq.s32.totalorder %v443, %v264
        %vm1232 = vcmp.eq.s32.totalorder %v443, %v265
        %vm1233 = vcmp.eq.s32.totalorder %v443, %v266
        %vm1234 = vcmp.eq.s32.totalorder %v443, %v267
        %vm1235 = vcmp.eq.s32.totalorder %v449, %v263
        %vm1236 = vcmp.eq.s32.totalorder %v449, %v264
        %vm1237 = vcmp.eq.s32.totalorder %v449, %v265
        %vm1238 = vcmp.eq.s32.totalorder %v449, %v266
        %vm1239 = vcmp.eq.s32.totalorder %v449, %v267
        %vm1240 = vcmp.eq.s32.totalorder %v456, %v263
        %vm1241 = vcmp.eq.s32.totalorder %v456, %v264
        %vm1242 = vcmp.eq.s32.totalorder %v456, %v265
        %vm1243 = vcmp.eq.s32.totalorder %v456, %v266
        %vm1244 = vcmp.eq.s32.totalorder %v456, %v267
        %vm1245 = vcmp.eq.s32.totalorder %v462, %v263
        %vm1246 = vcmp.eq.s32.totalorder %v462, %v264
        %vm1247 = vcmp.eq.s32.totalorder %v462, %v265
        %vm1248 = vcmp.eq.s32.totalorder %v462, %v266
        %vm1249 = vcmp.eq.s32.totalorder %v462, %v267
        %vm1250 = vcmp.eq.s32.totalorder %v469, %v263
        %vm1251 = vcmp.eq.s32.totalorder %v469, %v264
        %vm1252 = vcmp.eq.s32.totalorder %v469, %v265
        %vm1253 = vcmp.eq.s32.totalorder %v469, %v266
        %vm1254 = vcmp.eq.s32.totalorder %v469, %v267
        %vm1255 = vcmp.eq.s32.totalorder %v475, %v263
        %vm1256 = vcmp.eq.s32.totalorder %v475, %v264
        %vm1257 = vcmp.eq.s32.totalorder %v475, %v265
        %vm1258 = vcmp.eq.s32.totalorder %v475, %v266
        %vm1259 = vcmp.eq.s32.totalorder %v475, %v267
        %vm1260 = vcmp.eq.s32.totalorder %v482, %v263
        %vm1261 = vcmp.eq.s32.totalorder %v482, %v264
        %vm1262 = vcmp.eq.s32.totalorder %v482, %v265
        %vm1263 = vcmp.eq.s32.totalorder %v482, %v266
        %vm1264 = vcmp.eq.s32.totalorder %v482, %v267
        %vm1265 = vcmp.eq.s32.totalorder %v488, %v263
        %vm1266 = vcmp.eq.s32.totalorder %v488, %v264
        %vm1267 = vcmp.eq.s32.totalorder %v488, %v265
        %vm1268 = vcmp.eq.s32.totalorder %v488, %v266
        %vm1269 = vcmp.eq.s32.totalorder %v488, %v267
        %vm1270 = vcmp.eq.s32.totalorder %v495, %v263
        %vm1271 = vcmp.eq.s32.totalorder %v495, %v264
        %vm1272 = vcmp.eq.s32.totalorder %v495, %v265
        %vm1273 = vcmp.eq.s32.totalorder %v495, %v266
        %vm1274 = vcmp.eq.s32.totalorder %v495, %v267
        %vm1275 = vcmp.eq.s32.totalorder %v501, %v263
        %vm1276 = vcmp.eq.s32.totalorder %v501, %v264
        %vm1277 = vcmp.eq.s32.totalorder %v501, %v265
        %vm1278 = vcmp.eq.s32.totalorder %v501, %v266
        %vm1279 = vcmp.eq.s32.totalorder %v501, %v267
        %vm1280 = vcmp.eq.s32.totalorder %v508, %v263
        %vm1281 = vcmp.eq.s32.totalorder %v508, %v264
        %vm1282 = vcmp.eq.s32.totalorder %v508, %v265
        %vm1283 = vcmp.eq.s32.totalorder %v508, %v266
        %vm1284 = vcmp.eq.s32.totalorder %v508, %v267
        %vm1285 = vcmp.eq.s32.totalorder %v514, %v263
        %vm1286 = vcmp.eq.s32.totalorder %v514, %v264
        %vm1287 = vcmp.eq.s32.totalorder %v514, %v265
        %vm1288 = vcmp.eq.s32.totalorder %v514, %v266
        %vm1289 = vcmp.eq.s32.totalorder %v514, %v267
        %vm1290 = vcmp.eq.s32.totalorder %v521, %v263
        %vm1291 = vcmp.eq.s32.totalorder %v521, %v264
        %vm1292 = vcmp.eq.s32.totalorder %v521, %v265
        %vm1293 = vcmp.eq.s32.totalorder %v521, %v266
        %vm1294 = vcmp.eq.s32.totalorder %v521, %v267
        %vm1295 = vcmp.eq.s32.totalorder %v527, %v263
        %vm1296 = vcmp.eq.s32.totalorder %v527, %v264
        %vm1297 = vcmp.eq.s32.totalorder %v527, %v265
        %vm1298 = vcmp.eq.s32.totalorder %v527, %v266
        %vm1299 = vcmp.eq.s32.totalorder %v527, %v267
        %vm1300 = vcmp.eq.s32.totalorder %v534, %v263
        %vm1301 = vcmp.eq.s32.totalorder %v534, %v264
        %vm1302 = vcmp.eq.s32.totalorder %v534, %v265
        %vm1303 = vcmp.eq.s32.totalorder %v534, %v266
        %vm1304 = vcmp.eq.s32.totalorder %v534, %v267
        %vm1305 = vcmp.eq.s32.totalorder %v540, %v263
        %vm1306 = vcmp.eq.s32.totalorder %v540, %v264
        %vm1307 = vcmp.eq.s32.totalorder %v540, %v265
        %vm1308 = vcmp.eq.s32.totalorder %v540, %v266
        %vm1309 = vcmp.eq.s32.totalorder %v540, %v267
        %vm1310 = vcmp.eq.s32.totalorder %v547, %v263
        %vm1311 = vcmp.eq.s32.totalorder %v547, %v264
        %vm1312 = vcmp.eq.s32.totalorder %v547, %v265
        %vm1313 = vcmp.eq.s32.totalorder %v547, %v266
        %vm1314 = vcmp.eq.s32.totalorder %v547, %v267
        %vm1315 = vcmp.eq.s32.totalorder %v553, %v263
        %vm1316 = vcmp.eq.s32.totalorder %v553, %v264
        %vm1317 = vcmp.eq.s32.totalorder %v553, %v265
        %vm1318 = vcmp.eq.s32.totalorder %v553, %v266
        %vm1319 = vcmp.eq.s32.totalorder %v553, %v267
        %vm1320 = vcmp.eq.s32.totalorder %v560, %v263
        %vm1321 = vcmp.eq.s32.totalorder %v560, %v264
        %vm1322 = vcmp.eq.s32.totalorder %v560, %v265
        %vm1323 = vcmp.eq.s32.totalorder %v560, %v266
        %vm1324 = vcmp.eq.s32.totalorder %v560, %v267
        %vm1325 = vcmp.eq.s32.totalorder %v566, %v263
        %vm1326 = vcmp.eq.s32.totalorder %v566, %v264
        %vm1327 = vcmp.eq.s32.totalorder %v566, %v265
        %vm1328 = vcmp.eq.s32.totalorder %v566, %v266
        %vm1329 = vcmp.eq.s32.totalorder %v566, %v267
        %vm1330 = vcmp.eq.s32.totalorder %v573, %v263
        %vm1331 = vcmp.eq.s32.totalorder %v573, %v264
        %vm1332 = vcmp.eq.s32.totalorder %v573, %v265
        %vm1333 = vcmp.eq.s32.totalorder %v573, %v266
        %vm1334 = vcmp.eq.s32.totalorder %v573, %v267
        %vm1335 = vcmp.eq.s32.totalorder %v579, %v263
        %vm1336 = vcmp.eq.s32.totalorder %v579, %v264
        %vm1337 = vcmp.eq.s32.totalorder %v579, %v265
        %vm1338 = vcmp.eq.s32.totalorder %v579, %v266
        %vm1339 = vcmp.eq.s32.totalorder %v579, %v267
        %vm1340 = vcmp.eq.s32.totalorder %v586, %v263
        %vm1341 = vcmp.eq.s32.totalorder %v586, %v264
        %vm1342 = vcmp.eq.s32.totalorder %v586, %v265
        %vm1343 = vcmp.eq.s32.totalorder %v586, %v266
        %vm1344 = vcmp.eq.s32.totalorder %v586, %v267
        %vm1345 = vcmp.eq.s32.totalorder %v592, %v263
        %vm1346 = vcmp.eq.s32.totalorder %v592, %v264
        %vm1347 = vcmp.eq.s32.totalorder %v592, %v265
        %vm1348 = vcmp.eq.s32.totalorder %v592, %v266
        %vm1349 = vcmp.eq.s32.totalorder %v592, %v267
        %vm1350 = vcmp.eq.s32.totalorder %v599, %v263
        %vm1351 = vcmp.eq.s32.totalorder %v599, %v264
        %vm1352 = vcmp.eq.s32.totalorder %v599, %v265
        %vm1353 = vcmp.eq.s32.totalorder %v599, %v266
        %vm1354 = vcmp.eq.s32.totalorder %v599, %v267
        %vm1355 = vcmp.eq.s32.totalorder %v605, %v263
        %vm1356 = vcmp.eq.s32.totalorder %v605, %v264
        %vm1357 = vcmp.eq.s32.totalorder %v605, %v265
        %vm1358 = vcmp.eq.s32.totalorder %v605, %v266
        %vm1359 = vcmp.eq.s32.totalorder %v605, %v267
        %vm1360 = vcmp.eq.s32.totalorder %v612, %v263
        %vm1361 = vcmp.eq.s32.totalorder %v612, %v264
        %vm1362 = vcmp.eq.s32.totalorder %v612, %v265
        %vm1363 = vcmp.eq.s32.totalorder %v612, %v266
        %vm1364 = vcmp.eq.s32.totalorder %v612, %v267
        %vm1365 = vcmp.eq.s32.totalorder %v618, %v263
        %vm1366 = vcmp.eq.s32.totalorder %v618, %v264
        %vm1367 = vcmp.eq.s32.totalorder %v618, %v265
        %vm1368 = vcmp.eq.s32.totalorder %v618, %v266
        %vm1369 = vcmp.eq.s32.totalorder %v618, %v267
        %vm1370 = vcmp.eq.s32.totalorder %v625, %v263
        %vm1371 = vcmp.eq.s32.totalorder %v625, %v264
        %vm1372 = vcmp.eq.s32.totalorder %v625, %v265
        %vm1373 = vcmp.eq.s32.totalorder %v625, %v266
        %vm1374 = vcmp.eq.s32.totalorder %v625, %v267
        %vm1375 = vcmp.eq.s32.totalorder %v631, %v263
        %vm1376 = vcmp.eq.s32.totalorder %v631, %v264
        %vm1377 = vcmp.eq.s32.totalorder %v631, %v265
        %vm1378 = vcmp.eq.s32.totalorder %v631, %v266
        %vm1379 = vcmp.eq.s32.totalorder %v631, %v267
        %vm1380 = vcmp.eq.s32.totalorder %v638, %v263
        %vm1381 = vcmp.eq.s32.totalorder %v638, %v264
        %vm1382 = vcmp.eq.s32.totalorder %v638, %v265
        %vm1383 = vcmp.eq.s32.totalorder %v638, %v266
        %vm1384 = vcmp.eq.s32.totalorder %v638, %v267
        %vm1385 = vcmp.eq.s32.totalorder %v644, %v263
        %vm1386 = vcmp.eq.s32.totalorder %v644, %v264
        %vm1387 = vcmp.eq.s32.totalorder %v644, %v265
        %vm1388 = vcmp.eq.s32.totalorder %v644, %v266
        %vm1389 = vcmp.eq.s32.totalorder %v644, %v267
        %vm1390 = vcmp.eq.s32.totalorder %v651, %v263
        %vm1391 = vcmp.eq.s32.totalorder %v651, %v264
        %vm1392 = vcmp.eq.s32.totalorder %v651, %v265
        %vm1393 = vcmp.eq.s32.totalorder %v651, %v266
        %vm1394 = vcmp.eq.s32.totalorder %v651, %v267
        %vm1395 = vcmp.eq.s32.totalorder %v657, %v263
        %vm1396 = vcmp.eq.s32.totalorder %v657, %v264
        %vm1397 = vcmp.eq.s32.totalorder %v657, %v265
        %vm1398 = vcmp.eq.s32.totalorder %v657, %v266
        %vm1399 = vcmp.eq.s32.totalorder %v657, %v267
        %vm1400 = vcmp.eq.s32.totalorder %v664, %v263
        %vm1401 = vcmp.eq.s32.totalorder %v664, %v264
        %vm1402 = vcmp.eq.s32.totalorder %v664, %v265
        %vm1403 = vcmp.eq.s32.totalorder %v664, %v266
        %vm1404 = vcmp.eq.s32.totalorder %v664, %v267
        %vm1405 = vcmp.eq.s32.totalorder %v670, %v263
        %vm1406 = vcmp.eq.s32.totalorder %v670, %v264
        %vm1407 = vcmp.eq.s32.totalorder %v670, %v265
        %vm1408 = vcmp.eq.s32.totalorder %v670, %v266
        %vm1409 = vcmp.eq.s32.totalorder %v670, %v267
        %vm1410 = vcmp.eq.s32.totalorder %v677, %v263
        %vm1411 = vcmp.eq.s32.totalorder %v677, %v264
        %vm1412 = vcmp.eq.s32.totalorder %v677, %v265
        %vm1413 = vcmp.eq.s32.totalorder %v677, %v266
        %vm1414 = vcmp.eq.s32.totalorder %v677, %v267
        %vm1415 = vcmp.eq.s32.totalorder %v683, %v263
        %vm1416 = vcmp.eq.s32.totalorder %v683, %v264
        %vm1417 = vcmp.eq.s32.totalorder %v683, %v265
        %vm1418 = vcmp.eq.s32.totalorder %v683, %v266
        %vm1419 = vcmp.eq.s32.totalorder %v683, %v267
        %vm1420 = vcmp.eq.s32.totalorder %v690, %v263
        %vm1421 = vcmp.eq.s32.totalorder %v690, %v264
        %vm1422 = vcmp.eq.s32.totalorder %v690, %v265
        %vm1423 = vcmp.eq.s32.totalorder %v690, %v266
        %vm1424 = vcmp.eq.s32.totalorder %v690, %v267
        %vm1425 = vcmp.eq.s32.totalorder %v696, %v263
        %vm1426 = vcmp.eq.s32.totalorder %v696, %v264
        %vm1427 = vcmp.eq.s32.totalorder %v696, %v265
        %vm1428 = vcmp.eq.s32.totalorder %v696, %v266
        %vm1429 = vcmp.eq.s32.totalorder %v696, %v267
        %vm1430 = vcmp.eq.s32.totalorder %v703, %v263
        %vm1431 = vcmp.eq.s32.totalorder %v703, %v264
        %vm1432 = vcmp.eq.s32.totalorder %v703, %v265
        %vm1433 = vcmp.eq.s32.totalorder %v703, %v266
        %vm1434 = vcmp.eq.s32.totalorder %v703, %v267
        %vm1435 = vcmp.eq.s32.totalorder %v709, %v263
        %vm1436 = vcmp.eq.s32.totalorder %v709, %v264
        %vm1437 = vcmp.eq.s32.totalorder %v709, %v265
        %vm1438 = vcmp.eq.s32.totalorder %v709, %v266
        %vm1439 = vcmp.eq.s32.totalorder %v709, %v267
        %vm1440 = vcmp.eq.s32.totalorder %v716, %v263
        %vm1441 = vcmp.eq.s32.totalorder %v716, %v264
        %vm1442 = vcmp.eq.s32.totalorder %v716, %v265
        %vm1443 = vcmp.eq.s32.totalorder %v716, %v266
        %vm1444 = vcmp.eq.s32.totalorder %v716, %v267
        %vm1445 = vcmp.eq.s32.totalorder %v722, %v263
        %vm1446 = vcmp.eq.s32.totalorder %v722, %v264
        %vm1447 = vcmp.eq.s32.totalorder %v722, %v265
        %vm1448 = vcmp.eq.s32.totalorder %v722, %v266
        %vm1449 = vcmp.eq.s32.totalorder %v722, %v267
        %vm1450 = vcmp.eq.s32.totalorder %v729, %v263
        %vm1451 = vcmp.eq.s32.totalorder %v729, %v264
        %vm1452 = vcmp.eq.s32.totalorder %v729, %v265
        %vm1453 = vcmp.eq.s32.totalorder %v729, %v266
        %vm1454 = vcmp.eq.s32.totalorder %v729, %v267
        %vm1455 = vcmp.eq.s32.totalorder %v735, %v263
        %vm1456 = vcmp.eq.s32.totalorder %v735, %v264
        %vm1457 = vcmp.eq.s32.totalorder %v735, %v265
        %vm1458 = vcmp.eq.s32.totalorder %v735, %v266
        %vm1459 = vcmp.eq.s32.totalorder %v735, %v267
        %vm1460 = vcmp.eq.s32.totalorder %v742, %v263
        %vm1461 = vcmp.eq.s32.totalorder %v742, %v264
        %vm1462 = vcmp.eq.s32.totalorder %v742, %v265
        %vm1463 = vcmp.eq.s32.totalorder %v742, %v266
        %vm1464 = vcmp.eq.s32.totalorder %v742, %v267
        %vm1465 = vcmp.eq.s32.totalorder %v748, %v263
        %vm1466 = vcmp.eq.s32.totalorder %v748, %v264
        %vm1467 = vcmp.eq.s32.totalorder %v748, %v265
        %vm1468 = vcmp.eq.s32.totalorder %v748, %v266
        %vm1469 = vcmp.eq.s32.totalorder %v748, %v267
        %vm1470 = vcmp.eq.s32.totalorder %v755, %v263
        %vm1471 = vcmp.eq.s32.totalorder %v755, %v264
        %vm1472 = vcmp.eq.s32.totalorder %v755, %v265
        %vm1473 = vcmp.eq.s32.totalorder %v755, %v266
        %vm1474 = vcmp.eq.s32.totalorder %v755, %v267
        %vm1475 = vcmp.eq.s32.totalorder %v761, %v263
        %vm1476 = vcmp.eq.s32.totalorder %v761, %v264
        %vm1477 = vcmp.eq.s32.totalorder %v761, %v265
        %vm1478 = vcmp.eq.s32.totalorder %v761, %v266
        %vm1479 = vcmp.eq.s32.totalorder %v761, %v267
        %vm1480 = vcmp.eq.s32.totalorder %v768, %v263
        %vm1481 = vcmp.eq.s32.totalorder %v768, %v264
        %vm1482 = vcmp.eq.s32.totalorder %v768, %v265
        %vm1483 = vcmp.eq.s32.totalorder %v768, %v266
        %vm1484 = vcmp.eq.s32.totalorder %v768, %v267
        %vm1485 = vcmp.eq.s32.totalorder %v774, %v263
        %vm1486 = vcmp.eq.s32.totalorder %v774, %v264
        %vm1487 = vcmp.eq.s32.totalorder %v774, %v265
        %vm1488 = vcmp.eq.s32.totalorder %v774, %v266
        %vm1489 = vcmp.eq.s32.totalorder %v774, %v267
        %vm1490 = vcmp.eq.s32.totalorder %v781, %v263
        %vm1491 = vcmp.eq.s32.totalorder %v781, %v264
        %vm1492 = vcmp.eq.s32.totalorder %v781, %v265
        %vm1493 = vcmp.eq.s32.totalorder %v781, %v266
        %vm1494 = vcmp.eq.s32.totalorder %v781, %v267
        %vm1495 = vcmp.eq.s32.totalorder %v787, %v263
        %vm1496 = vcmp.eq.s32.totalorder %v787, %v264
        %vm1497 = vcmp.eq.s32.totalorder %v787, %v265
        %vm1498 = vcmp.eq.s32.totalorder %v787, %v266
        %vm1499 = vcmp.eq.s32.totalorder %v787, %v267
        %vm1500 = vcmp.eq.s32.totalorder %v794, %v263
        %vm1501 = vcmp.eq.s32.totalorder %v794, %v264
        %vm1502 = vcmp.eq.s32.totalorder %v794, %v265
        %vm1503 = vcmp.eq.s32.totalorder %v794, %v266
        %vm1504 = vcmp.eq.s32.totalorder %v794, %v267
        %vm1505 = vcmp.eq.s32.totalorder %v800, %v263
        %vm1506 = vcmp.eq.s32.totalorder %v800, %v264
        %vm1507 = vcmp.eq.s32.totalorder %v800, %v265
        %vm1508 = vcmp.eq.s32.totalorder %v800, %v266
        %vm1509 = vcmp.eq.s32.totalorder %v800, %v267
        %vm1510 = vcmp.eq.s32.totalorder %v807, %v263
        %vm1511 = vcmp.eq.s32.totalorder %v807, %v264
        %vm1512 = vcmp.eq.s32.totalorder %v807, %v265
        %vm1513 = vcmp.eq.s32.totalorder %v807, %v266
        %vm1514 = vcmp.eq.s32.totalorder %v807, %v267
        %vm1515 = vcmp.eq.s32.totalorder %v813, %v263
        %vm1516 = vcmp.eq.s32.totalorder %v813, %v264
        %vm1517 = vcmp.eq.s32.totalorder %v813, %v265
        %vm1518 = vcmp.eq.s32.totalorder %v813, %v266
        %vm1519 = vcmp.eq.s32.totalorder %v813, %v267
        %vm1520 = vcmp.eq.s32.totalorder %v820, %v263
        %vm1521 = vcmp.eq.s32.totalorder %v820, %v264
        %vm1522 = vcmp.eq.s32.totalorder %v820, %v265
        %vm1523 = vcmp.eq.s32.totalorder %v820, %v266
        %vm1524 = vcmp.eq.s32.totalorder %v820, %v267
        %vm1525 = vcmp.eq.s32.totalorder %v826, %v263
        %vm1526 = vcmp.eq.s32.totalorder %v826, %v264
        %vm1527 = vcmp.eq.s32.totalorder %v826, %v265
        %vm1528 = vcmp.eq.s32.totalorder %v826, %v266
        %vm1529 = vcmp.eq.s32.totalorder %v826, %v267
        %vm1530 = vcmp.eq.s32.totalorder %v833, %v263
        %vm1531 = vcmp.eq.s32.totalorder %v833, %v264
        %vm1532 = vcmp.eq.s32.totalorder %v833, %v265
        %vm1533 = vcmp.eq.s32.totalorder %v833, %v266
        %vm1534 = vcmp.eq.s32.totalorder %v833, %v267
        %vm1535 = vcmp.eq.s32.totalorder %v839, %v263
        %vm1536 = vcmp.eq.s32.totalorder %v839, %v264
        %vm1537 = vcmp.eq.s32.totalorder %v839, %v265
        %vm1538 = vcmp.eq.s32.totalorder %v839, %v266
        %vm1539 = vcmp.eq.s32.totalorder %v839, %v267
        %vm1540 = vcmp.eq.s32.totalorder %v846, %v263
        %vm1541 = vcmp.eq.s32.totalorder %v846, %v264
        %vm1542 = vcmp.eq.s32.totalorder %v846, %v265
        %vm1543 = vcmp.eq.s32.totalorder %v846, %v266
        %vm1544 = vcmp.eq.s32.totalorder %v846, %v267
        %vm1545 = vcmp.eq.s32.totalorder %v852, %v263
        %vm1546 = vcmp.eq.s32.totalorder %v852, %v264
        %vm1547 = vcmp.eq.s32.totalorder %v852, %v265
        %vm1548 = vcmp.eq.s32.totalorder %v852, %v266
        %vm1549 = vcmp.eq.s32.totalorder %v852, %v267
        %vm1550 = vcmp.eq.s32.totalorder %v859, %v263
        %vm1551 = vcmp.eq.s32.totalorder %v859, %v264
        %vm1552 = vcmp.eq.s32.totalorder %v859, %v265
        %vm1553 = vcmp.eq.s32.totalorder %v859, %v266
        %vm1554 = vcmp.eq.s32.totalorder %v859, %v267
        %vm1555 = vcmp.eq.s32.totalorder %v865, %v263
        %vm1556 = vcmp.eq.s32.totalorder %v865, %v264
        %vm1557 = vcmp.eq.s32.totalorder %v865, %v265
        %vm1558 = vcmp.eq.s32.totalorder %v865, %v266
        %vm1559 = vcmp.eq.s32.totalorder %v865, %v267
        %vm1560 = vcmp.eq.s32.totalorder %v872, %v263
        %vm1561 = vcmp.eq.s32.totalorder %v872, %v264
        %vm1562 = vcmp.eq.s32.totalorder %v872, %v265
        %vm1563 = vcmp.eq.s32.totalorder %v872, %v266
        %vm1564 = vcmp.eq.s32.totalorder %v872, %v267
        %vm1565 = vcmp.eq.s32.totalorder %v878, %v263
        %vm1566 = vcmp.eq.s32.totalorder %v878, %v264
        %vm1567 = vcmp.eq.s32.totalorder %v878, %v265
        %vm1568 = vcmp.eq.s32.totalorder %v878, %v266
        %vm1569 = vcmp.eq.s32.totalorder %v878, %v267
        %vm1570 = vcmp.eq.s32.totalorder %v885, %v263
        %vm1571 = vcmp.eq.s32.totalorder %v885, %v264
        %vm1572 = vcmp.eq.s32.totalorder %v885, %v265
        %vm1573 = vcmp.eq.s32.totalorder %v885, %v266
        %vm1574 = vcmp.eq.s32.totalorder %v885, %v267
        %vm1575 = vcmp.eq.s32.totalorder %v891, %v263
        %vm1576 = vcmp.eq.s32.totalorder %v891, %v264
        %vm1577 = vcmp.eq.s32.totalorder %v891, %v265
        %vm1578 = vcmp.eq.s32.totalorder %v891, %v266
        %vm1579 = vcmp.eq.s32.totalorder %v891, %v267
        %vm1580 = vcmp.eq.s32.totalorder %v898, %v263
        %vm1581 = vcmp.eq.s32.totalorder %v898, %v264
        %vm1582 = vcmp.eq.s32.totalorder %v898, %v265
        %vm1583 = vcmp.eq.s32.totalorder %v898, %v266
        %vm1584 = vcmp.eq.s32.totalorder %v898, %v267
        %vm1585 = vcmp.eq.s32.totalorder %v904, %v263
        %vm1586 = vcmp.eq.s32.totalorder %v904, %v264
        %vm1587 = vcmp.eq.s32.totalorder %v904, %v265
        %vm1588 = vcmp.eq.s32.totalorder %v904, %v266
        %vm1589 = vcmp.eq.s32.totalorder %v904, %v267
        %vm1590 = vcmp.eq.s32.totalorder %v911, %v263
        %vm1591 = vcmp.eq.s32.totalorder %v911, %v264
        %vm1592 = vcmp.eq.s32.totalorder %v911, %v265
        %vm1593 = vcmp.eq.s32.totalorder %v911, %v266
        %vm1594 = vcmp.eq.s32.totalorder %v911, %v267
        %vm1595 = vcmp.eq.s32.totalorder %v917, %v263
        %vm1596 = vcmp.eq.s32.totalorder %v917, %v264
        %vm1597 = vcmp.eq.s32.totalorder %v917, %v265
        %vm1598 = vcmp.eq.s32.totalorder %v917, %v266
        %vm1599 = vcmp.eq.s32.totalorder %v917, %v267
        %vm1600 = vcmp.eq.s32.totalorder %v924, %v263
        %vm1601 = vcmp.eq.s32.totalorder %v924, %v264
        %vm1602 = vcmp.eq.s32.totalorder %v924, %v265
        %vm1603 = vcmp.eq.s32.totalorder %v924, %v266
        %vm1604 = vcmp.eq.s32.totalorder %v924, %v267
        %vm1605 = vcmp.eq.s32.totalorder %v930, %v263
        %vm1606 = vcmp.eq.s32.totalorder %v930, %v264
        %vm1607 = vcmp.eq.s32.totalorder %v930, %v265
        %vm1608 = vcmp.eq.s32.totalorder %v930, %v266
        %vm1609 = vcmp.eq.s32.totalorder %v930, %v267
        %vm1610 = vcmp.eq.s32.totalorder %v937, %v263
        %vm1611 = vcmp.eq.s32.totalorder %v937, %v264
        %vm1612 = vcmp.eq.s32.totalorder %v937, %v265
        %vm1613 = vcmp.eq.s32.totalorder %v937, %v266
        %vm1614 = vcmp.eq.s32.totalorder %v937, %v267
        %vm1615 = vcmp.eq.s32.totalorder %v943, %v263
        %vm1616 = vcmp.eq.s32.totalorder %v943, %v264
        %vm1617 = vcmp.eq.s32.totalorder %v943, %v265
        %vm1618 = vcmp.eq.s32.totalorder %v943, %v266
        %vm1619 = vcmp.eq.s32.totalorder %v943, %v267
        %vm1620 = vcmp.eq.s32.totalorder %v950, %v263
        %vm1621 = vcmp.eq.s32.totalorder %v950, %v264
        %vm1622 = vcmp.eq.s32.totalorder %v950, %v265
        %vm1623 = vcmp.eq.s32.totalorder %v950, %v266
        %vm1624 = vcmp.eq.s32.totalorder %v950, %v267
        %vm1625 = vcmp.eq.s32.totalorder %v956, %v263
        %vm1626 = vcmp.eq.s32.totalorder %v956, %v264
        %vm1627 = vcmp.eq.s32.totalorder %v956, %v265
        %vm1628 = vcmp.eq.s32.totalorder %v956, %v266
        %vm1629 = vcmp.eq.s32.totalorder %v956, %v267
        %vm1630 = vcmp.eq.s32.totalorder %v963, %v263
        %vm1631 = vcmp.eq.s32.totalorder %v963, %v264
        %vm1632 = vcmp.eq.s32.totalorder %v963, %v265
        %vm1633 = vcmp.eq.s32.totalorder %v963, %v266
        %vm1634 = vcmp.eq.s32.totalorder %v963, %v267
        %vm1635 = vcmp.eq.s32.totalorder %v969, %v263
        %vm1636 = vcmp.eq.s32.totalorder %v969, %v264
        %vm1637 = vcmp.eq.s32.totalorder %v969, %v265
        %vm1638 = vcmp.eq.s32.totalorder %v969, %v266
        %vm1639 = vcmp.eq.s32.totalorder %v969, %v267
        %vm1640 = vcmp.eq.s32.totalorder %v976, %v263
        %vm1641 = vcmp.eq.s32.totalorder %v976, %v264
        %vm1642 = vcmp.eq.s32.totalorder %v976, %v265
        %vm1643 = vcmp.eq.s32.totalorder %v976, %v266
        %vm1644 = vcmp.eq.s32.totalorder %v976, %v267
        %vm1645 = vcmp.eq.s32.totalorder %v982, %v263
        %vm1646 = vcmp.eq.s32.totalorder %v982, %v264
        %vm1647 = vcmp.eq.s32.totalorder %v982, %v265
        %vm1648 = vcmp.eq.s32.totalorder %v982, %v266
        %vm1649 = vcmp.eq.s32.totalorder %v982, %v267
        %vm1650 = vcmp.eq.s32.totalorder %v989, %v263
        %vm1651 = vcmp.eq.s32.totalorder %v989, %v264
        %vm1652 = vcmp.eq.s32.totalorder %v989, %v265
        %vm1653 = vcmp.eq.s32.totalorder %v989, %v266
        %vm1654 = vcmp.eq.s32.totalorder %v989, %v267
        %vm1655 = vcmp.eq.s32.totalorder %v995, %v263
        %vm1656 = vcmp.eq.s32.totalorder %v995, %v264
        %vm1657 = vcmp.eq.s32.totalorder %v995, %v265
        %vm1658 = vcmp.eq.s32.totalorder %v995, %v266
        %vm1659 = vcmp.eq.s32.totalorder %v995, %v267
        %vm1660 = vcmp.eq.s32.totalorder %v1002, %v263
        %vm1661 = vcmp.eq.s32.totalorder %v1002, %v264
        %vm1662 = vcmp.eq.s32.totalorder %v1002, %v265
        %vm1663 = vcmp.eq.s32.totalorder %v1002, %v266
        %vm1664 = vcmp.eq.s32.totalorder %v1002, %v267
        %vm1665 = vcmp.eq.s32.totalorder %v1008, %v263
        %vm1666 = vcmp.eq.s32.totalorder %v1008, %v264
        %vm1667 = vcmp.eq.s32.totalorder %v1008, %v265
        %vm1668 = vcmp.eq.s32.totalorder %v1008, %v266
        %vm1669 = vcmp.eq.s32.totalorder %v1008, %v267
        %vm1670 = vcmp.eq.s32.totalorder %v1015, %v263
        %vm1671 = vcmp.eq.s32.totalorder %v1015, %v264
        %vm1672 = vcmp.eq.s32.totalorder %v1015, %v265
        %vm1673 = vcmp.eq.s32.totalorder %v1015, %v266
        %vm1674 = vcmp.eq.s32.totalorder %v1015, %v267
        %vm1675 = vcmp.eq.s32.totalorder %v1021, %v263
        %vm1676 = vcmp.eq.s32.totalorder %v1021, %v264
        %vm1677 = vcmp.eq.s32.totalorder %v1021, %v265
        %vm1678 = vcmp.eq.s32.totalorder %v1021, %v266
        %vm1679 = vcmp.eq.s32.totalorder %v1021, %v267
        %vm1680 = vcmp.eq.s32.totalorder %v1028, %v263
        %vm1681 = vcmp.eq.s32.totalorder %v1028, %v264
        %vm1682 = vcmp.eq.s32.totalorder %v1028, %v265
        %vm1683 = vcmp.eq.s32.totalorder %v1028, %v266
        %vm1684 = vcmp.eq.s32.totalorder %v1028, %v267
        %vm1685 = vcmp.eq.s32.totalorder %v1034, %v263
        %vm1686 = vcmp.eq.s32.totalorder %v1034, %v264
        %vm1687 = vcmp.eq.s32.totalorder %v1034, %v265
        %vm1688 = vcmp.eq.s32.totalorder %v1034, %v266
        %vm1689 = vcmp.eq.s32.totalorder %v1034, %v267
        %vm1690 = vcmp.eq.s32.totalorder %v1041, %v263
        %vm1691 = vcmp.eq.s32.totalorder %v1041, %v264
        %vm1692 = vcmp.eq.s32.totalorder %v1041, %v265
        %vm1693 = vcmp.eq.s32.totalorder %v1041, %v266
        %vm1694 = vcmp.eq.s32.totalorder %v1041, %v267
        %vm1695 = vcmp.eq.s32.totalorder %v1047, %v263
        %vm1696 = vcmp.eq.s32.totalorder %v1047, %v264
        %vm1697 = vcmp.eq.s32.totalorder %v1047, %v265
        %vm1698 = vcmp.eq.s32.totalorder %v1047, %v266
        %vm1699 = vcmp.eq.s32.totalorder %v1047, %v267
        %vm1700 = vcmp.eq.s32.totalorder %v1054, %v263
        %vm1701 = vcmp.eq.s32.totalorder %v1054, %v264
        %vm1702 = vcmp.eq.s32.totalorder %v1054, %v265
        %vm1703 = vcmp.eq.s32.totalorder %v1054, %v266
        %vm1704 = vcmp.eq.s32.totalorder %v1054, %v267
        %vm1705 = vcmp.eq.s32.totalorder %v1060, %v263
        %vm1706 = vcmp.eq.s32.totalorder %v1060, %v264
        %vm1707 = vcmp.eq.s32.totalorder %v1060, %v265
        %vm1708 = vcmp.eq.s32.totalorder %v1060, %v266
        %vm1709 = vcmp.eq.s32.totalorder %v1060, %v267
        %vm1710 = vcmp.eq.s32.totalorder %v1067, %v263
        %vm1711 = vcmp.eq.s32.totalorder %v1067, %v264
        %vm1712 = vcmp.eq.s32.totalorder %v1067, %v265
        %vm1713 = vcmp.eq.s32.totalorder %v1067, %v266
        %vm1714 = vcmp.eq.s32.totalorder %v1067, %v267
        %vm1715 = vcmp.eq.s32.totalorder %v1073, %v263
        %vm1716 = vcmp.eq.s32.totalorder %v1073, %v264
        %vm1717 = vcmp.eq.s32.totalorder %v1073, %v265
        %vm1718 = vcmp.eq.s32.totalorder %v1073, %v266
        %vm1719 = vcmp.eq.s32.totalorder %v1073, %v267
        %vm1720 = vcmp.eq.s32.totalorder %v1080, %v263
        %vm1721 = vcmp.eq.s32.totalorder %v1080, %v264
        %vm1722 = vcmp.eq.s32.totalorder %v1080, %v265
        %vm1723 = vcmp.eq.s32.totalorder %v1080, %v266
        %vm1724 = vcmp.eq.s32.totalorder %v1080, %v267
        %vm1725 = vcmp.eq.s32.totalorder %v1086, %v263
        %vm1726 = vcmp.eq.s32.totalorder %v1086, %v264
        %vm1727 = vcmp.eq.s32.totalorder %v1086, %v265
        %vm1728 = vcmp.eq.s32.totalorder %v1086, %v266
        %vm1729 = vcmp.eq.s32.totalorder %v1086, %v267
        %vm1730 = vcmp.eq.s32.totalorder %v1093, %v263
        %vm1731 = vcmp.eq.s32.totalorder %v1093, %v264
        %vm1732 = vcmp.eq.s32.totalorder %v1093, %v265
        %vm1733 = vcmp.eq.s32.totalorder %v1093, %v266
        %vm1734 = vcmp.eq.s32.totalorder %v1093, %v267
        %vm1735 = vcmp.eq.s32.totalorder %v1099, %v263
        %vm1736 = vcmp.eq.s32.totalorder %v1099, %v264
        %vm1737 = vcmp.eq.s32.totalorder %v1099, %v265
        %vm1738 = vcmp.eq.s32.totalorder %v1099, %v266
        %vm1739 = vcmp.eq.s32.totalorder %v1099, %v267
        %v1740 = vsel %vm1100, 1, 0
        %v1741 = vsel %vm1101, 1, 0
        %v1742 = vsel %vm1102, 1, 0
        %v1743 = vsel %vm1103, 1, 0
        %v1744 = vsel %vm1104, 1, 0
        %v1745 = vsel %vm1105, 1, 0
        %v1746 = vsel %vm1106, 1, 0
        %v1747 = vsel %vm1107, 1, 0
        %v1748 = vsel %vm1108, 1, 0
        %v1749 = vsel %vm1109, 1, 0
        %v1750 = vsel %vm1110, 1, 0
        %v1751 = vsel %vm1111, 1, 0
        %v1752 = vsel %vm1112, 1, 0
        %v1753 = vsel %vm1113, 1, 0
        %v1754 = vsel %vm1114, 1, 0
        %v1755 = vsel %vm1115, 1, 0
        %v1756 = vsel %vm1116, 1, 0
        %v1757 = vsel %vm1117, 1, 0
        %v1758 = vsel %vm1118, 1, 0
        %v1759 = vsel %vm1119, 1, 0
        %v1760 = vsel %vm1120, 1, 0
        %v1761 = vsel %vm1121, 1, 0
        %v1762 = vsel %vm1122, 1, 0
        %v1763 = vsel %vm1123, 1, 0
        %v1764 = vsel %vm1124, 1, 0
        %v1765 = vsel %vm1125, 1, 0
        %v1766 = vsel %vm1126, 1, 0
        %v1767 = vsel %vm1127, 1, 0
        %v1768 = vsel %vm1128, 1, 0
        %v1769 = vsel %vm1129, 1, 0
        %v1770 = vsel %vm1130, 1, 0
        %v1771 = vsel %vm1131, 1, 0
        %v1772 = vsel %vm1132, 1, 0
        %v1773 = vsel %vm1133, 1, 0
        %v1774 = vsel %vm1134, 1, 0
        %v1775 = vsel %vm1135, 1, 0
        %v1776 = vsel %vm1136, 1, 0
        %v1777 = vsel %vm1137, 1, 0
        %v1778 = vsel %vm1138, 1, 0
        %v1779 = vsel %vm1139, 1, 0
        %v1780 = vsel %vm1140, 1, 0
        %v1781 = vsel %vm1141, 1, 0
        %v1782 = vsel %vm1142, 1, 0
        %v1783 = vsel %vm1143, 1, 0
        %v1784 = vsel %vm1144, 1, 0
        %v1785 = vsel %vm1145, 1, 0
        %v1786 = vsel %vm1146, 1, 0
        %v1787 = vsel %vm1147, 1, 0
        %v1788 = vsel %vm1148, 1, 0
        %v1789 = vsel %vm1149, 1, 0
        %v1790 = vsel %vm1150, 1, 0
        %v1791 = vsel %vm1151, 1, 0
        %v1792 = vsel %vm1152, 1, 0
        %v1793 = vsel %vm1153, 1, 0
        %v1794 = vsel %vm1154, 1, 0
        %v1795 = vsel %vm1155, 1, 0
        %v1796 = vsel %vm1156, 1, 0
        %v1797 = vsel %vm1157, 1, 0
        %v1798 = vsel %vm1158, 1, 0
        %v1799 = vsel %vm1159, 1, 0
        %v1800 = vsel %vm1160, 1, 0
        %v1801 = vsel %vm1161, 1, 0
        %v1802 = vsel %vm1162, 1, 0
        %v1803 = vsel %vm1163, 1, 0
        %v1804 = vsel %vm1164, 1, 0
        %v1805 = vsel %vm1165, 1, 0
        %v1806 = vsel %vm1166, 1, 0
        %v1807 = vsel %vm1167, 1, 0
        %v1808 = vsel %vm1168, 1, 0
        %v1809 = vsel %vm1169, 1, 0
        %v1810 = vsel %vm1170, 1, 0
        %v1811 = vsel %vm1171, 1, 0
        %v1812 = vsel %vm1172, 1, 0
        %v1813 = vsel %vm1173, 1, 0
        %v1814 = vsel %vm1174, 1, 0
        %v1815 = vsel %vm1175, 1, 0
        %v1816 = vsel %vm1176, 1, 0
        %v1817 = vsel %vm1177, 1, 0
        %v1818 = vsel %vm1178, 1, 0
        %v1819 = vsel %vm1179, 1, 0
        %v1820 = vsel %vm1180, 1, 0
        %v1821 = vsel %vm1181, 1, 0
        %v1822 = vsel %vm1182, 1, 0
        %v1823 = vsel %vm1183, 1, 0
        %v1824 = vsel %vm1184, 1, 0
        %v1825 = vsel %vm1185, 1, 0
        %v1826 = vsel %vm1186, 1, 0
        %v1827 = vsel %vm1187, 1, 0
        %v1828 = vsel %vm1188, 1, 0
        %v1829 = vsel %vm1189, 1, 0
        %v1830 = vsel %vm1190, 1, 0
        %v1831 = vsel %vm1191, 1, 0
        %v1832 = vsel %vm1192, 1, 0
        %v1833 = vsel %vm1193, 1, 0
        %v1834 = vsel %vm1194, 1, 0
        %v1835 = vsel %vm1195, 1, 0
        %v1836 = vsel %vm1196, 1, 0
        %v1837 = vsel %vm1197, 1, 0
        %v1838 = vsel %vm1198, 1, 0
        %v1839 = vsel %vm1199, 1, 0
        %v1840 = vsel %vm1200, 1, 0
        %v1841 = vsel %vm1201, 1, 0
        %v1842 = vsel %vm1202, 1, 0
        %v1843 = vsel %vm1203, 1, 0
        %v1844 = vsel %vm1204, 1, 0
        %v1845 = vsel %vm1205, 1, 0
        %v1846 = vsel %vm1206, 1, 0
        %v1847 = vsel %vm1207, 1, 0
        %v1848 = vsel %vm1208, 1, 0
        %v1849 = vsel %vm1209, 1, 0
        %v1850 = vsel %vm1210, 1, 0
        %v1851 = vsel %vm1211, 1, 0
        %v1852 = vsel %vm1212, 1, 0
        %v1853 = vsel %vm1213, 1, 0
        %v1854 = vsel %vm1214, 1, 0
        %v1855 = vsel %vm1215, 1, 0
        %v1856 = vsel %vm1216, 1, 0
        %v1857 = vsel %vm1217, 1, 0
        %v1858 = vsel %vm1218, 1, 0
        %v1859 = vsel %vm1219, 1, 0
        %v1860 = vsel %vm1220, 1, 0
        %v1861 = vsel %vm1221, 1, 0
        %v1862 = vsel %vm1222, 1, 0
        %v1863 = vsel %vm1223, 1, 0
        %v1864 = vsel %vm1224, 1, 0
        %v1865 = vsel %vm1225, 1, 0
        %v1866 = vsel %vm1226, 1, 0
        %v1867 = vsel %vm1227, 1, 0
        %v1868 = vsel %vm1228, 1, 0
        %v1869 = vsel %vm1229, 1, 0
        %v1870 = vsel %vm1230, 1, 0
        %v1871 = vsel %vm1231, 1, 0
        %v1872 = vsel %vm1232, 1, 0
        %v1873 = vsel %vm1233, 1, 0
        %v1874 = vsel %vm1234, 1, 0
        %v1875 = vsel %vm1235, 1, 0
        %v1876 = vsel %vm1236, 1, 0
        %v1877 = vsel %vm1237, 1, 0
        %v1878 = vsel %vm1238, 1, 0
        %v1879 = vsel %vm1239, 1, 0
        %v1880 = vsel %vm1240, 1, 0
        %v1881 = vsel %vm1241, 1, 0
        %v1882 = vsel %vm1242, 1, 0
        %v1883 = vsel %vm1243, 1, 0
        %v1884 = vsel %vm1244, 1, 0
        %v1885 = vsel %vm1245, 1, 0
        %v1886 = vsel %vm1246, 1, 0
        %v1887 = vsel %vm1247, 1, 0
        %v1888 = vsel %vm1248, 1, 0
        %v1889 = vsel %vm1249, 1, 0
        %v1890 = vsel %vm1250, 1, 0
        %v1891 = vsel %vm1251, 1, 0
        %v1892 = vsel %vm1252, 1, 0
        %v1893 = vsel %vm1253, 1, 0
        %v1894 = vsel %vm1254, 1, 0
        %v1895 = vsel %vm1255, 1, 0
        %v1896 = vsel %vm1256, 1, 0
        %v1897 = vsel %vm1257, 1, 0
        %v1898 = vsel %vm1258, 1, 0
        %v1899 = vsel %vm1259, 1, 0
        %v1900 = vsel %vm1260, 1, 0
        %v1901 = vsel %vm1261, 1, 0
        %v1902 = vsel %vm1262, 1, 0
        %v1903 = vsel %vm1263, 1, 0
        %v1904 = vsel %vm1264, 1, 0
        %v1905 = vsel %vm1265, 1, 0
        %v1906 = vsel %vm1266, 1, 0
        %v1907 = vsel %vm1267, 1, 0
        %v1908 = vsel %vm1268, 1, 0
        %v1909 = vsel %vm1269, 1, 0
        %v1910 = vsel %vm1270, 1, 0
        %v1911 = vsel %vm1271, 1, 0
        %v1912 = vsel %vm1272, 1, 0
        %v1913 = vsel %vm1273, 1, 0
        %v1914 = vsel %vm1274, 1, 0
        %v1915 = vsel %vm1275, 1, 0
        %v1916 = vsel %vm1276, 1, 0
        %v1917 = vsel %vm1277, 1, 0
        %v1918 = vsel %vm1278, 1, 0
        %v1919 = vsel %vm1279, 1, 0
        %v1920 = vsel %vm1280, 1, 0
        %v1921 = vsel %vm1281, 1, 0
        %v1922 = vsel %vm1282, 1, 0
        %v1923 = vsel %vm1283, 1, 0
        %v1924 = vsel %vm1284, 1, 0
        %v1925 = vsel %vm1285, 1, 0
        %v1926 = vsel %vm1286, 1, 0
        %v1927 = vsel %vm1287, 1, 0
        %v1928 = vsel %vm1288, 1, 0
        %v1929 = vsel %vm1289, 1, 0
        %v1930 = vsel %vm1290, 1, 0
        %v1931 = vsel %vm1291, 1, 0
        %v1932 = vsel %vm1292, 1, 0
        %v1933 = vsel %vm1293, 1, 0
        %v1934 = vsel %vm1294, 1, 0
        %v1935 = vsel %vm1295, 1, 0
        %v1936 = vsel %vm1296, 1, 0
        %v1937 = vsel %vm1297, 1, 0
        %v1938 = vsel %vm1298, 1, 0
        %v1939 = vsel %vm1299, 1, 0
        %v1940 = vsel %vm1300, 1, 0
        %v1941 = vsel %vm1301, 1, 0
        %v1942 = vsel %vm1302, 1, 0
        %v1943 = vsel %vm1303, 1, 0
        %v1944 = vsel %vm1304, 1, 0
        %v1945 = vsel %vm1305, 1, 0
        %v1946 = vsel %vm1306, 1, 0
        %v1947 = vsel %vm1307, 1, 0
        %v1948 = vsel %vm1308, 1, 0
        %v1949 = vsel %vm1309, 1, 0
        %v1950 = vsel %vm1310, 1, 0
        %v1951 = vsel %vm1311, 1, 0
        %v1952 = vsel %vm1312, 1, 0
        %v1953 = vsel %vm1313, 1, 0
        %v1954 = vsel %vm1314, 1, 0
        %v1955 = vsel %vm1315, 1, 0
        %v1956 = vsel %vm1316, 1, 0
        %v1957 = vsel %vm1317, 1, 0
        %v1958 = vsel %vm1318, 1, 0
        %v1959 = vsel %vm1319, 1, 0
        %v1960 = vsel %vm1320, 1, 0
        %v1961 = vsel %vm1321, 1, 0
        %v1962 = vsel %vm1322, 1, 0
        %v1963 = vsel %vm1323, 1, 0
        %v1964 = vsel %vm1324, 1, 0
        %v1965 = vsel %vm1325, 1, 0
        %v1966 = vsel %vm1326, 1, 0
        %v1967 = vsel %vm1327, 1, 0
        %v1968 = vsel %vm1328, 1, 0
        %v1969 = vsel %vm1329, 1, 0
        %v1970 = vsel %vm1330, 1, 0
        %v1971 = vsel %vm1331, 1, 0
        %v1972 = vsel %vm1332, 1, 0
        %v1973 = vsel %vm1333, 1, 0
        %v1974 = vsel %vm1334, 1, 0
        %v1975 = vsel %vm1335, 1, 0
        %v1976 = vsel %vm1336, 1, 0
        %v1977 = vsel %vm1337, 1, 0
        %v1978 = vsel %vm1338, 1, 0
        %v1979 = vsel %vm1339, 1, 0
        %v1980 = vsel %vm1340, 1, 0
        %v1981 = vsel %vm1341, 1, 0
        %v1982 = vsel %vm1342, 1, 0
        %v1983 = vsel %vm1343, 1, 0
        %v1984 = vsel %vm1344, 1, 0
        %v1985 = vsel %vm1345, 1, 0
        %v1986 = vsel %vm1346, 1, 0
        %v1987 = vsel %vm1347, 1, 0
        %v1988 = vsel %vm1348, 1, 0
        %v1989 = vsel %vm1349, 1, 0
        %v1990 = vsel %vm1350, 1, 0
        %v1991 = vsel %vm1351, 1, 0
        %v1992 = vsel %vm1352, 1, 0
        %v1993 = vsel %vm1353, 1, 0
        %v1994 = vsel %vm1354, 1, 0
        %v1995 = vsel %vm1355, 1, 0
        %v1996 = vsel %vm1356, 1, 0
        %v1997 = vsel %vm1357, 1, 0
        %v1998 = vsel %vm1358, 1, 0
        %v1999 = vsel %vm1359, 1, 0
        %v2000 = vsel %vm1360, 1, 0
        %v2001 = vsel %vm1361, 1, 0
        %v2002 = vsel %vm1362, 1, 0
        %v2003 = vsel %vm1363, 1, 0
        %v2004 = vsel %vm1364, 1, 0
        %v2005 = vsel %vm1365, 1, 0
        %v2006 = vsel %vm1366, 1, 0
        %v2007 = vsel %vm1367, 1, 0
        %v2008 = vsel %vm1368, 1, 0
        %v2009 = vsel %vm1369, 1, 0
        %v2010 = vsel %vm1370, 1, 0
        %v2011 = vsel %vm1371, 1, 0
        %v2012 = vsel %vm1372, 1, 0
        %v2013 = vsel %vm1373, 1, 0
        %v2014 = vsel %vm1374, 1, 0
        %v2015 = vsel %vm1375, 1, 0
        %v2016 = vsel %vm1376, 1, 0
        %v2017 = vsel %vm1377, 1, 0
        %v2018 = vsel %vm1378, 1, 0
        %v2019 = vsel %vm1379, 1, 0
        %v2020 = vsel %vm1380, 1, 0
        %v2021 = vsel %vm1381, 1, 0
        %v2022 = vsel %vm1382, 1, 0
        %v2023 = vsel %vm1383, 1, 0
        %v2024 = vsel %vm1384, 1, 0
        %v2025 = vsel %vm1385, 1, 0
        %v2026 = vsel %vm1386, 1, 0
        %v2027 = vsel %vm1387, 1, 0
        %v2028 = vsel %vm1388, 1, 0
        %v2029 = vsel %vm1389, 1, 0
        %v2030 = vsel %vm1390, 1, 0
        %v2031 = vsel %vm1391, 1, 0
        %v2032 = vsel %vm1392, 1, 0
        %v2033 = vsel %vm1393, 1, 0
        %v2034 = vsel %vm1394, 1, 0
        %v2035 = vsel %vm1395, 1, 0
        %v2036 = vsel %vm1396, 1, 0
        %v2037 = vsel %vm1397, 1, 0
        %v2038 = vsel %vm1398, 1, 0
        %v2039 = vsel %vm1399, 1, 0
        %v2040 = vsel %vm1400, 1, 0
        %v2041 = vsel %vm1401, 1, 0
        %v2042 = vsel %vm1402, 1, 0
        %v2043 = vsel %vm1403, 1, 0
        %v2044 = vsel %vm1404, 1, 0
        %v2045 = vsel %vm1405, 1, 0
        %v2046 = vsel %vm1406, 1, 0
        %v2047 = vsel %vm1407, 1, 0
        %v2048 = vsel %vm1408, 1, 0
        %v2049 = vsel %vm1409, 1, 0
        %v2050 = vsel %vm1410, 1, 0
        %v2051 = vsel %vm1411, 1, 0
        %v2052 = vsel %vm1412, 1, 0
        %v2053 = vsel %vm1413, 1, 0
        %v2054 = vsel %vm1414, 1, 0
        %v2055 = vsel %vm1415, 1, 0
        %v2056 = vsel %vm1416, 1, 0
        %v2057 = vsel %vm1417, 1, 0
        %v2058 = vsel %vm1418, 1, 0
        %v2059 = vsel %vm1419, 1, 0
        %v2060 = vsel %vm1420, 1, 0
        %v2061 = vsel %vm1421, 1, 0
        %v2062 = vsel %vm1422, 1, 0
        %v2063 = vsel %vm1423, 1, 0
        %v2064 = vsel %vm1424, 1, 0
        %v2065 = vsel %vm1425, 1, 0
        %v2066 = vsel %vm1426, 1, 0
        %v2067 = vsel %vm1427, 1, 0
        %v2068 = vsel %vm1428, 1, 0
        %v2069 = vsel %vm1429, 1, 0
        %v2070 = vsel %vm1430, 1, 0
        %v2071 = vsel %vm1431, 1, 0
        %v2072 = vsel %vm1432, 1, 0
        %v2073 = vsel %vm1433, 1, 0
        %v2074 = vsel %vm1434, 1, 0
        %v2075 = vsel %vm1435, 1, 0
        %v2076 = vsel %vm1436, 1, 0
        %v2077 = vsel %vm1437, 1, 0
        %v2078 = vsel %vm1438, 1, 0
        %v2079 = vsel %vm1439, 1, 0
        %v2080 = vsel %vm1440, 1, 0
        %v2081 = vsel %vm1441, 1, 0
        %v2082 = vsel %vm1442, 1, 0
        %v2083 = vsel %vm1443, 1, 0
        %v2084 = vsel %vm1444, 1, 0
        %v2085 = vsel %vm1445, 1, 0
        %v2086 = vsel %vm1446, 1, 0
        %v2087 = vsel %vm1447, 1, 0
        %v2088 = vsel %vm1448, 1, 0
        %v2089 = vsel %vm1449, 1, 0
        %v2090 = vsel %vm1450, 1, 0
        %v2091 = vsel %vm1451, 1, 0
        %v2092 = vsel %vm1452, 1, 0
        %v2093 = vsel %vm1453, 1, 0
        %v2094 = vsel %vm1454, 1, 0
        %v2095 = vsel %vm1455, 1, 0
        %v2096 = vsel %vm1456, 1, 0
        %v2097 = vsel %vm1457, 1, 0
        %v2098 = vsel %vm1458, 1, 0
        %v2099 = vsel %vm1459, 1, 0
        %v2100 = vsel %vm1460, 1, 0
        %v2101 = vsel %vm1461, 1, 0
        %v2102 = vsel %vm1462, 1, 0
        %v2103 = vsel %vm1463, 1, 0
        %v2104 = vsel %vm1464, 1, 0
        %v2105 = vsel %vm1465, 1, 0
        %v2106 = vsel %vm1466, 1, 0
        %v2107 = vsel %vm1467, 1, 0
        %v2108 = vsel %vm1468, 1, 0
        %v2109 = vsel %vm1469, 1, 0
        %v2110 = vsel %vm1470, 1, 0
        %v2111 = vsel %vm1471, 1, 0
        %v2112 = vsel %vm1472, 1, 0
        %v2113 = vsel %vm1473, 1, 0
        %v2114 = vsel %vm1474, 1, 0
        %v2115 = vsel %vm1475, 1, 0
        %v2116 = vsel %vm1476, 1, 0
        %v2117 = vsel %vm1477, 1, 0
        %v2118 = vsel %vm1478, 1, 0
        %v2119 = vsel %vm1479, 1, 0
        %v2120 = vsel %vm1480, 1, 0
        %v2121 = vsel %vm1481, 1, 0
        %v2122 = vsel %vm1482, 1, 0
        %v2123 = vsel %vm1483, 1, 0
        %v2124 = vsel %vm1484, 1, 0
        %v2125 = vsel %vm1485, 1, 0
        %v2126 = vsel %vm1486, 1, 0
        %v2127 = vsel %vm1487, 1, 0
        %v2128 = vsel %vm1488, 1, 0
        %v2129 = vsel %vm1489, 1, 0
        %v2130 = vsel %vm1490, 1, 0
        %v2131 = vsel %vm1491, 1, 0
        %v2132 = vsel %vm1492, 1, 0
        %v2133 = vsel %vm1493, 1, 0
        %v2134 = vsel %vm1494, 1, 0
        %v2135 = vsel %vm1495, 1, 0
        %v2136 = vsel %vm1496, 1, 0
        %v2137 = vsel %vm1497, 1, 0
        %v2138 = vsel %vm1498, 1, 0
        %v2139 = vsel %vm1499, 1, 0
        %v2140 = vsel %vm1500, 1, 0
        %v2141 = vsel %vm1501, 1, 0
        %v2142 = vsel %vm1502, 1, 0
        %v2143 = vsel %vm1503, 1, 0
        %v2144 = vsel %vm1504, 1, 0
        %v2145 = vsel %vm1505, 1, 0
        %v2146 = vsel %vm1506, 1, 0
        %v2147 = vsel %vm1507, 1, 0
        %v2148 = vsel %vm1508, 1, 0
        %v2149 = vsel %vm1509, 1, 0
        %v2150 = vsel %vm1510, 1, 0
        %v2151 = vsel %vm1511, 1, 0
        %v2152 = vsel %vm1512, 1, 0
        %v2153 = vsel %vm1513, 1, 0
        %v2154 = vsel %vm1514, 1, 0
        %v2155 = vsel %vm1515, 1, 0
        %v2156 = vsel %vm1516, 1, 0
        %v2157 = vsel %vm1517, 1, 0
        %v2158 = vsel %vm1518, 1, 0
        %v2159 = vsel %vm1519, 1, 0
        %v2160 = vsel %vm1520, 1, 0
        %v2161 = vsel %vm1521, 1, 0
        %v2162 = vsel %vm1522, 1, 0
        %v2163 = vsel %vm1523, 1, 0
        %v2164 = vsel %vm1524, 1, 0
        %v2165 = vsel %vm1525, 1, 0
        %v2166 = vsel %vm1526, 1, 0
        %v2167 = vsel %vm1527, 1, 0
        %v2168 = vsel %vm1528, 1, 0
        %v2169 = vsel %vm1529, 1, 0
        %v2170 = vsel %vm1530, 1, 0
        %v2171 = vsel %vm1531, 1, 0
        %v2172 = vsel %vm1532, 1, 0
        %v2173 = vsel %vm1533, 1, 0
        %v2174 = vsel %vm1534, 1, 0
        %v2175 = vsel %vm1535, 1, 0
        %v2176 = vsel %vm1536, 1, 0
        %v2177 = vsel %vm1537, 1, 0
        %v2178 = vsel %vm1538, 1, 0
        %v2179 = vsel %vm1539, 1, 0
        %v2180 = vsel %vm1540, 1, 0
        %v2181 = vsel %vm1541, 1, 0
        %v2182 = vsel %vm1542, 1, 0
        %v2183 = vsel %vm1543, 1, 0
        %v2184 = vsel %vm1544, 1, 0
        %v2185 = vsel %vm1545, 1, 0
        %v2186 = vsel %vm1546, 1, 0
        %v2187 = vsel %vm1547, 1, 0
        %v2188 = vsel %vm1548, 1, 0
        %v2189 = vsel %vm1549, 1, 0
        %v2190 = vsel %vm1550, 1, 0
        %v2191 = vsel %vm1551, 1, 0
        %v2192 = vsel %vm1552, 1, 0
        %v2193 = vsel %vm1553, 1, 0
        %v2194 = vsel %vm1554, 1, 0
        %v2195 = vsel %vm1555, 1, 0
        %v2196 = vsel %vm1556, 1, 0
        %v2197 = vsel %vm1557, 1, 0
        %v2198 = vsel %vm1558, 1, 0
        %v2199 = vsel %vm1559, 1, 0
        %v2200 = vsel %vm1560, 1, 0
        %v2201 = vsel %vm1561, 1, 0
        %v2202 = vsel %vm1562, 1, 0
        %v2203 = vsel %vm1563, 1, 0
        %v2204 = vsel %vm1564, 1, 0
        %v2205 = vsel %vm1565, 1, 0
        %v2206 = vsel %vm1566, 1, 0
        %v2207 = vsel %vm1567, 1, 0
        %v2208 = vsel %vm1568, 1, 0
        %v2209 = vsel %vm1569, 1, 0
        %v2210 = vsel %vm1570, 1, 0
        %v2211 = vsel %vm1571, 1, 0
        %v2212 = vsel %vm1572, 1, 0
        %v2213 = vsel %vm1573, 1, 0
        %v2214 = vsel %vm1574, 1, 0
        %v2215 = vsel %vm1575, 1, 0
        %v2216 = vsel %vm1576, 1, 0
        %v2217 = vsel %vm1577, 1, 0
        %v2218 = vsel %vm1578, 1, 0
        %v2219 = vsel %vm1579, 1, 0
        %v2220 = vsel %vm1580, 1, 0
        %v2221 = vsel %vm1581, 1, 0
        %v2222 = vsel %vm1582, 1, 0
        %v2223 = vsel %vm1583, 1, 0
        %v2224 = vsel %vm1584, 1, 0
        %v2225 = vsel %vm1585, 1, 0
        %v2226 = vsel %vm1586, 1, 0
        %v2227 = vsel %vm1587, 1, 0
        %v2228 = vsel %vm1588, 1, 0
        %v2229 = vsel %vm1589, 1, 0
        %v2230 = vsel %vm1590, 1, 0
        %v2231 = vsel %vm1591, 1, 0
        %v2232 = vsel %vm1592, 1, 0
        %v2233 = vsel %vm1593, 1, 0
        %v2234 = vsel %vm1594, 1, 0
        %v2235 = vsel %vm1595, 1, 0
        %v2236 = vsel %vm1596, 1, 0
        %v2237 = vsel %vm1597, 1, 0
        %v2238 = vsel %vm1598, 1, 0
        %v2239 = vsel %vm1599, 1, 0
        %v2240 = vsel %vm1600, 1, 0
        %v2241 = vsel %vm1601, 1, 0
        %v2242 = vsel %vm1602, 1, 0
        %v2243 = vsel %vm1603, 1, 0
        %v2244 = vsel %vm1604, 1, 0
        %v2245 = vsel %vm1605, 1, 0
        %v2246 = vsel %vm1606, 1, 0
        %v2247 = vsel %vm1607, 1, 0
        %v2248 = vsel %vm1608, 1, 0
        %v2249 = vsel %vm1609, 1, 0
        %v2250 = vsel %vm1610, 1, 0
        %v2251 = vsel %vm1611, 1, 0
        %v2252 = vsel %vm1612, 1, 0
        %v2253 = vsel %vm1613, 1, 0
        %v2254 = vsel %vm1614, 1, 0
        %v2255 = vsel %vm1615, 1, 0
        %v2256 = vsel %vm1616, 1, 0
        %v2257 = vsel %vm1617, 1, 0
        %v2258 = vsel %vm1618, 1, 0
        %v2259 = vsel %vm1619, 1, 0
        %v2260 = vsel %vm1620, 1, 0
        %v2261 = vsel %vm1621, 1, 0
        %v2262 = vsel %vm1622, 1, 0
        %v2263 = vsel %vm1623, 1, 0
        %v2264 = vsel %vm1624, 1, 0
        %v2265 = vsel %vm1625, 1, 0
        %v2266 = vsel %vm1626, 1, 0
        %v2267 = vsel %vm1627, 1, 0
        %v2268 = vsel %vm1628, 1, 0
        %v2269 = vsel %vm1629, 1, 0
        %v2270 = vsel %vm1630, 1, 0
        %v2271 = vsel %vm1631, 1, 0
        %v2272 = vsel %vm1632, 1, 0
        %v2273 = vsel %vm1633, 1, 0
        %v2274 = vsel %vm1634, 1, 0
        %v2275 = vsel %vm1635, 1, 0
        %v2276 = vsel %vm1636, 1, 0
        %v2277 = vsel %vm1637, 1, 0
        %v2278 = vsel %vm1638, 1, 0
        %v2279 = vsel %vm1639, 1, 0
        %v2280 = vsel %vm1640, 1, 0
        %v2281 = vsel %vm1641, 1, 0
        %v2282 = vsel %vm1642, 1, 0
        %v2283 = vsel %vm1643, 1, 0
        %v2284 = vsel %vm1644, 1, 0
        %v2285 = vsel %vm1645, 1, 0
        %v2286 = vsel %vm1646, 1, 0
        %v2287 = vsel %vm1647, 1, 0
        %v2288 = vsel %vm1648, 1, 0
        %v2289 = vsel %vm1649, 1, 0
        %v2290 = vsel %vm1650, 1, 0
        %v2291 = vsel %vm1651, 1, 0
        %v2292 = vsel %vm1652, 1, 0
        %v2293 = vsel %vm1653, 1, 0
        %v2294 = vsel %vm1654, 1, 0
        %v2295 = vsel %vm1655, 1, 0
        %v2296 = vsel %vm1656, 1, 0
        %v2297 = vsel %vm1657, 1, 0
        %v2298 = vsel %vm1658, 1, 0
        %v2299 = vsel %vm1659, 1, 0
        %v2300 = vsel %vm1660, 1, 0
        %v2301 = vsel %vm1661, 1, 0
        %v2302 = vsel %vm1662, 1, 0
        %v2303 = vsel %vm1663, 1, 0
        %v2304 = vsel %vm1664, 1, 0
        %v2305 = vsel %vm1665, 1, 0
        %v2306 = vsel %vm1666, 1, 0
        %v2307 = vsel %vm1667, 1, 0
        %v2308 = vsel %vm1668, 1, 0
        %v2309 = vsel %vm1669, 1, 0
        %v2310 = vsel %vm1670, 1, 0
        %v2311 = vsel %vm1671, 1, 0
        %v2312 = vsel %vm1672, 1, 0
        %v2313 = vsel %vm1673, 1, 0
        %v2314 = vsel %vm1674, 1, 0
        %v2315 = vsel %vm1675, 1, 0
        %v2316 = vsel %vm1676, 1, 0
        %v2317 = vsel %vm1677, 1, 0
        %v2318 = vsel %vm1678, 1, 0
        %v2319 = vsel %vm1679, 1, 0
        %v2320 = vsel %vm1680, 1, 0
        %v2321 = vsel %vm1681, 1, 0
        %v2322 = vsel %vm1682, 1, 0
        %v2323 = vsel %vm1683, 1, 0
        %v2324 = vsel %vm1684, 1, 0
        %v2325 = vsel %vm1685, 1, 0
        %v2326 = vsel %vm1686, 1, 0
        %v2327 = vsel %vm1687, 1, 0
        %v2328 = vsel %vm1688, 1, 0
        %v2329 = vsel %vm1689, 1, 0
        %v2330 = vsel %vm1690, 1, 0
        %v2331 = vsel %vm1691, 1, 0
        %v2332 = vsel %vm1692, 1, 0
        %v2333 = vsel %vm1693, 1, 0
        %v2334 = vsel %vm1694, 1, 0
        %v2335 = vsel %vm1695, 1, 0
        %v2336 = vsel %vm1696, 1, 0
        %v2337 = vsel %vm1697, 1, 0
        %v2338 = vsel %vm1698, 1, 0
        %v2339 = vsel %vm1699, 1, 0
        %v2340 = vsel %vm1700, 1, 0
        %v2341 = vsel %vm1701, 1, 0
        %v2342 = vsel %vm1702, 1, 0
        %v2343 = vsel %vm1703, 1, 0
        %v2344 = vsel %vm1704, 1, 0
        %v2345 = vsel %vm1705, 1, 0
        %v2346 = vsel %vm1706, 1, 0
        %v2347 = vsel %vm1707, 1, 0
        %v2348 = vsel %vm1708, 1, 0
        %v2349 = vsel %vm1709, 1, 0
        %v2350 = vsel %vm1710, 1, 0
        %v2351 = vsel %vm1711, 1, 0
        %v2352 = vsel %vm1712, 1, 0
        %v2353 = vsel %vm1713, 1, 0
        %v2354 = vsel %vm1714, 1, 0
        %v2355 = vsel %vm1715, 1, 0
        %v2356 = vsel %vm1716, 1, 0
        %v2357 = vsel %vm1717, 1, 0
        %v2358 = vsel %vm1718, 1, 0
        %v2359 = vsel %vm1719, 1, 0
        %v2360 = vsel %vm1720, 1, 0
        %v2361 = vsel %vm1721, 1, 0
        %v2362 = vsel %vm1722, 1, 0
        %v2363 = vsel %vm1723, 1, 0
        %v2364 = vsel %vm1724, 1, 0
        %v2365 = vsel %vm1725, 1, 0
        %v2366 = vsel %vm1726, 1, 0
        %v2367 = vsel %vm1727, 1, 0
        %v2368 = vsel %vm1728, 1, 0
        %v2369 = vsel %vm1729, 1, 0
        %v2370 = vsel %vm1730, 1, 0
        %v2371 = vsel %vm1731, 1, 0
        %v2372 = vsel %vm1732, 1, 0
        %v2373 = vsel %vm1733, 1, 0
        %v2374 = vsel %vm1734, 1, 0
        %v2375 = vsel %vm1735, 1, 0
        %v2376 = vsel %vm1736, 1, 0
        %v2377 = vsel %vm1737, 1, 0
        %v2378 = vsel %vm1738, 1, 0
        %v2379 = vsel %vm1739, 1, 0
        %v2380 = vcvt.s32.f32 %v1740
        %v2381 = vcvt.s32.f32 %v1741
        %v2382 = vcvt.s32.f32 %v1742
        %v2383 = vcvt.s32.f32 %v1743
        %v2384 = vcvt.s32.f32 %v1744
        %v2385 = vcvt.s32.f32 %v1745
        %v2386 = vcvt.s32.f32 %v1746
        %v2387 = vcvt.s32.f32 %v1747
        %v2388 = vcvt.s32.f32 %v1748
        %v2389 = vcvt.s32.f32 %v1749
        %v2390 = vcvt.s32.f32 %v1750
        %v2391 = vcvt.s32.f32 %v1751
        %v2392 = vcvt.s32.f32 %v1752
        %v2393 = vcvt.s32.f32 %v1753
        %v2394 = vcvt.s32.f32 %v1754
        %v2395 = vcvt.s32.f32 %v1755
        %v2396 = vcvt.s32.f32 %v1756
        %v2397 = vcvt.s32.f32 %v1757
        %v2398 = vcvt.s32.f32 %v1758
        %v2399 = vcvt.s32.f32 %v1759
        %v2400 = vcvt.s32.f32 %v1760
        %v2401 = vcvt.s32.f32 %v1761
        %v2402 = vcvt.s32.f32 %v1762
        %v2403 = vcvt.s32.f32 %v1763
        %v2404 = vcvt.s32.f32 %v1764
        %v2405 = vcvt.s32.f32 %v1765
        %v2406 = vcvt.s32.f32 %v1766
        %v2407 = vcvt.s32.f32 %v1767
        %v2408 = vcvt.s32.f32 %v1768
        %v2409 = vcvt.s32.f32 %v1769
        %v2410 = vcvt.s32.f32 %v1770
        %v2411 = vcvt.s32.f32 %v1771
        %v2412 = vcvt.s32.f32 %v1772
        %v2413 = vcvt.s32.f32 %v1773
        %v2414 = vcvt.s32.f32 %v1774
        %v2415 = vcvt.s32.f32 %v1775
        %v2416 = vcvt.s32.f32 %v1776
        %v2417 = vcvt.s32.f32 %v1777
        %v2418 = vcvt.s32.f32 %v1778
        %v2419 = vcvt.s32.f32 %v1779
        %v2420 = vcvt.s32.f32 %v1780
        %v2421 = vcvt.s32.f32 %v1781
        %v2422 = vcvt.s32.f32 %v1782
        %v2423 = vcvt.s32.f32 %v1783
        %v2424 = vcvt.s32.f32 %v1784
        %v2425 = vcvt.s32.f32 %v1785
        %v2426 = vcvt.s32.f32 %v1786
        %v2427 = vcvt.s32.f32 %v1787
        %v2428 = vcvt.s32.f32 %v1788
        %v2429 = vcvt.s32.f32 %v1789
        %v2430 = vcvt.s32.f32 %v1790
        %v2431 = vcvt.s32.f32 %v1791
        %v2432 = vcvt.s32.f32 %v1792
        %v2433 = vcvt.s32.f32 %v1793
        %v2434 = vcvt.s32.f32 %v1794
        %v2435 = vcvt.s32.f32 %v1795
        %v2436 = vcvt.s32.f32 %v1796
        %v2437 = vcvt.s32.f32 %v1797
        %v2438 = vcvt.s32.f32 %v1798
        %v2439 = vcvt.s32.f32 %v1799
        %v2440 = vcvt.s32.f32 %v1800
        %v2441 = vcvt.s32.f32 %v1801
        %v2442 = vcvt.s32.f32 %v1802
        %v2443 = vcvt.s32.f32 %v1803
        %v2444 = vcvt.s32.f32 %v1804
        %v2445 = vcvt.s32.f32 %v1805
        %v2446 = vcvt.s32.f32 %v1806
        %v2447 = vcvt.s32.f32 %v1807
        %v2448 = vcvt.s32.f32 %v1808
        %v2449 = vcvt.s32.f32 %v1809
        %v2450 = vcvt.s32.f32 %v1810
        %v2451 = vcvt.s32.f32 %v1811
        %v2452 = vcvt.s32.f32 %v1812
        %v2453 = vcvt.s32.f32 %v1813
        %v2454 = vcvt.s32.f32 %v1814
        %v2455 = vcvt.s32.f32 %v1815
        %v2456 = vcvt.s32.f32 %v1816
        %v2457 = vcvt.s32.f32 %v1817
        %v2458 = vcvt.s32.f32 %v1818
        %v2459 = vcvt.s32.f32 %v1819
        %v2460 = vcvt.s32.f32 %v1820
        %v2461 = vcvt.s32.f32 %v1821
        %v2462 = vcvt.s32.f32 %v1822
        %v2463 = vcvt.s32.f32 %v1823
        %v2464 = vcvt.s32.f32 %v1824
        %v2465 = vcvt.s32.f32 %v1825
        %v2466 = vcvt.s32.f32 %v1826
        %v2467 = vcvt.s32.f32 %v1827
        %v2468 = vcvt.s32.f32 %v1828
        %v2469 = vcvt.s32.f32 %v1829
        %v2470 = vcvt.s32.f32 %v1830
        %v2471 = vcvt.s32.f32 %v1831
        %v2472 = vcvt.s32.f32 %v1832
        %v2473 = vcvt.s32.f32 %v1833
        %v2474 = vcvt.s32.f32 %v1834
        %v2475 = vcvt.s32.f32 %v1835
        %v2476 = vcvt.s32.f32 %v1836
        %v2477 = vcvt.s32.f32 %v1837
        %v2478 = vcvt.s32.f32 %v1838
        %v2479 = vcvt.s32.f32 %v1839
        %v2480 = vcvt.s32.f32 %v1840
        %v2481 = vcvt.s32.f32 %v1841
        %v2482 = vcvt.s32.f32 %v1842
        %v2483 = vcvt.s32.f32 %v1843
        %v2484 = vcvt.s32.f32 %v1844
        %v2485 = vcvt.s32.f32 %v1845
        %v2486 = vcvt.s32.f32 %v1846
        %v2487 = vcvt.s32.f32 %v1847
        %v2488 = vcvt.s32.f32 %v1848
        %v2489 = vcvt.s32.f32 %v1849
        %v2490 = vcvt.s32.f32 %v1850
        %v2491 = vcvt.s32.f32 %v1851
        %v2492 = vcvt.s32.f32 %v1852
        %v2493 = vcvt.s32.f32 %v1853
        %v2494 = vcvt.s32.f32 %v1854
        %v2495 = vcvt.s32.f32 %v1855
        %v2496 = vcvt.s32.f32 %v1856
        %v2497 = vcvt.s32.f32 %v1857
        %v2498 = vcvt.s32.f32 %v1858
        %v2499 = vcvt.s32.f32 %v1859
        %v2500 = vcvt.s32.f32 %v1860
        %v2501 = vcvt.s32.f32 %v1861
        %v2502 = vcvt.s32.f32 %v1862
        %v2503 = vcvt.s32.f32 %v1863
        %v2504 = vcvt.s32.f32 %v1864
        %v2505 = vcvt.s32.f32 %v1865
        %v2506 = vcvt.s32.f32 %v1866
        %v2507 = vcvt.s32.f32 %v1867
        %v2508 = vcvt.s32.f32 %v1868
        %v2509 = vcvt.s32.f32 %v1869
        %v2510 = vcvt.s32.f32 %v1870
        %v2511 = vcvt.s32.f32 %v1871
        %v2512 = vcvt.s32.f32 %v1872
        %v2513 = vcvt.s32.f32 %v1873
        %v2514 = vcvt.s32.f32 %v1874
        %v2515 = vcvt.s32.f32 %v1875
        %v2516 = vcvt.s32.f32 %v1876
        %v2517 = vcvt.s32.f32 %v1877
        %v2518 = vcvt.s32.f32 %v1878
        %v2519 = vcvt.s32.f32 %v1879
        %v2520 = vcvt.s32.f32 %v1880
        %v2521 = vcvt.s32.f32 %v1881
        %v2522 = vcvt.s32.f32 %v1882
        %v2523 = vcvt.s32.f32 %v1883
        %v2524 = vcvt.s32.f32 %v1884
        %v2525 = vcvt.s32.f32 %v1885
        %v2526 = vcvt.s32.f32 %v1886
        %v2527 = vcvt.s32.f32 %v1887
        %v2528 = vcvt.s32.f32 %v1888
        %v2529 = vcvt.s32.f32 %v1889
        %v2530 = vcvt.s32.f32 %v1890
        %v2531 = vcvt.s32.f32 %v1891
        %v2532 = vcvt.s32.f32 %v1892
        %v2533 = vcvt.s32.f32 %v1893
        %v2534 = vcvt.s32.f32 %v1894
        %v2535 = vcvt.s32.f32 %v1895
        %v2536 = vcvt.s32.f32 %v1896
        %v2537 = vcvt.s32.f32 %v1897
        %v2538 = vcvt.s32.f32 %v1898
        %v2539 = vcvt.s32.f32 %v1899
        %v2540 = vcvt.s32.f32 %v1900
        %v2541 = vcvt.s32.f32 %v1901
        %v2542 = vcvt.s32.f32 %v1902
        %v2543 = vcvt.s32.f32 %v1903
        %v2544 = vcvt.s32.f32 %v1904
        %v2545 = vcvt.s32.f32 %v1905
        %v2546 = vcvt.s32.f32 %v1906
        %v2547 = vcvt.s32.f32 %v1907
        %v2548 = vcvt.s32.f32 %v1908
        %v2549 = vcvt.s32.f32 %v1909
        %v2550 = vcvt.s32.f32 %v1910
        %v2551 = vcvt.s32.f32 %v1911
        %v2552 = vcvt.s32.f32 %v1912
        %v2553 = vcvt.s32.f32 %v1913
        %v2554 = vcvt.s32.f32 %v1914
        %v2555 = vcvt.s32.f32 %v1915
        %v2556 = vcvt.s32.f32 %v1916
        %v2557 = vcvt.s32.f32 %v1917
        %v2558 = vcvt.s32.f32 %v1918
        %v2559 = vcvt.s32.f32 %v1919
        %v2560 = vcvt.s32.f32 %v1920
        %v2561 = vcvt.s32.f32 %v1921
        %v2562 = vcvt.s32.f32 %v1922
        %v2563 = vcvt.s32.f32 %v1923
        %v2564 = vcvt.s32.f32 %v1924
        %v2565 = vcvt.s32.f32 %v1925
        %v2566 = vcvt.s32.f32 %v1926
        %v2567 = vcvt.s32.f32 %v1927
        %v2568 = vcvt.s32.f32 %v1928
        %v2569 = vcvt.s32.f32 %v1929
        %v2570 = vcvt.s32.f32 %v1930
        %v2571 = vcvt.s32.f32 %v1931
        %v2572 = vcvt.s32.f32 %v1932
        %v2573 = vcvt.s32.f32 %v1933
        %v2574 = vcvt.s32.f32 %v1934
        %v2575 = vcvt.s32.f32 %v1935
        %v2576 = vcvt.s32.f32 %v1936
        %v2577 = vcvt.s32.f32 %v1937
        %v2578 = vcvt.s32.f32 %v1938
        %v2579 = vcvt.s32.f32 %v1939
        %v2580 = vcvt.s32.f32 %v1940
        %v2581 = vcvt.s32.f32 %v1941
        %v2582 = vcvt.s32.f32 %v1942
        %v2583 = vcvt.s32.f32 %v1943
        %v2584 = vcvt.s32.f32 %v1944
        %v2585 = vcvt.s32.f32 %v1945
        %v2586 = vcvt.s32.f32 %v1946
        %v2587 = vcvt.s32.f32 %v1947
        %v2588 = vcvt.s32.f32 %v1948
        %v2589 = vcvt.s32.f32 %v1949
        %v2590 = vcvt.s32.f32 %v1950
        %v2591 = vcvt.s32.f32 %v1951
        %v2592 = vcvt.s32.f32 %v1952
        %v2593 = vcvt.s32.f32 %v1953
        %v2594 = vcvt.s32.f32 %v1954
        %v2595 = vcvt.s32.f32 %v1955
        %v2596 = vcvt.s32.f32 %v1956
        %v2597 = vcvt.s32.f32 %v1957
        %v2598 = vcvt.s32.f32 %v1958
        %v2599 = vcvt.s32.f32 %v1959
        %v2600 = vcvt.s32.f32 %v1960
        %v2601 = vcvt.s32.f32 %v1961
        %v2602 = vcvt.s32.f32 %v1962
        %v2603 = vcvt.s32.f32 %v1963
        %v2604 = vcvt.s32.f32 %v1964
        %v2605 = vcvt.s32.f32 %v1965
        %v2606 = vcvt.s32.f32 %v1966
        %v2607 = vcvt.s32.f32 %v1967
        %v2608 = vcvt.s32.f32 %v1968
        %v2609 = vcvt.s32.f32 %v1969
        %v2610 = vcvt.s32.f32 %v1970
        %v2611 = vcvt.s32.f32 %v1971
        %v2612 = vcvt.s32.f32 %v1972
        %v2613 = vcvt.s32.f32 %v1973
        %v2614 = vcvt.s32.f32 %v1974
        %v2615 = vcvt.s32.f32 %v1975
        %v2616 = vcvt.s32.f32 %v1976
        %v2617 = vcvt.s32.f32 %v1977
        %v2618 = vcvt.s32.f32 %v1978
        %v2619 = vcvt.s32.f32 %v1979
        %v2620 = vcvt.s32.f32 %v1980
        %v2621 = vcvt.s32.f32 %v1981
        %v2622 = vcvt.s32.f32 %v1982
        %v2623 = vcvt.s32.f32 %v1983
        %v2624 = vcvt.s32.f32 %v1984
        %v2625 = vcvt.s32.f32 %v1985
        %v2626 = vcvt.s32.f32 %v1986
        %v2627 = vcvt.s32.f32 %v1987
        %v2628 = vcvt.s32.f32 %v1988
        %v2629 = vcvt.s32.f32 %v1989
        %v2630 = vcvt.s32.f32 %v1990
        %v2631 = vcvt.s32.f32 %v1991
        %v2632 = vcvt.s32.f32 %v1992
        %v2633 = vcvt.s32.f32 %v1993
        %v2634 = vcvt.s32.f32 %v1994
        %v2635 = vcvt.s32.f32 %v1995
        %v2636 = vcvt.s32.f32 %v1996
        %v2637 = vcvt.s32.f32 %v1997
        %v2638 = vcvt.s32.f32 %v1998
        %v2639 = vcvt.s32.f32 %v1999
        %v2640 = vcvt.s32.f32 %v2000
        %v2641 = vcvt.s32.f32 %v2001
        %v2642 = vcvt.s32.f32 %v2002
        %v2643 = vcvt.s32.f32 %v2003
        %v2644 = vcvt.s32.f32 %v2004
        %v2645 = vcvt.s32.f32 %v2005
        %v2646 = vcvt.s32.f32 %v2006
        %v2647 = vcvt.s32.f32 %v2007
        %v2648 = vcvt.s32.f32 %v2008
        %v2649 = vcvt.s32.f32 %v2009
        %v2650 = vcvt.s32.f32 %v2010
        %v2651 = vcvt.s32.f32 %v2011
        %v2652 = vcvt.s32.f32 %v2012
        %v2653 = vcvt.s32.f32 %v2013
        %v2654 = vcvt.s32.f32 %v2014
        %v2655 = vcvt.s32.f32 %v2015
        %v2656 = vcvt.s32.f32 %v2016
        %v2657 = vcvt.s32.f32 %v2017
        %v2658 = vcvt.s32.f32 %v2018
        %v2659 = vcvt.s32.f32 %v2019
        %v2660 = vcvt.s32.f32 %v2020
        %v2661 = vcvt.s32.f32 %v2021
        %v2662 = vcvt.s32.f32 %v2022
        %v2663 = vcvt.s32.f32 %v2023
        %v2664 = vcvt.s32.f32 %v2024
        %v2665 = vcvt.s32.f32 %v2025
        %v2666 = vcvt.s32.f32 %v2026
        %v2667 = vcvt.s32.f32 %v2027
        %v2668 = vcvt.s32.f32 %v2028
        %v2669 = vcvt.s32.f32 %v2029
        %v2670 = vcvt.s32.f32 %v2030
        %v2671 = vcvt.s32.f32 %v2031
        %v2672 = vcvt.s32.f32 %v2032
        %v2673 = vcvt.s32.f32 %v2033
        %v2674 = vcvt.s32.f32 %v2034
        %v2675 = vcvt.s32.f32 %v2035
        %v2676 = vcvt.s32.f32 %v2036
        %v2677 = vcvt.s32.f32 %v2037
        %v2678 = vcvt.s32.f32 %v2038
        %v2679 = vcvt.s32.f32 %v2039
        %v2680 = vcvt.s32.f32 %v2040
        %v2681 = vcvt.s32.f32 %v2041
        %v2682 = vcvt.s32.f32 %v2042
        %v2683 = vcvt.s32.f32 %v2043
        %v2684 = vcvt.s32.f32 %v2044
        %v2685 = vcvt.s32.f32 %v2045
        %v2686 = vcvt.s32.f32 %v2046
        %v2687 = vcvt.s32.f32 %v2047
        %v2688 = vcvt.s32.f32 %v2048
        %v2689 = vcvt.s32.f32 %v2049
        %v2690 = vcvt.s32.f32 %v2050
        %v2691 = vcvt.s32.f32 %v2051
        %v2692 = vcvt.s32.f32 %v2052
        %v2693 = vcvt.s32.f32 %v2053
        %v2694 = vcvt.s32.f32 %v2054
        %v2695 = vcvt.s32.f32 %v2055
        %v2696 = vcvt.s32.f32 %v2056
        %v2697 = vcvt.s32.f32 %v2057
        %v2698 = vcvt.s32.f32 %v2058
        %v2699 = vcvt.s32.f32 %v2059
        %v2700 = vcvt.s32.f32 %v2060
        %v2701 = vcvt.s32.f32 %v2061
        %v2702 = vcvt.s32.f32 %v2062
        %v2703 = vcvt.s32.f32 %v2063
        %v2704 = vcvt.s32.f32 %v2064
        %v2705 = vcvt.s32.f32 %v2065
        %v2706 = vcvt.s32.f32 %v2066
        %v2707 = vcvt.s32.f32 %v2067
        %v2708 = vcvt.s32.f32 %v2068
        %v2709 = vcvt.s32.f32 %v2069
        %v2710 = vcvt.s32.f32 %v2070
        %v2711 = vcvt.s32.f32 %v2071
        %v2712 = vcvt.s32.f32 %v2072
        %v2713 = vcvt.s32.f32 %v2073
        %v2714 = vcvt.s32.f32 %v2074
        %v2715 = vcvt.s32.f32 %v2075
        %v2716 = vcvt.s32.f32 %v2076
        %v2717 = vcvt.s32.f32 %v2077
        %v2718 = vcvt.s32.f32 %v2078
        %v2719 = vcvt.s32.f32 %v2079
        %v2720 = vcvt.s32.f32 %v2080
        %v2721 = vcvt.s32.f32 %v2081
        %v2722 = vcvt.s32.f32 %v2082
        %v2723 = vcvt.s32.f32 %v2083
        %v2724 = vcvt.s32.f32 %v2084
        %v2725 = vcvt.s32.f32 %v2085
        %v2726 = vcvt.s32.f32 %v2086
        %v2727 = vcvt.s32.f32 %v2087
        %v2728 = vcvt.s32.f32 %v2088
        %v2729 = vcvt.s32.f32 %v2089
        %v2730 = vcvt.s32.f32 %v2090
        %v2731 = vcvt.s32.f32 %v2091
        %v2732 = vcvt.s32.f32 %v2092
        %v2733 = vcvt.s32.f32 %v2093
        %v2734 = vcvt.s32.f32 %v2094
        %v2735 = vcvt.s32.f32 %v2095
        %v2736 = vcvt.s32.f32 %v2096
        %v2737 = vcvt.s32.f32 %v2097
        %v2738 = vcvt.s32.f32 %v2098
        %v2739 = vcvt.s32.f32 %v2099
        %v2740 = vcvt.s32.f32 %v2100
        %v2741 = vcvt.s32.f32 %v2101
        %v2742 = vcvt.s32.f32 %v2102
        %v2743 = vcvt.s32.f32 %v2103
        %v2744 = vcvt.s32.f32 %v2104
        %v2745 = vcvt.s32.f32 %v2105
        %v2746 = vcvt.s32.f32 %v2106
        %v2747 = vcvt.s32.f32 %v2107
        %v2748 = vcvt.s32.f32 %v2108
        %v2749 = vcvt.s32.f32 %v2109
        %v2750 = vcvt.s32.f32 %v2110
        %v2751 = vcvt.s32.f32 %v2111
        %v2752 = vcvt.s32.f32 %v2112
        %v2753 = vcvt.s32.f32 %v2113
        %v2754 = vcvt.s32.f32 %v2114
        %v2755 = vcvt.s32.f32 %v2115
        %v2756 = vcvt.s32.f32 %v2116
        %v2757 = vcvt.s32.f32 %v2117
        %v2758 = vcvt.s32.f32 %v2118
        %v2759 = vcvt.s32.f32 %v2119
        %v2760 = vcvt.s32.f32 %v2120
        %v2761 = vcvt.s32.f32 %v2121
        %v2762 = vcvt.s32.f32 %v2122
        %v2763 = vcvt.s32.f32 %v2123
        %v2764 = vcvt.s32.f32 %v2124
        %v2765 = vcvt.s32.f32 %v2125
        %v2766 = vcvt.s32.f32 %v2126
        %v2767 = vcvt.s32.f32 %v2127
        %v2768 = vcvt.s32.f32 %v2128
        %v2769 = vcvt.s32.f32 %v2129
        %v2770 = vcvt.s32.f32 %v2130
        %v2771 = vcvt.s32.f32 %v2131
        %v2772 = vcvt.s32.f32 %v2132
        %v2773 = vcvt.s32.f32 %v2133
        %v2774 = vcvt.s32.f32 %v2134
        %v2775 = vcvt.s32.f32 %v2135
        %v2776 = vcvt.s32.f32 %v2136
        %v2777 = vcvt.s32.f32 %v2137
        %v2778 = vcvt.s32.f32 %v2138
        %v2779 = vcvt.s32.f32 %v2139
        %v2780 = vcvt.s32.f32 %v2140
        %v2781 = vcvt.s32.f32 %v2141
        %v2782 = vcvt.s32.f32 %v2142
        %v2783 = vcvt.s32.f32 %v2143
        %v2784 = vcvt.s32.f32 %v2144
        %v2785 = vcvt.s32.f32 %v2145
        %v2786 = vcvt.s32.f32 %v2146
        %v2787 = vcvt.s32.f32 %v2147
        %v2788 = vcvt.s32.f32 %v2148
        %v2789 = vcvt.s32.f32 %v2149
        %v2790 = vcvt.s32.f32 %v2150
        %v2791 = vcvt.s32.f32 %v2151
        %v2792 = vcvt.s32.f32 %v2152
        %v2793 = vcvt.s32.f32 %v2153
        %v2794 = vcvt.s32.f32 %v2154
        %v2795 = vcvt.s32.f32 %v2155
        %v2796 = vcvt.s32.f32 %v2156
        %v2797 = vcvt.s32.f32 %v2157
        %v2798 = vcvt.s32.f32 %v2158
        %v2799 = vcvt.s32.f32 %v2159
        %v2800 = vcvt.s32.f32 %v2160
        %v2801 = vcvt.s32.f32 %v2161
        %v2802 = vcvt.s32.f32 %v2162
        %v2803 = vcvt.s32.f32 %v2163
        %v2804 = vcvt.s32.f32 %v2164
        %v2805 = vcvt.s32.f32 %v2165
        %v2806 = vcvt.s32.f32 %v2166
        %v2807 = vcvt.s32.f32 %v2167
        %v2808 = vcvt.s32.f32 %v2168
        %v2809 = vcvt.s32.f32 %v2169
        %v2810 = vcvt.s32.f32 %v2170
        %v2811 = vcvt.s32.f32 %v2171
        %v2812 = vcvt.s32.f32 %v2172
        %v2813 = vcvt.s32.f32 %v2173
        %v2814 = vcvt.s32.f32 %v2174
        %v2815 = vcvt.s32.f32 %v2175
        %v2816 = vcvt.s32.f32 %v2176
        %v2817 = vcvt.s32.f32 %v2177
        %v2818 = vcvt.s32.f32 %v2178
        %v2819 = vcvt.s32.f32 %v2179
        %v2820 = vcvt.s32.f32 %v2180
        %v2821 = vcvt.s32.f32 %v2181
        %v2822 = vcvt.s32.f32 %v2182
        %v2823 = vcvt.s32.f32 %v2183
        %v2824 = vcvt.s32.f32 %v2184
        %v2825 = vcvt.s32.f32 %v2185
        %v2826 = vcvt.s32.f32 %v2186
        %v2827 = vcvt.s32.f32 %v2187
        %v2828 = vcvt.s32.f32 %v2188
        %v2829 = vcvt.s32.f32 %v2189
        %v2830 = vcvt.s32.f32 %v2190
        %v2831 = vcvt.s32.f32 %v2191
        %v2832 = vcvt.s32.f32 %v2192
        %v2833 = vcvt.s32.f32 %v2193
        %v2834 = vcvt.s32.f32 %v2194
        %v2835 = vcvt.s32.f32 %v2195
        %v2836 = vcvt.s32.f32 %v2196
        %v2837 = vcvt.s32.f32 %v2197
        %v2838 = vcvt.s32.f32 %v2198
        %v2839 = vcvt.s32.f32 %v2199
        %v2840 = vcvt.s32.f32 %v2200
        %v2841 = vcvt.s32.f32 %v2201
        %v2842 = vcvt.s32.f32 %v2202
        %v2843 = vcvt.s32.f32 %v2203
        %v2844 = vcvt.s32.f32 %v2204
        %v2845 = vcvt.s32.f32 %v2205
        %v2846 = vcvt.s32.f32 %v2206
        %v2847 = vcvt.s32.f32 %v2207
        %v2848 = vcvt.s32.f32 %v2208
        %v2849 = vcvt.s32.f32 %v2209
        %v2850 = vcvt.s32.f32 %v2210
        %v2851 = vcvt.s32.f32 %v2211
        %v2852 = vcvt.s32.f32 %v2212
        %v2853 = vcvt.s32.f32 %v2213
        %v2854 = vcvt.s32.f32 %v2214
        %v2855 = vcvt.s32.f32 %v2215
        %v2856 = vcvt.s32.f32 %v2216
        %v2857 = vcvt.s32.f32 %v2217
        %v2858 = vcvt.s32.f32 %v2218
        %v2859 = vcvt.s32.f32 %v2219
        %v2860 = vcvt.s32.f32 %v2220
        %v2861 = vcvt.s32.f32 %v2221
        %v2862 = vcvt.s32.f32 %v2222
        %v2863 = vcvt.s32.f32 %v2223
        %v2864 = vcvt.s32.f32 %v2224
        %v2865 = vcvt.s32.f32 %v2225
        %v2866 = vcvt.s32.f32 %v2226
        %v2867 = vcvt.s32.f32 %v2227
        %v2868 = vcvt.s32.f32 %v2228
        %v2869 = vcvt.s32.f32 %v2229
        %v2870 = vcvt.s32.f32 %v2230
        %v2871 = vcvt.s32.f32 %v2231
        %v2872 = vcvt.s32.f32 %v2232
        %v2873 = vcvt.s32.f32 %v2233
        %v2874 = vcvt.s32.f32 %v2234
        %v2875 = vcvt.s32.f32 %v2235
        %v2876 = vcvt.s32.f32 %v2236
        %v2877 = vcvt.s32.f32 %v2237
        %v2878 = vcvt.s32.f32 %v2238
        %v2879 = vcvt.s32.f32 %v2239
        %v2880 = vcvt.s32.f32 %v2240
        %v2881 = vcvt.s32.f32 %v2241
        %v2882 = vcvt.s32.f32 %v2242
        %v2883 = vcvt.s32.f32 %v2243
        %v2884 = vcvt.s32.f32 %v2244
        %v2885 = vcvt.s32.f32 %v2245
        %v2886 = vcvt.s32.f32 %v2246
        %v2887 = vcvt.s32.f32 %v2247
        %v2888 = vcvt.s32.f32 %v2248
        %v2889 = vcvt.s32.f32 %v2249
        %v2890 = vcvt.s32.f32 %v2250
        %v2891 = vcvt.s32.f32 %v2251
        %v2892 = vcvt.s32.f32 %v2252
        %v2893 = vcvt.s32.f32 %v2253
        %v2894 = vcvt.s32.f32 %v2254
        %v2895 = vcvt.s32.f32 %v2255
        %v2896 = vcvt.s32.f32 %v2256
        %v2897 = vcvt.s32.f32 %v2257
        %v2898 = vcvt.s32.f32 %v2258
        %v2899 = vcvt.s32.f32 %v2259
        %v2900 = vcvt.s32.f32 %v2260
        %v2901 = vcvt.s32.f32 %v2261
        %v2902 = vcvt.s32.f32 %v2262
        %v2903 = vcvt.s32.f32 %v2263
        %v2904 = vcvt.s32.f32 %v2264
        %v2905 = vcvt.s32.f32 %v2265
        %v2906 = vcvt.s32.f32 %v2266
        %v2907 = vcvt.s32.f32 %v2267
        %v2908 = vcvt.s32.f32 %v2268
        %v2909 = vcvt.s32.f32 %v2269
        %v2910 = vcvt.s32.f32 %v2270
        %v2911 = vcvt.s32.f32 %v2271
        %v2912 = vcvt.s32.f32 %v2272
        %v2913 = vcvt.s32.f32 %v2273
        %v2914 = vcvt.s32.f32 %v2274
        %v2915 = vcvt.s32.f32 %v2275
        %v2916 = vcvt.s32.f32 %v2276
        %v2917 = vcvt.s32.f32 %v2277
        %v2918 = vcvt.s32.f32 %v2278
        %v2919 = vcvt.s32.f32 %v2279
        %v2920 = vcvt.s32.f32 %v2280
        %v2921 = vcvt.s32.f32 %v2281
        %v2922 = vcvt.s32.f32 %v2282
        %v2923 = vcvt.s32.f32 %v2283
        %v2924 = vcvt.s32.f32 %v2284
        %v2925 = vcvt.s32.f32 %v2285
        %v2926 = vcvt.s32.f32 %v2286
        %v2927 = vcvt.s32.f32 %v2287
        %v2928 = vcvt.s32.f32 %v2288
        %v2929 = vcvt.s32.f32 %v2289
        %v2930 = vcvt.s32.f32 %v2290
        %v2931 = vcvt.s32.f32 %v2291
        %v2932 = vcvt.s32.f32 %v2292
        %v2933 = vcvt.s32.f32 %v2293
        %v2934 = vcvt.s32.f32 %v2294
        %v2935 = vcvt.s32.f32 %v2295
        %v2936 = vcvt.s32.f32 %v2296
        %v2937 = vcvt.s32.f32 %v2297
        %v2938 = vcvt.s32.f32 %v2298
        %v2939 = vcvt.s32.f32 %v2299
        %v2940 = vcvt.s32.f32 %v2300
        %v2941 = vcvt.s32.f32 %v2301
        %v2942 = vcvt.s32.f32 %v2302
        %v2943 = vcvt.s32.f32 %v2303
        %v2944 = vcvt.s32.f32 %v2304
        %v2945 = vcvt.s32.f32 %v2305
        %v2946 = vcvt.s32.f32 %v2306
        %v2947 = vcvt.s32.f32 %v2307
        %v2948 = vcvt.s32.f32 %v2308
        %v2949 = vcvt.s32.f32 %v2309
        %v2950 = vcvt.s32.f32 %v2310
        %v2951 = vcvt.s32.f32 %v2311
        %v2952 = vcvt.s32.f32 %v2312
        %v2953 = vcvt.s32.f32 %v2313
        %v2954 = vcvt.s32.f32 %v2314
        %v2955 = vcvt.s32.f32 %v2315
        %v2956 = vcvt.s32.f32 %v2316
        %v2957 = vcvt.s32.f32 %v2317
        %v2958 = vcvt.s32.f32 %v2318
        %v2959 = vcvt.s32.f32 %v2319
        %v2960 = vcvt.s32.f32 %v2320
        %v2961 = vcvt.s32.f32 %v2321
        %v2962 = vcvt.s32.f32 %v2322
        %v2963 = vcvt.s32.f32 %v2323
        %v2964 = vcvt.s32.f32 %v2324
        %v2965 = vcvt.s32.f32 %v2325
        %v2966 = vcvt.s32.f32 %v2326
        %v2967 = vcvt.s32.f32 %v2327
        %v2968 = vcvt.s32.f32 %v2328
        %v2969 = vcvt.s32.f32 %v2329
        %v2970 = vcvt.s32.f32 %v2330
        %v2971 = vcvt.s32.f32 %v2331
        %v2972 = vcvt.s32.f32 %v2332
        %v2973 = vcvt.s32.f32 %v2333
        %v2974 = vcvt.s32.f32 %v2334
        %v2975 = vcvt.s32.f32 %v2335
        %v2976 = vcvt.s32.f32 %v2336
        %v2977 = vcvt.s32.f32 %v2337
        %v2978 = vcvt.s32.f32 %v2338
        %v2979 = vcvt.s32.f32 %v2339
        %v2980 = vcvt.s32.f32 %v2340
        %v2981 = vcvt.s32.f32 %v2341
        %v2982 = vcvt.s32.f32 %v2342
        %v2983 = vcvt.s32.f32 %v2343
        %v2984 = vcvt.s32.f32 %v2344
        %v2985 = vcvt.s32.f32 %v2345
        %v2986 = vcvt.s32.f32 %v2346
        %v2987 = vcvt.s32.f32 %v2347
        %v2988 = vcvt.s32.f32 %v2348
        %v2989 = vcvt.s32.f32 %v2349
        %v2990 = vcvt.s32.f32 %v2350
        %v2991 = vcvt.s32.f32 %v2351
        %v2992 = vcvt.s32.f32 %v2352
        %v2993 = vcvt.s32.f32 %v2353
        %v2994 = vcvt.s32.f32 %v2354
        %v2995 = vcvt.s32.f32 %v2355
        %v2996 = vcvt.s32.f32 %v2356
        %v2997 = vcvt.s32.f32 %v2357
        %v2998 = vcvt.s32.f32 %v2358
        %v2999 = vcvt.s32.f32 %v2359
        %v3000 = vcvt.s32.f32 %v2360
        %v3001 = vcvt.s32.f32 %v2361
        %v3002 = vcvt.s32.f32 %v2362
        %v3003 = vcvt.s32.f32 %v2363
        %v3004 = vcvt.s32.f32 %v2364
        %v3005 = vcvt.s32.f32 %v2365
        %v3006 = vcvt.s32.f32 %v2366
        %v3007 = vcvt.s32.f32 %v2367
        %v3008 = vcvt.s32.f32 %v2368
        %v3009 = vcvt.s32.f32 %v2369
        %v3010 = vcvt.s32.f32 %v2370
        %v3011 = vcvt.s32.f32 %v2371
        %v3012 = vcvt.s32.f32 %v2372
        %v3013 = vcvt.s32.f32 %v2373
        %v3014 = vcvt.s32.f32 %v2374
        %v3015 = vcvt.s32.f32 %v2375
        %v3016 = vcvt.s32.f32 %v2376
        %v3017 = vcvt.s32.f32 %v2377
        %v3018 = vcvt.s32.f32 %v2378
        %v3019 = vcvt.s32.f32 %v2379
        %v3020 = vpack.c.bf16 %v2381, %v2380
        %v3021 = vpack.c.bf16 %v2383, %v2382
        %v3022 = vpack.c.bf16 %v2384, %v2384
        %v3023 = vpack.c.bf16 %v2386, %v2385
        %v3024 = vpack.c.bf16 %v2388, %v2387
        %v3025 = vpack.c.bf16 %v2389, %v2389
        %v3026 = vpack.c.bf16 %v2391, %v2390
        %v3027 = vpack.c.bf16 %v2393, %v2392
        %v3028 = vpack.c.bf16 %v2394, %v2394
        %v3029 = vpack.c.bf16 %v2396, %v2395
        %v3030 = vpack.c.bf16 %v2398, %v2397
        %v3031 = vpack.c.bf16 %v2399, %v2399
        %v3032 = vpack.c.bf16 %v2401, %v2400
        %v3033 = vpack.c.bf16 %v2403, %v2402
        %v3034 = vpack.c.bf16 %v2404, %v2404
        %v3035 = vpack.c.bf16 %v2406, %v2405
        %v3036 = vpack.c.bf16 %v2408, %v2407
        %v3037 = vpack.c.bf16 %v2409, %v2409
        %v3038 = vpack.c.bf16 %v2411, %v2410
        %v3039 = vpack.c.bf16 %v2413, %v2412
        %v3040 = vpack.c.bf16 %v2414, %v2414
        %v3041 = vpack.c.bf16 %v2416, %v2415
        %v3042 = vpack.c.bf16 %v2418, %v2417
        %v3043 = vpack.c.bf16 %v2419, %v2419
        %v3044 = vpack.c.bf16 %v2421, %v2420
        %v3045 = vpack.c.bf16 %v2423, %v2422
        %v3046 = vpack.c.bf16 %v2424, %v2424
        %v3047 = vpack.c.bf16 %v2426, %v2425
        %v3048 = vpack.c.bf16 %v2428, %v2427
        %v3049 = vpack.c.bf16 %v2429, %v2429
        %v3050 = vpack.c.bf16 %v2431, %v2430
        %v3051 = vpack.c.bf16 %v2433, %v2432
        %v3052 = vpack.c.bf16 %v2434, %v2434
        %v3053 = vpack.c.bf16 %v2436, %v2435
        %v3054 = vpack.c.bf16 %v2438, %v2437
        %v3055 = vpack.c.bf16 %v2439, %v2439
        %v3056 = vpack.c.bf16 %v2441, %v2440
        %v3057 = vpack.c.bf16 %v2443, %v2442
        %v3058 = vpack.c.bf16 %v2444, %v2444
        %v3059 = vpack.c.bf16 %v2446, %v2445
        %v3060 = vpack.c.bf16 %v2448, %v2447
        %v3061 = vpack.c.bf16 %v2449, %v2449
        %v3062 = vpack.c.bf16 %v2451, %v2450
        %v3063 = vpack.c.bf16 %v2453, %v2452
        %v3064 = vpack.c.bf16 %v2454, %v2454
        %v3065 = vpack.c.bf16 %v2456, %v2455
        %v3066 = vpack.c.bf16 %v2458, %v2457
        %v3067 = vpack.c.bf16 %v2459, %v2459
        %v3068 = vpack.c.bf16 %v2461, %v2460
        %v3069 = vpack.c.bf16 %v2463, %v2462
        %v3070 = vpack.c.bf16 %v2464, %v2464
        %v3071 = vpack.c.bf16 %v2466, %v2465
        %v3072 = vpack.c.bf16 %v2468, %v2467
        %v3073 = vpack.c.bf16 %v2469, %v2469
        %v3074 = vpack.c.bf16 %v2471, %v2470
        %v3075 = vpack.c.bf16 %v2473, %v2472
        %v3076 = vpack.c.bf16 %v2474, %v2474
        %v3077 = vpack.c.bf16 %v2476, %v2475
        %v3078 = vpack.c.bf16 %v2478, %v2477
        %v3079 = vpack.c.bf16 %v2479, %v2479
        %v3080 = vpack.c.bf16 %v2481, %v2480
        %v3081 = vpack.c.bf16 %v2483, %v2482
        %v3082 = vpack.c.bf16 %v2484, %v2484
        %v3083 = vpack.c.bf16 %v2486, %v2485
        %v3084 = vpack.c.bf16 %v2488, %v2487
        %v3085 = vpack.c.bf16 %v2489, %v2489
        %v3086 = vpack.c.bf16 %v2491, %v2490
        %v3087 = vpack.c.bf16 %v2493, %v2492
        %v3088 = vpack.c.bf16 %v2494, %v2494
        %v3089 = vpack.c.bf16 %v2496, %v2495
        %v3090 = vpack.c.bf16 %v2498, %v2497
        %v3091 = vpack.c.bf16 %v2499, %v2499
        %v3092 = vpack.c.bf16 %v2501, %v2500
        %v3093 = vpack.c.bf16 %v2503, %v2502
        %v3094 = vpack.c.bf16 %v2504, %v2504
        %v3095 = vpack.c.bf16 %v2506, %v2505
        %v3096 = vpack.c.bf16 %v2508, %v2507
        %v3097 = vpack.c.bf16 %v2509, %v2509
        %v3098 = vpack.c.bf16 %v2511, %v2510
        %v3099 = vpack.c.bf16 %v2513, %v2512
        %v3100 = vpack.c.bf16 %v2514, %v2514
        %v3101 = vpack.c.bf16 %v2516, %v2515
        %v3102 = vpack.c.bf16 %v2518, %v2517
        %v3103 = vpack.c.bf16 %v2519, %v2519
        %v3104 = vpack.c.bf16 %v2521, %v2520
        %v3105 = vpack.c.bf16 %v2523, %v2522
        %v3106 = vpack.c.bf16 %v2524, %v2524
        %v3107 = vpack.c.bf16 %v2526, %v2525
        %v3108 = vpack.c.bf16 %v2528, %v2527
        %v3109 = vpack.c.bf16 %v2529, %v2529
        %v3110 = vpack.c.bf16 %v2531, %v2530
        %v3111 = vpack.c.bf16 %v2533, %v2532
        %v3112 = vpack.c.bf16 %v2534, %v2534
        %v3113 = vpack.c.bf16 %v2536, %v2535
        %v3114 = vpack.c.bf16 %v2538, %v2537
        %v3115 = vpack.c.bf16 %v2539, %v2539
        %v3116 = vpack.c.bf16 %v2541, %v2540
        %v3117 = vpack.c.bf16 %v2543, %v2542
        %v3118 = vpack.c.bf16 %v2544, %v2544
        %v3119 = vpack.c.bf16 %v2546, %v2545
        %v3120 = vpack.c.bf16 %v2548, %v2547
        %v3121 = vpack.c.bf16 %v2549, %v2549
        %v3122 = vpack.c.bf16 %v2551, %v2550
        %v3123 = vpack.c.bf16 %v2553, %v2552
        %v3124 = vpack.c.bf16 %v2554, %v2554
        %v3125 = vpack.c.bf16 %v2556, %v2555
        %v3126 = vpack.c.bf16 %v2558, %v2557
        %v3127 = vpack.c.bf16 %v2559, %v2559
        %v3128 = vpack.c.bf16 %v2561, %v2560
        %v3129 = vpack.c.bf16 %v2563, %v2562
        %v3130 = vpack.c.bf16 %v2564, %v2564
        %v3131 = vpack.c.bf16 %v2566, %v2565
        %v3132 = vpack.c.bf16 %v2568, %v2567
        %v3133 = vpack.c.bf16 %v2569, %v2569
        %v3134 = vpack.c.bf16 %v2571, %v2570
        %v3135 = vpack.c.bf16 %v2573, %v2572
        %v3136 = vpack.c.bf16 %v2574, %v2574
        %v3137 = vpack.c.bf16 %v2576, %v2575
        %v3138 = vpack.c.bf16 %v2578, %v2577
        %v3139 = vpack.c.bf16 %v2579, %v2579
        %v3140 = vpack.c.bf16 %v2581, %v2580
        %v3141 = vpack.c.bf16 %v2583, %v2582
        %v3142 = vpack.c.bf16 %v2584, %v2584
        %v3143 = vpack.c.bf16 %v2586, %v2585
        %v3144 = vpack.c.bf16 %v2588, %v2587
        %v3145 = vpack.c.bf16 %v2589, %v2589
        %v3146 = vpack.c.bf16 %v2591, %v2590
        %v3147 = vpack.c.bf16 %v2593, %v2592
        %v3148 = vpack.c.bf16 %v2594, %v2594
        %v3149 = vpack.c.bf16 %v2596, %v2595
        %v3150 = vpack.c.bf16 %v2598, %v2597
        %v3151 = vpack.c.bf16 %v2599, %v2599
        %v3152 = vpack.c.bf16 %v2601, %v2600
        %v3153 = vpack.c.bf16 %v2603, %v2602
        %v3154 = vpack.c.bf16 %v2604, %v2604
        %v3155 = vpack.c.bf16 %v2606, %v2605
        %v3156 = vpack.c.bf16 %v2608, %v2607
        %v3157 = vpack.c.bf16 %v2609, %v2609
        %v3158 = vpack.c.bf16 %v2611, %v2610
        %v3159 = vpack.c.bf16 %v2613, %v2612
        %v3160 = vpack.c.bf16 %v2614, %v2614
        %v3161 = vpack.c.bf16 %v2616, %v2615
        %v3162 = vpack.c.bf16 %v2618, %v2617
        %v3163 = vpack.c.bf16 %v2619, %v2619
        %v3164 = vpack.c.bf16 %v2621, %v2620
        %v3165 = vpack.c.bf16 %v2623, %v2622
        %v3166 = vpack.c.bf16 %v2624, %v2624
        %v3167 = vpack.c.bf16 %v2626, %v2625
        %v3168 = vpack.c.bf16 %v2628, %v2627
        %v3169 = vpack.c.bf16 %v2629, %v2629
        %v3170 = vpack.c.bf16 %v2631, %v2630
        %v3171 = vpack.c.bf16 %v2633, %v2632
        %v3172 = vpack.c.bf16 %v2634, %v2634
        %v3173 = vpack.c.bf16 %v2636, %v2635
        %v3174 = vpack.c.bf16 %v2638, %v2637
        %v3175 = vpack.c.bf16 %v2639, %v2639
        %v3176 = vpack.c.bf16 %v2641, %v2640
        %v3177 = vpack.c.bf16 %v2643, %v2642
        %v3178 = vpack.c.bf16 %v2644, %v2644
        %v3179 = vpack.c.bf16 %v2646, %v2645
        %v3180 = vpack.c.bf16 %v2648, %v2647
        %v3181 = vpack.c.bf16 %v2649, %v2649
        %v3182 = vpack.c.bf16 %v2651, %v2650
        %v3183 = vpack.c.bf16 %v2653, %v2652
        %v3184 = vpack.c.bf16 %v2654, %v2654
        %v3185 = vpack.c.bf16 %v2656, %v2655
        %v3186 = vpack.c.bf16 %v2658, %v2657
        %v3187 = vpack.c.bf16 %v2659, %v2659
        %v3188 = vpack.c.bf16 %v2661, %v2660
        %v3189 = vpack.c.bf16 %v2663, %v2662
        %v3190 = vpack.c.bf16 %v2664, %v2664
        %v3191 = vpack.c.bf16 %v2666, %v2665
        %v3192 = vpack.c.bf16 %v2668, %v2667
        %v3193 = vpack.c.bf16 %v2669, %v2669
        %v3194 = vpack.c.bf16 %v2671, %v2670
        %v3195 = vpack.c.bf16 %v2673, %v2672
        %v3196 = vpack.c.bf16 %v2674, %v2674
        %v3197 = vpack.c.bf16 %v2676, %v2675
        %v3198 = vpack.c.bf16 %v2678, %v2677
        %v3199 = vpack.c.bf16 %v2679, %v2679
        %v3200 = vpack.c.bf16 %v2681, %v2680
        %v3201 = vpack.c.bf16 %v2683, %v2682
        %v3202 = vpack.c.bf16 %v2684, %v2684
        %v3203 = vpack.c.bf16 %v2686, %v2685
        %v3204 = vpack.c.bf16 %v2688, %v2687
        %v3205 = vpack.c.bf16 %v2689, %v2689
        %v3206 = vpack.c.bf16 %v2691, %v2690
        %v3207 = vpack.c.bf16 %v2693, %v2692
        %v3208 = vpack.c.bf16 %v2694, %v2694
        %v3209 = vpack.c.bf16 %v2696, %v2695
        %v3210 = vpack.c.bf16 %v2698, %v2697
        %v3211 = vpack.c.bf16 %v2699, %v2699
        %v3212 = vpack.c.bf16 %v2701, %v2700
        %v3213 = vpack.c.bf16 %v2703, %v2702
        %v3214 = vpack.c.bf16 %v2704, %v2704
        %v3215 = vpack.c.bf16 %v2706, %v2705
        %v3216 = vpack.c.bf16 %v2708, %v2707
        %v3217 = vpack.c.bf16 %v2709, %v2709
        %v3218 = vpack.c.bf16 %v2711, %v2710
        %v3219 = vpack.c.bf16 %v2713, %v2712
        %v3220 = vpack.c.bf16 %v2714, %v2714
        %v3221 = vpack.c.bf16 %v2716, %v2715
        %v3222 = vpack.c.bf16 %v2718, %v2717
        %v3223 = vpack.c.bf16 %v2719, %v2719
        %v3224 = vpack.c.bf16 %v2721, %v2720
        %v3225 = vpack.c.bf16 %v2723, %v2722
        %v3226 = vpack.c.bf16 %v2724, %v2724
        %v3227 = vpack.c.bf16 %v2726, %v2725
        %v3228 = vpack.c.bf16 %v2728, %v2727
        %v3229 = vpack.c.bf16 %v2729, %v2729
        %v3230 = vpack.c.bf16 %v2731, %v2730
        %v3231 = vpack.c.bf16 %v2733, %v2732
        %v3232 = vpack.c.bf16 %v2734, %v2734
        %v3233 = vpack.c.bf16 %v2736, %v2735
        %v3234 = vpack.c.bf16 %v2738, %v2737
        %v3235 = vpack.c.bf16 %v2739, %v2739
        %v3236 = vpack.c.bf16 %v2741, %v2740
        %v3237 = vpack.c.bf16 %v2743, %v2742
        %v3238 = vpack.c.bf16 %v2744, %v2744
        %v3239 = vpack.c.bf16 %v2746, %v2745
        %v3240 = vpack.c.bf16 %v2748, %v2747
        %v3241 = vpack.c.bf16 %v2749, %v2749
        %v3242 = vpack.c.bf16 %v2751, %v2750
        %v3243 = vpack.c.bf16 %v2753, %v2752
        %v3244 = vpack.c.bf16 %v2754, %v2754
        %v3245 = vpack.c.bf16 %v2756, %v2755
        %v3246 = vpack.c.bf16 %v2758, %v2757
        %v3247 = vpack.c.bf16 %v2759, %v2759
        %v3248 = vpack.c.bf16 %v2761, %v2760
        %v3249 = vpack.c.bf16 %v2763, %v2762
        %v3250 = vpack.c.bf16 %v2764, %v2764
        %v3251 = vpack.c.bf16 %v2766, %v2765
        %v3252 = vpack.c.bf16 %v2768, %v2767
        %v3253 = vpack.c.bf16 %v2769, %v2769
        %v3254 = vpack.c.bf16 %v2771, %v2770
        %v3255 = vpack.c.bf16 %v2773, %v2772
        %v3256 = vpack.c.bf16 %v2774, %v2774
        %v3257 = vpack.c.bf16 %v2776, %v2775
        %v3258 = vpack.c.bf16 %v2778, %v2777
        %v3259 = vpack.c.bf16 %v2779, %v2779
        %v3260 = vpack.c.bf16 %v2781, %v2780
        %v3261 = vpack.c.bf16 %v2783, %v2782
        %v3262 = vpack.c.bf16 %v2784, %v2784
        %v3263 = vpack.c.bf16 %v2786, %v2785
        %v3264 = vpack.c.bf16 %v2788, %v2787
        %v3265 = vpack.c.bf16 %v2789, %v2789
        %v3266 = vpack.c.bf16 %v2791, %v2790
        %v3267 = vpack.c.bf16 %v2793, %v2792
        %v3268 = vpack.c.bf16 %v2794, %v2794
        %v3269 = vpack.c.bf16 %v2796, %v2795
        %v3270 = vpack.c.bf16 %v2798, %v2797
        %v3271 = vpack.c.bf16 %v2799, %v2799
        %v3272 = vpack.c.bf16 %v2801, %v2800
        %v3273 = vpack.c.bf16 %v2803, %v2802
        %v3274 = vpack.c.bf16 %v2804, %v2804
        %v3275 = vpack.c.bf16 %v2806, %v2805
        %v3276 = vpack.c.bf16 %v2808, %v2807
        %v3277 = vpack.c.bf16 %v2809, %v2809
        %v3278 = vpack.c.bf16 %v2811, %v2810
        %v3279 = vpack.c.bf16 %v2813, %v2812
        %v3280 = vpack.c.bf16 %v2814, %v2814
        %v3281 = vpack.c.bf16 %v2816, %v2815
        %v3282 = vpack.c.bf16 %v2818, %v2817
        %v3283 = vpack.c.bf16 %v2819, %v2819
        %v3284 = vpack.c.bf16 %v2821, %v2820
        %v3285 = vpack.c.bf16 %v2823, %v2822
        %v3286 = vpack.c.bf16 %v2824, %v2824
        %v3287 = vpack.c.bf16 %v2826, %v2825
        %v3288 = vpack.c.bf16 %v2828, %v2827
        %v3289 = vpack.c.bf16 %v2829, %v2829
        %v3290 = vpack.c.bf16 %v2831, %v2830
        %v3291 = vpack.c.bf16 %v2833, %v2832
        %v3292 = vpack.c.bf16 %v2834, %v2834
        %v3293 = vpack.c.bf16 %v2836, %v2835
        %v3294 = vpack.c.bf16 %v2838, %v2837
        %v3295 = vpack.c.bf16 %v2839, %v2839
        %v3296 = vpack.c.bf16 %v2841, %v2840
        %v3297 = vpack.c.bf16 %v2843, %v2842
        %v3298 = vpack.c.bf16 %v2844, %v2844
        %v3299 = vpack.c.bf16 %v2846, %v2845
        %v3300 = vpack.c.bf16 %v2848, %v2847
        %v3301 = vpack.c.bf16 %v2849, %v2849
        %v3302 = vpack.c.bf16 %v2851, %v2850
        %v3303 = vpack.c.bf16 %v2853, %v2852
        %v3304 = vpack.c.bf16 %v2854, %v2854
        %v3305 = vpack.c.bf16 %v2856, %v2855
        %v3306 = vpack.c.bf16 %v2858, %v2857
        %v3307 = vpack.c.bf16 %v2859, %v2859
        %v3308 = vpack.c.bf16 %v2861, %v2860
        %v3309 = vpack.c.bf16 %v2863, %v2862
        %v3310 = vpack.c.bf16 %v2864, %v2864
        %v3311 = vpack.c.bf16 %v2866, %v2865
        %v3312 = vpack.c.bf16 %v2868, %v2867
        %v3313 = vpack.c.bf16 %v2869, %v2869
        %v3314 = vpack.c.bf16 %v2871, %v2870
        %v3315 = vpack.c.bf16 %v2873, %v2872
        %v3316 = vpack.c.bf16 %v2874, %v2874
        %v3317 = vpack.c.bf16 %v2876, %v2875
        %v3318 = vpack.c.bf16 %v2878, %v2877
        %v3319 = vpack.c.bf16 %v2879, %v2879
        %v3320 = vpack.c.bf16 %v2881, %v2880
        %v3321 = vpack.c.bf16 %v2883, %v2882
        %v3322 = vpack.c.bf16 %v2884, %v2884
        %v3323 = vpack.c.bf16 %v2886, %v2885
        %v3324 = vpack.c.bf16 %v2888, %v2887
        %v3325 = vpack.c.bf16 %v2889, %v2889
        %v3326 = vpack.c.bf16 %v2891, %v2890
        %v3327 = vpack.c.bf16 %v2893, %v2892
        %v3328 = vpack.c.bf16 %v2894, %v2894
        %v3329 = vpack.c.bf16 %v2896, %v2895
        %v3330 = vpack.c.bf16 %v2898, %v2897
        %v3331 = vpack.c.bf16 %v2899, %v2899
        %v3332 = vpack.c.bf16 %v2901, %v2900
        %v3333 = vpack.c.bf16 %v2903, %v2902
        %v3334 = vpack.c.bf16 %v2904, %v2904
        %v3335 = vpack.c.bf16 %v2906, %v2905
        %v3336 = vpack.c.bf16 %v2908, %v2907
        %v3337 = vpack.c.bf16 %v2909, %v2909
        %v3338 = vpack.c.bf16 %v2911, %v2910
        %v3339 = vpack.c.bf16 %v2913, %v2912
        %v3340 = vpack.c.bf16 %v2914, %v2914
        %v3341 = vpack.c.bf16 %v2916, %v2915
        %v3342 = vpack.c.bf16 %v2918, %v2917
        %v3343 = vpack.c.bf16 %v2919, %v2919
        %v3344 = vpack.c.bf16 %v2921, %v2920
        %v3345 = vpack.c.bf16 %v2923, %v2922
        %v3346 = vpack.c.bf16 %v2924, %v2924
        %v3347 = vpack.c.bf16 %v2926, %v2925
        %v3348 = vpack.c.bf16 %v2928, %v2927
        %v3349 = vpack.c.bf16 %v2929, %v2929
        %v3350 = vpack.c.bf16 %v2931, %v2930
        %v3351 = vpack.c.bf16 %v2933, %v2932
        %v3352 = vpack.c.bf16 %v2934, %v2934
        %v3353 = vpack.c.bf16 %v2936, %v2935
        %v3354 = vpack.c.bf16 %v2938, %v2937
        %v3355 = vpack.c.bf16 %v2939, %v2939
        %v3356 = vpack.c.bf16 %v2941, %v2940
        %v3357 = vpack.c.bf16 %v2943, %v2942
        %v3358 = vpack.c.bf16 %v2944, %v2944
        %v3359 = vpack.c.bf16 %v2946, %v2945
        %v3360 = vpack.c.bf16 %v2948, %v2947
        %v3361 = vpack.c.bf16 %v2949, %v2949
        %v3362 = vpack.c.bf16 %v2951, %v2950
        %v3363 = vpack.c.bf16 %v2953, %v2952
        %v3364 = vpack.c.bf16 %v2954, %v2954
        %v3365 = vpack.c.bf16 %v2956, %v2955
        %v3366 = vpack.c.bf16 %v2958, %v2957
        %v3367 = vpack.c.bf16 %v2959, %v2959
        %v3368 = vpack.c.bf16 %v2961, %v2960
        %v3369 = vpack.c.bf16 %v2963, %v2962
        %v3370 = vpack.c.bf16 %v2964, %v2964
        %v3371 = vpack.c.bf16 %v2966, %v2965
        %v3372 = vpack.c.bf16 %v2968, %v2967
        %v3373 = vpack.c.bf16 %v2969, %v2969
        %v3374 = vpack.c.bf16 %v2971, %v2970
        %v3375 = vpack.c.bf16 %v2973, %v2972
        %v3376 = vpack.c.bf16 %v2974, %v2974
        %v3377 = vpack.c.bf16 %v2976, %v2975
        %v3378 = vpack.c.bf16 %v2978, %v2977
        %v3379 = vpack.c.bf16 %v2979, %v2979
        %v3380 = vpack.c.bf16 %v2981, %v2980
        %v3381 = vpack.c.bf16 %v2983, %v2982
        %v3382 = vpack.c.bf16 %v2984, %v2984
        %v3383 = vpack.c.bf16 %v2986, %v2985
        %v3384 = vpack.c.bf16 %v2988, %v2987
        %v3385 = vpack.c.bf16 %v2989, %v2989
        %v3386 = vpack.c.bf16 %v2991, %v2990
        %v3387 = vpack.c.bf16 %v2993, %v2992
        %v3388 = vpack.c.bf16 %v2994, %v2994
        %v3389 = vpack.c.bf16 %v2996, %v2995
        %v3390 = vpack.c.bf16 %v2998, %v2997
        %v3391 = vpack.c.bf16 %v2999, %v2999
        %v3392 = vpack.c.bf16 %v3001, %v3000
        %v3393 = vpack.c.bf16 %v3003, %v3002
        %v3394 = vpack.c.bf16 %v3004, %v3004
        %v3395 = vpack.c.bf16 %v3006, %v3005
        %v3396 = vpack.c.bf16 %v3008, %v3007
        %v3397 = vpack.c.bf16 %v3009, %v3009
        %v3398 = vpack.c.bf16 %v3011, %v3010
        %v3399 = vpack.c.bf16 %v3013, %v3012
        %v3400 = vpack.c.bf16 %v3014, %v3014
        %v3401 = vpack.c.bf16 %v3016, %v3015
        %v3402 = vpack.c.bf16 %v3018, %v3017
        %v3403 = vpack.c.bf16 %v3019, %v3019
        %v3404 = vld [vmem:[%s0] sm:$0xf]
        %v3405 = vld [vmem:[%s0 + $0x4] sm:$0xf]
        %v3406 = vld [vmem:[%s0 + $0x8] sm:$0xf]
        %v3407 = vld [vmem:[%s0 + $0xc] sm:$0xf]
        %v3408 = vld [vmem:[%s0 + $0x10] sm:$0xf]
        %v3409 = vld [vmem:[%s0 + $0x14] sm:$0xf]
        %v3410 = vld [vmem:[%s0 + $0x18] sm:$0xf]
        %v3411 = vld [vmem:[%s0 + $0x1c] sm:$0xf]
        %v3412 = vld [vmem:[%s0 + $0x20] sm:$0xf]
        %v3413 = vld [vmem:[%s0 + $0x24] sm:$0xf]
        %v3414 = vld [vmem:[%s0 + $0x28] sm:$0xf]
        %v3415 = vld [vmem:[%s0 + $0x2c] sm:$0xf]
        %v3416 = vld [vmem:[%s0 + $0x30] sm:$0xf]
        %v3417 = vld [vmem:[%s0 + $0x34] sm:$0xf]
        %v3418 = vld [vmem:[%s0 + $0x38] sm:$0xf]
        %v3419 = vld [vmem:[%s0 + $0x3c] sm:$0xf]
        %v3420 = vld [vmem:[%s0 + $0x40] sm:$0xf]
        %v3421 = vld [vmem:[%s0 + $0x44] sm:$0xf]
        %v3422 = vld [vmem:[%s0 + $0x48] sm:$0xf]
        %v3423 = vld [vmem:[%s0 + $0x4c] sm:$0xf]
        %v3424 = vld [vmem:[%s0 + $0x50] sm:$0xf]
        %v3425 = vld [vmem:[%s0 + $0x54] sm:$0xf]
        %v3426 = vld [vmem:[%s0 + $0x58] sm:$0xf]
        %v3427 = vld [vmem:[%s0 + $0x5c] sm:$0xf]
        %v3428 = vld [vmem:[%s0 + $0x60] sm:$0xf]
        %v3429 = vld [vmem:[%s0 + $0x64] sm:$0xf]
        %v3430 = vld [vmem:[%s0 + $0x68] sm:$0xf]
        %v3431 = vld [vmem:[%s0 + $0x6c] sm:$0xf]
        %v3432 = vld [vmem:[%s0 + $0x70] sm:$0xf]
        %v3433 = vld [vmem:[%s0 + $0x74] sm:$0xf]
        %v3434 = vld [vmem:[%s0 + $0x78] sm:$0xf]
        %v3435 = vld [vmem:[%s0 + $0x7c] sm:$0xf]
        %v3436 = vld [vmem:[%s0 + $0x80] sm:$0xf]
        %v3437 = vld [vmem:[%s0 + $0x84] sm:$0xf]
        %v3438 = vld [vmem:[%s0 + $0x88] sm:$0xf]
        %v3439 = vld [vmem:[%s0 + $0x8c] sm:$0xf]
        %v3440 = vld [vmem:[%s0 + $0x90] sm:$0xf]
        %v3441 = vld [vmem:[%s0 + $0x94] sm:$0xf]
        %v3442 = vld [vmem:[%s0 + $0x98] sm:$0xf]
        %v3443 = vld [vmem:[%s0 + $0x9c] sm:$0xf]
        %v3444 = vld [vmem:[%s0 + $0xa0] sm:$0xf]
        %v3445 = vld [vmem:[%s0 + $0xa4] sm:$0xf]
        %v3446 = vld [vmem:[%s0 + $0xa8] sm:$0xf]
        %v3447 = vld [vmem:[%s0 + $0xac] sm:$0xf]
        %v3448 = vld [vmem:[%s0 + $0xb0] sm:$0xf]
        %v3449 = vld [vmem:[%s0 + $0xb4] sm:$0xf]
        %v3450 = vld [vmem:[%s0 + $0xb8] sm:$0xf]
        %v3451 = vld [vmem:[%s0 + $0xbc] sm:$0xf]
        %v3452 = vld [vmem:[%s0 + $0xc0] sm:$0xf]
        %v3453 = vld [vmem:[%s0 + $0xc4] sm:$0xf]
        %v3454 = vld [vmem:[%s0 + $0xc8] sm:$0xf]
        %v3455 = vld [vmem:[%s0 + $0xcc] sm:$0xf]
        %v3456 = vld [vmem:[%s0 + $0xd0] sm:$0xf]
        %v3457 = vld [vmem:[%s0 + $0xd4] sm:$0xf]
        %v3458 = vld [vmem:[%s0 + $0xd8] sm:$0xf]
        %v3459 = vld [vmem:[%s0 + $0xdc] sm:$0xf]
        %v3460 = vld [vmem:[%s0 + $0xe0] sm:$0xf]
        %v3461 = vld [vmem:[%s0 + $0xe4] sm:$0xf]
        %v3462 = vld [vmem:[%s0 + $0xe8] sm:$0xf]
        %v3463 = vld [vmem:[%s0 + $0xec] sm:$0xf]
        %v3464 = vld [vmem:[%s0 + $0xf0] sm:$0xf]
        %v3465 = vld [vmem:[%s0 + $0xf4] sm:$0xf]
        %v3466 = vld [vmem:[%s0 + $0xf8] sm:$0xf]
        %v3467 = vld [vmem:[%s0 + $0xfc] sm:$0xf]
        %v3468 = vld [vmem:[%s0 + $0x100] sm:$0xf]
        %v3469 = vld [vmem:[%s0 + $0x104] sm:$0xf]
        %v3470 = vld [vmem:[%s0 + $0x108] sm:$0xf]
        %v3471 = vld [vmem:[%s0 + $0x10c] sm:$0xf]
        %v3472 = vld [vmem:[%s0 + $0x110] sm:$0xf]
        %v3473 = vld [vmem:[%s0 + $0x114] sm:$0xf]
        %v3474 = vld [vmem:[%s0 + $0x118] sm:$0xf]
        %v3475 = vld [vmem:[%s0 + $0x11c] sm:$0xf]
        %v3476 = vld [vmem:[%s0 + $0x120] sm:$0xf]
        %v3477 = vld [vmem:[%s0 + $0x124] sm:$0xf]
        %v3478 = vld [vmem:[%s0 + $0x128] sm:$0xf]
        %v3863 = vunpack.c.l.b16 %v3020
        %v3864 = vunpack.c.h.b16 %v3020
        %v3865 = vunpack.c.l.b16 %v3021
        %v3866 = vunpack.c.h.b16 %v3021
        %v3867 = vunpack.c.l.b16 %v3022
        %v3868 = vunpack.c.l.b16 %v3023
        %v3869 = vunpack.c.h.b16 %v3023
        %v3870 = vunpack.c.l.b16 %v3024
        %v3871 = vunpack.c.h.b16 %v3024
        %v3872 = vunpack.c.l.b16 %v3025
        %v3873 = vunpack.c.l.b16 %v3026
        %v3874 = vunpack.c.h.b16 %v3026
        %v3875 = vunpack.c.l.b16 %v3027
        %v3876 = vunpack.c.h.b16 %v3027
        %v3877 = vunpack.c.l.b16 %v3028
        %v3878 = vunpack.c.l.b16 %v3029
        %v3879 = vunpack.c.h.b16 %v3029
        %v3880 = vunpack.c.l.b16 %v3030
        %v3881 = vunpack.c.h.b16 %v3030
        %v3882 = vunpack.c.l.b16 %v3031
        %v3883 = vunpack.c.l.b16 %v3032
        %v3884 = vunpack.c.h.b16 %v3032
        %v3885 = vunpack.c.l.b16 %v3033
        %v3886 = vunpack.c.h.b16 %v3033
        %v3887 = vunpack.c.l.b16 %v3034
        %v3888 = vunpack.c.l.b16 %v3035
        %v3889 = vunpack.c.h.b16 %v3035
        %v3890 = vunpack.c.l.b16 %v3036
        %v3891 = vunpack.c.h.b16 %v3036
        %v3892 = vunpack.c.l.b16 %v3037
        %v3893 = vunpack.c.l.b16 %v3038
        %v3894 = vunpack.c.h.b16 %v3038
        %v3895 = vunpack.c.l.b16 %v3039
        %v3896 = vunpack.c.h.b16 %v3039
        %v3897 = vunpack.c.l.b16 %v3040
        %v3898 = vunpack.c.l.b16 %v3041
        %v3899 = vunpack.c.h.b16 %v3041
        %v3900 = vunpack.c.l.b16 %v3042
        %v3901 = vunpack.c.h.b16 %v3042
        %v3902 = vunpack.c.l.b16 %v3043
        %v3903 = vunpack.c.l.b16 %v3044
        %v3904 = vunpack.c.h.b16 %v3044
        %v3905 = vunpack.c.l.b16 %v3045
        %v3906 = vunpack.c.h.b16 %v3045
        %v3907 = vunpack.c.l.b16 %v3046
        %v3908 = vunpack.c.l.b16 %v3047
        %v3909 = vunpack.c.h.b16 %v3047
        %v3910 = vunpack.c.l.b16 %v3048
        %v3911 = vunpack.c.h.b16 %v3048
        %v3912 = vunpack.c.l.b16 %v3049
        %v3913 = vunpack.c.l.b16 %v3050
        %v3914 = vunpack.c.h.b16 %v3050
        %v3915 = vunpack.c.l.b16 %v3051
        %v3916 = vunpack.c.h.b16 %v3051
        %v3917 = vunpack.c.l.b16 %v3052
        %v3918 = vunpack.c.l.b16 %v3053
        %v3919 = vunpack.c.h.b16 %v3053
        %v3920 = vunpack.c.l.b16 %v3054
        %v3921 = vunpack.c.h.b16 %v3054
        %v3922 = vunpack.c.l.b16 %v3055
        %v3923 = vunpack.c.l.b16 %v3056
        %v3924 = vunpack.c.h.b16 %v3056
        %v3925 = vunpack.c.l.b16 %v3057
        %v3926 = vunpack.c.h.b16 %v3057
        %v3927 = vunpack.c.l.b16 %v3058
        %v3928 = vunpack.c.l.b16 %v3059
        %v3929 = vunpack.c.h.b16 %v3059
        %v3930 = vunpack.c.l.b16 %v3060
        %v3931 = vunpack.c.h.b16 %v3060
        %v3932 = vunpack.c.l.b16 %v3061
        %v3933 = vunpack.c.l.b16 %v3062
        %v3934 = vunpack.c.h.b16 %v3062
        %v3935 = vunpack.c.l.b16 %v3063
        %v3936 = vunpack.c.h.b16 %v3063
        %v3937 = vunpack.c.l.b16 %v3064
        %v3938 = vunpack.c.l.b16 %v3065
        %v3939 = vunpack.c.h.b16 %v3065
        %v3940 = vunpack.c.l.b16 %v3066
        %v3941 = vunpack.c.h.b16 %v3066
        %v3942 = vunpack.c.l.b16 %v3067
        %v3943 = vunpack.c.l.b16 %v3068
        %v3944 = vunpack.c.h.b16 %v3068
        %v3945 = vunpack.c.l.b16 %v3069
        %v3946 = vunpack.c.h.b16 %v3069
        %v3947 = vunpack.c.l.b16 %v3070
        %v3948 = vunpack.c.l.b16 %v3071
        %v3949 = vunpack.c.h.b16 %v3071
        %v3950 = vunpack.c.l.b16 %v3072
        %v3951 = vunpack.c.h.b16 %v3072
        %v3952 = vunpack.c.l.b16 %v3073
        %v3953 = vunpack.c.l.b16 %v3074
        %v3954 = vunpack.c.h.b16 %v3074
        %v3955 = vunpack.c.l.b16 %v3075
        %v3956 = vunpack.c.h.b16 %v3075
        %v3957 = vunpack.c.l.b16 %v3076
        %v3958 = vunpack.c.l.b16 %v3077
        %v3959 = vunpack.c.h.b16 %v3077
        %v3960 = vunpack.c.l.b16 %v3078
        %v3961 = vunpack.c.h.b16 %v3078
        %v3962 = vunpack.c.l.b16 %v3079
        %v3963 = vunpack.c.l.b16 %v3080
        %v3964 = vunpack.c.h.b16 %v3080
        %v3965 = vunpack.c.l.b16 %v3081
        %v3966 = vunpack.c.h.b16 %v3081
        %v3967 = vunpack.c.l.b16 %v3082
        %v3968 = vunpack.c.l.b16 %v3083
        %v3969 = vunpack.c.h.b16 %v3083
        %v3970 = vunpack.c.l.b16 %v3084
        %v3971 = vunpack.c.h.b16 %v3084
        %v3972 = vunpack.c.l.b16 %v3085
        %v3973 = vunpack.c.l.b16 %v3086
        %v3974 = vunpack.c.h.b16 %v3086
        %v3975 = vunpack.c.l.b16 %v3087
        %v3976 = vunpack.c.h.b16 %v3087
        %v3977 = vunpack.c.l.b16 %v3088
        %v3978 = vunpack.c.l.b16 %v3089
        %v3979 = vunpack.c.h.b16 %v3089
        %v3980 = vunpack.c.l.b16 %v3090
        %v3981 = vunpack.c.h.b16 %v3090
        %v3982 = vunpack.c.l.b16 %v3091
        %v3983 = vunpack.c.l.b16 %v3092
        %v3984 = vunpack.c.h.b16 %v3092
        %v3985 = vunpack.c.l.b16 %v3093
        %v3986 = vunpack.c.h.b16 %v3093
        %v3987 = vunpack.c.l.b16 %v3094
        %v3988 = vunpack.c.l.b16 %v3095
        %v3989 = vunpack.c.h.b16 %v3095
        %v3990 = vunpack.c.l.b16 %v3096
        %v3991 = vunpack.c.h.b16 %v3096
        %v3992 = vunpack.c.l.b16 %v3097
        %v3993 = vunpack.c.l.b16 %v3098
        %v3994 = vunpack.c.h.b16 %v3098
        %v3995 = vunpack.c.l.b16 %v3099
        %v3996 = vunpack.c.h.b16 %v3099
        %v3997 = vunpack.c.l.b16 %v3100
        %v3998 = vunpack.c.l.b16 %v3101
        %v3999 = vunpack.c.h.b16 %v3101
        %v4000 = vunpack.c.l.b16 %v3102
        %v4001 = vunpack.c.h.b16 %v3102
        %v4002 = vunpack.c.l.b16 %v3103
        %v4003 = vunpack.c.l.b16 %v3104
        %v4004 = vunpack.c.h.b16 %v3104
        %v4005 = vunpack.c.l.b16 %v3105
        %v4006 = vunpack.c.h.b16 %v3105
        %v4007 = vunpack.c.l.b16 %v3106
        %v4008 = vunpack.c.l.b16 %v3107
        %v4009 = vunpack.c.h.b16 %v3107
        %v4010 = vunpack.c.l.b16 %v3108
        %v4011 = vunpack.c.h.b16 %v3108
        %v4012 = vunpack.c.l.b16 %v3109
        %v4013 = vunpack.c.l.b16 %v3110
        %v4014 = vunpack.c.h.b16 %v3110
        %v4015 = vunpack.c.l.b16 %v3111
        %v4016 = vunpack.c.h.b16 %v3111
        %v4017 = vunpack.c.l.b16 %v3112
        %v4018 = vunpack.c.l.b16 %v3113
        %v4019 = vunpack.c.h.b16 %v3113
        %v4020 = vunpack.c.l.b16 %v3114
        %v4021 = vunpack.c.h.b16 %v3114
        %v4022 = vunpack.c.l.b16 %v3115
        %v4023 = vunpack.c.l.b16 %v3116
        %v4024 = vunpack.c.h.b16 %v3116
        %v4025 = vunpack.c.l.b16 %v3117
        %v4026 = vunpack.c.h.b16 %v3117
        %v4027 = vunpack.c.l.b16 %v3118
        %v4028 = vunpack.c.l.b16 %v3119
        %v4029 = vunpack.c.h.b16 %v3119
        %v4030 = vunpack.c.l.b16 %v3120
        %v4031 = vunpack.c.h.b16 %v3120
        %v4032 = vunpack.c.l.b16 %v3121
        %v4033 = vunpack.c.l.b16 %v3122
        %v4034 = vunpack.c.h.b16 %v3122
        %v4035 = vunpack.c.l.b16 %v3123
        %v4036 = vunpack.c.h.b16 %v3123
        %v4037 = vunpack.c.l.b16 %v3124
        %v4038 = vunpack.c.l.b16 %v3125
        %v4039 = vunpack.c.h.b16 %v3125
        %v4040 = vunpack.c.l.b16 %v3126
        %v4041 = vunpack.c.h.b16 %v3126
        %v4042 = vunpack.c.l.b16 %v3127
        %v4043 = vunpack.c.l.b16 %v3128
        %v4044 = vunpack.c.h.b16 %v3128
        %v4045 = vunpack.c.l.b16 %v3129
        %v4046 = vunpack.c.h.b16 %v3129
        %v4047 = vunpack.c.l.b16 %v3130
        %v4048 = vunpack.c.l.b16 %v3131
        %v4049 = vunpack.c.h.b16 %v3131
        %v4050 = vunpack.c.l.b16 %v3132
        %v4051 = vunpack.c.h.b16 %v3132
        %v4052 = vunpack.c.l.b16 %v3133
        %v4053 = vunpack.c.l.b16 %v3134
        %v4054 = vunpack.c.h.b16 %v3134
        %v4055 = vunpack.c.l.b16 %v3135
        %v4056 = vunpack.c.h.b16 %v3135
        %v4057 = vunpack.c.l.b16 %v3136
        %v4058 = vunpack.c.l.b16 %v3137
        %v4059 = vunpack.c.h.b16 %v3137
        %v4060 = vunpack.c.l.b16 %v3138
        %v4061 = vunpack.c.h.b16 %v3138
        %v4062 = vunpack.c.l.b16 %v3139
        %v4063 = vunpack.c.l.b16 %v3140
        %v4064 = vunpack.c.h.b16 %v3140
        %v4065 = vunpack.c.l.b16 %v3141
        %v4066 = vunpack.c.h.b16 %v3141
        %v4067 = vunpack.c.l.b16 %v3142
        %v4068 = vunpack.c.l.b16 %v3143
        %v4069 = vunpack.c.h.b16 %v3143
        %v4070 = vunpack.c.l.b16 %v3144
        %v4071 = vunpack.c.h.b16 %v3144
        %v4072 = vunpack.c.l.b16 %v3145
        %v4073 = vunpack.c.l.b16 %v3146
        %v4074 = vunpack.c.h.b16 %v3146
        %v4075 = vunpack.c.l.b16 %v3147
        %v4076 = vunpack.c.h.b16 %v3147
        %v4077 = vunpack.c.l.b16 %v3148
        %v4078 = vunpack.c.l.b16 %v3149
        %v4079 = vunpack.c.h.b16 %v3149
        %v4080 = vunpack.c.l.b16 %v3150
        %v4081 = vunpack.c.h.b16 %v3150
        %v4082 = vunpack.c.l.b16 %v3151
        %v4083 = vunpack.c.l.b16 %v3152
        %v4084 = vunpack.c.h.b16 %v3152
        %v4085 = vunpack.c.l.b16 %v3153
        %v4086 = vunpack.c.h.b16 %v3153
        %v4087 = vunpack.c.l.b16 %v3154
        %v4088 = vunpack.c.l.b16 %v3155
        %v4089 = vunpack.c.h.b16 %v3155
        %v4090 = vunpack.c.l.b16 %v3156
        %v4091 = vunpack.c.h.b16 %v3156
        %v4092 = vunpack.c.l.b16 %v3157
        %v4093 = vunpack.c.l.b16 %v3158
        %v4094 = vunpack.c.h.b16 %v3158
        %v4095 = vunpack.c.l.b16 %v3159
        %v4096 = vunpack.c.h.b16 %v3159
        %v4097 = vunpack.c.l.b16 %v3160
        %v4098 = vunpack.c.l.b16 %v3161
        %v4099 = vunpack.c.h.b16 %v3161
        %v4100 = vunpack.c.l.b16 %v3162
        %v4101 = vunpack.c.h.b16 %v3162
        %v4102 = vunpack.c.l.b16 %v3163
        %v4103 = vunpack.c.l.b16 %v3164
        %v4104 = vunpack.c.h.b16 %v3164
        %v4105 = vunpack.c.l.b16 %v3165
        %v4106 = vunpack.c.h.b16 %v3165
        %v4107 = vunpack.c.l.b16 %v3166
        %v4108 = vunpack.c.l.b16 %v3167
        %v4109 = vunpack.c.h.b16 %v3167
        %v4110 = vunpack.c.l.b16 %v3168
        %v4111 = vunpack.c.h.b16 %v3168
        %v4112 = vunpack.c.l.b16 %v3169
        %v4113 = vunpack.c.l.b16 %v3170
        %v4114 = vunpack.c.h.b16 %v3170
        %v4115 = vunpack.c.l.b16 %v3171
        %v4116 = vunpack.c.h.b16 %v3171
        %v4117 = vunpack.c.l.b16 %v3172
        %v4118 = vunpack.c.l.b16 %v3173
        %v4119 = vunpack.c.h.b16 %v3173
        %v4120 = vunpack.c.l.b16 %v3174
        %v4121 = vunpack.c.h.b16 %v3174
        %v4122 = vunpack.c.l.b16 %v3175
        %v4123 = vunpack.c.l.b16 %v3176
        %v4124 = vunpack.c.h.b16 %v3176
        %v4125 = vunpack.c.l.b16 %v3177
        %v4126 = vunpack.c.h.b16 %v3177
        %v4127 = vunpack.c.l.b16 %v3178
        %v4128 = vunpack.c.l.b16 %v3179
        %v4129 = vunpack.c.h.b16 %v3179
        %v4130 = vunpack.c.l.b16 %v3180
        %v4131 = vunpack.c.h.b16 %v3180
        %v4132 = vunpack.c.l.b16 %v3181
        %v4133 = vunpack.c.l.b16 %v3182
        %v4134 = vunpack.c.h.b16 %v3182
        %v4135 = vunpack.c.l.b16 %v3183
        %v4136 = vunpack.c.h.b16 %v3183
        %v4137 = vunpack.c.l.b16 %v3184
        %v4138 = vunpack.c.l.b16 %v3185
        %v4139 = vunpack.c.h.b16 %v3185
        %v4140 = vunpack.c.l.b16 %v3186
        %v4141 = vunpack.c.h.b16 %v3186
        %v4142 = vunpack.c.l.b16 %v3187
        %v4143 = vunpack.c.l.b16 %v3188
        %v4144 = vunpack.c.h.b16 %v3188
        %v4145 = vunpack.c.l.b16 %v3189
        %v4146 = vunpack.c.h.b16 %v3189
        %v4147 = vunpack.c.l.b16 %v3190
        %v4148 = vunpack.c.l.b16 %v3191
        %v4149 = vunpack.c.h.b16 %v3191
        %v4150 = vunpack.c.l.b16 %v3192
        %v4151 = vunpack.c.h.b16 %v3192
        %v4152 = vunpack.c.l.b16 %v3193
        %v4153 = vunpack.c.l.b16 %v3194
        %v4154 = vunpack.c.h.b16 %v3194
        %v4155 = vunpack.c.l.b16 %v3195
        %v4156 = vunpack.c.h.b16 %v3195
        %v4157 = vunpack.c.l.b16 %v3196
        %v4158 = vunpack.c.l.b16 %v3197
        %v4159 = vunpack.c.h.b16 %v3197
        %v4160 = vunpack.c.l.b16 %v3198
        %v4161 = vunpack.c.h.b16 %v3198
        %v4162 = vunpack.c.l.b16 %v3199
        %v4163 = vunpack.c.l.b16 %v3200
        %v4164 = vunpack.c.h.b16 %v3200
        %v4165 = vunpack.c.l.b16 %v3201
        %v4166 = vunpack.c.h.b16 %v3201
        %v4167 = vunpack.c.l.b16 %v3202
        %v4168 = vunpack.c.l.b16 %v3203
        %v4169 = vunpack.c.h.b16 %v3203
        %v4170 = vunpack.c.l.b16 %v3204
        %v4171 = vunpack.c.h.b16 %v3204
        %v4172 = vunpack.c.l.b16 %v3205
        %v4173 = vunpack.c.l.b16 %v3206
        %v4174 = vunpack.c.h.b16 %v3206
        %v4175 = vunpack.c.l.b16 %v3207
        %v4176 = vunpack.c.h.b16 %v3207
        %v4177 = vunpack.c.l.b16 %v3208
        %v4178 = vunpack.c.l.b16 %v3209
        %v4179 = vunpack.c.h.b16 %v3209
        %v4180 = vunpack.c.l.b16 %v3210
        %v4181 = vunpack.c.h.b16 %v3210
        %v4182 = vunpack.c.l.b16 %v3211
        %v4183 = vunpack.c.l.b16 %v3212
        %v4184 = vunpack.c.h.b16 %v3212
        %v4185 = vunpack.c.l.b16 %v3213
        %v4186 = vunpack.c.h.b16 %v3213
        %v4187 = vunpack.c.l.b16 %v3214
        %v4188 = vunpack.c.l.b16 %v3215
        %v4189 = vunpack.c.h.b16 %v3215
        %v4190 = vunpack.c.l.b16 %v3216
        %v4191 = vunpack.c.h.b16 %v3216
        %v4192 = vunpack.c.l.b16 %v3217
        %v4193 = vunpack.c.l.b16 %v3218
        %v4194 = vunpack.c.h.b16 %v3218
        %v4195 = vunpack.c.l.b16 %v3219
        %v4196 = vunpack.c.h.b16 %v3219
        %v4197 = vunpack.c.l.b16 %v3220
        %v4198 = vunpack.c.l.b16 %v3221
        %v4199 = vunpack.c.h.b16 %v3221
        %v4200 = vunpack.c.l.b16 %v3222
        %v4201 = vunpack.c.h.b16 %v3222
        %v4202 = vunpack.c.l.b16 %v3223
        %v4203 = vunpack.c.l.b16 %v3224
        %v4204 = vunpack.c.h.b16 %v3224
        %v4205 = vunpack.c.l.b16 %v3225
        %v4206 = vunpack.c.h.b16 %v3225
        %v4207 = vunpack.c.l.b16 %v3226
        %v4208 = vunpack.c.l.b16 %v3227
        %v4209 = vunpack.c.h.b16 %v3227
        %v4210 = vunpack.c.l.b16 %v3228
        %v4211 = vunpack.c.h.b16 %v3228
        %v4212 = vunpack.c.l.b16 %v3229
        %v4213 = vunpack.c.l.b16 %v3230
        %v4214 = vunpack.c.h.b16 %v3230
        %v4215 = vunpack.c.l.b16 %v3231
        %v4216 = vunpack.c.h.b16 %v3231
        %v4217 = vunpack.c.l.b16 %v3232
        %v4218 = vunpack.c.l.b16 %v3233
        %v4219 = vunpack.c.h.b16 %v3233
        %v4220 = vunpack.c.l.b16 %v3234
        %v4221 = vunpack.c.h.b16 %v3234
        %v4222 = vunpack.c.l.b16 %v3235
        %v4223 = vunpack.c.l.b16 %v3236
        %v4224 = vunpack.c.h.b16 %v3236
        %v4225 = vunpack.c.l.b16 %v3237
        %v4226 = vunpack.c.h.b16 %v3237
        %v4227 = vunpack.c.l.b16 %v3238
        %v4228 = vunpack.c.l.b16 %v3239
        %v4229 = vunpack.c.h.b16 %v3239
        %v4230 = vunpack.c.l.b16 %v3240
        %v4231 = vunpack.c.h.b16 %v3240
        %v4232 = vunpack.c.l.b16 %v3241
        %v4233 = vunpack.c.l.b16 %v3242
        %v4234 = vunpack.c.h.b16 %v3242
        %v4235 = vunpack.c.l.b16 %v3243
        %v4236 = vunpack.c.h.b16 %v3243
        %v4237 = vunpack.c.l.b16 %v3244
        %v4238 = vunpack.c.l.b16 %v3245
        %v4239 = vunpack.c.h.b16 %v3245
        %v4240 = vunpack.c.l.b16 %v3246
        %v4241 = vunpack.c.h.b16 %v3246
        %v4242 = vunpack.c.l.b16 %v3247
        %v4243 = vunpack.c.l.b16 %v3248
        %v4244 = vunpack.c.h.b16 %v3248
        %v4245 = vunpack.c.l.b16 %v3249
        %v4246 = vunpack.c.h.b16 %v3249
        %v4247 = vunpack.c.l.b16 %v3250
        %v4248 = vunpack.c.l.b16 %v3251
        %v4249 = vunpack.c.h.b16 %v3251
        %v4250 = vunpack.c.l.b16 %v3252
        %v4251 = vunpack.c.h.b16 %v3252
        %v4252 = vunpack.c.l.b16 %v3253
        %v4253 = vunpack.c.l.b16 %v3254
        %v4254 = vunpack.c.h.b16 %v3254
        %v4255 = vunpack.c.l.b16 %v3255
        %v4256 = vunpack.c.h.b16 %v3255
        %v4257 = vunpack.c.l.b16 %v3256
        %v4258 = vunpack.c.l.b16 %v3257
        %v4259 = vunpack.c.h.b16 %v3257
        %v4260 = vunpack.c.l.b16 %v3258
        %v4261 = vunpack.c.h.b16 %v3258
        %v4262 = vunpack.c.l.b16 %v3259
        %v4263 = vunpack.c.l.b16 %v3260
        %v4264 = vunpack.c.h.b16 %v3260
        %v4265 = vunpack.c.l.b16 %v3261
        %v4266 = vunpack.c.h.b16 %v3261
        %v4267 = vunpack.c.l.b16 %v3262
        %v4268 = vunpack.c.l.b16 %v3263
        %v4269 = vunpack.c.h.b16 %v3263
        %v4270 = vunpack.c.l.b16 %v3264
        %v4271 = vunpack.c.h.b16 %v3264
        %v4272 = vunpack.c.l.b16 %v3265
        %v4273 = vunpack.c.l.b16 %v3266
        %v4274 = vunpack.c.h.b16 %v3266
        %v4275 = vunpack.c.l.b16 %v3267
        %v4276 = vunpack.c.h.b16 %v3267
        %v4277 = vunpack.c.l.b16 %v3268
        %v4278 = vunpack.c.l.b16 %v3269
        %v4279 = vunpack.c.h.b16 %v3269
        %v4280 = vunpack.c.l.b16 %v3270
        %v4281 = vunpack.c.h.b16 %v3270
        %v4282 = vunpack.c.l.b16 %v3271
        %v4283 = vunpack.c.l.b16 %v3272
        %v4284 = vunpack.c.h.b16 %v3272
        %v4285 = vunpack.c.l.b16 %v3273
        %v4286 = vunpack.c.h.b16 %v3273
        %v4287 = vunpack.c.l.b16 %v3274
        %v4288 = vunpack.c.l.b16 %v3275
        %v4289 = vunpack.c.h.b16 %v3275
        %v4290 = vunpack.c.l.b16 %v3276
        %v4291 = vunpack.c.h.b16 %v3276
        %v4292 = vunpack.c.l.b16 %v3277
        %v4293 = vunpack.c.l.b16 %v3278
        %v4294 = vunpack.c.h.b16 %v3278
        %v4295 = vunpack.c.l.b16 %v3279
        %v4296 = vunpack.c.h.b16 %v3279
        %v4297 = vunpack.c.l.b16 %v3280
        %v4298 = vunpack.c.l.b16 %v3281
        %v4299 = vunpack.c.h.b16 %v3281
        %v4300 = vunpack.c.l.b16 %v3282
        %v4301 = vunpack.c.h.b16 %v3282
        %v4302 = vunpack.c.l.b16 %v3283
        %v4303 = vunpack.c.l.b16 %v3284
        %v4304 = vunpack.c.h.b16 %v3284
        %v4305 = vunpack.c.l.b16 %v3285
        %v4306 = vunpack.c.h.b16 %v3285
        %v4307 = vunpack.c.l.b16 %v3286
        %v4308 = vunpack.c.l.b16 %v3287
        %v4309 = vunpack.c.h.b16 %v3287
        %v4310 = vunpack.c.l.b16 %v3288
        %v4311 = vunpack.c.h.b16 %v3288
        %v4312 = vunpack.c.l.b16 %v3289
        %v4313 = vunpack.c.l.b16 %v3290
        %v4314 = vunpack.c.h.b16 %v3290
        %v4315 = vunpack.c.l.b16 %v3291
        %v4316 = vunpack.c.h.b16 %v3291
        %v4317 = vunpack.c.l.b16 %v3292
        %v4318 = vunpack.c.l.b16 %v3293
        %v4319 = vunpack.c.h.b16 %v3293
        %v4320 = vunpack.c.l.b16 %v3294
        %v4321 = vunpack.c.h.b16 %v3294
        %v4322 = vunpack.c.l.b16 %v3295
        %v4323 = vunpack.c.l.b16 %v3296
        %v4324 = vunpack.c.h.b16 %v3296
        %v4325 = vunpack.c.l.b16 %v3297
        %v4326 = vunpack.c.h.b16 %v3297
        %v4327 = vunpack.c.l.b16 %v3298
        %v4328 = vunpack.c.l.b16 %v3299
        %v4329 = vunpack.c.h.b16 %v3299
        %v4330 = vunpack.c.l.b16 %v3300
        %v4331 = vunpack.c.h.b16 %v3300
        %v4332 = vunpack.c.l.b16 %v3301
        %v4333 = vunpack.c.l.b16 %v3302
        %v4334 = vunpack.c.h.b16 %v3302
        %v4335 = vunpack.c.l.b16 %v3303
        %v4336 = vunpack.c.h.b16 %v3303
        %v4337 = vunpack.c.l.b16 %v3304
        %v4338 = vunpack.c.l.b16 %v3305
        %v4339 = vunpack.c.h.b16 %v3305
        %v4340 = vunpack.c.l.b16 %v3306
        %v4341 = vunpack.c.h.b16 %v3306
        %v4342 = vunpack.c.l.b16 %v3307
        %v4343 = vunpack.c.l.b16 %v3308
        %v4344 = vunpack.c.h.b16 %v3308
        %v4345 = vunpack.c.l.b16 %v3309
        %v4346 = vunpack.c.h.b16 %v3309
        %v4347 = vunpack.c.l.b16 %v3310
        %v4348 = vunpack.c.l.b16 %v3311
        %v4349 = vunpack.c.h.b16 %v3311
        %v4350 = vunpack.c.l.b16 %v3312
        %v4351 = vunpack.c.h.b16 %v3312
        %v4352 = vunpack.c.l.b16 %v3313
        %v4353 = vunpack.c.l.b16 %v3314
        %v4354 = vunpack.c.h.b16 %v3314
        %v4355 = vunpack.c.l.b16 %v3315
        %v4356 = vunpack.c.h.b16 %v3315
        %v4357 = vunpack.c.l.b16 %v3316
        %v4358 = vunpack.c.l.b16 %v3317
        %v4359 = vunpack.c.h.b16 %v3317
        %v4360 = vunpack.c.l.b16 %v3318
        %v4361 = vunpack.c.h.b16 %v3318
        %v4362 = vunpack.c.l.b16 %v3319
        %v4363 = vunpack.c.l.b16 %v3320
        %v4364 = vunpack.c.h.b16 %v3320
        %v4365 = vunpack.c.l.b16 %v3321
        %v4366 = vunpack.c.h.b16 %v3321
        %v4367 = vunpack.c.l.b16 %v3322
        %v4368 = vunpack.c.l.b16 %v3323
        %v4369 = vunpack.c.h.b16 %v3323
        %v4370 = vunpack.c.l.b16 %v3324
        %v4371 = vunpack.c.h.b16 %v3324
        %v4372 = vunpack.c.l.b16 %v3325
        %v4373 = vunpack.c.l.b16 %v3326
        %v4374 = vunpack.c.h.b16 %v3326
        %v4375 = vunpack.c.l.b16 %v3327
        %v4376 = vunpack.c.h.b16 %v3327
        %v4377 = vunpack.c.l.b16 %v3328
        %v4378 = vunpack.c.l.b16 %v3329
        %v4379 = vunpack.c.h.b16 %v3329
        %v4380 = vunpack.c.l.b16 %v3330
        %v4381 = vunpack.c.h.b16 %v3330
        %v4382 = vunpack.c.l.b16 %v3331
        %v4383 = vunpack.c.l.b16 %v3332
        %v4384 = vunpack.c.h.b16 %v3332
        %v4385 = vunpack.c.l.b16 %v3333
        %v4386 = vunpack.c.h.b16 %v3333
        %v4387 = vunpack.c.l.b16 %v3334
        %v4388 = vunpack.c.l.b16 %v3335
        %v4389 = vunpack.c.h.b16 %v3335
        %v4390 = vunpack.c.l.b16 %v3336
        %v4391 = vunpack.c.h.b16 %v3336
        %v4392 = vunpack.c.l.b16 %v3337
        %v4393 = vunpack.c.l.b16 %v3338
        %v4394 = vunpack.c.h.b16 %v3338
        %v4395 = vunpack.c.l.b16 %v3339
        %v4396 = vunpack.c.h.b16 %v3339
        %v4397 = vunpack.c.l.b16 %v3340
        %v4398 = vunpack.c.l.b16 %v3341
        %v4399 = vunpack.c.h.b16 %v3341
        %v4400 = vunpack.c.l.b16 %v3342
        %v4401 = vunpack.c.h.b16 %v3342
        %v4402 = vunpack.c.l.b16 %v3343
        %v4403 = vunpack.c.l.b16 %v3344
        %v4404 = vunpack.c.h.b16 %v3344
        %v4405 = vunpack.c.l.b16 %v3345
        %v4406 = vunpack.c.h.b16 %v3345
        %v4407 = vunpack.c.l.b16 %v3346
        %v4408 = vunpack.c.l.b16 %v3347
        %v4409 = vunpack.c.h.b16 %v3347
        %v4410 = vunpack.c.l.b16 %v3348
        %v4411 = vunpack.c.h.b16 %v3348
        %v4412 = vunpack.c.l.b16 %v3349
        %v4413 = vunpack.c.l.b16 %v3350
        %v4414 = vunpack.c.h.b16 %v3350
        %v4415 = vunpack.c.l.b16 %v3351
        %v4416 = vunpack.c.h.b16 %v3351
        %v4417 = vunpack.c.l.b16 %v3352
        %v4418 = vunpack.c.l.b16 %v3353
        %v4419 = vunpack.c.h.b16 %v3353
        %v4420 = vunpack.c.l.b16 %v3354
        %v4421 = vunpack.c.h.b16 %v3354
        %v4422 = vunpack.c.l.b16 %v3355
        %v4423 = vunpack.c.l.b16 %v3356
        %v4424 = vunpack.c.h.b16 %v3356
        %v4425 = vunpack.c.l.b16 %v3357
        %v4426 = vunpack.c.h.b16 %v3357
        %v4427 = vunpack.c.l.b16 %v3358
        %v4428 = vunpack.c.l.b16 %v3359
        %v4429 = vunpack.c.h.b16 %v3359
        %v4430 = vunpack.c.l.b16 %v3360
        %v4431 = vunpack.c.h.b16 %v3360
        %v4432 = vunpack.c.l.b16 %v3361
        %v4433 = vunpack.c.l.b16 %v3362
        %v4434 = vunpack.c.h.b16 %v3362
        %v4435 = vunpack.c.l.b16 %v3363
        %v4436 = vunpack.c.h.b16 %v3363
        %v4437 = vunpack.c.l.b16 %v3364
        %v4438 = vunpack.c.l.b16 %v3365
        %v4439 = vunpack.c.h.b16 %v3365
        %v4440 = vunpack.c.l.b16 %v3366
        %v4441 = vunpack.c.h.b16 %v3366
        %v4442 = vunpack.c.l.b16 %v3367
        %v4443 = vunpack.c.l.b16 %v3368
        %v4444 = vunpack.c.h.b16 %v3368
        %v4445 = vunpack.c.l.b16 %v3369
        %v4446 = vunpack.c.h.b16 %v3369
        %v4447 = vunpack.c.l.b16 %v3370
        %v4448 = vunpack.c.l.b16 %v3371
        %v4449 = vunpack.c.h.b16 %v3371
        %v4450 = vunpack.c.l.b16 %v3372
        %v4451 = vunpack.c.h.b16 %v3372
        %v4452 = vunpack.c.l.b16 %v3373
        %v4453 = vunpack.c.l.b16 %v3374
        %v4454 = vunpack.c.h.b16 %v3374
        %v4455 = vunpack.c.l.b16 %v3375
        %v4456 = vunpack.c.h.b16 %v3375
        %v4457 = vunpack.c.l.b16 %v3376
        %v4458 = vunpack.c.l.b16 %v3377
        %v4459 = vunpack.c.h.b16 %v3377
        %v4460 = vunpack.c.l.b16 %v3378
        %v4461 = vunpack.c.h.b16 %v3378
        %v4462 = vunpack.c.l.b16 %v3379
        %v4463 = vunpack.c.l.b16 %v3380
        %v4464 = vunpack.c.h.b16 %v3380
        %v4465 = vunpack.c.l.b16 %v3381
        %v4466 = vunpack.c.h.b16 %v3381
        %v4467 = vunpack.c.l.b16 %v3382
        %v4468 = vunpack.c.l.b16 %v3383
        %v4469 = vunpack.c.h.b16 %v3383
        %v4470 = vunpack.c.l.b16 %v3384
        %v4471 = vunpack.c.h.b16 %v3384
        %v4472 = vunpack.c.l.b16 %v3385
        %v4473 = vunpack.c.l.b16 %v3386
        %v4474 = vunpack.c.h.b16 %v3386
        %v4475 = vunpack.c.l.b16 %v3387
        %v4476 = vunpack.c.h.b16 %v3387
        %v4477 = vunpack.c.l.b16 %v3388
        %v4478 = vunpack.c.l.b16 %v3389
        %v4479 = vunpack.c.h.b16 %v3389
        %v4480 = vunpack.c.l.b16 %v3390
        %v4481 = vunpack.c.h.b16 %v3390
        %v4482 = vunpack.c.l.b16 %v3391
        %v4483 = vunpack.c.l.b16 %v3392
        %v4484 = vunpack.c.h.b16 %v3392
        %v4485 = vunpack.c.l.b16 %v3393
        %v4486 = vunpack.c.h.b16 %v3393
        %v4487 = vunpack.c.l.b16 %v3394
        %v4488 = vunpack.c.l.b16 %v3395
        %v4489 = vunpack.c.h.b16 %v3395
        %v4490 = vunpack.c.l.b16 %v3396
        %v4491 = vunpack.c.h.b16 %v3396
        %v4492 = vunpack.c.l.b16 %v3397
        %v4493 = vunpack.c.l.b16 %v3398
        %v4494 = vunpack.c.h.b16 %v3398
        %v4495 = vunpack.c.l.b16 %v3399
        %v4496 = vunpack.c.h.b16 %v3399
        %v4497 = vunpack.c.l.b16 %v3400
        %v4498 = vunpack.c.l.b16 %v3401
        %v4499 = vunpack.c.h.b16 %v3401
        %v4500 = vunpack.c.l.b16 %v3402
        %v4501 = vunpack.c.h.b16 %v3402
        %v4502 = vunpack.c.l.b16 %v3403
        %v4503 = vpack.c.b16 %v3868, %v3863
        %v4504 = vpack.c.b16 %v3869, %v3864
        %v4505 = vpack.c.b16 %v3870, %v3865
        %v4506 = vpack.c.b16 %v3871, %v3866
        %v4507 = vpack.c.b16 %v3872, %v3867
        %v4508 = vpack.c.b16 %v3878, %v3873
        %v4509 = vpack.c.b16 %v3879, %v3874
        %v4510 = vpack.c.b16 %v3880, %v3875
        %v4511 = vpack.c.b16 %v3881, %v3876
        %v4512 = vpack.c.b16 %v3882, %v3877
        %v4513 = vpack.c.b16 %v3888, %v3883
        %v4514 = vpack.c.b16 %v3889, %v3884
        %v4515 = vpack.c.b16 %v3890, %v3885
        %v4516 = vpack.c.b16 %v3891, %v3886
        %v4517 = vpack.c.b16 %v3892, %v3887
        %v4518 = vpack.c.b16 %v3898, %v3893
        %v4519 = vpack.c.b16 %v3899, %v3894
        %v4520 = vpack.c.b16 %v3900, %v3895
        %v4521 = vpack.c.b16 %v3901, %v3896
        %v4522 = vpack.c.b16 %v3902, %v3897
        %v4523 = vpack.c.b16 %v3908, %v3903
        %v4524 = vpack.c.b16 %v3909, %v3904
        %v4525 = vpack.c.b16 %v3910, %v3905
        %v4526 = vpack.c.b16 %v3911, %v3906
        %v4527 = vpack.c.b16 %v3912, %v3907
        %v4528 = vpack.c.b16 %v3918, %v3913
        %v4529 = vpack.c.b16 %v3919, %v3914
        %v4530 = vpack.c.b16 %v3920, %v3915
        %v4531 = vpack.c.b16 %v3921, %v3916
        %v4532 = vpack.c.b16 %v3922, %v3917
        %v4533 = vpack.c.b16 %v3928, %v3923
        %v4534 = vpack.c.b16 %v3929, %v3924
        %v4535 = vpack.c.b16 %v3930, %v3925
        %v4536 = vpack.c.b16 %v3931, %v3926
        %v4537 = vpack.c.b16 %v3932, %v3927
        %v4538 = vpack.c.b16 %v3938, %v3933
        %v4539 = vpack.c.b16 %v3939, %v3934
        %v4540 = vpack.c.b16 %v3940, %v3935
        %v4541 = vpack.c.b16 %v3941, %v3936
        %v4542 = vpack.c.b16 %v3942, %v3937
        %v4543 = vpack.c.b16 %v3948, %v3943
        %v4544 = vpack.c.b16 %v3949, %v3944
        %v4545 = vpack.c.b16 %v3950, %v3945
        %v4546 = vpack.c.b16 %v3951, %v3946
        %v4547 = vpack.c.b16 %v3952, %v3947
        %v4548 = vpack.c.b16 %v3958, %v3953
        %v4549 = vpack.c.b16 %v3959, %v3954
        %v4550 = vpack.c.b16 %v3960, %v3955
        %v4551 = vpack.c.b16 %v3961, %v3956
        %v4552 = vpack.c.b16 %v3962, %v3957
        %v4553 = vpack.c.b16 %v3968, %v3963
        %v4554 = vpack.c.b16 %v3969, %v3964
        %v4555 = vpack.c.b16 %v3970, %v3965
        %v4556 = vpack.c.b16 %v3971, %v3966
        %v4557 = vpack.c.b16 %v3972, %v3967
        %v4558 = vpack.c.b16 %v3978, %v3973
        %v4559 = vpack.c.b16 %v3979, %v3974
        %v4560 = vpack.c.b16 %v3980, %v3975
        %v4561 = vpack.c.b16 %v3981, %v3976
        %v4562 = vpack.c.b16 %v3982, %v3977
        %v4563 = vpack.c.b16 %v3988, %v3983
        %v4564 = vpack.c.b16 %v3989, %v3984
        %v4565 = vpack.c.b16 %v3990, %v3985
        %v4566 = vpack.c.b16 %v3991, %v3986
        %v4567 = vpack.c.b16 %v3992, %v3987
        %v4568 = vpack.c.b16 %v3998, %v3993
        %v4569 = vpack.c.b16 %v3999, %v3994
        %v4570 = vpack.c.b16 %v4000, %v3995
        %v4571 = vpack.c.b16 %v4001, %v3996
        %v4572 = vpack.c.b16 %v4002, %v3997
        %v4573 = vpack.c.b16 %v4008, %v4003
        %v4574 = vpack.c.b16 %v4009, %v4004
        %v4575 = vpack.c.b16 %v4010, %v4005
        %v4576 = vpack.c.b16 %v4011, %v4006
        %v4577 = vpack.c.b16 %v4012, %v4007
        %v4578 = vpack.c.b16 %v4018, %v4013
        %v4579 = vpack.c.b16 %v4019, %v4014
        %v4580 = vpack.c.b16 %v4020, %v4015
        %v4581 = vpack.c.b16 %v4021, %v4016
        %v4582 = vpack.c.b16 %v4022, %v4017
        %v4583 = vpack.c.b16 %v4028, %v4023
        %v4584 = vpack.c.b16 %v4029, %v4024
        %v4585 = vpack.c.b16 %v4030, %v4025
        %v4586 = vpack.c.b16 %v4031, %v4026
        %v4587 = vpack.c.b16 %v4032, %v4027
        %v4588 = vpack.c.b16 %v4038, %v4033
        %v4589 = vpack.c.b16 %v4039, %v4034
        %v4590 = vpack.c.b16 %v4040, %v4035
        %v4591 = vpack.c.b16 %v4041, %v4036
        %v4592 = vpack.c.b16 %v4042, %v4037
        %v4593 = vpack.c.b16 %v4048, %v4043
        %v4594 = vpack.c.b16 %v4049, %v4044
        %v4595 = vpack.c.b16 %v4050, %v4045
        %v4596 = vpack.c.b16 %v4051, %v4046
        %v4597 = vpack.c.b16 %v4052, %v4047
        %v4598 = vpack.c.b16 %v4058, %v4053
        %v4599 = vpack.c.b16 %v4059, %v4054
        %v4600 = vpack.c.b16 %v4060, %v4055
        %v4601 = vpack.c.b16 %v4061, %v4056
        %v4602 = vpack.c.b16 %v4062, %v4057
        %v4603 = vpack.c.b16 %v4068, %v4063
        %v4604 = vpack.c.b16 %v4069, %v4064
        %v4605 = vpack.c.b16 %v4070, %v4065
        %v4606 = vpack.c.b16 %v4071, %v4066
        %v4607 = vpack.c.b16 %v4072, %v4067
        %v4608 = vpack.c.b16 %v4078, %v4073
        %v4609 = vpack.c.b16 %v4079, %v4074
        %v4610 = vpack.c.b16 %v4080, %v4075
        %v4611 = vpack.c.b16 %v4081, %v4076
        %v4612 = vpack.c.b16 %v4082, %v4077
        %v4613 = vpack.c.b16 %v4088, %v4083
        %v4614 = vpack.c.b16 %v4089, %v4084
        %v4615 = vpack.c.b16 %v4090, %v4085
        %v4616 = vpack.c.b16 %v4091, %v4086
        %v4617 = vpack.c.b16 %v4092, %v4087
        %v4618 = vpack.c.b16 %v4098, %v4093
        %v4619 = vpack.c.b16 %v4099, %v4094
        %v4620 = vpack.c.b16 %v4100, %v4095
        %v4621 = vpack.c.b16 %v4101, %v4096
        %v4622 = vpack.c.b16 %v4102, %v4097
        %v4623 = vpack.c.b16 %v4108, %v4103
        %v4624 = vpack.c.b16 %v4109, %v4104
        %v4625 = vpack.c.b16 %v4110, %v4105
        %v4626 = vpack.c.b16 %v4111, %v4106
        %v4627 = vpack.c.b16 %v4112, %v4107
        %v4628 = vpack.c.b16 %v4118, %v4113
        %v4629 = vpack.c.b16 %v4119, %v4114
        %v4630 = vpack.c.b16 %v4120, %v4115
        %v4631 = vpack.c.b16 %v4121, %v4116
        %v4632 = vpack.c.b16 %v4122, %v4117
        %v4633 = vpack.c.b16 %v4128, %v4123
        %v4634 = vpack.c.b16 %v4129, %v4124
        %v4635 = vpack.c.b16 %v4130, %v4125
        %v4636 = vpack.c.b16 %v4131, %v4126
        %v4637 = vpack.c.b16 %v4132, %v4127
        %v4638 = vpack.c.b16 %v4138, %v4133
        %v4639 = vpack.c.b16 %v4139, %v4134
        %v4640 = vpack.c.b16 %v4140, %v4135
        %v4641 = vpack.c.b16 %v4141, %v4136
        %v4642 = vpack.c.b16 %v4142, %v4137
        %v4643 = vpack.c.b16 %v4148, %v4143
        %v4644 = vpack.c.b16 %v4149, %v4144
        %v4645 = vpack.c.b16 %v4150, %v4145
        %v4646 = vpack.c.b16 %v4151, %v4146
        %v4647 = vpack.c.b16 %v4152, %v4147
        %v4648 = vpack.c.b16 %v4158, %v4153
        %v4649 = vpack.c.b16 %v4159, %v4154
        %v4650 = vpack.c.b16 %v4160, %v4155
        %v4651 = vpack.c.b16 %v4161, %v4156
        %v4652 = vpack.c.b16 %v4162, %v4157
        %v4653 = vpack.c.b16 %v4168, %v4163
        %v4654 = vpack.c.b16 %v4169, %v4164
        %v4655 = vpack.c.b16 %v4170, %v4165
        %v4656 = vpack.c.b16 %v4171, %v4166
        %v4657 = vpack.c.b16 %v4172, %v4167
        %v4658 = vpack.c.b16 %v4178, %v4173
        %v4659 = vpack.c.b16 %v4179, %v4174
        %v4660 = vpack.c.b16 %v4180, %v4175
        %v4661 = vpack.c.b16 %v4181, %v4176
        %v4662 = vpack.c.b16 %v4182, %v4177
        %v4663 = vpack.c.b16 %v4188, %v4183
        %v4664 = vpack.c.b16 %v4189, %v4184
        %v4665 = vpack.c.b16 %v4190, %v4185
        %v4666 = vpack.c.b16 %v4191, %v4186
        %v4667 = vpack.c.b16 %v4192, %v4187
        %v4668 = vpack.c.b16 %v4198, %v4193
        %v4669 = vpack.c.b16 %v4199, %v4194
        %v4670 = vpack.c.b16 %v4200, %v4195
        %v4671 = vpack.c.b16 %v4201, %v4196
        %v4672 = vpack.c.b16 %v4202, %v4197
        %v4673 = vpack.c.b16 %v4208, %v4203
        %v4674 = vpack.c.b16 %v4209, %v4204
        %v4675 = vpack.c.b16 %v4210, %v4205
        %v4676 = vpack.c.b16 %v4211, %v4206
        %v4677 = vpack.c.b16 %v4212, %v4207
        %v4678 = vpack.c.b16 %v4218, %v4213
        %v4679 = vpack.c.b16 %v4219, %v4214
        %v4680 = vpack.c.b16 %v4220, %v4215
        %v4681 = vpack.c.b16 %v4221, %v4216
        %v4682 = vpack.c.b16 %v4222, %v4217
        %v4683 = vpack.c.b16 %v4228, %v4223
        %v4684 = vpack.c.b16 %v4229, %v4224
        %v4685 = vpack.c.b16 %v4230, %v4225
        %v4686 = vpack.c.b16 %v4231, %v4226
        %v4687 = vpack.c.b16 %v4232, %v4227
        %v4688 = vpack.c.b16 %v4238, %v4233
        %v4689 = vpack.c.b16 %v4239, %v4234
        %v4690 = vpack.c.b16 %v4240, %v4235
        %v4691 = vpack.c.b16 %v4241, %v4236
        %v4692 = vpack.c.b16 %v4242, %v4237
        %v4693 = vpack.c.b16 %v4248, %v4243
        %v4694 = vpack.c.b16 %v4249, %v4244
        %v4695 = vpack.c.b16 %v4250, %v4245
        %v4696 = vpack.c.b16 %v4251, %v4246
        %v4697 = vpack.c.b16 %v4252, %v4247
        %v4698 = vpack.c.b16 %v4258, %v4253
        %v4699 = vpack.c.b16 %v4259, %v4254
        %v4700 = vpack.c.b16 %v4260, %v4255
        %v4701 = vpack.c.b16 %v4261, %v4256
        %v4702 = vpack.c.b16 %v4262, %v4257
        %v4703 = vpack.c.b16 %v4268, %v4263
        %v4704 = vpack.c.b16 %v4269, %v4264
        %v4705 = vpack.c.b16 %v4270, %v4265
        %v4706 = vpack.c.b16 %v4271, %v4266
        %v4707 = vpack.c.b16 %v4272, %v4267
        %v4708 = vpack.c.b16 %v4278, %v4273
        %v4709 = vpack.c.b16 %v4279, %v4274
        %v4710 = vpack.c.b16 %v4280, %v4275
        %v4711 = vpack.c.b16 %v4281, %v4276
        %v4712 = vpack.c.b16 %v4282, %v4277
        %v4713 = vpack.c.b16 %v4288, %v4283
        %v4714 = vpack.c.b16 %v4289, %v4284
        %v4715 = vpack.c.b16 %v4290, %v4285
        %v4716 = vpack.c.b16 %v4291, %v4286
        %v4717 = vpack.c.b16 %v4292, %v4287
        %v4718 = vpack.c.b16 %v4298, %v4293
        %v4719 = vpack.c.b16 %v4299, %v4294
        %v4720 = vpack.c.b16 %v4300, %v4295
        %v4721 = vpack.c.b16 %v4301, %v4296
        %v4722 = vpack.c.b16 %v4302, %v4297
        %v4723 = vpack.c.b16 %v4308, %v4303
        %v4724 = vpack.c.b16 %v4309, %v4304
        %v4725 = vpack.c.b16 %v4310, %v4305
        %v4726 = vpack.c.b16 %v4311, %v4306
        %v4727 = vpack.c.b16 %v4312, %v4307
        %v4728 = vpack.c.b16 %v4318, %v4313
        %v4729 = vpack.c.b16 %v4319, %v4314
        %v4730 = vpack.c.b16 %v4320, %v4315
        %v4731 = vpack.c.b16 %v4321, %v4316
        %v4732 = vpack.c.b16 %v4322, %v4317
        %v4733 = vpack.c.b16 %v4328, %v4323
        %v4734 = vpack.c.b16 %v4329, %v4324
        %v4735 = vpack.c.b16 %v4330, %v4325
        %v4736 = vpack.c.b16 %v4331, %v4326
        %v4737 = vpack.c.b16 %v4332, %v4327
        %v4738 = vpack.c.b16 %v4338, %v4333
        %v4739 = vpack.c.b16 %v4339, %v4334
        %v4740 = vpack.c.b16 %v4340, %v4335
        %v4741 = vpack.c.b16 %v4341, %v4336
        %v4742 = vpack.c.b16 %v4342, %v4337
        %v4743 = vpack.c.b16 %v4348, %v4343
        %v4744 = vpack.c.b16 %v4349, %v4344
        %v4745 = vpack.c.b16 %v4350, %v4345
        %v4746 = vpack.c.b16 %v4351, %v4346
        %v4747 = vpack.c.b16 %v4352, %v4347
        %v4748 = vpack.c.b16 %v4358, %v4353
        %v4749 = vpack.c.b16 %v4359, %v4354
        %v4750 = vpack.c.b16 %v4360, %v4355
        %v4751 = vpack.c.b16 %v4361, %v4356
        %v4752 = vpack.c.b16 %v4362, %v4357
        %v4753 = vpack.c.b16 %v4368, %v4363
        %v4754 = vpack.c.b16 %v4369, %v4364
        %v4755 = vpack.c.b16 %v4370, %v4365
        %v4756 = vpack.c.b16 %v4371, %v4366
        %v4757 = vpack.c.b16 %v4372, %v4367
        %v4758 = vpack.c.b16 %v4378, %v4373
        %v4759 = vpack.c.b16 %v4379, %v4374
        %v4760 = vpack.c.b16 %v4380, %v4375
        %v4761 = vpack.c.b16 %v4381, %v4376
        %v4762 = vpack.c.b16 %v4382, %v4377
        %v4763 = vpack.c.b16 %v4388, %v4383
        %v4764 = vpack.c.b16 %v4389, %v4384
        %v4765 = vpack.c.b16 %v4390, %v4385
        %v4766 = vpack.c.b16 %v4391, %v4386
        %v4767 = vpack.c.b16 %v4392, %v4387
        %v4768 = vpack.c.b16 %v4398, %v4393
        %v4769 = vpack.c.b16 %v4399, %v4394
        %v4770 = vpack.c.b16 %v4400, %v4395
        %v4771 = vpack.c.b16 %v4401, %v4396
        %v4772 = vpack.c.b16 %v4402, %v4397
        %v4773 = vpack.c.b16 %v4408, %v4403
        %v4774 = vpack.c.b16 %v4409, %v4404
        %v4775 = vpack.c.b16 %v4410, %v4405
        %v4776 = vpack.c.b16 %v4411, %v4406
        %v4777 = vpack.c.b16 %v4412, %v4407
        %v4778 = vpack.c.b16 %v4418, %v4413
        %v4779 = vpack.c.b16 %v4419, %v4414
        %v4780 = vpack.c.b16 %v4420, %v4415
        %v4781 = vpack.c.b16 %v4421, %v4416
        %v4782 = vpack.c.b16 %v4422, %v4417
        %v4783 = vpack.c.b16 %v4428, %v4423
        %v4784 = vpack.c.b16 %v4429, %v4424
        %v4785 = vpack.c.b16 %v4430, %v4425
        %v4786 = vpack.c.b16 %v4431, %v4426
        %v4787 = vpack.c.b16 %v4432, %v4427
        %v4788 = vpack.c.b16 %v4438, %v4433
        %v4789 = vpack.c.b16 %v4439, %v4434
        %v4790 = vpack.c.b16 %v4440, %v4435
        %v4791 = vpack.c.b16 %v4441, %v4436
        %v4792 = vpack.c.b16 %v4442, %v4437
        %v4793 = vpack.c.b16 %v4448, %v4443
        %v4794 = vpack.c.b16 %v4449, %v4444
        %v4795 = vpack.c.b16 %v4450, %v4445
        %v4796 = vpack.c.b16 %v4451, %v4446
        %v4797 = vpack.c.b16 %v4452, %v4447
        %v4798 = vpack.c.b16 %v4458, %v4453
        %v4799 = vpack.c.b16 %v4459, %v4454
        %v4800 = vpack.c.b16 %v4460, %v4455
        %v4801 = vpack.c.b16 %v4461, %v4456
        %v4802 = vpack.c.b16 %v4462, %v4457
        %v4803 = vpack.c.b16 %v4468, %v4463
        %v4804 = vpack.c.b16 %v4469, %v4464
        %v4805 = vpack.c.b16 %v4470, %v4465
        %v4806 = vpack.c.b16 %v4471, %v4466
        %v4807 = vpack.c.b16 %v4472, %v4467
        %v4808 = vpack.c.b16 %v4478, %v4473
        %v4809 = vpack.c.b16 %v4479, %v4474
        %v4810 = vpack.c.b16 %v4480, %v4475
        %v4811 = vpack.c.b16 %v4481, %v4476
        %v4812 = vpack.c.b16 %v4482, %v4477
        %v4813 = vpack.c.b16 %v4488, %v4483
        %v4814 = vpack.c.b16 %v4489, %v4484
        %v4815 = vpack.c.b16 %v4490, %v4485
        %v4816 = vpack.c.b16 %v4491, %v4486
        %v4817 = vpack.c.b16 %v4492, %v4487
        %v4818 = vpack.c.b16 %v4498, %v4493
        %v4819 = vpack.c.b16 %v4499, %v4494
        %v4820 = vpack.c.b16 %v4500, %v4495
        %v4821 = vpack.c.b16 %v4501, %v4496
        %v4822 = vpack.c.b16 %v4502, %v4497
        %v5154 = vunpack.c.l.b16 %v3404
        %v5155 = vunpack.c.l.b16 %v3405
        %v5156 = vunpack.c.l.b16 %v3406
        %v5157 = vunpack.c.l.b16 %v3407
        %v5158 = vunpack.c.l.b16 %v3408
        %v5159 = vunpack.c.l.b16 %v3409
        %v5160 = vunpack.c.l.b16 %v3410
        %v5161 = vunpack.c.l.b16 %v3411
        %v5162 = vunpack.c.l.b16 %v3412
        %v5163 = vunpack.c.l.b16 %v3413
        %v5164 = vunpack.c.l.b16 %v3414
        %v5165 = vunpack.c.l.b16 %v3415
        %v5166 = vunpack.c.l.b16 %v3416
        %v5167 = vunpack.c.l.b16 %v3417
        %v5168 = vunpack.c.l.b16 %v3418
        %v5169 = vunpack.c.l.b16 %v3419
        %v5170 = vunpack.c.l.b16 %v3420
        %v5171 = vunpack.c.l.b16 %v3421
        %v5172 = vunpack.c.l.b16 %v3422
        %v5173 = vunpack.c.l.b16 %v3423
        %v5174 = vunpack.c.l.b16 %v3424
        %v5175 = vunpack.c.l.b16 %v3425
        %v5176 = vunpack.c.l.b16 %v3426
        %v5177 = vunpack.c.l.b16 %v3427
        %v5178 = vunpack.c.l.b16 %v3428
        %v5179 = vunpack.c.l.b16 %v3429
        %v5180 = vunpack.c.l.b16 %v3430
        %v5181 = vunpack.c.l.b16 %v3431
        %v5182 = vunpack.c.l.b16 %v3432
        %v5183 = vunpack.c.l.b16 %v3433
        %v5184 = vunpack.c.l.b16 %v3434
        %v5185 = vunpack.c.l.b16 %v3435
        %v5186 = vunpack.c.l.b16 %v3436
        %v5187 = vunpack.c.l.b16 %v3437
        %v5188 = vunpack.c.l.b16 %v3438
        %v5189 = vunpack.c.l.b16 %v3439
        %v5190 = vunpack.c.l.b16 %v3440
        %v5191 = vunpack.c.l.b16 %v3441
        %v5192 = vunpack.c.l.b16 %v3442
        %v5193 = vunpack.c.l.b16 %v3443
        %v5194 = vunpack.c.l.b16 %v3444
        %v5195 = vunpack.c.l.b16 %v3445
        %v5196 = vunpack.c.l.b16 %v3446
        %v5197 = vunpack.c.l.b16 %v3447
        %v5198 = vunpack.c.l.b16 %v3448
        %v5199 = vunpack.c.l.b16 %v3449
        %v5200 = vunpack.c.l.b16 %v3450
        %v5201 = vunpack.c.l.b16 %v3451
        %v5202 = vunpack.c.l.b16 %v3452
        %v5203 = vunpack.c.l.b16 %v3453
        %v5204 = vunpack.c.l.b16 %v3454
        %v5205 = vunpack.c.l.b16 %v3455
        %v5206 = vunpack.c.l.b16 %v3456
        %v5207 = vunpack.c.l.b16 %v3457
        %v5208 = vunpack.c.l.b16 %v3458
        %v5209 = vunpack.c.l.b16 %v3459
        %v5210 = vunpack.c.l.b16 %v3460
        %v5211 = vunpack.c.l.b16 %v3461
        %v5212 = vunpack.c.l.b16 %v3462
        %v5213 = vunpack.c.l.b16 %v3463
        %v5214 = vunpack.c.l.b16 %v3464
        %v5215 = vunpack.c.l.b16 %v3465
        %v5216 = vunpack.c.l.b16 %v3466
        %v5217 = vunpack.c.l.b16 %v3467
        %v5218 = vunpack.c.l.b16 %v3468
        %v5219 = vunpack.c.l.b16 %v3469
        %v5220 = vunpack.c.l.b16 %v3470
        %v5221 = vunpack.c.l.b16 %v3471
        %v5222 = vunpack.c.l.b16 %v3472
        %v5223 = vunpack.c.l.b16 %v3473
        %v5224 = vunpack.c.l.b16 %v3474
        %v5225 = vunpack.c.l.b16 %v3475
        %v5226 = vunpack.c.l.b16 %v3476
        %v5227 = vunpack.c.l.b16 %v3477
        %v5228 = vunpack.c.l.b16 %v3478
        %v5229 = vpack.c.b16 %v5155, %v5154
        %v5230 = vpack.c.b16 %v5157, %v5156
        %v5231 = vpack.c.b16 %v5159, %v5158
        %v5232 = vpack.c.b16 %v5161, %v5160
        %v5233 = vpack.c.b16 %v5163, %v5162
        %v5234 = vpack.c.b16 %v5165, %v5164
        %v5235 = vpack.c.b16 %v5167, %v5166
        %v5236 = vpack.c.b16 %v5169, %v5168
        %v5237 = vpack.c.b16 %v5171, %v5170
        %v5238 = vpack.c.b16 %v5173, %v5172
        %v5239 = vpack.c.b16 %v5175, %v5174
        %v5240 = vpack.c.b16 %v5177, %v5176
        %v5241 = vpack.c.b16 %v5179, %v5178
        %v5242 = vpack.c.b16 %v5181, %v5180
        %v5243 = vpack.c.b16 %v5183, %v5182
        %v5244 = vpack.c.b16 %v5185, %v5184
        %v5245 = vpack.c.b16 %v5187, %v5186
        %v5246 = vpack.c.b16 %v5189, %v5188
        %v5247 = vpack.c.b16 %v5191, %v5190
        %v5248 = vpack.c.b16 %v5193, %v5192
        %v5249 = vpack.c.b16 %v5195, %v5194
        %v5250 = vpack.c.b16 %v5197, %v5196
        %v5251 = vpack.c.b16 %v5199, %v5198
        %v5252 = vpack.c.b16 %v5201, %v5200
        %v5253 = vpack.c.b16 %v5203, %v5202
        %v5254 = vpack.c.b16 %v5205, %v5204
        %v5255 = vpack.c.b16 %v5207, %v5206
        %v5256 = vpack.c.b16 %v5209, %v5208
        %v5257 = vpack.c.b16 %v5211, %v5210
        %v5258 = vpack.c.b16 %v5213, %v5212
        %v5259 = vpack.c.b16 %v5215, %v5214
        %v5260 = vpack.c.b16 %v5217, %v5216
        %v5261 = vpack.c.b16 %v5219, %v5218
        %v5262 = vpack.c.b16 %v5221, %v5220
        %v5263 = vpack.c.b16 %v5223, %v5222
        %v5264 = vpack.c.b16 %v5225, %v5224
        %v5265 = vpack.c.b16 %v5227, %v5226
        %v5266 = vpack.c.b16 %v5228, %v5228
        %vm5304 = vcmask 719872
        %v5306 = vsel %vm5304, %v4507, 0
        %v5309 = vsel %vm5304, %v4512, 0
        %v5312 = vsel %vm5304, %v4517, 0
        %v5315 = vsel %vm5304, %v4522, 0
        %v5318 = vsel %vm5304, %v4527, 0
        %v5321 = vsel %vm5304, %v4532, 0
        %v5324 = vsel %vm5304, %v4537, 0
        %v5327 = vsel %vm5304, %v4542, 0
        %v5330 = vsel %vm5304, %v4547, 0
        %v5333 = vsel %vm5304, %v4552, 0
        %v5336 = vsel %vm5304, %v4557, 0
        %v5339 = vsel %vm5304, %v4562, 0
        %v5342 = vsel %vm5304, %v4567, 0
        %v5345 = vsel %vm5304, %v4572, 0
        %v5348 = vsel %vm5304, %v4577, 0
        %v5351 = vsel %vm5304, %v4582, 0
        %v5354 = vsel %vm5304, %v4587, 0
        %v5357 = vsel %vm5304, %v4592, 0
        %v5360 = vsel %vm5304, %v4597, 0
        %v5363 = vsel %vm5304, %v4602, 0
        %v5366 = vsel %vm5304, %v4607, 0
        %v5369 = vsel %vm5304, %v4612, 0
        %v5372 = vsel %vm5304, %v4617, 0
        %v5375 = vsel %vm5304, %v4622, 0
        %v5378 = vsel %vm5304, %v4627, 0
        %v5381 = vsel %vm5304, %v4632, 0
        %v5384 = vsel %vm5304, %v4637, 0
        %v5387 = vsel %vm5304, %v4642, 0
        %v5390 = vsel %vm5304, %v4647, 0
        %v5393 = vsel %vm5304, %v4652, 0
        %v5396 = vsel %vm5304, %v4657, 0
        %v5399 = vsel %vm5304, %v4662, 0
        %v5402 = vsel %vm5304, %v4667, 0
        %v5405 = vsel %vm5304, %v4672, 0
        %v5408 = vsel %vm5304, %v4677, 0
        %v5411 = vsel %vm5304, %v4682, 0
        %v5414 = vsel %vm5304, %v4687, 0
        %v5417 = vsel %vm5304, %v4692, 0
        %v5420 = vsel %vm5304, %v4697, 0
        %v5423 = vsel %vm5304, %v4702, 0
        %v5426 = vsel %vm5304, %v4707, 0
        %v5429 = vsel %vm5304, %v4712, 0
        %v5432 = vsel %vm5304, %v4717, 0
        %v5435 = vsel %vm5304, %v4722, 0
        %v5438 = vsel %vm5304, %v4727, 0
        %v5441 = vsel %vm5304, %v4732, 0
        %v5444 = vsel %vm5304, %v4737, 0
        %v5447 = vsel %vm5304, %v4742, 0
        %v5450 = vsel %vm5304, %v4747, 0
        %v5453 = vsel %vm5304, %v4752, 0
        %v5456 = vsel %vm5304, %v4757, 0
        %v5459 = vsel %vm5304, %v4762, 0
        %v5462 = vsel %vm5304, %v4767, 0
        %v5465 = vsel %vm5304, %v4772, 0
        %v5468 = vsel %vm5304, %v4777, 0
        %v5471 = vsel %vm5304, %v4782, 0
        %v5474 = vsel %vm5304, %v4787, 0
        %v5477 = vsel %vm5304, %v4792, 0
        %v5480 = vsel %vm5304, %v4797, 0
        %v5483 = vsel %vm5304, %v4802, 0
        %v5486 = vsel %vm5304, %v4807, 0
        %v5489 = vsel %vm5304, %v4812, 0
        %v5492 = vsel %vm5304, %v4817, 0
        %v5495 = vsel %vm5304, %v4822, 0
        %vm5497 = vcmask 1043456
        %v5499 = vsel %vm5497, %v5266, 0
        %5501 = vmatpush.bf16.msra.mxu0 %v5236
        %5502 = vmatpush.bf16.msra.mxu0 %v5235
        %5503 = vmatpush.bf16.msra.mxu0 %v5234
        %5504 = vmatpush.bf16.msra.mxu0 %v5233
        %5505 = vmatpush.bf16.msra.mxu0 %v5232
        %5506 = vmatpush.bf16.msra.mxu0 %v5231
        %5507 = vmatpush.bf16.msra.mxu0 %v5230
        %5508 = vmatpush.bf16.msra.mxu0 %v5229
        %5509 = vmatmul.bf16.gmra.mxu0 %v4503
        %v5510 = vpop.f32.mrf.mxu0
        %v5511 = vadd.f32 0.0, %v5510
        %v5512 = vpop.f32.mrf.mxu0
        %v5513 = vadd.f32 0.0, %v5512
        %5514 = vmatmul.bf16.gmra.mxu0 %v4508
        %v5515 = vpop.f32.mrf.mxu0
        %v5516 = vadd.f32 0.0, %v5515
        %v5517 = vpop.f32.mrf.mxu0
        %v5518 = vadd.f32 0.0, %v5517
        %5519 = vmatmul.bf16.gmra.mxu0 %v4513
        %v5520 = vpop.f32.mrf.mxu0
        %v5521 = vadd.f32 0.0, %v5520
        %v5522 = vpop.f32.mrf.mxu0
        %v5523 = vadd.f32 0.0, %v5522
        %5524 = vmatmul.bf16.gmra.mxu0 %v4518
        %v5525 = vpop.f32.mrf.mxu0
        %v5526 = vadd.f32 0.0, %v5525
        %v5527 = vpop.f32.mrf.mxu0
        %v5528 = vadd.f32 0.0, %v5527
        %5529 = vmatmul.bf16.gmra.mxu0 %v4523
        %v5530 = vpop.f32.mrf.mxu0
        %v5531 = vadd.f32 0.0, %v5530
        %v5532 = vpop.f32.mrf.mxu0
        %v5533 = vadd.f32 0.0, %v5532
        %5534 = vmatmul.bf16.gmra.mxu0 %v4528
        %v5535 = vpop.f32.mrf.mxu0
        %v5536 = vadd.f32 0.0, %v5535
        %v5537 = vpop.f32.mrf.mxu0
        %v5538 = vadd.f32 0.0, %v5537
        %5539 = vmatmul.bf16.gmra.mxu0 %v4533
        %v5540 = vpop.f32.mrf.mxu0
        %v5541 = vadd.f32 0.0, %v5540
        %v5542 = vpop.f32.mrf.mxu0
        %v5543 = vadd.f32 0.0, %v5542
        %5544 = vmatmul.bf16.gmra.mxu0 %v4538
        %v5545 = vpop.f32.mrf.mxu0
        %v5546 = vadd.f32 0.0, %v5545
        %v5547 = vpop.f32.mrf.mxu0
        %v5548 = vadd.f32 0.0, %v5547
        %5549 = vmatmul.bf16.gmra.mxu0 %v4543
        %v5550 = vpop.f32.mrf.mxu0
        %v5551 = vadd.f32 0.0, %v5550
        %v5552 = vpop.f32.mrf.mxu0
        %v5553 = vadd.f32 0.0, %v5552
        %5554 = vmatmul.bf16.gmra.mxu0 %v4548
        %v5555 = vpop.f32.mrf.mxu0
        %v5556 = vadd.f32 0.0, %v5555
        %v5557 = vpop.f32.mrf.mxu0
        %v5558 = vadd.f32 0.0, %v5557
        %5559 = vmatmul.bf16.gmra.mxu0 %v4553
        %v5560 = vpop.f32.mrf.mxu0
        %v5561 = vadd.f32 0.0, %v5560
        %v5562 = vpop.f32.mrf.mxu0
        %v5563 = vadd.f32 0.0, %v5562
        %5564 = vmatmul.bf16.gmra.mxu0 %v4558
        %v5565 = vpop.f32.mrf.mxu0
        %v5566 = vadd.f32 0.0, %v5565
        %v5567 = vpop.f32.mrf.mxu0
        %v5568 = vadd.f32 0.0, %v5567
        %5569 = vmatmul.bf16.gmra.mxu0 %v4563
        %v5570 = vpop.f32.mrf.mxu0
        %v5571 = vadd.f32 0.0, %v5570
        %v5572 = vpop.f32.mrf.mxu0
        %v5573 = vadd.f32 0.0, %v5572
        %5574 = vmatmul.bf16.gmra.mxu0 %v4568
        %v5575 = vpop.f32.mrf.mxu0
        %v5576 = vadd.f32 0.0, %v5575
        %v5577 = vpop.f32.mrf.mxu0
        %v5578 = vadd.f32 0.0, %v5577
        %5579 = vmatmul.bf16.gmra.mxu0 %v4573
        %v5580 = vpop.f32.mrf.mxu0
        %v5581 = vadd.f32 0.0, %v5580
        %v5582 = vpop.f32.mrf.mxu0
        %v5583 = vadd.f32 0.0, %v5582
        %5584 = vmatmul.bf16.gmra.mxu0 %v4578
        %v5585 = vpop.f32.mrf.mxu0
        %v5586 = vadd.f32 0.0, %v5585
        %v5587 = vpop.f32.mrf.mxu0
        %v5588 = vadd.f32 0.0, %v5587
        %5589 = vmatmul.bf16.gmra.mxu0 %v4583
        %v5590 = vpop.f32.mrf.mxu0
        %v5591 = vadd.f32 0.0, %v5590
        %v5592 = vpop.f32.mrf.mxu0
        %v5593 = vadd.f32 0.0, %v5592
        %5594 = vmatmul.bf16.gmra.mxu0 %v4588
        %v5595 = vpop.f32.mrf.mxu0
        %v5596 = vadd.f32 0.0, %v5595
        %v5597 = vpop.f32.mrf.mxu0
        %v5598 = vadd.f32 0.0, %v5597
        %5599 = vmatmul.bf16.gmra.mxu0 %v4593
        %v5600 = vpop.f32.mrf.mxu0
        %v5601 = vadd.f32 0.0, %v5600
        %v5602 = vpop.f32.mrf.mxu0
        %v5603 = vadd.f32 0.0, %v5602
        %5604 = vmatmul.bf16.gmra.mxu0 %v4598
        %v5605 = vpop.f32.mrf.mxu0
        %v5606 = vadd.f32 0.0, %v5605
        %v5607 = vpop.f32.mrf.mxu0
        %v5608 = vadd.f32 0.0, %v5607
        %5609 = vmatmul.bf16.gmra.mxu0 %v4603
        %v5610 = vpop.f32.mrf.mxu0
        %v5611 = vadd.f32 0.0, %v5610
        %v5612 = vpop.f32.mrf.mxu0
        %v5613 = vadd.f32 0.0, %v5612
        %5614 = vmatmul.bf16.gmra.mxu0 %v4608
        %v5615 = vpop.f32.mrf.mxu0
        %v5616 = vadd.f32 0.0, %v5615
        %v5617 = vpop.f32.mrf.mxu0
        %v5618 = vadd.f32 0.0, %v5617
        %5619 = vmatmul.bf16.gmra.mxu0 %v4613
        %v5620 = vpop.f32.mrf.mxu0
        %v5621 = vadd.f32 0.0, %v5620
        %v5622 = vpop.f32.mrf.mxu0
        %v5623 = vadd.f32 0.0, %v5622
        %5624 = vmatmul.bf16.gmra.mxu0 %v4618
        %v5625 = vpop.f32.mrf.mxu0
        %v5626 = vadd.f32 0.0, %v5625
        %v5627 = vpop.f32.mrf.mxu0
        %v5628 = vadd.f32 0.0, %v5627
        %5629 = vmatmul.bf16.gmra.mxu0 %v4623
        %v5630 = vpop.f32.mrf.mxu0
        %v5631 = vadd.f32 0.0, %v5630
        %v5632 = vpop.f32.mrf.mxu0
        %v5633 = vadd.f32 0.0, %v5632
        %5634 = vmatmul.bf16.gmra.mxu0 %v4628
        %v5635 = vpop.f32.mrf.mxu0
        %v5636 = vadd.f32 0.0, %v5635
        %v5637 = vpop.f32.mrf.mxu0
        %v5638 = vadd.f32 0.0, %v5637
        %5639 = vmatmul.bf16.gmra.mxu0 %v4633
        %v5640 = vpop.f32.mrf.mxu0
        %v5641 = vadd.f32 0.0, %v5640
        %v5642 = vpop.f32.mrf.mxu0
        %v5643 = vadd.f32 0.0, %v5642
        %5644 = vmatmul.bf16.gmra.mxu0 %v4638
        %v5645 = vpop.f32.mrf.mxu0
        %v5646 = vadd.f32 0.0, %v5645
        %v5647 = vpop.f32.mrf.mxu0
        %v5648 = vadd.f32 0.0, %v5647
        %5649 = vmatmul.bf16.gmra.mxu0 %v4643
        %v5650 = vpop.f32.mrf.mxu0
        %v5651 = vadd.f32 0.0, %v5650
        %v5652 = vpop.f32.mrf.mxu0
        %v5653 = vadd.f32 0.0, %v5652
        %5654 = vmatmul.bf16.gmra.mxu0 %v4648
        %v5655 = vpop.f32.mrf.mxu0
        %v5656 = vadd.f32 0.0, %v5655
        %v5657 = vpop.f32.mrf.mxu0
        %v5658 = vadd.f32 0.0, %v5657
        %5659 = vmatmul.bf16.gmra.mxu0 %v4653
        %v5660 = vpop.f32.mrf.mxu0
        %v5661 = vadd.f32 0.0, %v5660
        %v5662 = vpop.f32.mrf.mxu0
        %v5663 = vadd.f32 0.0, %v5662
        %5664 = vmatmul.bf16.gmra.mxu0 %v4658
        %v5665 = vpop.f32.mrf.mxu0
        %v5666 = vadd.f32 0.0, %v5665
        %v5667 = vpop.f32.mrf.mxu0
        %v5668 = vadd.f32 0.0, %v5667
        %5669 = vmatmul.bf16.gmra.mxu0 %v4663
        %v5670 = vpop.f32.mrf.mxu0
        %v5671 = vadd.f32 0.0, %v5670
        %v5672 = vpop.f32.mrf.mxu0
        %v5673 = vadd.f32 0.0, %v5672
        %5674 = vmatmul.bf16.gmra.mxu0 %v4668
        %v5675 = vpop.f32.mrf.mxu0
        %v5676 = vadd.f32 0.0, %v5675
        %v5677 = vpop.f32.mrf.mxu0
        %v5678 = vadd.f32 0.0, %v5677
        %5679 = vmatmul.bf16.gmra.mxu0 %v4673
        %v5680 = vpop.f32.mrf.mxu0
        %v5681 = vadd.f32 0.0, %v5680
        %v5682 = vpop.f32.mrf.mxu0
        %v5683 = vadd.f32 0.0, %v5682
        %5684 = vmatmul.bf16.gmra.mxu0 %v4678
        %v5685 = vpop.f32.mrf.mxu0
        %v5686 = vadd.f32 0.0, %v5685
        %v5687 = vpop.f32.mrf.mxu0
        %v5688 = vadd.f32 0.0, %v5687
        %5689 = vmatmul.bf16.gmra.mxu0 %v4683
        %v5690 = vpop.f32.mrf.mxu0
        %v5691 = vadd.f32 0.0, %v5690
        %v5692 = vpop.f32.mrf.mxu0
        %v5693 = vadd.f32 0.0, %v5692
        %5694 = vmatmul.bf16.gmra.mxu0 %v4688
        %v5695 = vpop.f32.mrf.mxu0
        %v5696 = vadd.f32 0.0, %v5695
        %v5697 = vpop.f32.mrf.mxu0
        %v5698 = vadd.f32 0.0, %v5697
        %5699 = vmatmul.bf16.gmra.mxu0 %v4693
        %v5700 = vpop.f32.mrf.mxu0
        %v5701 = vadd.f32 0.0, %v5700
        %v5702 = vpop.f32.mrf.mxu0
        %v5703 = vadd.f32 0.0, %v5702
        %5704 = vmatmul.bf16.gmra.mxu0 %v4698
        %v5705 = vpop.f32.mrf.mxu0
        %v5706 = vadd.f32 0.0, %v5705
        %v5707 = vpop.f32.mrf.mxu0
        %v5708 = vadd.f32 0.0, %v5707
        %5709 = vmatmul.bf16.gmra.mxu0 %v4703
        %v5710 = vpop.f32.mrf.mxu0
        %v5711 = vadd.f32 0.0, %v5710
        %v5712 = vpop.f32.mrf.mxu0
        %v5713 = vadd.f32 0.0, %v5712
        %5714 = vmatmul.bf16.gmra.mxu0 %v4708
        %v5715 = vpop.f32.mrf.mxu0
        %v5716 = vadd.f32 0.0, %v5715
        %v5717 = vpop.f32.mrf.mxu0
        %v5718 = vadd.f32 0.0, %v5717
        %5719 = vmatmul.bf16.gmra.mxu0 %v4713
        %v5720 = vpop.f32.mrf.mxu0
        %v5721 = vadd.f32 0.0, %v5720
        %v5722 = vpop.f32.mrf.mxu0
        %v5723 = vadd.f32 0.0, %v5722
        %5724 = vmatmul.bf16.gmra.mxu0 %v4718
        %v5725 = vpop.f32.mrf.mxu0
        %v5726 = vadd.f32 0.0, %v5725
        %v5727 = vpop.f32.mrf.mxu0
        %v5728 = vadd.f32 0.0, %v5727
        %5729 = vmatmul.bf16.gmra.mxu0 %v4723
        %v5730 = vpop.f32.mrf.mxu0
        %v5731 = vadd.f32 0.0, %v5730
        %v5732 = vpop.f32.mrf.mxu0
        %v5733 = vadd.f32 0.0, %v5732
        %5734 = vmatmul.bf16.gmra.mxu0 %v4728
        %v5735 = vpop.f32.mrf.mxu0
        %v5736 = vadd.f32 0.0, %v5735
        %v5737 = vpop.f32.mrf.mxu0
        %v5738 = vadd.f32 0.0, %v5737
        %5739 = vmatmul.bf16.gmra.mxu0 %v4733
        %v5740 = vpop.f32.mrf.mxu0
        %v5741 = vadd.f32 0.0, %v5740
        %v5742 = vpop.f32.mrf.mxu0
        %v5743 = vadd.f32 0.0, %v5742
        %5744 = vmatmul.bf16.gmra.mxu0 %v4738
        %v5745 = vpop.f32.mrf.mxu0
        %v5746 = vadd.f32 0.0, %v5745
        %v5747 = vpop.f32.mrf.mxu0
        %v5748 = vadd.f32 0.0, %v5747
        %5749 = vmatmul.bf16.gmra.mxu0 %v4743
        %v5750 = vpop.f32.mrf.mxu0
        %v5751 = vadd.f32 0.0, %v5750
        %v5752 = vpop.f32.mrf.mxu0
        %v5753 = vadd.f32 0.0, %v5752
        %5754 = vmatmul.bf16.gmra.mxu0 %v4748
        %v5755 = vpop.f32.mrf.mxu0
        %v5756 = vadd.f32 0.0, %v5755
        %v5757 = vpop.f32.mrf.mxu0
        %v5758 = vadd.f32 0.0, %v5757
        %5759 = vmatmul.bf16.gmra.mxu0 %v4753
        %v5760 = vpop.f32.mrf.mxu0
        %v5761 = vadd.f32 0.0, %v5760
        %v5762 = vpop.f32.mrf.mxu0
        %v5763 = vadd.f32 0.0, %v5762
        %5764 = vmatmul.bf16.gmra.mxu0 %v4758
        %v5765 = vpop.f32.mrf.mxu0
        %v5766 = vadd.f32 0.0, %v5765
        %v5767 = vpop.f32.mrf.mxu0
        %v5768 = vadd.f32 0.0, %v5767
        %5769 = vmatmul.bf16.gmra.mxu0 %v4763
        %v5770 = vpop.f32.mrf.mxu0
        %v5771 = vadd.f32 0.0, %v5770
        %v5772 = vpop.f32.mrf.mxu0
        %v5773 = vadd.f32 0.0, %v5772
        %5774 = vmatmul.bf16.gmra.mxu0 %v4768
        %v5775 = vpop.f32.mrf.mxu0
        %v5776 = vadd.f32 0.0, %v5775
        %v5777 = vpop.f32.mrf.mxu0
        %v5778 = vadd.f32 0.0, %v5777
        %5779 = vmatmul.bf16.gmra.mxu0 %v4773
        %v5780 = vpop.f32.mrf.mxu0
        %v5781 = vadd.f32 0.0, %v5780
        %v5782 = vpop.f32.mrf.mxu0
        %v5783 = vadd.f32 0.0, %v5782
        %5784 = vmatmul.bf16.gmra.mxu0 %v4778
        %v5785 = vpop.f32.mrf.mxu0
        %v5786 = vadd.f32 0.0, %v5785
        %v5787 = vpop.f32.mrf.mxu0
        %v5788 = vadd.f32 0.0, %v5787
        %5789 = vmatmul.bf16.gmra.mxu0 %v4783
        %v5790 = vpop.f32.mrf.mxu0
        %v5791 = vadd.f32 0.0, %v5790
        %v5792 = vpop.f32.mrf.mxu0
        %v5793 = vadd.f32 0.0, %v5792
        %5794 = vmatmul.bf16.gmra.mxu0 %v4788
        %v5795 = vpop.f32.mrf.mxu0
        %v5796 = vadd.f32 0.0, %v5795
        %v5797 = vpop.f32.mrf.mxu0
        %v5798 = vadd.f32 0.0, %v5797
        %5799 = vmatmul.bf16.gmra.mxu0 %v4793
        %v5800 = vpop.f32.mrf.mxu0
        %v5801 = vadd.f32 0.0, %v5800
        %v5802 = vpop.f32.mrf.mxu0
        %v5803 = vadd.f32 0.0, %v5802
        %5804 = vmatmul.bf16.gmra.mxu0 %v4798
        %v5805 = vpop.f32.mrf.mxu0
        %v5806 = vadd.f32 0.0, %v5805
        %v5807 = vpop.f32.mrf.mxu0
        %v5808 = vadd.f32 0.0, %v5807
        %5809 = vmatmul.bf16.gmra.mxu0 %v4803
        %v5810 = vpop.f32.mrf.mxu0
        %v5811 = vadd.f32 0.0, %v5810
        %v5812 = vpop.f32.mrf.mxu0
        %v5813 = vadd.f32 0.0, %v5812
        %5814 = vmatmul.bf16.gmra.mxu0 %v4808
        %v5815 = vpop.f32.mrf.mxu0
        %v5816 = vadd.f32 0.0, %v5815
        %v5817 = vpop.f32.mrf.mxu0
        %v5818 = vadd.f32 0.0, %v5817
        %5819 = vmatmul.bf16.gmra.mxu0 %v4813
        %v5820 = vpop.f32.mrf.mxu0
        %v5821 = vadd.f32 0.0, %v5820
        %v5822 = vpop.f32.mrf.mxu0
        %v5823 = vadd.f32 0.0, %v5822
        %5824 = vmatmul.bf16.gmra.mxu0 %v4818
        %v5825 = vpop.f32.mrf.mxu0
        %v5826 = vadd.f32 0.0, %v5825
        %v5827 = vpop.f32.mrf.mxu0
        %v5828 = vadd.f32 0.0, %v5827
        %5829 = vdwg.mxu0
        %5830 = vmatpush.bf16.msra.mxu0 %v5244
        %5831 = vmatpush.bf16.msra.mxu0 %v5243
        %5832 = vmatpush.bf16.msra.mxu0 %v5242
        %5833 = vmatpush.bf16.msra.mxu0 %v5241
        %5834 = vmatpush.bf16.msra.mxu0 %v5240
        %5835 = vmatpush.bf16.msra.mxu0 %v5239
        %5836 = vmatpush.bf16.msra.mxu0 %v5238
        %5837 = vmatpush.bf16.msra.mxu0 %v5237
        %5838 = vmatmul.bf16.gmra.mxu0 %v4504
        %v5839 = vpop.f32.mrf.mxu0
        %v5840 = vadd.f32 %v5511, %v5839
        %v5841 = vpop.f32.mrf.mxu0
        %v5842 = vadd.f32 %v5513, %v5841
        %5843 = vmatmul.bf16.gmra.mxu0 %v4509
        %v5844 = vpop.f32.mrf.mxu0
        %v5845 = vadd.f32 %v5516, %v5844
        %v5846 = vpop.f32.mrf.mxu0
        %v5847 = vadd.f32 %v5518, %v5846
        %5848 = vmatmul.bf16.gmra.mxu0 %v4514
        %v5849 = vpop.f32.mrf.mxu0
        %v5850 = vadd.f32 %v5521, %v5849
        %v5851 = vpop.f32.mrf.mxu0
        %v5852 = vadd.f32 %v5523, %v5851
        %5853 = vmatmul.bf16.gmra.mxu0 %v4519
        %v5854 = vpop.f32.mrf.mxu0
        %v5855 = vadd.f32 %v5526, %v5854
        %v5856 = vpop.f32.mrf.mxu0
        %v5857 = vadd.f32 %v5528, %v5856
        %5858 = vmatmul.bf16.gmra.mxu0 %v4524
        %v5859 = vpop.f32.mrf.mxu0
        %v5860 = vadd.f32 %v5531, %v5859
        %v5861 = vpop.f32.mrf.mxu0
        %v5862 = vadd.f32 %v5533, %v5861
        %5863 = vmatmul.bf16.gmra.mxu0 %v4529
        %v5864 = vpop.f32.mrf.mxu0
        %v5865 = vadd.f32 %v5536, %v5864
        %v5866 = vpop.f32.mrf.mxu0
        %v5867 = vadd.f32 %v5538, %v5866
        %5868 = vmatmul.bf16.gmra.mxu0 %v4534
        %v5869 = vpop.f32.mrf.mxu0
        %v5870 = vadd.f32 %v5541, %v5869
        %v5871 = vpop.f32.mrf.mxu0
        %v5872 = vadd.f32 %v5543, %v5871
        %5873 = vmatmul.bf16.gmra.mxu0 %v4539
        %v5874 = vpop.f32.mrf.mxu0
        %v5875 = vadd.f32 %v5546, %v5874
        %v5876 = vpop.f32.mrf.mxu0
        %v5877 = vadd.f32 %v5548, %v5876
        %5878 = vmatmul.bf16.gmra.mxu0 %v4544
        %v5879 = vpop.f32.mrf.mxu0
        %v5880 = vadd.f32 %v5551, %v5879
        %v5881 = vpop.f32.mrf.mxu0
        %v5882 = vadd.f32 %v5553, %v5881
        %5883 = vmatmul.bf16.gmra.mxu0 %v4549
        %v5884 = vpop.f32.mrf.mxu0
        %v5885 = vadd.f32 %v5556, %v5884
        %v5886 = vpop.f32.mrf.mxu0
        %v5887 = vadd.f32 %v5558, %v5886
        %5888 = vmatmul.bf16.gmra.mxu0 %v4554
        %v5889 = vpop.f32.mrf.mxu0
        %v5890 = vadd.f32 %v5561, %v5889
        %v5891 = vpop.f32.mrf.mxu0
        %v5892 = vadd.f32 %v5563, %v5891
        %5893 = vmatmul.bf16.gmra.mxu0 %v4559
        %v5894 = vpop.f32.mrf.mxu0
        %v5895 = vadd.f32 %v5566, %v5894
        %v5896 = vpop.f32.mrf.mxu0
        %v5897 = vadd.f32 %v5568, %v5896
        %5898 = vmatmul.bf16.gmra.mxu0 %v4564
        %v5899 = vpop.f32.mrf.mxu0
        %v5900 = vadd.f32 %v5571, %v5899
        %v5901 = vpop.f32.mrf.mxu0
        %v5902 = vadd.f32 %v5573, %v5901
        %5903 = vmatmul.bf16.gmra.mxu0 %v4569
        %v5904 = vpop.f32.mrf.mxu0
        %v5905 = vadd.f32 %v5576, %v5904
        %v5906 = vpop.f32.mrf.mxu0
        %v5907 = vadd.f32 %v5578, %v5906
        %5908 = vmatmul.bf16.gmra.mxu0 %v4574
        %v5909 = vpop.f32.mrf.mxu0
        %v5910 = vadd.f32 %v5581, %v5909
        %v5911 = vpop.f32.mrf.mxu0
        %v5912 = vadd.f32 %v5583, %v5911
        %5913 = vmatmul.bf16.gmra.mxu0 %v4579
        %v5914 = vpop.f32.mrf.mxu0
        %v5915 = vadd.f32 %v5586, %v5914
        %v5916 = vpop.f32.mrf.mxu0
        %v5917 = vadd.f32 %v5588, %v5916
        %5918 = vmatmul.bf16.gmra.mxu0 %v4584
        %v5919 = vpop.f32.mrf.mxu0
        %v5920 = vadd.f32 %v5591, %v5919
        %v5921 = vpop.f32.mrf.mxu0
        %v5922 = vadd.f32 %v5593, %v5921
        %5923 = vmatmul.bf16.gmra.mxu0 %v4589
        %v5924 = vpop.f32.mrf.mxu0
        %v5925 = vadd.f32 %v5596, %v5924
        %v5926 = vpop.f32.mrf.mxu0
        %v5927 = vadd.f32 %v5598, %v5926
        %5928 = vmatmul.bf16.gmra.mxu0 %v4594
        %v5929 = vpop.f32.mrf.mxu0
        %v5930 = vadd.f32 %v5601, %v5929
        %v5931 = vpop.f32.mrf.mxu0
        %v5932 = vadd.f32 %v5603, %v5931
        %5933 = vmatmul.bf16.gmra.mxu0 %v4599
        %v5934 = vpop.f32.mrf.mxu0
        %v5935 = vadd.f32 %v5606, %v5934
        %v5936 = vpop.f32.mrf.mxu0
        %v5937 = vadd.f32 %v5608, %v5936
        %5938 = vmatmul.bf16.gmra.mxu0 %v4604
        %v5939 = vpop.f32.mrf.mxu0
        %v5940 = vadd.f32 %v5611, %v5939
        %v5941 = vpop.f32.mrf.mxu0
        %v5942 = vadd.f32 %v5613, %v5941
        %5943 = vmatmul.bf16.gmra.mxu0 %v4609
        %v5944 = vpop.f32.mrf.mxu0
        %v5945 = vadd.f32 %v5616, %v5944
        %v5946 = vpop.f32.mrf.mxu0
        %v5947 = vadd.f32 %v5618, %v5946
        %5948 = vmatmul.bf16.gmra.mxu0 %v4614
        %v5949 = vpop.f32.mrf.mxu0
        %v5950 = vadd.f32 %v5621, %v5949
        %v5951 = vpop.f32.mrf.mxu0
        %v5952 = vadd.f32 %v5623, %v5951
        %5953 = vmatmul.bf16.gmra.mxu0 %v4619
        %v5954 = vpop.f32.mrf.mxu0
        %v5955 = vadd.f32 %v5626, %v5954
        %v5956 = vpop.f32.mrf.mxu0
        %v5957 = vadd.f32 %v5628, %v5956
        %5958 = vmatmul.bf16.gmra.mxu0 %v4624
        %v5959 = vpop.f32.mrf.mxu0
        %v5960 = vadd.f32 %v5631, %v5959
        %v5961 = vpop.f32.mrf.mxu0
        %v5962 = vadd.f32 %v5633, %v5961
        %5963 = vmatmul.bf16.gmra.mxu0 %v4629
        %v5964 = vpop.f32.mrf.mxu0
        %v5965 = vadd.f32 %v5636, %v5964
        %v5966 = vpop.f32.mrf.mxu0
        %v5967 = vadd.f32 %v5638, %v5966
        %5968 = vmatmul.bf16.gmra.mxu0 %v4634
        %v5969 = vpop.f32.mrf.mxu0
        %v5970 = vadd.f32 %v5641, %v5969
        %v5971 = vpop.f32.mrf.mxu0
        %v5972 = vadd.f32 %v5643, %v5971
        %5973 = vmatmul.bf16.gmra.mxu0 %v4639
        %v5974 = vpop.f32.mrf.mxu0
        %v5975 = vadd.f32 %v5646, %v5974
        %v5976 = vpop.f32.mrf.mxu0
        %v5977 = vadd.f32 %v5648, %v5976
        %5978 = vmatmul.bf16.gmra.mxu0 %v4644
        %v5979 = vpop.f32.mrf.mxu0
        %v5980 = vadd.f32 %v5651, %v5979
        %v5981 = vpop.f32.mrf.mxu0
        %v5982 = vadd.f32 %v5653, %v5981
        %5983 = vmatmul.bf16.gmra.mxu0 %v4649
        %v5984 = vpop.f32.mrf.mxu0
        %v5985 = vadd.f32 %v5656, %v5984
        %v5986 = vpop.f32.mrf.mxu0
        %v5987 = vadd.f32 %v5658, %v5986
        %5988 = vmatmul.bf16.gmra.mxu0 %v4654
        %v5989 = vpop.f32.mrf.mxu0
        %v5990 = vadd.f32 %v5661, %v5989
        %v5991 = vpop.f32.mrf.mxu0
        %v5992 = vadd.f32 %v5663, %v5991
        %5993 = vmatmul.bf16.gmra.mxu0 %v4659
        %v5994 = vpop.f32.mrf.mxu0
        %v5995 = vadd.f32 %v5666, %v5994
        %v5996 = vpop.f32.mrf.mxu0
        %v5997 = vadd.f32 %v5668, %v5996
        %5998 = vmatmul.bf16.gmra.mxu0 %v4664
        %v5999 = vpop.f32.mrf.mxu0
        %v6000 = vadd.f32 %v5671, %v5999
        %v6001 = vpop.f32.mrf.mxu0
        %v6002 = vadd.f32 %v5673, %v6001
        %6003 = vmatmul.bf16.gmra.mxu0 %v4669
        %v6004 = vpop.f32.mrf.mxu0
        %v6005 = vadd.f32 %v5676, %v6004
        %v6006 = vpop.f32.mrf.mxu0
        %v6007 = vadd.f32 %v5678, %v6006
        %6008 = vmatmul.bf16.gmra.mxu0 %v4674
        %v6009 = vpop.f32.mrf.mxu0
        %v6010 = vadd.f32 %v5681, %v6009
        %v6011 = vpop.f32.mrf.mxu0
        %v6012 = vadd.f32 %v5683, %v6011
        %6013 = vmatmul.bf16.gmra.mxu0 %v4679
        %v6014 = vpop.f32.mrf.mxu0
        %v6015 = vadd.f32 %v5686, %v6014
        %v6016 = vpop.f32.mrf.mxu0
        %v6017 = vadd.f32 %v5688, %v6016
        %6018 = vmatmul.bf16.gmra.mxu0 %v4684
        %v6019 = vpop.f32.mrf.mxu0
        %v6020 = vadd.f32 %v5691, %v6019
        %v6021 = vpop.f32.mrf.mxu0
        %v6022 = vadd.f32 %v5693, %v6021
        %6023 = vmatmul.bf16.gmra.mxu0 %v4689
        %v6024 = vpop.f32.mrf.mxu0
        %v6025 = vadd.f32 %v5696, %v6024
        %v6026 = vpop.f32.mrf.mxu0
        %v6027 = vadd.f32 %v5698, %v6026
        %6028 = vmatmul.bf16.gmra.mxu0 %v4694
        %v6029 = vpop.f32.mrf.mxu0
        %v6030 = vadd.f32 %v5701, %v6029
        %v6031 = vpop.f32.mrf.mxu0
        %v6032 = vadd.f32 %v5703, %v6031
        %6033 = vmatmul.bf16.gmra.mxu0 %v4699
        %v6034 = vpop.f32.mrf.mxu0
        %v6035 = vadd.f32 %v5706, %v6034
        %v6036 = vpop.f32.mrf.mxu0
        %v6037 = vadd.f32 %v5708, %v6036
        %6038 = vmatmul.bf16.gmra.mxu0 %v4704
        %v6039 = vpop.f32.mrf.mxu0
        %v6040 = vadd.f32 %v5711, %v6039
        %v6041 = vpop.f32.mrf.mxu0
        %v6042 = vadd.f32 %v5713, %v6041
        %6043 = vmatmul.bf16.gmra.mxu0 %v4709
        %v6044 = vpop.f32.mrf.mxu0
        %v6045 = vadd.f32 %v5716, %v6044
        %v6046 = vpop.f32.mrf.mxu0
        %v6047 = vadd.f32 %v5718, %v6046
        %6048 = vmatmul.bf16.gmra.mxu0 %v4714
        %v6049 = vpop.f32.mrf.mxu0
        %v6050 = vadd.f32 %v5721, %v6049
        %v6051 = vpop.f32.mrf.mxu0
        %v6052 = vadd.f32 %v5723, %v6051
        %6053 = vmatmul.bf16.gmra.mxu0 %v4719
        %v6054 = vpop.f32.mrf.mxu0
        %v6055 = vadd.f32 %v5726, %v6054
        %v6056 = vpop.f32.mrf.mxu0
        %v6057 = vadd.f32 %v5728, %v6056
        %6058 = vmatmul.bf16.gmra.mxu0 %v4724
        %v6059 = vpop.f32.mrf.mxu0
        %v6060 = vadd.f32 %v5731, %v6059
        %v6061 = vpop.f32.mrf.mxu0
        %v6062 = vadd.f32 %v5733, %v6061
        %6063 = vmatmul.bf16.gmra.mxu0 %v4729
        %v6064 = vpop.f32.mrf.mxu0
        %v6065 = vadd.f32 %v5736, %v6064
        %v6066 = vpop.f32.mrf.mxu0
        %v6067 = vadd.f32 %v5738, %v6066
        %6068 = vmatmul.bf16.gmra.mxu0 %v4734
        %v6069 = vpop.f32.mrf.mxu0
        %v6070 = vadd.f32 %v5741, %v6069
        %v6071 = vpop.f32.mrf.mxu0
        %v6072 = vadd.f32 %v5743, %v6071
        %6073 = vmatmul.bf16.gmra.mxu0 %v4739
        %v6074 = vpop.f32.mrf.mxu0
        %v6075 = vadd.f32 %v5746, %v6074
        %v6076 = vpop.f32.mrf.mxu0
        %v6077 = vadd.f32 %v5748, %v6076
        %6078 = vmatmul.bf16.gmra.mxu0 %v4744
        %v6079 = vpop.f32.mrf.mxu0
        %v6080 = vadd.f32 %v5751, %v6079
        %v6081 = vpop.f32.mrf.mxu0
        %v6082 = vadd.f32 %v5753, %v6081
        %6083 = vmatmul.bf16.gmra.mxu0 %v4749
        %v6084 = vpop.f32.mrf.mxu0
        %v6085 = vadd.f32 %v5756, %v6084
        %v6086 = vpop.f32.mrf.mxu0
        %v6087 = vadd.f32 %v5758, %v6086
        %6088 = vmatmul.bf16.gmra.mxu0 %v4754
        %v6089 = vpop.f32.mrf.mxu0
        %v6090 = vadd.f32 %v5761, %v6089
        %v6091 = vpop.f32.mrf.mxu0
        %v6092 = vadd.f32 %v5763, %v6091
        %6093 = vmatmul.bf16.gmra.mxu0 %v4759
        %v6094 = vpop.f32.mrf.mxu0
        %v6095 = vadd.f32 %v5766, %v6094
        %v6096 = vpop.f32.mrf.mxu0
        %v6097 = vadd.f32 %v5768, %v6096
        %6098 = vmatmul.bf16.gmra.mxu0 %v4764
        %v6099 = vpop.f32.mrf.mxu0
        %v6100 = vadd.f32 %v5771, %v6099
        %v6101 = vpop.f32.mrf.mxu0
        %v6102 = vadd.f32 %v5773, %v6101
        %6103 = vmatmul.bf16.gmra.mxu0 %v4769
        %v6104 = vpop.f32.mrf.mxu0
        %v6105 = vadd.f32 %v5776, %v6104
        %v6106 = vpop.f32.mrf.mxu0
        %v6107 = vadd.f32 %v5778, %v6106
        %6108 = vmatmul.bf16.gmra.mxu0 %v4774
        %v6109 = vpop.f32.mrf.mxu0
        %v6110 = vadd.f32 %v5781, %v6109
        %v6111 = vpop.f32.mrf.mxu0
        %v6112 = vadd.f32 %v5783, %v6111
        %6113 = vmatmul.bf16.gmra.mxu0 %v4779
        %v6114 = vpop.f32.mrf.mxu0
        %v6115 = vadd.f32 %v5786, %v6114
        %v6116 = vpop.f32.mrf.mxu0
        %v6117 = vadd.f32 %v5788, %v6116
        %6118 = vmatmul.bf16.gmra.mxu0 %v4784
        %v6119 = vpop.f32.mrf.mxu0
        %v6120 = vadd.f32 %v5791, %v6119
        %v6121 = vpop.f32.mrf.mxu0
        %v6122 = vadd.f32 %v5793, %v6121
        %6123 = vmatmul.bf16.gmra.mxu0 %v4789
        %v6124 = vpop.f32.mrf.mxu0
        %v6125 = vadd.f32 %v5796, %v6124
        %v6126 = vpop.f32.mrf.mxu0
        %v6127 = vadd.f32 %v5798, %v6126
        %6128 = vmatmul.bf16.gmra.mxu0 %v4794
        %v6129 = vpop.f32.mrf.mxu0
        %v6130 = vadd.f32 %v5801, %v6129
        %v6131 = vpop.f32.mrf.mxu0
        %v6132 = vadd.f32 %v5803, %v6131
        %6133 = vmatmul.bf16.gmra.mxu0 %v4799
        %v6134 = vpop.f32.mrf.mxu0
        %v6135 = vadd.f32 %v5806, %v6134
        %v6136 = vpop.f32.mrf.mxu0
        %v6137 = vadd.f32 %v5808, %v6136
        %6138 = vmatmul.bf16.gmra.mxu0 %v4804
        %v6139 = vpop.f32.mrf.mxu0
        %v6140 = vadd.f32 %v5811, %v6139
        %v6141 = vpop.f32.mrf.mxu0
        %v6142 = vadd.f32 %v5813, %v6141
        %6143 = vmatmul.bf16.gmra.mxu0 %v4809
        %v6144 = vpop.f32.mrf.mxu0
        %v6145 = vadd.f32 %v5816, %v6144
        %v6146 = vpop.f32.mrf.mxu0
        %v6147 = vadd.f32 %v5818, %v6146
        %6148 = vmatmul.bf16.gmra.mxu0 %v4814
        %v6149 = vpop.f32.mrf.mxu0
        %v6150 = vadd.f32 %v5821, %v6149
        %v6151 = vpop.f32.mrf.mxu0
        %v6152 = vadd.f32 %v5823, %v6151
        %6153 = vmatmul.bf16.gmra.mxu0 %v4819
        %v6154 = vpop.f32.mrf.mxu0
        %v6155 = vadd.f32 %v5826, %v6154
        %v6156 = vpop.f32.mrf.mxu0
        %v6157 = vadd.f32 %v5828, %v6156
        %6158 = vdwg.mxu0
        %6159 = vmatpush.bf16.msra.mxu0 %v5252
        %6160 = vmatpush.bf16.msra.mxu0 %v5251
        %6161 = vmatpush.bf16.msra.mxu0 %v5250
        %6162 = vmatpush.bf16.msra.mxu0 %v5249
        %6163 = vmatpush.bf16.msra.mxu0 %v5248
        %6164 = vmatpush.bf16.msra.mxu0 %v5247
        %6165 = vmatpush.bf16.msra.mxu0 %v5246
        %6166 = vmatpush.bf16.msra.mxu0 %v5245
        %6167 = vmatmul.bf16.gmra.mxu0 %v4505
        %v6168 = vpop.f32.mrf.mxu0
        %v6169 = vadd.f32 %v5840, %v6168
        %v6170 = vpop.f32.mrf.mxu0
        %v6171 = vadd.f32 %v5842, %v6170
        %6172 = vmatmul.bf16.gmra.mxu0 %v4510
        %v6173 = vpop.f32.mrf.mxu0
        %v6174 = vadd.f32 %v5845, %v6173
        %v6175 = vpop.f32.mrf.mxu0
        %v6176 = vadd.f32 %v5847, %v6175
        %6177 = vmatmul.bf16.gmra.mxu0 %v4515
        %v6178 = vpop.f32.mrf.mxu0
        %v6179 = vadd.f32 %v5850, %v6178
        %v6180 = vpop.f32.mrf.mxu0
        %v6181 = vadd.f32 %v5852, %v6180
        %6182 = vmatmul.bf16.gmra.mxu0 %v4520
        %v6183 = vpop.f32.mrf.mxu0
        %v6184 = vadd.f32 %v5855, %v6183
        %v6185 = vpop.f32.mrf.mxu0
        %v6186 = vadd.f32 %v5857, %v6185
        %6187 = vmatmul.bf16.gmra.mxu0 %v4525
        %v6188 = vpop.f32.mrf.mxu0
        %v6189 = vadd.f32 %v5860, %v6188
        %v6190 = vpop.f32.mrf.mxu0
        %v6191 = vadd.f32 %v5862, %v6190
        %6192 = vmatmul.bf16.gmra.mxu0 %v4530
        %v6193 = vpop.f32.mrf.mxu0
        %v6194 = vadd.f32 %v5865, %v6193
        %v6195 = vpop.f32.mrf.mxu0
        %v6196 = vadd.f32 %v5867, %v6195
        %6197 = vmatmul.bf16.gmra.mxu0 %v4535
        %v6198 = vpop.f32.mrf.mxu0
        %v6199 = vadd.f32 %v5870, %v6198
        %v6200 = vpop.f32.mrf.mxu0
        %v6201 = vadd.f32 %v5872, %v6200
        %6202 = vmatmul.bf16.gmra.mxu0 %v4540
        %v6203 = vpop.f32.mrf.mxu0
        %v6204 = vadd.f32 %v5875, %v6203
        %v6205 = vpop.f32.mrf.mxu0
        %v6206 = vadd.f32 %v5877, %v6205
        %6207 = vmatmul.bf16.gmra.mxu0 %v4545
        %v6208 = vpop.f32.mrf.mxu0
        %v6209 = vadd.f32 %v5880, %v6208
        %v6210 = vpop.f32.mrf.mxu0
        %v6211 = vadd.f32 %v5882, %v6210
        %6212 = vmatmul.bf16.gmra.mxu0 %v4550
        %v6213 = vpop.f32.mrf.mxu0
        %v6214 = vadd.f32 %v5885, %v6213
        %v6215 = vpop.f32.mrf.mxu0
        %v6216 = vadd.f32 %v5887, %v6215
        %6217 = vmatmul.bf16.gmra.mxu0 %v4555
        %v6218 = vpop.f32.mrf.mxu0
        %v6219 = vadd.f32 %v5890, %v6218
        %v6220 = vpop.f32.mrf.mxu0
        %v6221 = vadd.f32 %v5892, %v6220
        %6222 = vmatmul.bf16.gmra.mxu0 %v4560
        %v6223 = vpop.f32.mrf.mxu0
        %v6224 = vadd.f32 %v5895, %v6223
        %v6225 = vpop.f32.mrf.mxu0
        %v6226 = vadd.f32 %v5897, %v6225
        %6227 = vmatmul.bf16.gmra.mxu0 %v4565
        %v6228 = vpop.f32.mrf.mxu0
        %v6229 = vadd.f32 %v5900, %v6228
        %v6230 = vpop.f32.mrf.mxu0
        %v6231 = vadd.f32 %v5902, %v6230
        %6232 = vmatmul.bf16.gmra.mxu0 %v4570
        %v6233 = vpop.f32.mrf.mxu0
        %v6234 = vadd.f32 %v5905, %v6233
        %v6235 = vpop.f32.mrf.mxu0
        %v6236 = vadd.f32 %v5907, %v6235
        %6237 = vmatmul.bf16.gmra.mxu0 %v4575
        %v6238 = vpop.f32.mrf.mxu0
        %v6239 = vadd.f32 %v5910, %v6238
        %v6240 = vpop.f32.mrf.mxu0
        %v6241 = vadd.f32 %v5912, %v6240
        %6242 = vmatmul.bf16.gmra.mxu0 %v4580
        %v6243 = vpop.f32.mrf.mxu0
        %v6244 = vadd.f32 %v5915, %v6243
        %v6245 = vpop.f32.mrf.mxu0
        %v6246 = vadd.f32 %v5917, %v6245
        %6247 = vmatmul.bf16.gmra.mxu0 %v4585
        %v6248 = vpop.f32.mrf.mxu0
        %v6249 = vadd.f32 %v5920, %v6248
        %v6250 = vpop.f32.mrf.mxu0
        %v6251 = vadd.f32 %v5922, %v6250
        %6252 = vmatmul.bf16.gmra.mxu0 %v4590
        %v6253 = vpop.f32.mrf.mxu0
        %v6254 = vadd.f32 %v5925, %v6253
        %v6255 = vpop.f32.mrf.mxu0
        %v6256 = vadd.f32 %v5927, %v6255
        %6257 = vmatmul.bf16.gmra.mxu0 %v4595
        %v6258 = vpop.f32.mrf.mxu0
        %v6259 = vadd.f32 %v5930, %v6258
        %v6260 = vpop.f32.mrf.mxu0
        %v6261 = vadd.f32 %v5932, %v6260
        %6262 = vmatmul.bf16.gmra.mxu0 %v4600
        %v6263 = vpop.f32.mrf.mxu0
        %v6264 = vadd.f32 %v5935, %v6263
        %v6265 = vpop.f32.mrf.mxu0
        %v6266 = vadd.f32 %v5937, %v6265
        %6267 = vmatmul.bf16.gmra.mxu0 %v4605
        %v6268 = vpop.f32.mrf.mxu0
        %v6269 = vadd.f32 %v5940, %v6268
        %v6270 = vpop.f32.mrf.mxu0
        %v6271 = vadd.f32 %v5942, %v6270
        %6272 = vmatmul.bf16.gmra.mxu0 %v4610
        %v6273 = vpop.f32.mrf.mxu0
        %v6274 = vadd.f32 %v5945, %v6273
        %v6275 = vpop.f32.mrf.mxu0
        %v6276 = vadd.f32 %v5947, %v6275
        %6277 = vmatmul.bf16.gmra.mxu0 %v4615
        %v6278 = vpop.f32.mrf.mxu0
        %v6279 = vadd.f32 %v5950, %v6278
        %v6280 = vpop.f32.mrf.mxu0
        %v6281 = vadd.f32 %v5952, %v6280
        %6282 = vmatmul.bf16.gmra.mxu0 %v4620
        %v6283 = vpop.f32.mrf.mxu0
        %v6284 = vadd.f32 %v5955, %v6283
        %v6285 = vpop.f32.mrf.mxu0
        %v6286 = vadd.f32 %v5957, %v6285
        %6287 = vmatmul.bf16.gmra.mxu0 %v4625
        %v6288 = vpop.f32.mrf.mxu0
        %v6289 = vadd.f32 %v5960, %v6288
        %v6290 = vpop.f32.mrf.mxu0
        %v6291 = vadd.f32 %v5962, %v6290
        %6292 = vmatmul.bf16.gmra.mxu0 %v4630
        %v6293 = vpop.f32.mrf.mxu0
        %v6294 = vadd.f32 %v5965, %v6293
        %v6295 = vpop.f32.mrf.mxu0
        %v6296 = vadd.f32 %v5967, %v6295
        %6297 = vmatmul.bf16.gmra.mxu0 %v4635
        %v6298 = vpop.f32.mrf.mxu0
        %v6299 = vadd.f32 %v5970, %v6298
        %v6300 = vpop.f32.mrf.mxu0
        %v6301 = vadd.f32 %v5972, %v6300
        %6302 = vmatmul.bf16.gmra.mxu0 %v4640
        %v6303 = vpop.f32.mrf.mxu0
        %v6304 = vadd.f32 %v5975, %v6303
        %v6305 = vpop.f32.mrf.mxu0
        %v6306 = vadd.f32 %v5977, %v6305
        %6307 = vmatmul.bf16.gmra.mxu0 %v4645
        %v6308 = vpop.f32.mrf.mxu0
        %v6309 = vadd.f32 %v5980, %v6308
        %v6310 = vpop.f32.mrf.mxu0
        %v6311 = vadd.f32 %v5982, %v6310
        %6312 = vmatmul.bf16.gmra.mxu0 %v4650
        %v6313 = vpop.f32.mrf.mxu0
        %v6314 = vadd.f32 %v5985, %v6313
        %v6315 = vpop.f32.mrf.mxu0
        %v6316 = vadd.f32 %v5987, %v6315
        %6317 = vmatmul.bf16.gmra.mxu0 %v4655
        %v6318 = vpop.f32.mrf.mxu0
        %v6319 = vadd.f32 %v5990, %v6318
        %v6320 = vpop.f32.mrf.mxu0
        %v6321 = vadd.f32 %v5992, %v6320
        %6322 = vmatmul.bf16.gmra.mxu0 %v4660
        %v6323 = vpop.f32.mrf.mxu0
        %v6324 = vadd.f32 %v5995, %v6323
        %v6325 = vpop.f32.mrf.mxu0
        %v6326 = vadd.f32 %v5997, %v6325
        %6327 = vmatmul.bf16.gmra.mxu0 %v4665
        %v6328 = vpop.f32.mrf.mxu0
        %v6329 = vadd.f32 %v6000, %v6328
        %v6330 = vpop.f32.mrf.mxu0
        %v6331 = vadd.f32 %v6002, %v6330
        %6332 = vmatmul.bf16.gmra.mxu0 %v4670
        %v6333 = vpop.f32.mrf.mxu0
        %v6334 = vadd.f32 %v6005, %v6333
        %v6335 = vpop.f32.mrf.mxu0
        %v6336 = vadd.f32 %v6007, %v6335
        %6337 = vmatmul.bf16.gmra.mxu0 %v4675
        %v6338 = vpop.f32.mrf.mxu0
        %v6339 = vadd.f32 %v6010, %v6338
        %v6340 = vpop.f32.mrf.mxu0
        %v6341 = vadd.f32 %v6012, %v6340
        %6342 = vmatmul.bf16.gmra.mxu0 %v4680
        %v6343 = vpop.f32.mrf.mxu0
        %v6344 = vadd.f32 %v6015, %v6343
        %v6345 = vpop.f32.mrf.mxu0
        %v6346 = vadd.f32 %v6017, %v6345
        %6347 = vmatmul.bf16.gmra.mxu0 %v4685
        %v6348 = vpop.f32.mrf.mxu0
        %v6349 = vadd.f32 %v6020, %v6348
        %v6350 = vpop.f32.mrf.mxu0
        %v6351 = vadd.f32 %v6022, %v6350
        %6352 = vmatmul.bf16.gmra.mxu0 %v4690
        %v6353 = vpop.f32.mrf.mxu0
        %v6354 = vadd.f32 %v6025, %v6353
        %v6355 = vpop.f32.mrf.mxu0
        %v6356 = vadd.f32 %v6027, %v6355
        %6357 = vmatmul.bf16.gmra.mxu0 %v4695
        %v6358 = vpop.f32.mrf.mxu0
        %v6359 = vadd.f32 %v6030, %v6358
        %v6360 = vpop.f32.mrf.mxu0
        %v6361 = vadd.f32 %v6032, %v6360
        %6362 = vmatmul.bf16.gmra.mxu0 %v4700
        %v6363 = vpop.f32.mrf.mxu0
        %v6364 = vadd.f32 %v6035, %v6363
        %v6365 = vpop.f32.mrf.mxu0
        %v6366 = vadd.f32 %v6037, %v6365
        %6367 = vmatmul.bf16.gmra.mxu0 %v4705
        %v6368 = vpop.f32.mrf.mxu0
        %v6369 = vadd.f32 %v6040, %v6368
        %v6370 = vpop.f32.mrf.mxu0
        %v6371 = vadd.f32 %v6042, %v6370
        %6372 = vmatmul.bf16.gmra.mxu0 %v4710
        %v6373 = vpop.f32.mrf.mxu0
        %v6374 = vadd.f32 %v6045, %v6373
        %v6375 = vpop.f32.mrf.mxu0
        %v6376 = vadd.f32 %v6047, %v6375
        %6377 = vmatmul.bf16.gmra.mxu0 %v4715
        %v6378 = vpop.f32.mrf.mxu0
        %v6379 = vadd.f32 %v6050, %v6378
        %v6380 = vpop.f32.mrf.mxu0
        %v6381 = vadd.f32 %v6052, %v6380
        %6382 = vmatmul.bf16.gmra.mxu0 %v4720
        %v6383 = vpop.f32.mrf.mxu0
        %v6384 = vadd.f32 %v6055, %v6383
        %v6385 = vpop.f32.mrf.mxu0
        %v6386 = vadd.f32 %v6057, %v6385
        %6387 = vmatmul.bf16.gmra.mxu0 %v4725
        %v6388 = vpop.f32.mrf.mxu0
        %v6389 = vadd.f32 %v6060, %v6388
        %v6390 = vpop.f32.mrf.mxu0
        %v6391 = vadd.f32 %v6062, %v6390
        %6392 = vmatmul.bf16.gmra.mxu0 %v4730
        %v6393 = vpop.f32.mrf.mxu0
        %v6394 = vadd.f32 %v6065, %v6393
        %v6395 = vpop.f32.mrf.mxu0
        %v6396 = vadd.f32 %v6067, %v6395
        %6397 = vmatmul.bf16.gmra.mxu0 %v4735
        %v6398 = vpop.f32.mrf.mxu0
        %v6399 = vadd.f32 %v6070, %v6398
        %v6400 = vpop.f32.mrf.mxu0
        %v6401 = vadd.f32 %v6072, %v6400
        %6402 = vmatmul.bf16.gmra.mxu0 %v4740
        %v6403 = vpop.f32.mrf.mxu0
        %v6404 = vadd.f32 %v6075, %v6403
        %v6405 = vpop.f32.mrf.mxu0
        %v6406 = vadd.f32 %v6077, %v6405
        %6407 = vmatmul.bf16.gmra.mxu0 %v4745
        %v6408 = vpop.f32.mrf.mxu0
        %v6409 = vadd.f32 %v6080, %v6408
        %v6410 = vpop.f32.mrf.mxu0
        %v6411 = vadd.f32 %v6082, %v6410
        %6412 = vmatmul.bf16.gmra.mxu0 %v4750
        %v6413 = vpop.f32.mrf.mxu0
        %v6414 = vadd.f32 %v6085, %v6413
        %v6415 = vpop.f32.mrf.mxu0
        %v6416 = vadd.f32 %v6087, %v6415
        %6417 = vmatmul.bf16.gmra.mxu0 %v4755
        %v6418 = vpop.f32.mrf.mxu0
        %v6419 = vadd.f32 %v6090, %v6418
        %v6420 = vpop.f32.mrf.mxu0
        %v6421 = vadd.f32 %v6092, %v6420
        %6422 = vmatmul.bf16.gmra.mxu0 %v4760
        %v6423 = vpop.f32.mrf.mxu0
        %v6424 = vadd.f32 %v6095, %v6423
        %v6425 = vpop.f32.mrf.mxu0
        %v6426 = vadd.f32 %v6097, %v6425
        %6427 = vmatmul.bf16.gmra.mxu0 %v4765
        %v6428 = vpop.f32.mrf.mxu0
        %v6429 = vadd.f32 %v6100, %v6428
        %v6430 = vpop.f32.mrf.mxu0
        %v6431 = vadd.f32 %v6102, %v6430
        %6432 = vmatmul.bf16.gmra.mxu0 %v4770
        %v6433 = vpop.f32.mrf.mxu0
        %v6434 = vadd.f32 %v6105, %v6433
        %v6435 = vpop.f32.mrf.mxu0
        %v6436 = vadd.f32 %v6107, %v6435
        %6437 = vmatmul.bf16.gmra.mxu0 %v4775
        %v6438 = vpop.f32.mrf.mxu0
        %v6439 = vadd.f32 %v6110, %v6438
        %v6440 = vpop.f32.mrf.mxu0
        %v6441 = vadd.f32 %v6112, %v6440
        %6442 = vmatmul.bf16.gmra.mxu0 %v4780
        %v6443 = vpop.f32.mrf.mxu0
        %v6444 = vadd.f32 %v6115, %v6443
        %v6445 = vpop.f32.mrf.mxu0
        %v6446 = vadd.f32 %v6117, %v6445
        %6447 = vmatmul.bf16.gmra.mxu0 %v4785
        %v6448 = vpop.f32.mrf.mxu0
        %v6449 = vadd.f32 %v6120, %v6448
        %v6450 = vpop.f32.mrf.mxu0
        %v6451 = vadd.f32 %v6122, %v6450
        %6452 = vmatmul.bf16.gmra.mxu0 %v4790
        %v6453 = vpop.f32.mrf.mxu0
        %v6454 = vadd.f32 %v6125, %v6453
        %v6455 = vpop.f32.mrf.mxu0
        %v6456 = vadd.f32 %v6127, %v6455
        %6457 = vmatmul.bf16.gmra.mxu0 %v4795
        %v6458 = vpop.f32.mrf.mxu0
        %v6459 = vadd.f32 %v6130, %v6458
        %v6460 = vpop.f32.mrf.mxu0
        %v6461 = vadd.f32 %v6132, %v6460
        %6462 = vmatmul.bf16.gmra.mxu0 %v4800
        %v6463 = vpop.f32.mrf.mxu0
        %v6464 = vadd.f32 %v6135, %v6463
        %v6465 = vpop.f32.mrf.mxu0
        %v6466 = vadd.f32 %v6137, %v6465
        %6467 = vmatmul.bf16.gmra.mxu0 %v4805
        %v6468 = vpop.f32.mrf.mxu0
        %v6469 = vadd.f32 %v6140, %v6468
        %v6470 = vpop.f32.mrf.mxu0
        %v6471 = vadd.f32 %v6142, %v6470
        %6472 = vmatmul.bf16.gmra.mxu0 %v4810
        %v6473 = vpop.f32.mrf.mxu0
        %v6474 = vadd.f32 %v6145, %v6473
        %v6475 = vpop.f32.mrf.mxu0
        %v6476 = vadd.f32 %v6147, %v6475
        %6477 = vmatmul.bf16.gmra.mxu0 %v4815
        %v6478 = vpop.f32.mrf.mxu0
        %v6479 = vadd.f32 %v6150, %v6478
        %v6480 = vpop.f32.mrf.mxu0
        %v6481 = vadd.f32 %v6152, %v6480
        %6482 = vmatmul.bf16.gmra.mxu0 %v4820
        %v6483 = vpop.f32.mrf.mxu0
        %v6484 = vadd.f32 %v6155, %v6483
        %v6485 = vpop.f32.mrf.mxu0
        %v6486 = vadd.f32 %v6157, %v6485
        %6487 = vdwg.mxu0
        %6488 = vmatpush.bf16.msra.mxu0 %v5260
        %6489 = vmatpush.bf16.msra.mxu0 %v5259
        %6490 = vmatpush.bf16.msra.mxu0 %v5258
        %6491 = vmatpush.bf16.msra.mxu0 %v5257
        %6492 = vmatpush.bf16.msra.mxu0 %v5256
        %6493 = vmatpush.bf16.msra.mxu0 %v5255
        %6494 = vmatpush.bf16.msra.mxu0 %v5254
        %6495 = vmatpush.bf16.msra.mxu0 %v5253
        %6496 = vmatmul.bf16.gmra.mxu0 %v4506
        %v6497 = vpop.f32.mrf.mxu0
        %v6498 = vadd.f32 %v6169, %v6497
        %v6499 = vpop.f32.mrf.mxu0
        %v6500 = vadd.f32 %v6171, %v6499
        %6501 = vmatmul.bf16.gmra.mxu0 %v4511
        %v6502 = vpop.f32.mrf.mxu0
        %v6503 = vadd.f32 %v6174, %v6502
        %v6504 = vpop.f32.mrf.mxu0
        %v6505 = vadd.f32 %v6176, %v6504
        %6506 = vmatmul.bf16.gmra.mxu0 %v4516
        %v6507 = vpop.f32.mrf.mxu0
        %v6508 = vadd.f32 %v6179, %v6507
        %v6509 = vpop.f32.mrf.mxu0
        %v6510 = vadd.f32 %v6181, %v6509
        %6511 = vmatmul.bf16.gmra.mxu0 %v4521
        %v6512 = vpop.f32.mrf.mxu0
        %v6513 = vadd.f32 %v6184, %v6512
        %v6514 = vpop.f32.mrf.mxu0
        %v6515 = vadd.f32 %v6186, %v6514
        %6516 = vmatmul.bf16.gmra.mxu0 %v4526
        %v6517 = vpop.f32.mrf.mxu0
        %v6518 = vadd.f32 %v6189, %v6517
        %v6519 = vpop.f32.mrf.mxu0
        %v6520 = vadd.f32 %v6191, %v6519
        %6521 = vmatmul.bf16.gmra.mxu0 %v4531
        %v6522 = vpop.f32.mrf.mxu0
        %v6523 = vadd.f32 %v6194, %v6522
        %v6524 = vpop.f32.mrf.mxu0
        %v6525 = vadd.f32 %v6196, %v6524
        %6526 = vmatmul.bf16.gmra.mxu0 %v4536
        %v6527 = vpop.f32.mrf.mxu0
        %v6528 = vadd.f32 %v6199, %v6527
        %v6529 = vpop.f32.mrf.mxu0
        %v6530 = vadd.f32 %v6201, %v6529
        %6531 = vmatmul.bf16.gmra.mxu0 %v4541
        %v6532 = vpop.f32.mrf.mxu0
        %v6533 = vadd.f32 %v6204, %v6532
        %v6534 = vpop.f32.mrf.mxu0
        %v6535 = vadd.f32 %v6206, %v6534
        %6536 = vmatmul.bf16.gmra.mxu0 %v4546
        %v6537 = vpop.f32.mrf.mxu0
        %v6538 = vadd.f32 %v6209, %v6537
        %v6539 = vpop.f32.mrf.mxu0
        %v6540 = vadd.f32 %v6211, %v6539
        %6541 = vmatmul.bf16.gmra.mxu0 %v4551
        %v6542 = vpop.f32.mrf.mxu0
        %v6543 = vadd.f32 %v6214, %v6542
        %v6544 = vpop.f32.mrf.mxu0
        %v6545 = vadd.f32 %v6216, %v6544
        %6546 = vmatmul.bf16.gmra.mxu0 %v4556
        %v6547 = vpop.f32.mrf.mxu0
        %v6548 = vadd.f32 %v6219, %v6547
        %v6549 = vpop.f32.mrf.mxu0
        %v6550 = vadd.f32 %v6221, %v6549
        %6551 = vmatmul.bf16.gmra.mxu0 %v4561
        %v6552 = vpop.f32.mrf.mxu0
        %v6553 = vadd.f32 %v6224, %v6552
        %v6554 = vpop.f32.mrf.mxu0
        %v6555 = vadd.f32 %v6226, %v6554
        %6556 = vmatmul.bf16.gmra.mxu0 %v4566
        %v6557 = vpop.f32.mrf.mxu0
        %v6558 = vadd.f32 %v6229, %v6557
        %v6559 = vpop.f32.mrf.mxu0
        %v6560 = vadd.f32 %v6231, %v6559
        %6561 = vmatmul.bf16.gmra.mxu0 %v4571
        %v6562 = vpop.f32.mrf.mxu0
        %v6563 = vadd.f32 %v6234, %v6562
        %v6564 = vpop.f32.mrf.mxu0
        %v6565 = vadd.f32 %v6236, %v6564
        %6566 = vmatmul.bf16.gmra.mxu0 %v4576
        %v6567 = vpop.f32.mrf.mxu0
        %v6568 = vadd.f32 %v6239, %v6567
        %v6569 = vpop.f32.mrf.mxu0
        %v6570 = vadd.f32 %v6241, %v6569
        %6571 = vmatmul.bf16.gmra.mxu0 %v4581
        %v6572 = vpop.f32.mrf.mxu0
        %v6573 = vadd.f32 %v6244, %v6572
        %v6574 = vpop.f32.mrf.mxu0
        %v6575 = vadd.f32 %v6246, %v6574
        %6576 = vmatmul.bf16.gmra.mxu0 %v4586
        %v6577 = vpop.f32.mrf.mxu0
        %v6578 = vadd.f32 %v6249, %v6577
        %v6579 = vpop.f32.mrf.mxu0
        %v6580 = vadd.f32 %v6251, %v6579
        %6581 = vmatmul.bf16.gmra.mxu0 %v4591
        %v6582 = vpop.f32.mrf.mxu0
        %v6583 = vadd.f32 %v6254, %v6582
        %v6584 = vpop.f32.mrf.mxu0
        %v6585 = vadd.f32 %v6256, %v6584
        %6586 = vmatmul.bf16.gmra.mxu0 %v4596
        %v6587 = vpop.f32.mrf.mxu0
        %v6588 = vadd.f32 %v6259, %v6587
        %v6589 = vpop.f32.mrf.mxu0
        %v6590 = vadd.f32 %v6261, %v6589
        %6591 = vmatmul.bf16.gmra.mxu0 %v4601
        %v6592 = vpop.f32.mrf.mxu0
        %v6593 = vadd.f32 %v6264, %v6592
        %v6594 = vpop.f32.mrf.mxu0
        %v6595 = vadd.f32 %v6266, %v6594
        %6596 = vmatmul.bf16.gmra.mxu0 %v4606
        %v6597 = vpop.f32.mrf.mxu0
        %v6598 = vadd.f32 %v6269, %v6597
        %v6599 = vpop.f32.mrf.mxu0
        %v6600 = vadd.f32 %v6271, %v6599
        %6601 = vmatmul.bf16.gmra.mxu0 %v4611
        %v6602 = vpop.f32.mrf.mxu0
        %v6603 = vadd.f32 %v6274, %v6602
        %v6604 = vpop.f32.mrf.mxu0
        %v6605 = vadd.f32 %v6276, %v6604
        %6606 = vmatmul.bf16.gmra.mxu0 %v4616
        %v6607 = vpop.f32.mrf.mxu0
        %v6608 = vadd.f32 %v6279, %v6607
        %v6609 = vpop.f32.mrf.mxu0
        %v6610 = vadd.f32 %v6281, %v6609
        %6611 = vmatmul.bf16.gmra.mxu0 %v4621
        %v6612 = vpop.f32.mrf.mxu0
        %v6613 = vadd.f32 %v6284, %v6612
        %v6614 = vpop.f32.mrf.mxu0
        %v6615 = vadd.f32 %v6286, %v6614
        %6616 = vmatmul.bf16.gmra.mxu0 %v4626
        %v6617 = vpop.f32.mrf.mxu0
        %v6618 = vadd.f32 %v6289, %v6617
        %v6619 = vpop.f32.mrf.mxu0
        %v6620 = vadd.f32 %v6291, %v6619
        %6621 = vmatmul.bf16.gmra.mxu0 %v4631
        %v6622 = vpop.f32.mrf.mxu0
        %v6623 = vadd.f32 %v6294, %v6622
        %v6624 = vpop.f32.mrf.mxu0
        %v6625 = vadd.f32 %v6296, %v6624
        %6626 = vmatmul.bf16.gmra.mxu0 %v4636
        %v6627 = vpop.f32.mrf.mxu0
        %v6628 = vadd.f32 %v6299, %v6627
        %v6629 = vpop.f32.mrf.mxu0
        %v6630 = vadd.f32 %v6301, %v6629
        %6631 = vmatmul.bf16.gmra.mxu0 %v4641
        %v6632 = vpop.f32.mrf.mxu0
        %v6633 = vadd.f32 %v6304, %v6632
        %v6634 = vpop.f32.mrf.mxu0
        %v6635 = vadd.f32 %v6306, %v6634
        %6636 = vmatmul.bf16.gmra.mxu0 %v4646
        %v6637 = vpop.f32.mrf.mxu0
        %v6638 = vadd.f32 %v6309, %v6637
        %v6639 = vpop.f32.mrf.mxu0
        %v6640 = vadd.f32 %v6311, %v6639
        %6641 = vmatmul.bf16.gmra.mxu0 %v4651
        %v6642 = vpop.f32.mrf.mxu0
        %v6643 = vadd.f32 %v6314, %v6642
        %v6644 = vpop.f32.mrf.mxu0
        %v6645 = vadd.f32 %v6316, %v6644
        %6646 = vmatmul.bf16.gmra.mxu0 %v4656
        %v6647 = vpop.f32.mrf.mxu0
        %v6648 = vadd.f32 %v6319, %v6647
        %v6649 = vpop.f32.mrf.mxu0
        %v6650 = vadd.f32 %v6321, %v6649
        %6651 = vmatmul.bf16.gmra.mxu0 %v4661
        %v6652 = vpop.f32.mrf.mxu0
        %v6653 = vadd.f32 %v6324, %v6652
        %v6654 = vpop.f32.mrf.mxu0
        %v6655 = vadd.f32 %v6326, %v6654
        %6656 = vmatmul.bf16.gmra.mxu0 %v4666
        %v6657 = vpop.f32.mrf.mxu0
        %v6658 = vadd.f32 %v6329, %v6657
        %v6659 = vpop.f32.mrf.mxu0
        %v6660 = vadd.f32 %v6331, %v6659
        %6661 = vmatmul.bf16.gmra.mxu0 %v4671
        %v6662 = vpop.f32.mrf.mxu0
        %v6663 = vadd.f32 %v6334, %v6662
        %v6664 = vpop.f32.mrf.mxu0
        %v6665 = vadd.f32 %v6336, %v6664
        %6666 = vmatmul.bf16.gmra.mxu0 %v4676
        %v6667 = vpop.f32.mrf.mxu0
        %v6668 = vadd.f32 %v6339, %v6667
        %v6669 = vpop.f32.mrf.mxu0
        %v6670 = vadd.f32 %v6341, %v6669
        %6671 = vmatmul.bf16.gmra.mxu0 %v4681
        %v6672 = vpop.f32.mrf.mxu0
        %v6673 = vadd.f32 %v6344, %v6672
        %v6674 = vpop.f32.mrf.mxu0
        %v6675 = vadd.f32 %v6346, %v6674
        %6676 = vmatmul.bf16.gmra.mxu0 %v4686
        %v6677 = vpop.f32.mrf.mxu0
        %v6678 = vadd.f32 %v6349, %v6677
        %v6679 = vpop.f32.mrf.mxu0
        %v6680 = vadd.f32 %v6351, %v6679
        %6681 = vmatmul.bf16.gmra.mxu0 %v4691
        %v6682 = vpop.f32.mrf.mxu0
        %v6683 = vadd.f32 %v6354, %v6682
        %v6684 = vpop.f32.mrf.mxu0
        %v6685 = vadd.f32 %v6356, %v6684
        %6686 = vmatmul.bf16.gmra.mxu0 %v4696
        %v6687 = vpop.f32.mrf.mxu0
        %v6688 = vadd.f32 %v6359, %v6687
        %v6689 = vpop.f32.mrf.mxu0
        %v6690 = vadd.f32 %v6361, %v6689
        %6691 = vmatmul.bf16.gmra.mxu0 %v4701
        %v6692 = vpop.f32.mrf.mxu0
        %v6693 = vadd.f32 %v6364, %v6692
        %v6694 = vpop.f32.mrf.mxu0
        %v6695 = vadd.f32 %v6366, %v6694
        %6696 = vmatmul.bf16.gmra.mxu0 %v4706
        %v6697 = vpop.f32.mrf.mxu0
        %v6698 = vadd.f32 %v6369, %v6697
        %v6699 = vpop.f32.mrf.mxu0
        %v6700 = vadd.f32 %v6371, %v6699
        %6701 = vmatmul.bf16.gmra.mxu0 %v4711
        %v6702 = vpop.f32.mrf.mxu0
        %v6703 = vadd.f32 %v6374, %v6702
        %v6704 = vpop.f32.mrf.mxu0
        %v6705 = vadd.f32 %v6376, %v6704
        %6706 = vmatmul.bf16.gmra.mxu0 %v4716
        %v6707 = vpop.f32.mrf.mxu0
        %v6708 = vadd.f32 %v6379, %v6707
        %v6709 = vpop.f32.mrf.mxu0
        %v6710 = vadd.f32 %v6381, %v6709
        %6711 = vmatmul.bf16.gmra.mxu0 %v4721
        %v6712 = vpop.f32.mrf.mxu0
        %v6713 = vadd.f32 %v6384, %v6712
        %v6714 = vpop.f32.mrf.mxu0
        %v6715 = vadd.f32 %v6386, %v6714
        %6716 = vmatmul.bf16.gmra.mxu0 %v4726
        %v6717 = vpop.f32.mrf.mxu0
        %v6718 = vadd.f32 %v6389, %v6717
        %v6719 = vpop.f32.mrf.mxu0
        %v6720 = vadd.f32 %v6391, %v6719
        %6721 = vmatmul.bf16.gmra.mxu0 %v4731
        %v6722 = vpop.f32.mrf.mxu0
        %v6723 = vadd.f32 %v6394, %v6722
        %v6724 = vpop.f32.mrf.mxu0
        %v6725 = vadd.f32 %v6396, %v6724
        %6726 = vmatmul.bf16.gmra.mxu0 %v4736
        %v6727 = vpop.f32.mrf.mxu0
        %v6728 = vadd.f32 %v6399, %v6727
        %v6729 = vpop.f32.mrf.mxu0
        %v6730 = vadd.f32 %v6401, %v6729
        %6731 = vmatmul.bf16.gmra.mxu0 %v4741
        %v6732 = vpop.f32.mrf.mxu0
        %v6733 = vadd.f32 %v6404, %v6732
        %v6734 = vpop.f32.mrf.mxu0
        %v6735 = vadd.f32 %v6406, %v6734
        %6736 = vmatmul.bf16.gmra.mxu0 %v4746
        %v6737 = vpop.f32.mrf.mxu0
        %v6738 = vadd.f32 %v6409, %v6737
        %v6739 = vpop.f32.mrf.mxu0
        %v6740 = vadd.f32 %v6411, %v6739
        %6741 = vmatmul.bf16.gmra.mxu0 %v4751
        %v6742 = vpop.f32.mrf.mxu0
        %v6743 = vadd.f32 %v6414, %v6742
        %v6744 = vpop.f32.mrf.mxu0
        %v6745 = vadd.f32 %v6416, %v6744
        %6746 = vmatmul.bf16.gmra.mxu0 %v4756
        %v6747 = vpop.f32.mrf.mxu0
        %v6748 = vadd.f32 %v6419, %v6747
        %v6749 = vpop.f32.mrf.mxu0
        %v6750 = vadd.f32 %v6421, %v6749
        %6751 = vmatmul.bf16.gmra.mxu0 %v4761
        %v6752 = vpop.f32.mrf.mxu0
        %v6753 = vadd.f32 %v6424, %v6752
        %v6754 = vpop.f32.mrf.mxu0
        %v6755 = vadd.f32 %v6426, %v6754
        %6756 = vmatmul.bf16.gmra.mxu0 %v4766
        %v6757 = vpop.f32.mrf.mxu0
        %v6758 = vadd.f32 %v6429, %v6757
        %v6759 = vpop.f32.mrf.mxu0
        %v6760 = vadd.f32 %v6431, %v6759
        %6761 = vmatmul.bf16.gmra.mxu0 %v4771
        %v6762 = vpop.f32.mrf.mxu0
        %v6763 = vadd.f32 %v6434, %v6762
        %v6764 = vpop.f32.mrf.mxu0
        %v6765 = vadd.f32 %v6436, %v6764
        %6766 = vmatmul.bf16.gmra.mxu0 %v4776
        %v6767 = vpop.f32.mrf.mxu0
        %v6768 = vadd.f32 %v6439, %v6767
        %v6769 = vpop.f32.mrf.mxu0
        %v6770 = vadd.f32 %v6441, %v6769
        %6771 = vmatmul.bf16.gmra.mxu0 %v4781
        %v6772 = vpop.f32.mrf.mxu0
        %v6773 = vadd.f32 %v6444, %v6772
        %v6774 = vpop.f32.mrf.mxu0
        %v6775 = vadd.f32 %v6446, %v6774
        %6776 = vmatmul.bf16.gmra.mxu0 %v4786
        %v6777 = vpop.f32.mrf.mxu0
        %v6778 = vadd.f32 %v6449, %v6777
        %v6779 = vpop.f32.mrf.mxu0
        %v6780 = vadd.f32 %v6451, %v6779
        %6781 = vmatmul.bf16.gmra.mxu0 %v4791
        %v6782 = vpop.f32.mrf.mxu0
        %v6783 = vadd.f32 %v6454, %v6782
        %v6784 = vpop.f32.mrf.mxu0
        %v6785 = vadd.f32 %v6456, %v6784
        %6786 = vmatmul.bf16.gmra.mxu0 %v4796
        %v6787 = vpop.f32.mrf.mxu0
        %v6788 = vadd.f32 %v6459, %v6787
        %v6789 = vpop.f32.mrf.mxu0
        %v6790 = vadd.f32 %v6461, %v6789
        %6791 = vmatmul.bf16.gmra.mxu0 %v4801
        %v6792 = vpop.f32.mrf.mxu0
        %v6793 = vadd.f32 %v6464, %v6792
        %v6794 = vpop.f32.mrf.mxu0
        %v6795 = vadd.f32 %v6466, %v6794
        %6796 = vmatmul.bf16.gmra.mxu0 %v4806
        %v6797 = vpop.f32.mrf.mxu0
        %v6798 = vadd.f32 %v6469, %v6797
        %v6799 = vpop.f32.mrf.mxu0
        %v6800 = vadd.f32 %v6471, %v6799
        %6801 = vmatmul.bf16.gmra.mxu0 %v4811
        %v6802 = vpop.f32.mrf.mxu0
        %v6803 = vadd.f32 %v6474, %v6802
        %v6804 = vpop.f32.mrf.mxu0
        %v6805 = vadd.f32 %v6476, %v6804
        %6806 = vmatmul.bf16.gmra.mxu0 %v4816
        %v6807 = vpop.f32.mrf.mxu0
        %v6808 = vadd.f32 %v6479, %v6807
        %v6809 = vpop.f32.mrf.mxu0
        %v6810 = vadd.f32 %v6481, %v6809
        %6811 = vmatmul.bf16.gmra.mxu0 %v4821
        %v6812 = vpop.f32.mrf.mxu0
        %v6813 = vadd.f32 %v6484, %v6812
        %v6814 = vpop.f32.mrf.mxu0
        %v6815 = vadd.f32 %v6486, %v6814
        %6816 = vdwg.mxu0
        %6817 = vmatpush.bf16.msra.mxu0 0
        %6818 = vmatpush.bf16.msra.mxu0 0
        %6819 = vmatpush.bf16.msra.mxu0 %v5499
        %6820 = vmatpush.bf16.msra.mxu0 %v5265
        %6821 = vmatpush.bf16.msra.mxu0 %v5264
        %6822 = vmatpush.bf16.msra.mxu0 %v5263
        %6823 = vmatpush.bf16.msra.mxu0 %v5262
        %6824 = vmatpush.bf16.msra.mxu0 %v5261
        %6825 = vmatmul.bf16.gmra.mxu0 %v5306
        %v6826 = vpop.f32.mrf.mxu0
        %v6827 = vadd.f32 %v6498, %v6826
        %v6828 = vpop.f32.mrf.mxu0
        %v6829 = vadd.f32 %v6500, %v6828
        %6830 = vmatmul.bf16.gmra.mxu0 %v5309
        %v6831 = vpop.f32.mrf.mxu0
        %v6832 = vadd.f32 %v6503, %v6831
        %v6833 = vpop.f32.mrf.mxu0
        %v6834 = vadd.f32 %v6505, %v6833
        %6835 = vmatmul.bf16.gmra.mxu0 %v5312
        %v6836 = vpop.f32.mrf.mxu0
        %v6837 = vadd.f32 %v6508, %v6836
        %v6838 = vpop.f32.mrf.mxu0
        %v6839 = vadd.f32 %v6510, %v6838
        %6840 = vmatmul.bf16.gmra.mxu0 %v5315
        %v6841 = vpop.f32.mrf.mxu0
        %v6842 = vadd.f32 %v6513, %v6841
        %v6843 = vpop.f32.mrf.mxu0
        %v6844 = vadd.f32 %v6515, %v6843
        %6845 = vmatmul.bf16.gmra.mxu0 %v5318
        %v6846 = vpop.f32.mrf.mxu0
        %v6847 = vadd.f32 %v6518, %v6846
        %v6848 = vpop.f32.mrf.mxu0
        %v6849 = vadd.f32 %v6520, %v6848
        %6850 = vmatmul.bf16.gmra.mxu0 %v5321
        %v6851 = vpop.f32.mrf.mxu0
        %v6852 = vadd.f32 %v6523, %v6851
        %v6853 = vpop.f32.mrf.mxu0
        %v6854 = vadd.f32 %v6525, %v6853
        %6855 = vmatmul.bf16.gmra.mxu0 %v5324
        %v6856 = vpop.f32.mrf.mxu0
        %v6857 = vadd.f32 %v6528, %v6856
        %v6858 = vpop.f32.mrf.mxu0
        %v6859 = vadd.f32 %v6530, %v6858
        %6860 = vmatmul.bf16.gmra.mxu0 %v5327
        %v6861 = vpop.f32.mrf.mxu0
        %v6862 = vadd.f32 %v6533, %v6861
        %v6863 = vpop.f32.mrf.mxu0
        %v6864 = vadd.f32 %v6535, %v6863
        %6865 = vmatmul.bf16.gmra.mxu0 %v5330
        %v6866 = vpop.f32.mrf.mxu0
        %v6867 = vadd.f32 %v6538, %v6866
        %v6868 = vpop.f32.mrf.mxu0
        %v6869 = vadd.f32 %v6540, %v6868
        %6870 = vmatmul.bf16.gmra.mxu0 %v5333
        %v6871 = vpop.f32.mrf.mxu0
        %v6872 = vadd.f32 %v6543, %v6871
        %v6873 = vpop.f32.mrf.mxu0
        %v6874 = vadd.f32 %v6545, %v6873
        %6875 = vmatmul.bf16.gmra.mxu0 %v5336
        %v6876 = vpop.f32.mrf.mxu0
        %v6877 = vadd.f32 %v6548, %v6876
        %v6878 = vpop.f32.mrf.mxu0
        %v6879 = vadd.f32 %v6550, %v6878
        %6880 = vmatmul.bf16.gmra.mxu0 %v5339
        %v6881 = vpop.f32.mrf.mxu0
        %v6882 = vadd.f32 %v6553, %v6881
        %v6883 = vpop.f32.mrf.mxu0
        %v6884 = vadd.f32 %v6555, %v6883
        %6885 = vmatmul.bf16.gmra.mxu0 %v5342
        %v6886 = vpop.f32.mrf.mxu0
        %v6887 = vadd.f32 %v6558, %v6886
        %v6888 = vpop.f32.mrf.mxu0
        %v6889 = vadd.f32 %v6560, %v6888
        %6890 = vmatmul.bf16.gmra.mxu0 %v5345
        %v6891 = vpop.f32.mrf.mxu0
        %v6892 = vadd.f32 %v6563, %v6891
        %v6893 = vpop.f32.mrf.mxu0
        %v6894 = vadd.f32 %v6565, %v6893
        %6895 = vmatmul.bf16.gmra.mxu0 %v5348
        %v6896 = vpop.f32.mrf.mxu0
        %v6897 = vadd.f32 %v6568, %v6896
        %v6898 = vpop.f32.mrf.mxu0
        %v6899 = vadd.f32 %v6570, %v6898
        %6900 = vmatmul.bf16.gmra.mxu0 %v5351
        %v6901 = vpop.f32.mrf.mxu0
        %v6902 = vadd.f32 %v6573, %v6901
        %v6903 = vpop.f32.mrf.mxu0
        %v6904 = vadd.f32 %v6575, %v6903
        %6905 = vmatmul.bf16.gmra.mxu0 %v5354
        %v6906 = vpop.f32.mrf.mxu0
        %v6907 = vadd.f32 %v6578, %v6906
        %v6908 = vpop.f32.mrf.mxu0
        %v6909 = vadd.f32 %v6580, %v6908
        %6910 = vmatmul.bf16.gmra.mxu0 %v5357
        %v6911 = vpop.f32.mrf.mxu0
        %v6912 = vadd.f32 %v6583, %v6911
        %v6913 = vpop.f32.mrf.mxu0
        %v6914 = vadd.f32 %v6585, %v6913
        %6915 = vmatmul.bf16.gmra.mxu0 %v5360
        %v6916 = vpop.f32.mrf.mxu0
        %v6917 = vadd.f32 %v6588, %v6916
        %v6918 = vpop.f32.mrf.mxu0
        %v6919 = vadd.f32 %v6590, %v6918
        %6920 = vmatmul.bf16.gmra.mxu0 %v5363
        %v6921 = vpop.f32.mrf.mxu0
        %v6922 = vadd.f32 %v6593, %v6921
        %v6923 = vpop.f32.mrf.mxu0
        %v6924 = vadd.f32 %v6595, %v6923
        %6925 = vmatmul.bf16.gmra.mxu0 %v5366
        %v6926 = vpop.f32.mrf.mxu0
        %v6927 = vadd.f32 %v6598, %v6926
        %v6928 = vpop.f32.mrf.mxu0
        %v6929 = vadd.f32 %v6600, %v6928
        %6930 = vmatmul.bf16.gmra.mxu0 %v5369
        %v6931 = vpop.f32.mrf.mxu0
        %v6932 = vadd.f32 %v6603, %v6931
        %v6933 = vpop.f32.mrf.mxu0
        %v6934 = vadd.f32 %v6605, %v6933
        %6935 = vmatmul.bf16.gmra.mxu0 %v5372
        %v6936 = vpop.f32.mrf.mxu0
        %v6937 = vadd.f32 %v6608, %v6936
        %v6938 = vpop.f32.mrf.mxu0
        %v6939 = vadd.f32 %v6610, %v6938
        %6940 = vmatmul.bf16.gmra.mxu0 %v5375
        %v6941 = vpop.f32.mrf.mxu0
        %v6942 = vadd.f32 %v6613, %v6941
        %v6943 = vpop.f32.mrf.mxu0
        %v6944 = vadd.f32 %v6615, %v6943
        %6945 = vmatmul.bf16.gmra.mxu0 %v5378
        %v6946 = vpop.f32.mrf.mxu0
        %v6947 = vadd.f32 %v6618, %v6946
        %v6948 = vpop.f32.mrf.mxu0
        %v6949 = vadd.f32 %v6620, %v6948
        %6950 = vmatmul.bf16.gmra.mxu0 %v5381
        %v6951 = vpop.f32.mrf.mxu0
        %v6952 = vadd.f32 %v6623, %v6951
        %v6953 = vpop.f32.mrf.mxu0
        %v6954 = vadd.f32 %v6625, %v6953
        %6955 = vmatmul.bf16.gmra.mxu0 %v5384
        %v6956 = vpop.f32.mrf.mxu0
        %v6957 = vadd.f32 %v6628, %v6956
        %v6958 = vpop.f32.mrf.mxu0
        %v6959 = vadd.f32 %v6630, %v6958
        %6960 = vmatmul.bf16.gmra.mxu0 %v5387
        %v6961 = vpop.f32.mrf.mxu0
        %v6962 = vadd.f32 %v6633, %v6961
        %v6963 = vpop.f32.mrf.mxu0
        %v6964 = vadd.f32 %v6635, %v6963
        %6965 = vmatmul.bf16.gmra.mxu0 %v5390
        %v6966 = vpop.f32.mrf.mxu0
        %v6967 = vadd.f32 %v6638, %v6966
        %v6968 = vpop.f32.mrf.mxu0
        %v6969 = vadd.f32 %v6640, %v6968
        %6970 = vmatmul.bf16.gmra.mxu0 %v5393
        %v6971 = vpop.f32.mrf.mxu0
        %v6972 = vadd.f32 %v6643, %v6971
        %v6973 = vpop.f32.mrf.mxu0
        %v6974 = vadd.f32 %v6645, %v6973
        %6975 = vmatmul.bf16.gmra.mxu0 %v5396
        %v6976 = vpop.f32.mrf.mxu0
        %v6977 = vadd.f32 %v6648, %v6976
        %v6978 = vpop.f32.mrf.mxu0
        %v6979 = vadd.f32 %v6650, %v6978
        %6980 = vmatmul.bf16.gmra.mxu0 %v5399
        %v6981 = vpop.f32.mrf.mxu0
        %v6982 = vadd.f32 %v6653, %v6981
        %v6983 = vpop.f32.mrf.mxu0
        %v6984 = vadd.f32 %v6655, %v6983
        %6985 = vmatmul.bf16.gmra.mxu0 %v5402
        %v6986 = vpop.f32.mrf.mxu0
        %v6987 = vadd.f32 %v6658, %v6986
        %v6988 = vpop.f32.mrf.mxu0
        %v6989 = vadd.f32 %v6660, %v6988
        %6990 = vmatmul.bf16.gmra.mxu0 %v5405
        %v6991 = vpop.f32.mrf.mxu0
        %v6992 = vadd.f32 %v6663, %v6991
        %v6993 = vpop.f32.mrf.mxu0
        %v6994 = vadd.f32 %v6665, %v6993
        %6995 = vmatmul.bf16.gmra.mxu0 %v5408
        %v6996 = vpop.f32.mrf.mxu0
        %v6997 = vadd.f32 %v6668, %v6996
        %v6998 = vpop.f32.mrf.mxu0
        %v6999 = vadd.f32 %v6670, %v6998
        %7000 = vmatmul.bf16.gmra.mxu0 %v5411
        %v7001 = vpop.f32.mrf.mxu0
        %v7002 = vadd.f32 %v6673, %v7001
        %v7003 = vpop.f32.mrf.mxu0
        %v7004 = vadd.f32 %v6675, %v7003
        %7005 = vmatmul.bf16.gmra.mxu0 %v5414
        %v7006 = vpop.f32.mrf.mxu0
        %v7007 = vadd.f32 %v6678, %v7006
        %v7008 = vpop.f32.mrf.mxu0
        %v7009 = vadd.f32 %v6680, %v7008
        %7010 = vmatmul.bf16.gmra.mxu0 %v5417
        %v7011 = vpop.f32.mrf.mxu0
        %v7012 = vadd.f32 %v6683, %v7011
        %v7013 = vpop.f32.mrf.mxu0
        %v7014 = vadd.f32 %v6685, %v7013
        %7015 = vmatmul.bf16.gmra.mxu0 %v5420
        %v7016 = vpop.f32.mrf.mxu0
        %v7017 = vadd.f32 %v6688, %v7016
        %v7018 = vpop.f32.mrf.mxu0
        %v7019 = vadd.f32 %v6690, %v7018
        %7020 = vmatmul.bf16.gmra.mxu0 %v5423
        %v7021 = vpop.f32.mrf.mxu0
        %v7022 = vadd.f32 %v6693, %v7021
        %v7023 = vpop.f32.mrf.mxu0
        %v7024 = vadd.f32 %v6695, %v7023
        %7025 = vmatmul.bf16.gmra.mxu0 %v5426
        %v7026 = vpop.f32.mrf.mxu0
        %v7027 = vadd.f32 %v6698, %v7026
        %v7028 = vpop.f32.mrf.mxu0
        %v7029 = vadd.f32 %v6700, %v7028
        %7030 = vmatmul.bf16.gmra.mxu0 %v5429
        %v7031 = vpop.f32.mrf.mxu0
        %v7032 = vadd.f32 %v6703, %v7031
        %v7033 = vpop.f32.mrf.mxu0
        %v7034 = vadd.f32 %v6705, %v7033
        %7035 = vmatmul.bf16.gmra.mxu0 %v5432
        %v7036 = vpop.f32.mrf.mxu0
        %v7037 = vadd.f32 %v6708, %v7036
        %v7038 = vpop.f32.mrf.mxu0
        %v7039 = vadd.f32 %v6710, %v7038
        %7040 = vmatmul.bf16.gmra.mxu0 %v5435
        %v7041 = vpop.f32.mrf.mxu0
        %v7042 = vadd.f32 %v6713, %v7041
        %v7043 = vpop.f32.mrf.mxu0
        %v7044 = vadd.f32 %v6715, %v7043
        %7045 = vmatmul.bf16.gmra.mxu0 %v5438
        %v7046 = vpop.f32.mrf.mxu0
        %v7047 = vadd.f32 %v6718, %v7046
        %v7048 = vpop.f32.mrf.mxu0
        %v7049 = vadd.f32 %v6720, %v7048
        %7050 = vmatmul.bf16.gmra.mxu0 %v5441
        %v7051 = vpop.f32.mrf.mxu0
        %v7052 = vadd.f32 %v6723, %v7051
        %v7053 = vpop.f32.mrf.mxu0
        %v7054 = vadd.f32 %v6725, %v7053
        %7055 = vmatmul.bf16.gmra.mxu0 %v5444
        %v7056 = vpop.f32.mrf.mxu0
        %v7057 = vadd.f32 %v6728, %v7056
        %v7058 = vpop.f32.mrf.mxu0
        %v7059 = vadd.f32 %v6730, %v7058
        %7060 = vmatmul.bf16.gmra.mxu0 %v5447
        %v7061 = vpop.f32.mrf.mxu0
        %v7062 = vadd.f32 %v6733, %v7061
        %v7063 = vpop.f32.mrf.mxu0
        %v7064 = vadd.f32 %v6735, %v7063
        %7065 = vmatmul.bf16.gmra.mxu0 %v5450
        %v7066 = vpop.f32.mrf.mxu0
        %v7067 = vadd.f32 %v6738, %v7066
        %v7068 = vpop.f32.mrf.mxu0
        %v7069 = vadd.f32 %v6740, %v7068
        %7070 = vmatmul.bf16.gmra.mxu0 %v5453
        %v7071 = vpop.f32.mrf.mxu0
        %v7072 = vadd.f32 %v6743, %v7071
        %v7073 = vpop.f32.mrf.mxu0
        %v7074 = vadd.f32 %v6745, %v7073
        %7075 = vmatmul.bf16.gmra.mxu0 %v5456
        %v7076 = vpop.f32.mrf.mxu0
        %v7077 = vadd.f32 %v6748, %v7076
        %v7078 = vpop.f32.mrf.mxu0
        %v7079 = vadd.f32 %v6750, %v7078
        %7080 = vmatmul.bf16.gmra.mxu0 %v5459
        %v7081 = vpop.f32.mrf.mxu0
        %v7082 = vadd.f32 %v6753, %v7081
        %v7083 = vpop.f32.mrf.mxu0
        %v7084 = vadd.f32 %v6755, %v7083
        %7085 = vmatmul.bf16.gmra.mxu0 %v5462
        %v7086 = vpop.f32.mrf.mxu0
        %v7087 = vadd.f32 %v6758, %v7086
        %v7088 = vpop.f32.mrf.mxu0
        %v7089 = vadd.f32 %v6760, %v7088
        %7090 = vmatmul.bf16.gmra.mxu0 %v5465
        %v7091 = vpop.f32.mrf.mxu0
        %v7092 = vadd.f32 %v6763, %v7091
        %v7093 = vpop.f32.mrf.mxu0
        %v7094 = vadd.f32 %v6765, %v7093
        %7095 = vmatmul.bf16.gmra.mxu0 %v5468
        %v7096 = vpop.f32.mrf.mxu0
        %v7097 = vadd.f32 %v6768, %v7096
        %v7098 = vpop.f32.mrf.mxu0
        %v7099 = vadd.f32 %v6770, %v7098
        %7100 = vmatmul.bf16.gmra.mxu0 %v5471
        %v7101 = vpop.f32.mrf.mxu0
        %v7102 = vadd.f32 %v6773, %v7101
        %v7103 = vpop.f32.mrf.mxu0
        %v7104 = vadd.f32 %v6775, %v7103
        %7105 = vmatmul.bf16.gmra.mxu0 %v5474
        %v7106 = vpop.f32.mrf.mxu0
        %v7107 = vadd.f32 %v6778, %v7106
        %v7108 = vpop.f32.mrf.mxu0
        %v7109 = vadd.f32 %v6780, %v7108
        %7110 = vmatmul.bf16.gmra.mxu0 %v5477
        %v7111 = vpop.f32.mrf.mxu0
        %v7112 = vadd.f32 %v6783, %v7111
        %v7113 = vpop.f32.mrf.mxu0
        %v7114 = vadd.f32 %v6785, %v7113
        %7115 = vmatmul.bf16.gmra.mxu0 %v5480
        %v7116 = vpop.f32.mrf.mxu0
        %v7117 = vadd.f32 %v6788, %v7116
        %v7118 = vpop.f32.mrf.mxu0
        %v7119 = vadd.f32 %v6790, %v7118
        %7120 = vmatmul.bf16.gmra.mxu0 %v5483
        %v7121 = vpop.f32.mrf.mxu0
        %v7122 = vadd.f32 %v6793, %v7121
        %v7123 = vpop.f32.mrf.mxu0
        %v7124 = vadd.f32 %v6795, %v7123
        %7125 = vmatmul.bf16.gmra.mxu0 %v5486
        %v7126 = vpop.f32.mrf.mxu0
        %v7127 = vadd.f32 %v6798, %v7126
        %v7128 = vpop.f32.mrf.mxu0
        %v7129 = vadd.f32 %v6800, %v7128
        %7130 = vmatmul.bf16.gmra.mxu0 %v5489
        %v7131 = vpop.f32.mrf.mxu0
        %v7132 = vadd.f32 %v6803, %v7131
        %v7133 = vpop.f32.mrf.mxu0
        %v7134 = vadd.f32 %v6805, %v7133
        %7135 = vmatmul.bf16.gmra.mxu0 %v5492
        %v7136 = vpop.f32.mrf.mxu0
        %v7137 = vadd.f32 %v6808, %v7136
        %v7138 = vpop.f32.mrf.mxu0
        %v7139 = vadd.f32 %v6810, %v7138
        %7140 = vmatmul.bf16.gmra.mxu0 %v5495
        %v7141 = vpop.f32.mrf.mxu0
        %v7142 = vadd.f32 %v6813, %v7141
        %v7143 = vpop.f32.mrf.mxu0
        %v7144 = vadd.f32 %v6815, %v7143
        %7145 = vdwg.mxu0
        %vm7146 = vcmask 261120
        %v7147 = vsel %vm7146, %v6827, 0.0
        %7148 = vadd.xlane.f32.xlu0 %v7147
        %v7149 = vpop.xlane.xlu0 %7148
        %v7150 = vsel %vm7146, %v6829, 0.0
        %7151 = vadd.xlane.f32.xlu0 %v7150
        %v7152 = vpop.xlane.xlu0 %7151
        %v7153 = vsel %vm7146, %v6832, 0.0
        %7154 = vadd.xlane.f32.xlu0 %v7153
        %v7155 = vpop.xlane.xlu0 %7154
        %v7156 = vsel %vm7146, %v6834, 0.0
        %7157 = vadd.xlane.f32.xlu0 %v7156
        %v7158 = vpop.xlane.xlu0 %7157
        %v7159 = vsel %vm7146, %v6837, 0.0
        %7160 = vadd.xlane.f32.xlu0 %v7159
        %v7161 = vpop.xlane.xlu0 %7160
        %v7162 = vsel %vm7146, %v6839, 0.0
        %7163 = vadd.xlane.f32.xlu0 %v7162
        %v7164 = vpop.xlane.xlu0 %7163
        %v7165 = vsel %vm7146, %v6842, 0.0
        %7166 = vadd.xlane.f32.xlu0 %v7165
        %v7167 = vpop.xlane.xlu0 %7166
        %v7168 = vsel %vm7146, %v6844, 0.0
        %7169 = vadd.xlane.f32.xlu0 %v7168
        %v7170 = vpop.xlane.xlu0 %7169
        %v7171 = vsel %vm7146, %v6847, 0.0
        %7172 = vadd.xlane.f32.xlu0 %v7171
        %v7173 = vpop.xlane.xlu0 %7172
        %v7174 = vsel %vm7146, %v6849, 0.0
        %7175 = vadd.xlane.f32.xlu0 %v7174
        %v7176 = vpop.xlane.xlu0 %7175
        %v7177 = vsel %vm7146, %v6852, 0.0
        %7178 = vadd.xlane.f32.xlu0 %v7177
        %v7179 = vpop.xlane.xlu0 %7178
        %v7180 = vsel %vm7146, %v6854, 0.0
        %7181 = vadd.xlane.f32.xlu0 %v7180
        %v7182 = vpop.xlane.xlu0 %7181
        %v7183 = vsel %vm7146, %v6857, 0.0
        %7184 = vadd.xlane.f32.xlu0 %v7183
        %v7185 = vpop.xlane.xlu0 %7184
        %v7186 = vsel %vm7146, %v6859, 0.0
        %7187 = vadd.xlane.f32.xlu0 %v7186
        %v7188 = vpop.xlane.xlu0 %7187
        %v7189 = vsel %vm7146, %v6862, 0.0
        %7190 = vadd.xlane.f32.xlu0 %v7189
        %v7191 = vpop.xlane.xlu0 %7190
        %v7192 = vsel %vm7146, %v6864, 0.0
        %7193 = vadd.xlane.f32.xlu0 %v7192
        %v7194 = vpop.xlane.xlu0 %7193
        %v7195 = vsel %vm7146, %v6867, 0.0
        %7196 = vadd.xlane.f32.xlu0 %v7195
        %v7197 = vpop.xlane.xlu0 %7196
        %v7198 = vsel %vm7146, %v6869, 0.0
        %7199 = vadd.xlane.f32.xlu0 %v7198
        %v7200 = vpop.xlane.xlu0 %7199
        %v7201 = vsel %vm7146, %v6872, 0.0
        %7202 = vadd.xlane.f32.xlu0 %v7201
        %v7203 = vpop.xlane.xlu0 %7202
        %v7204 = vsel %vm7146, %v6874, 0.0
        %7205 = vadd.xlane.f32.xlu0 %v7204
        %v7206 = vpop.xlane.xlu0 %7205
        %v7207 = vsel %vm7146, %v6877, 0.0
        %7208 = vadd.xlane.f32.xlu0 %v7207
        %v7209 = vpop.xlane.xlu0 %7208
        %v7210 = vsel %vm7146, %v6879, 0.0
        %7211 = vadd.xlane.f32.xlu0 %v7210
        %v7212 = vpop.xlane.xlu0 %7211
        %v7213 = vsel %vm7146, %v6882, 0.0
        %7214 = vadd.xlane.f32.xlu0 %v7213
        %v7215 = vpop.xlane.xlu0 %7214
        %v7216 = vsel %vm7146, %v6884, 0.0
        %7217 = vadd.xlane.f32.xlu0 %v7216
        %v7218 = vpop.xlane.xlu0 %7217
        %v7219 = vsel %vm7146, %v6887, 0.0
        %7220 = vadd.xlane.f32.xlu0 %v7219
        %v7221 = vpop.xlane.xlu0 %7220
        %v7222 = vsel %vm7146, %v6889, 0.0
        %7223 = vadd.xlane.f32.xlu0 %v7222
        %v7224 = vpop.xlane.xlu0 %7223
        %v7225 = vsel %vm7146, %v6892, 0.0
        %7226 = vadd.xlane.f32.xlu0 %v7225
        %v7227 = vpop.xlane.xlu0 %7226
        %v7228 = vsel %vm7146, %v6894, 0.0
        %7229 = vadd.xlane.f32.xlu0 %v7228
        %v7230 = vpop.xlane.xlu0 %7229
        %v7231 = vsel %vm7146, %v6897, 0.0
        %7232 = vadd.xlane.f32.xlu0 %v7231
        %v7233 = vpop.xlane.xlu0 %7232
        %v7234 = vsel %vm7146, %v6899, 0.0
        %7235 = vadd.xlane.f32.xlu0 %v7234
        %v7236 = vpop.xlane.xlu0 %7235
        %v7237 = vsel %vm7146, %v6902, 0.0
        %7238 = vadd.xlane.f32.xlu0 %v7237
        %v7239 = vpop.xlane.xlu0 %7238
        %v7240 = vsel %vm7146, %v6904, 0.0
        %7241 = vadd.xlane.f32.xlu0 %v7240
        %v7242 = vpop.xlane.xlu0 %7241
        %v7243 = vsel %vm7146, %v6907, 0.0
        %7244 = vadd.xlane.f32.xlu0 %v7243
        %v7245 = vpop.xlane.xlu0 %7244
        %v7246 = vsel %vm7146, %v6909, 0.0
        %7247 = vadd.xlane.f32.xlu0 %v7246
        %v7248 = vpop.xlane.xlu0 %7247
        %v7249 = vsel %vm7146, %v6912, 0.0
        %7250 = vadd.xlane.f32.xlu0 %v7249
        %v7251 = vpop.xlane.xlu0 %7250
        %v7252 = vsel %vm7146, %v6914, 0.0
        %7253 = vadd.xlane.f32.xlu0 %v7252
        %v7254 = vpop.xlane.xlu0 %7253
        %v7255 = vsel %vm7146, %v6917, 0.0
        %7256 = vadd.xlane.f32.xlu0 %v7255
        %v7257 = vpop.xlane.xlu0 %7256
        %v7258 = vsel %vm7146, %v6919, 0.0
        %7259 = vadd.xlane.f32.xlu0 %v7258
        %v7260 = vpop.xlane.xlu0 %7259
        %v7261 = vsel %vm7146, %v6922, 0.0
        %7262 = vadd.xlane.f32.xlu0 %v7261
        %v7263 = vpop.xlane.xlu0 %7262
        %v7264 = vsel %vm7146, %v6924, 0.0
        %7265 = vadd.xlane.f32.xlu0 %v7264
        %v7266 = vpop.xlane.xlu0 %7265
        %v7267 = vsel %vm7146, %v6927, 0.0
        %7268 = vadd.xlane.f32.xlu0 %v7267
        %v7269 = vpop.xlane.xlu0 %7268
        %v7270 = vsel %vm7146, %v6929, 0.0
        %7271 = vadd.xlane.f32.xlu0 %v7270
        %v7272 = vpop.xlane.xlu0 %7271
        %v7273 = vsel %vm7146, %v6932, 0.0
        %7274 = vadd.xlane.f32.xlu0 %v7273
        %v7275 = vpop.xlane.xlu0 %7274
        %v7276 = vsel %vm7146, %v6934, 0.0
        %7277 = vadd.xlane.f32.xlu0 %v7276
        %v7278 = vpop.xlane.xlu0 %7277
        %v7279 = vsel %vm7146, %v6937, 0.0
        %7280 = vadd.xlane.f32.xlu0 %v7279
        %v7281 = vpop.xlane.xlu0 %7280
        %v7282 = vsel %vm7146, %v6939, 0.0
        %7283 = vadd.xlane.f32.xlu0 %v7282
        %v7284 = vpop.xlane.xlu0 %7283
        %v7285 = vsel %vm7146, %v6942, 0.0
        %7286 = vadd.xlane.f32.xlu0 %v7285
        %v7287 = vpop.xlane.xlu0 %7286
        %v7288 = vsel %vm7146, %v6944, 0.0
        %7289 = vadd.xlane.f32.xlu0 %v7288
        %v7290 = vpop.xlane.xlu0 %7289
        %v7291 = vsel %vm7146, %v6947, 0.0
        %7292 = vadd.xlane.f32.xlu0 %v7291
        %v7293 = vpop.xlane.xlu0 %7292
        %v7294 = vsel %vm7146, %v6949, 0.0
        %7295 = vadd.xlane.f32.xlu0 %v7294
        %v7296 = vpop.xlane.xlu0 %7295
        %v7297 = vsel %vm7146, %v6952, 0.0
        %7298 = vadd.xlane.f32.xlu0 %v7297
        %v7299 = vpop.xlane.xlu0 %7298
        %v7300 = vsel %vm7146, %v6954, 0.0
        %7301 = vadd.xlane.f32.xlu0 %v7300
        %v7302 = vpop.xlane.xlu0 %7301
        %v7303 = vsel %vm7146, %v6957, 0.0
        %7304 = vadd.xlane.f32.xlu0 %v7303
        %v7305 = vpop.xlane.xlu0 %7304
        %v7306 = vsel %vm7146, %v6959, 0.0
        %7307 = vadd.xlane.f32.xlu0 %v7306
        %v7308 = vpop.xlane.xlu0 %7307
        %v7309 = vsel %vm7146, %v6962, 0.0
        %7310 = vadd.xlane.f32.xlu0 %v7309
        %v7311 = vpop.xlane.xlu0 %7310
        %v7312 = vsel %vm7146, %v6964, 0.0
        %7313 = vadd.xlane.f32.xlu0 %v7312
        %v7314 = vpop.xlane.xlu0 %7313
        %v7315 = vsel %vm7146, %v6967, 0.0
        %7316 = vadd.xlane.f32.xlu0 %v7315
        %v7317 = vpop.xlane.xlu0 %7316
        %v7318 = vsel %vm7146, %v6969, 0.0
        %7319 = vadd.xlane.f32.xlu0 %v7318
        %v7320 = vpop.xlane.xlu0 %7319
        %v7321 = vsel %vm7146, %v6972, 0.0
        %7322 = vadd.xlane.f32.xlu0 %v7321
        %v7323 = vpop.xlane.xlu0 %7322
        %v7324 = vsel %vm7146, %v6974, 0.0
        %7325 = vadd.xlane.f32.xlu0 %v7324
        %v7326 = vpop.xlane.xlu0 %7325
        %v7327 = vsel %vm7146, %v6977, 0.0
        %7328 = vadd.xlane.f32.xlu0 %v7327
        %v7329 = vpop.xlane.xlu0 %7328
        %v7330 = vsel %vm7146, %v6979, 0.0
        %7331 = vadd.xlane.f32.xlu0 %v7330
        %v7332 = vpop.xlane.xlu0 %7331
        %v7333 = vsel %vm7146, %v6982, 0.0
        %7334 = vadd.xlane.f32.xlu0 %v7333
        %v7335 = vpop.xlane.xlu0 %7334
        %v7336 = vsel %vm7146, %v6984, 0.0
        %7337 = vadd.xlane.f32.xlu0 %v7336
        %v7338 = vpop.xlane.xlu0 %7337
        %v7339 = vsel %vm7146, %v6987, 0.0
        %7340 = vadd.xlane.f32.xlu0 %v7339
        %v7341 = vpop.xlane.xlu0 %7340
        %v7342 = vsel %vm7146, %v6989, 0.0
        %7343 = vadd.xlane.f32.xlu0 %v7342
        %v7344 = vpop.xlane.xlu0 %7343
        %v7345 = vsel %vm7146, %v6992, 0.0
        %7346 = vadd.xlane.f32.xlu0 %v7345
        %v7347 = vpop.xlane.xlu0 %7346
        %v7348 = vsel %vm7146, %v6994, 0.0
        %7349 = vadd.xlane.f32.xlu0 %v7348
        %v7350 = vpop.xlane.xlu0 %7349
        %v7351 = vsel %vm7146, %v6997, 0.0
        %7352 = vadd.xlane.f32.xlu0 %v7351
        %v7353 = vpop.xlane.xlu0 %7352
        %v7354 = vsel %vm7146, %v6999, 0.0
        %7355 = vadd.xlane.f32.xlu0 %v7354
        %v7356 = vpop.xlane.xlu0 %7355
        %v7357 = vsel %vm7146, %v7002, 0.0
        %7358 = vadd.xlane.f32.xlu0 %v7357
        %v7359 = vpop.xlane.xlu0 %7358
        %v7360 = vsel %vm7146, %v7004, 0.0
        %7361 = vadd.xlane.f32.xlu0 %v7360
        %v7362 = vpop.xlane.xlu0 %7361
        %v7363 = vsel %vm7146, %v7007, 0.0
        %7364 = vadd.xlane.f32.xlu0 %v7363
        %v7365 = vpop.xlane.xlu0 %7364
        %v7366 = vsel %vm7146, %v7009, 0.0
        %7367 = vadd.xlane.f32.xlu0 %v7366
        %v7368 = vpop.xlane.xlu0 %7367
        %v7369 = vsel %vm7146, %v7012, 0.0
        %7370 = vadd.xlane.f32.xlu0 %v7369
        %v7371 = vpop.xlane.xlu0 %7370
        %v7372 = vsel %vm7146, %v7014, 0.0
        %7373 = vadd.xlane.f32.xlu0 %v7372
        %v7374 = vpop.xlane.xlu0 %7373
        %v7375 = vsel %vm7146, %v7017, 0.0
        %7376 = vadd.xlane.f32.xlu0 %v7375
        %v7377 = vpop.xlane.xlu0 %7376
        %v7378 = vsel %vm7146, %v7019, 0.0
        %7379 = vadd.xlane.f32.xlu0 %v7378
        %v7380 = vpop.xlane.xlu0 %7379
        %v7381 = vsel %vm7146, %v7022, 0.0
        %7382 = vadd.xlane.f32.xlu0 %v7381
        %v7383 = vpop.xlane.xlu0 %7382
        %v7384 = vsel %vm7146, %v7024, 0.0
        %7385 = vadd.xlane.f32.xlu0 %v7384
        %v7386 = vpop.xlane.xlu0 %7385
        %v7387 = vsel %vm7146, %v7027, 0.0
        %7388 = vadd.xlane.f32.xlu0 %v7387
        %v7389 = vpop.xlane.xlu0 %7388
        %v7390 = vsel %vm7146, %v7029, 0.0
        %7391 = vadd.xlane.f32.xlu0 %v7390
        %v7392 = vpop.xlane.xlu0 %7391
        %v7393 = vsel %vm7146, %v7032, 0.0
        %7394 = vadd.xlane.f32.xlu0 %v7393
        %v7395 = vpop.xlane.xlu0 %7394
        %v7396 = vsel %vm7146, %v7034, 0.0
        %7397 = vadd.xlane.f32.xlu0 %v7396
        %v7398 = vpop.xlane.xlu0 %7397
        %v7399 = vsel %vm7146, %v7037, 0.0
        %7400 = vadd.xlane.f32.xlu0 %v7399
        %v7401 = vpop.xlane.xlu0 %7400
        %v7402 = vsel %vm7146, %v7039, 0.0
        %7403 = vadd.xlane.f32.xlu0 %v7402
        %v7404 = vpop.xlane.xlu0 %7403
        %v7405 = vsel %vm7146, %v7042, 0.0
        %7406 = vadd.xlane.f32.xlu0 %v7405
        %v7407 = vpop.xlane.xlu0 %7406
        %v7408 = vsel %vm7146, %v7044, 0.0
        %7409 = vadd.xlane.f32.xlu0 %v7408
        %v7410 = vpop.xlane.xlu0 %7409
        %v7411 = vsel %vm7146, %v7047, 0.0
        %7412 = vadd.xlane.f32.xlu0 %v7411
        %v7413 = vpop.xlane.xlu0 %7412
        %v7414 = vsel %vm7146, %v7049, 0.0
        %7415 = vadd.xlane.f32.xlu0 %v7414
        %v7416 = vpop.xlane.xlu0 %7415
        %v7417 = vsel %vm7146, %v7052, 0.0
        %7418 = vadd.xlane.f32.xlu0 %v7417
        %v7419 = vpop.xlane.xlu0 %7418
        %v7420 = vsel %vm7146, %v7054, 0.0
        %7421 = vadd.xlane.f32.xlu0 %v7420
        %v7422 = vpop.xlane.xlu0 %7421
        %v7423 = vsel %vm7146, %v7057, 0.0
        %7424 = vadd.xlane.f32.xlu0 %v7423
        %v7425 = vpop.xlane.xlu0 %7424
        %v7426 = vsel %vm7146, %v7059, 0.0
        %7427 = vadd.xlane.f32.xlu0 %v7426
        %v7428 = vpop.xlane.xlu0 %7427
        %v7429 = vsel %vm7146, %v7062, 0.0
        %7430 = vadd.xlane.f32.xlu0 %v7429
        %v7431 = vpop.xlane.xlu0 %7430
        %v7432 = vsel %vm7146, %v7064, 0.0
        %7433 = vadd.xlane.f32.xlu0 %v7432
        %v7434 = vpop.xlane.xlu0 %7433
        %v7435 = vsel %vm7146, %v7067, 0.0
        %7436 = vadd.xlane.f32.xlu0 %v7435
        %v7437 = vpop.xlane.xlu0 %7436
        %v7438 = vsel %vm7146, %v7069, 0.0
        %7439 = vadd.xlane.f32.xlu0 %v7438
        %v7440 = vpop.xlane.xlu0 %7439
        %v7441 = vsel %vm7146, %v7072, 0.0
        %7442 = vadd.xlane.f32.xlu0 %v7441
        %v7443 = vpop.xlane.xlu0 %7442
        %v7444 = vsel %vm7146, %v7074, 0.0
        %7445 = vadd.xlane.f32.xlu0 %v7444
        %v7446 = vpop.xlane.xlu0 %7445
        %v7447 = vsel %vm7146, %v7077, 0.0
        %7448 = vadd.xlane.f32.xlu0 %v7447
        %v7449 = vpop.xlane.xlu0 %7448
        %v7450 = vsel %vm7146, %v7079, 0.0
        %7451 = vadd.xlane.f32.xlu0 %v7450
        %v7452 = vpop.xlane.xlu0 %7451
        %v7453 = vsel %vm7146, %v7082, 0.0
        %7454 = vadd.xlane.f32.xlu0 %v7453
        %v7455 = vpop.xlane.xlu0 %7454
        %v7456 = vsel %vm7146, %v7084, 0.0
        %7457 = vadd.xlane.f32.xlu0 %v7456
        %v7458 = vpop.xlane.xlu0 %7457
        %v7459 = vsel %vm7146, %v7087, 0.0
        %7460 = vadd.xlane.f32.xlu0 %v7459
        %v7461 = vpop.xlane.xlu0 %7460
        %v7462 = vsel %vm7146, %v7089, 0.0
        %7463 = vadd.xlane.f32.xlu0 %v7462
        %v7464 = vpop.xlane.xlu0 %7463
        %v7465 = vsel %vm7146, %v7092, 0.0
        %7466 = vadd.xlane.f32.xlu0 %v7465
        %v7467 = vpop.xlane.xlu0 %7466
        %v7468 = vsel %vm7146, %v7094, 0.0
        %7469 = vadd.xlane.f32.xlu0 %v7468
        %v7470 = vpop.xlane.xlu0 %7469
        %v7471 = vsel %vm7146, %v7097, 0.0
        %7472 = vadd.xlane.f32.xlu0 %v7471
        %v7473 = vpop.xlane.xlu0 %7472
        %v7474 = vsel %vm7146, %v7099, 0.0
        %7475 = vadd.xlane.f32.xlu0 %v7474
        %v7476 = vpop.xlane.xlu0 %7475
        %v7477 = vsel %vm7146, %v7102, 0.0
        %7478 = vadd.xlane.f32.xlu0 %v7477
        %v7479 = vpop.xlane.xlu0 %7478
        %v7480 = vsel %vm7146, %v7104, 0.0
        %7481 = vadd.xlane.f32.xlu0 %v7480
        %v7482 = vpop.xlane.xlu0 %7481
        %v7483 = vsel %vm7146, %v7107, 0.0
        %7484 = vadd.xlane.f32.xlu0 %v7483
        %v7485 = vpop.xlane.xlu0 %7484
        %v7486 = vsel %vm7146, %v7109, 0.0
        %7487 = vadd.xlane.f32.xlu0 %v7486
        %v7488 = vpop.xlane.xlu0 %7487
        %v7489 = vsel %vm7146, %v7112, 0.0
        %7490 = vadd.xlane.f32.xlu0 %v7489
        %v7491 = vpop.xlane.xlu0 %7490
        %v7492 = vsel %vm7146, %v7114, 0.0
        %7493 = vadd.xlane.f32.xlu0 %v7492
        %v7494 = vpop.xlane.xlu0 %7493
        %v7495 = vsel %vm7146, %v7117, 0.0
        %7496 = vadd.xlane.f32.xlu0 %v7495
        %v7497 = vpop.xlane.xlu0 %7496
        %v7498 = vsel %vm7146, %v7119, 0.0
        %7499 = vadd.xlane.f32.xlu0 %v7498
        %v7500 = vpop.xlane.xlu0 %7499
        %v7501 = vsel %vm7146, %v7122, 0.0
        %7502 = vadd.xlane.f32.xlu0 %v7501
        %v7503 = vpop.xlane.xlu0 %7502
        %v7504 = vsel %vm7146, %v7124, 0.0
        %7505 = vadd.xlane.f32.xlu0 %v7504
        %v7506 = vpop.xlane.xlu0 %7505
        %v7507 = vsel %vm7146, %v7127, 0.0
        %7508 = vadd.xlane.f32.xlu0 %v7507
        %v7509 = vpop.xlane.xlu0 %7508
        %v7510 = vsel %vm7146, %v7129, 0.0
        %7511 = vadd.xlane.f32.xlu0 %v7510
        %v7512 = vpop.xlane.xlu0 %7511
        %v7513 = vsel %vm7146, %v7132, 0.0
        %7514 = vadd.xlane.f32.xlu0 %v7513
        %v7515 = vpop.xlane.xlu0 %7514
        %v7516 = vsel %vm7146, %v7134, 0.0
        %7517 = vadd.xlane.f32.xlu0 %v7516
        %v7518 = vpop.xlane.xlu0 %7517
        %v7519 = vsel %vm7146, %v7137, 0.0
        %7520 = vadd.xlane.f32.xlu0 %v7519
        %v7521 = vpop.xlane.xlu0 %7520
        %v7522 = vsel %vm7146, %v7139, 0.0
        %7523 = vadd.xlane.f32.xlu0 %v7522
        %v7524 = vpop.xlane.xlu0 %7523
        %v7525 = vsel %vm7146, %v7142, 0.0
        %7526 = vadd.xlane.f32.xlu0 %v7525
        %v7527 = vpop.xlane.xlu0 %7526
        %v7528 = vsel %vm7146, %v7144, 0.0
        %7529 = vadd.xlane.f32.xlu0 %v7528
        %v7530 = vpop.xlane.xlu0 %7529
        %v7531 = vrcp.pop 32.0
        %v7532 = vmul.f32 32.0, %v7531
        %v7533 = vsub.f32 1.0, %v7532
        %v7534 = vmul.f32 %v7531, %v7533
        %v7535 = vadd.f32 %v7531, %v7534
        %vm7536 = vweird.f32 %v7531
        %v7537 = vsel %vm7536, %v7531, %v7535
        %v7538 = vmul.f32 %v7149, %v7537
        %v7539 = vmul.f32 %v7152, %v7537
        %v7540 = vmul.f32 %v7155, %v7537
        %v7541 = vmul.f32 %v7158, %v7537
        %v7542 = vmul.f32 %v7161, %v7537
        %v7543 = vmul.f32 %v7164, %v7537
        %v7544 = vmul.f32 %v7167, %v7537
        %v7545 = vmul.f32 %v7170, %v7537
        %v7546 = vmul.f32 %v7173, %v7537
        %v7547 = vmul.f32 %v7176, %v7537
        %v7548 = vmul.f32 %v7179, %v7537
        %v7549 = vmul.f32 %v7182, %v7537
        %v7550 = vmul.f32 %v7185, %v7537
        %v7551 = vmul.f32 %v7188, %v7537
        %v7552 = vmul.f32 %v7191, %v7537
        %v7553 = vmul.f32 %v7194, %v7537
        %v7554 = vmul.f32 %v7197, %v7537
        %v7555 = vmul.f32 %v7200, %v7537
        %v7556 = vmul.f32 %v7203, %v7537
        %v7557 = vmul.f32 %v7206, %v7537
        %v7558 = vmul.f32 %v7209, %v7537
        %v7559 = vmul.f32 %v7212, %v7537
        %v7560 = vmul.f32 %v7215, %v7537
        %v7561 = vmul.f32 %v7218, %v7537
        %v7562 = vmul.f32 %v7221, %v7537
        %v7563 = vmul.f32 %v7224, %v7537
        %v7564 = vmul.f32 %v7227, %v7537
        %v7565 = vmul.f32 %v7230, %v7537
        %v7566 = vmul.f32 %v7233, %v7537
        %v7567 = vmul.f32 %v7236, %v7537
        %v7568 = vmul.f32 %v7239, %v7537
        %v7569 = vmul.f32 %v7242, %v7537
        %v7570 = vmul.f32 %v7245, %v7537
        %v7571 = vmul.f32 %v7248, %v7537
        %v7572 = vmul.f32 %v7251, %v7537
        %v7573 = vmul.f32 %v7254, %v7537
        %v7574 = vmul.f32 %v7257, %v7537
        %v7575 = vmul.f32 %v7260, %v7537
        %v7576 = vmul.f32 %v7263, %v7537
        %v7577 = vmul.f32 %v7266, %v7537
        %v7578 = vmul.f32 %v7269, %v7537
        %v7579 = vmul.f32 %v7272, %v7537
        %v7580 = vmul.f32 %v7275, %v7537
        %v7581 = vmul.f32 %v7278, %v7537
        %v7582 = vmul.f32 %v7281, %v7537
        %v7583 = vmul.f32 %v7284, %v7537
        %v7584 = vmul.f32 %v7287, %v7537
        %v7585 = vmul.f32 %v7290, %v7537
        %v7586 = vmul.f32 %v7293, %v7537
        %v7587 = vmul.f32 %v7296, %v7537
        %v7588 = vmul.f32 %v7299, %v7537
        %v7589 = vmul.f32 %v7302, %v7537
        %v7590 = vmul.f32 %v7305, %v7537
        %v7591 = vmul.f32 %v7308, %v7537
        %v7592 = vmul.f32 %v7311, %v7537
        %v7593 = vmul.f32 %v7314, %v7537
        %v7594 = vmul.f32 %v7317, %v7537
        %v7595 = vmul.f32 %v7320, %v7537
        %v7596 = vmul.f32 %v7323, %v7537
        %v7597 = vmul.f32 %v7326, %v7537
        %v7598 = vmul.f32 %v7329, %v7537
        %v7599 = vmul.f32 %v7332, %v7537
        %v7600 = vmul.f32 %v7335, %v7537
        %v7601 = vmul.f32 %v7338, %v7537
        %v7602 = vmul.f32 %v7341, %v7537
        %v7603 = vmul.f32 %v7344, %v7537
        %v7604 = vmul.f32 %v7347, %v7537
        %v7605 = vmul.f32 %v7350, %v7537
        %v7606 = vmul.f32 %v7353, %v7537
        %v7607 = vmul.f32 %v7356, %v7537
        %v7608 = vmul.f32 %v7359, %v7537
        %v7609 = vmul.f32 %v7362, %v7537
        %v7610 = vmul.f32 %v7365, %v7537
        %v7611 = vmul.f32 %v7368, %v7537
        %v7612 = vmul.f32 %v7371, %v7537
        %v7613 = vmul.f32 %v7374, %v7537
        %v7614 = vmul.f32 %v7377, %v7537
        %v7615 = vmul.f32 %v7380, %v7537
        %v7616 = vmul.f32 %v7383, %v7537
        %v7617 = vmul.f32 %v7386, %v7537
        %v7618 = vmul.f32 %v7389, %v7537
        %v7619 = vmul.f32 %v7392, %v7537
        %v7620 = vmul.f32 %v7395, %v7537
        %v7621 = vmul.f32 %v7398, %v7537
        %v7622 = vmul.f32 %v7401, %v7537
        %v7623 = vmul.f32 %v7404, %v7537
        %v7624 = vmul.f32 %v7407, %v7537
        %v7625 = vmul.f32 %v7410, %v7537
        %v7626 = vmul.f32 %v7413, %v7537
        %v7627 = vmul.f32 %v7416, %v7537
        %v7628 = vmul.f32 %v7419, %v7537
        %v7629 = vmul.f32 %v7422, %v7537
        %v7630 = vmul.f32 %v7425, %v7537
        %v7631 = vmul.f32 %v7428, %v7537
        %v7632 = vmul.f32 %v7431, %v7537
        %v7633 = vmul.f32 %v7434, %v7537
        %v7634 = vmul.f32 %v7437, %v7537
        %v7635 = vmul.f32 %v7440, %v7537
        %v7636 = vmul.f32 %v7443, %v7537
        %v7637 = vmul.f32 %v7446, %v7537
        %v7638 = vmul.f32 %v7449, %v7537
        %v7639 = vmul.f32 %v7452, %v7537
        %v7640 = vmul.f32 %v7455, %v7537
        %v7641 = vmul.f32 %v7458, %v7537
        %v7642 = vmul.f32 %v7461, %v7537
        %v7643 = vmul.f32 %v7464, %v7537
        %v7644 = vmul.f32 %v7467, %v7537
        %v7645 = vmul.f32 %v7470, %v7537
        %v7646 = vmul.f32 %v7473, %v7537
        %v7647 = vmul.f32 %v7476, %v7537
        %v7648 = vmul.f32 %v7479, %v7537
        %v7649 = vmul.f32 %v7482, %v7537
        %v7650 = vmul.f32 %v7485, %v7537
        %v7651 = vmul.f32 %v7488, %v7537
        %v7652 = vmul.f32 %v7491, %v7537
        %v7653 = vmul.f32 %v7494, %v7537
        %v7654 = vmul.f32 %v7497, %v7537
        %v7655 = vmul.f32 %v7500, %v7537
        %v7656 = vmul.f32 %v7503, %v7537
        %v7657 = vmul.f32 %v7506, %v7537
        %v7658 = vmul.f32 %v7509, %v7537
        %v7659 = vmul.f32 %v7512, %v7537
        %v7660 = vmul.f32 %v7515, %v7537
        %v7661 = vmul.f32 %v7518, %v7537
        %v7662 = vmul.f32 %v7521, %v7537
        %v7663 = vmul.f32 %v7524, %v7537
        %v7664 = vmul.f32 %v7527, %v7537
        %v7665 = vmul.f32 %v7530, %v7537
        %v7666 = vsub.f32 %v6827, %v7538
        %v7667 = vsub.f32 %v6829, %v7539
        %v7668 = vsub.f32 %v6832, %v7540
        %v7669 = vsub.f32 %v6834, %v7541
        %v7670 = vsub.f32 %v6837, %v7542
        %v7671 = vsub.f32 %v6839, %v7543
        %v7672 = vsub.f32 %v6842, %v7544
        %v7673 = vsub.f32 %v6844, %v7545
        %v7674 = vsub.f32 %v6847, %v7546
        %v7675 = vsub.f32 %v6849, %v7547
        %v7676 = vsub.f32 %v6852, %v7548
        %v7677 = vsub.f32 %v6854, %v7549
        %v7678 = vsub.f32 %v6857, %v7550
        %v7679 = vsub.f32 %v6859, %v7551
        %v7680 = vsub.f32 %v6862, %v7552
        %v7681 = vsub.f32 %v6864, %v7553
        %v7682 = vsub.f32 %v6867, %v7554
        %v7683 = vsub.f32 %v6869, %v7555
        %v7684 = vsub.f32 %v6872, %v7556
        %v7685 = vsub.f32 %v6874, %v7557
        %v7686 = vsub.f32 %v6877, %v7558
        %v7687 = vsub.f32 %v6879, %v7559
        %v7688 = vsub.f32 %v6882, %v7560
        %v7689 = vsub.f32 %v6884, %v7561
        %v7690 = vsub.f32 %v6887, %v7562
        %v7691 = vsub.f32 %v6889, %v7563
        %v7692 = vsub.f32 %v6892, %v7564
        %v7693 = vsub.f32 %v6894, %v7565
        %v7694 = vsub.f32 %v6897, %v7566
        %v7695 = vsub.f32 %v6899, %v7567
        %v7696 = vsub.f32 %v6902, %v7568
        %v7697 = vsub.f32 %v6904, %v7569
        %v7698 = vsub.f32 %v6907, %v7570
        %v7699 = vsub.f32 %v6909, %v7571
        %v7700 = vsub.f32 %v6912, %v7572
        %v7701 = vsub.f32 %v6914, %v7573
        %v7702 = vsub.f32 %v6917, %v7574
        %v7703 = vsub.f32 %v6919, %v7575
        %v7704 = vsub.f32 %v6922, %v7576
        %v7705 = vsub.f32 %v6924, %v7577
        %v7706 = vsub.f32 %v6927, %v7578
        %v7707 = vsub.f32 %v6929, %v7579
        %v7708 = vsub.f32 %v6932, %v7580
        %v7709 = vsub.f32 %v6934, %v7581
        %v7710 = vsub.f32 %v6937, %v7582
        %v7711 = vsub.f32 %v6939, %v7583
        %v7712 = vsub.f32 %v6942, %v7584
        %v7713 = vsub.f32 %v6944, %v7585
        %v7714 = vsub.f32 %v6947, %v7586
        %v7715 = vsub.f32 %v6949, %v7587
        %v7716 = vsub.f32 %v6952, %v7588
        %v7717 = vsub.f32 %v6954, %v7589
        %v7718 = vsub.f32 %v6957, %v7590
        %v7719 = vsub.f32 %v6959, %v7591
        %v7720 = vsub.f32 %v6962, %v7592
        %v7721 = vsub.f32 %v6964, %v7593
        %v7722 = vsub.f32 %v6967, %v7594
        %v7723 = vsub.f32 %v6969, %v7595
        %v7724 = vsub.f32 %v6972, %v7596
        %v7725 = vsub.f32 %v6974, %v7597
        %v7726 = vsub.f32 %v6977, %v7598
        %v7727 = vsub.f32 %v6979, %v7599
        %v7728 = vsub.f32 %v6982, %v7600
        %v7729 = vsub.f32 %v6984, %v7601
        %v7730 = vsub.f32 %v6987, %v7602
        %v7731 = vsub.f32 %v6989, %v7603
        %v7732 = vsub.f32 %v6992, %v7604
        %v7733 = vsub.f32 %v6994, %v7605
        %v7734 = vsub.f32 %v6997, %v7606
        %v7735 = vsub.f32 %v6999, %v7607
        %v7736 = vsub.f32 %v7002, %v7608
        %v7737 = vsub.f32 %v7004, %v7609
        %v7738 = vsub.f32 %v7007, %v7610
        %v7739 = vsub.f32 %v7009, %v7611
        %v7740 = vsub.f32 %v7012, %v7612
        %v7741 = vsub.f32 %v7014, %v7613
        %v7742 = vsub.f32 %v7017, %v7614
        %v7743 = vsub.f32 %v7019, %v7615
        %v7744 = vsub.f32 %v7022, %v7616
        %v7745 = vsub.f32 %v7024, %v7617
        %v7746 = vsub.f32 %v7027, %v7618
        %v7747 = vsub.f32 %v7029, %v7619
        %v7748 = vsub.f32 %v7032, %v7620
        %v7749 = vsub.f32 %v7034, %v7621
        %v7750 = vsub.f32 %v7037, %v7622
        %v7751 = vsub.f32 %v7039, %v7623
        %v7752 = vsub.f32 %v7042, %v7624
        %v7753 = vsub.f32 %v7044, %v7625
        %v7754 = vsub.f32 %v7047, %v7626
        %v7755 = vsub.f32 %v7049, %v7627
        %v7756 = vsub.f32 %v7052, %v7628
        %v7757 = vsub.f32 %v7054, %v7629
        %v7758 = vsub.f32 %v7057, %v7630
        %v7759 = vsub.f32 %v7059, %v7631
        %v7760 = vsub.f32 %v7062, %v7632
        %v7761 = vsub.f32 %v7064, %v7633
        %v7762 = vsub.f32 %v7067, %v7634
        %v7763 = vsub.f32 %v7069, %v7635
        %v7764 = vsub.f32 %v7072, %v7636
        %v7765 = vsub.f32 %v7074, %v7637
        %v7766 = vsub.f32 %v7077, %v7638
        %v7767 = vsub.f32 %v7079, %v7639
        %v7768 = vsub.f32 %v7082, %v7640
        %v7769 = vsub.f32 %v7084, %v7641
        %v7770 = vsub.f32 %v7087, %v7642
        %v7771 = vsub.f32 %v7089, %v7643
        %v7772 = vsub.f32 %v7092, %v7644
        %v7773 = vsub.f32 %v7094, %v7645
        %v7774 = vsub.f32 %v7097, %v7646
        %v7775 = vsub.f32 %v7099, %v7647
        %v7776 = vsub.f32 %v7102, %v7648
        %v7777 = vsub.f32 %v7104, %v7649
        %v7778 = vsub.f32 %v7107, %v7650
        %v7779 = vsub.f32 %v7109, %v7651
        %v7780 = vsub.f32 %v7112, %v7652
        %v7781 = vsub.f32 %v7114, %v7653
        %v7782 = vsub.f32 %v7117, %v7654
        %v7783 = vsub.f32 %v7119, %v7655
        %v7784 = vsub.f32 %v7122, %v7656
        %v7785 = vsub.f32 %v7124, %v7657
        %v7786 = vsub.f32 %v7127, %v7658
        %v7787 = vsub.f32 %v7129, %v7659
        %v7788 = vsub.f32 %v7132, %v7660
        %v7789 = vsub.f32 %v7134, %v7661
        %v7790 = vsub.f32 %v7137, %v7662
        %v7791 = vsub.f32 %v7139, %v7663
        %v7792 = vsub.f32 %v7142, %v7664
        %v7793 = vsub.f32 %v7144, %v7665
        %v7794 = vmul.f32 %v7666, %v7666
        %v7795 = vmul.f32 %v7667, %v7667
        %v7796 = vmul.f32 %v7668, %v7668
        %v7797 = vmul.f32 %v7669, %v7669
        %v7798 = vmul.f32 %v7670, %v7670
        %v7799 = vmul.f32 %v7671, %v7671
        %v7800 = vmul.f32 %v7672, %v7672
        %v7801 = vmul.f32 %v7673, %v7673
        %v7802 = vmul.f32 %v7674, %v7674
        %v7803 = vmul.f32 %v7675, %v7675
        %v7804 = vmul.f32 %v7676, %v7676
        %v7805 = vmul.f32 %v7677, %v7677
        %v7806 = vmul.f32 %v7678, %v7678
        %v7807 = vmul.f32 %v7679, %v7679
        %v7808 = vmul.f32 %v7680, %v7680
        %v7809 = vmul.f32 %v7681, %v7681
        %v7810 = vmul.f32 %v7682, %v7682
        %v7811 = vmul.f32 %v7683, %v7683
        %v7812 = vmul.f32 %v7684, %v7684
        %v7813 = vmul.f32 %v7685, %v7685
        %v7814 = vmul.f32 %v7686, %v7686
        %v7815 = vmul.f32 %v7687, %v7687
        %v7816 = vmul.f32 %v7688, %v7688
        %v7817 = vmul.f32 %v7689, %v7689
        %v7818 = vmul.f32 %v7690, %v7690
        %v7819 = vmul.f32 %v7691, %v7691
        %v7820 = vmul.f32 %v7692, %v7692
        %v7821 = vmul.f32 %v7693, %v7693
        %v7822 = vmul.f32 %v7694, %v7694
        %v7823 = vmul.f32 %v7695, %v7695
        %v7824 = vmul.f32 %v7696, %v7696
        %v7825 = vmul.f32 %v7697, %v7697
        %v7826 = vmul.f32 %v7698, %v7698
        %v7827 = vmul.f32 %v7699, %v7699
        %v7828 = vmul.f32 %v7700, %v7700
        %v7829 = vmul.f32 %v7701, %v7701
        %v7830 = vmul.f32 %v7702, %v7702
        %v7831 = vmul.f32 %v7703, %v7703
        %v7832 = vmul.f32 %v7704, %v7704
        %v7833 = vmul.f32 %v7705, %v7705
        %v7834 = vmul.f32 %v7706, %v7706
        %v7835 = vmul.f32 %v7707, %v7707
        %v7836 = vmul.f32 %v7708, %v7708
        %v7837 = vmul.f32 %v7709, %v7709
        %v7838 = vmul.f32 %v7710, %v7710
        %v7839 = vmul.f32 %v7711, %v7711
        %v7840 = vmul.f32 %v7712, %v7712
        %v7841 = vmul.f32 %v7713, %v7713
        %v7842 = vmul.f32 %v7714, %v7714
        %v7843 = vmul.f32 %v7715, %v7715
        %v7844 = vmul.f32 %v7716, %v7716
        %v7845 = vmul.f32 %v7717, %v7717
        %v7846 = vmul.f32 %v7718, %v7718
        %v7847 = vmul.f32 %v7719, %v7719
        %v7848 = vmul.f32 %v7720, %v7720
        %v7849 = vmul.f32 %v7721, %v7721
        %v7850 = vmul.f32 %v7722, %v7722
        %v7851 = vmul.f32 %v7723, %v7723
        %v7852 = vmul.f32 %v7724, %v7724
        %v7853 = vmul.f32 %v7725, %v7725
        %v7854 = vmul.f32 %v7726, %v7726
        %v7855 = vmul.f32 %v7727, %v7727
        %v7856 = vmul.f32 %v7728, %v7728
        %v7857 = vmul.f32 %v7729, %v7729
        %v7858 = vmul.f32 %v7730, %v7730
        %v7859 = vmul.f32 %v7731, %v7731
        %v7860 = vmul.f32 %v7732, %v7732
        %v7861 = vmul.f32 %v7733, %v7733
        %v7862 = vmul.f32 %v7734, %v7734
        %v7863 = vmul.f32 %v7735, %v7735
        %v7864 = vmul.f32 %v7736, %v7736
        %v7865 = vmul.f32 %v7737, %v7737
        %v7866 = vmul.f32 %v7738, %v7738
        %v7867 = vmul.f32 %v7739, %v7739
        %v7868 = vmul.f32 %v7740, %v7740
        %v7869 = vmul.f32 %v7741, %v7741
        %v7870 = vmul.f32 %v7742, %v7742
        %v7871 = vmul.f32 %v7743, %v7743
        %v7872 = vmul.f32 %v7744, %v7744
        %v7873 = vmul.f32 %v7745, %v7745
        %v7874 = vmul.f32 %v7746, %v7746
        %v7875 = vmul.f32 %v7747, %v7747
        %v7876 = vmul.f32 %v7748, %v7748
        %v7877 = vmul.f32 %v7749, %v7749
        %v7878 = vmul.f32 %v7750, %v7750
        %v7879 = vmul.f32 %v7751, %v7751
        %v7880 = vmul.f32 %v7752, %v7752
        %v7881 = vmul.f32 %v7753, %v7753
        %v7882 = vmul.f32 %v7754, %v7754
        %v7883 = vmul.f32 %v7755, %v7755
        %v7884 = vmul.f32 %v7756, %v7756
        %v7885 = vmul.f32 %v7757, %v7757
        %v7886 = vmul.f32 %v7758, %v7758
        %v7887 = vmul.f32 %v7759, %v7759
        %v7888 = vmul.f32 %v7760, %v7760
        %v7889 = vmul.f32 %v7761, %v7761
        %v7890 = vmul.f32 %v7762, %v7762
        %v7891 = vmul.f32 %v7763, %v7763
        %v7892 = vmul.f32 %v7764, %v7764
        %v7893 = vmul.f32 %v7765, %v7765
        %v7894 = vmul.f32 %v7766, %v7766
        %v7895 = vmul.f32 %v7767, %v7767
        %v7896 = vmul.f32 %v7768, %v7768
        %v7897 = vmul.f32 %v7769, %v7769
        %v7898 = vmul.f32 %v7770, %v7770
        %v7899 = vmul.f32 %v7771, %v7771
        %v7900 = vmul.f32 %v7772, %v7772
        %v7901 = vmul.f32 %v7773, %v7773
        %v7902 = vmul.f32 %v7774, %v7774
        %v7903 = vmul.f32 %v7775, %v7775
        %v7904 = vmul.f32 %v7776, %v7776
        %v7905 = vmul.f32 %v7777, %v7777
        %v7906 = vmul.f32 %v7778, %v7778
        %v7907 = vmul.f32 %v7779, %v7779
        %v7908 = vmul.f32 %v7780, %v7780
        %v7909 = vmul.f32 %v7781, %v7781
        %v7910 = vmul.f32 %v7782, %v7782
        %v7911 = vmul.f32 %v7783, %v7783
        %v7912 = vmul.f32 %v7784, %v7784
        %v7913 = vmul.f32 %v7785, %v7785
        %v7914 = vmul.f32 %v7786, %v7786
        %v7915 = vmul.f32 %v7787, %v7787
        %v7916 = vmul.f32 %v7788, %v7788
        %v7917 = vmul.f32 %v7789, %v7789
        %v7918 = vmul.f32 %v7790, %v7790
        %v7919 = vmul.f32 %v7791, %v7791
        %v7920 = vmul.f32 %v7792, %v7792
        %v7921 = vmul.f32 %v7793, %v7793
        %v7922 = vsel %vm7146, %v7794, 0.0
        %7923 = vadd.xlane.f32.xlu0 %v7922
        %v7924 = vpop.xlane.xlu0 %7923
        %v7925 = vsel %vm7146, %v7795, 0.0
        %7926 = vadd.xlane.f32.xlu0 %v7925
        %v7927 = vpop.xlane.xlu0 %7926
        %v7928 = vsel %vm7146, %v7796, 0.0
        %7929 = vadd.xlane.f32.xlu0 %v7928
        %v7930 = vpop.xlane.xlu0 %7929
        %v7931 = vsel %vm7146, %v7797, 0.0
        %7932 = vadd.xlane.f32.xlu0 %v7931
        %v7933 = vpop.xlane.xlu0 %7932
        %v7934 = vsel %vm7146, %v7798, 0.0
        %7935 = vadd.xlane.f32.xlu0 %v7934
        %v7936 = vpop.xlane.xlu0 %7935
        %v7937 = vsel %vm7146, %v7799, 0.0
        %7938 = vadd.xlane.f32.xlu0 %v7937
        %v7939 = vpop.xlane.xlu0 %7938
        %v7940 = vsel %vm7146, %v7800, 0.0
        %7941 = vadd.xlane.f32.xlu0 %v7940
        %v7942 = vpop.xlane.xlu0 %7941
        %v7943 = vsel %vm7146, %v7801, 0.0
        %7944 = vadd.xlane.f32.xlu0 %v7943
        %v7945 = vpop.xlane.xlu0 %7944
        %v7946 = vsel %vm7146, %v7802, 0.0
        %7947 = vadd.xlane.f32.xlu0 %v7946
        %v7948 = vpop.xlane.xlu0 %7947
        %v7949 = vsel %vm7146, %v7803, 0.0
        %7950 = vadd.xlane.f32.xlu0 %v7949
        %v7951 = vpop.xlane.xlu0 %7950
        %v7952 = vsel %vm7146, %v7804, 0.0
        %7953 = vadd.xlane.f32.xlu0 %v7952
        %v7954 = vpop.xlane.xlu0 %7953
        %v7955 = vsel %vm7146, %v7805, 0.0
        %7956 = vadd.xlane.f32.xlu0 %v7955
        %v7957 = vpop.xlane.xlu0 %7956
        %v7958 = vsel %vm7146, %v7806, 0.0
        %7959 = vadd.xlane.f32.xlu0 %v7958
        %v7960 = vpop.xlane.xlu0 %7959
        %v7961 = vsel %vm7146, %v7807, 0.0
        %7962 = vadd.xlane.f32.xlu0 %v7961
        %v7963 = vpop.xlane.xlu0 %7962
        %v7964 = vsel %vm7146, %v7808, 0.0
        %7965 = vadd.xlane.f32.xlu0 %v7964
        %v7966 = vpop.xlane.xlu0 %7965
        %v7967 = vsel %vm7146, %v7809, 0.0
        %7968 = vadd.xlane.f32.xlu0 %v7967
        %v7969 = vpop.xlane.xlu0 %7968
        %v7970 = vsel %vm7146, %v7810, 0.0
        %7971 = vadd.xlane.f32.xlu0 %v7970
        %v7972 = vpop.xlane.xlu0 %7971
        %v7973 = vsel %vm7146, %v7811, 0.0
        %7974 = vadd.xlane.f32.xlu0 %v7973
        %v7975 = vpop.xlane.xlu0 %7974
        %v7976 = vsel %vm7146, %v7812, 0.0
        %7977 = vadd.xlane.f32.xlu0 %v7976
        %v7978 = vpop.xlane.xlu0 %7977
        %v7979 = vsel %vm7146, %v7813, 0.0
        %7980 = vadd.xlane.f32.xlu0 %v7979
        %v7981 = vpop.xlane.xlu0 %7980
        %v7982 = vsel %vm7146, %v7814, 0.0
        %7983 = vadd.xlane.f32.xlu0 %v7982
        %v7984 = vpop.xlane.xlu0 %7983
        %v7985 = vsel %vm7146, %v7815, 0.0
        %7986 = vadd.xlane.f32.xlu0 %v7985
        %v7987 = vpop.xlane.xlu0 %7986
        %v7988 = vsel %vm7146, %v7816, 0.0
        %7989 = vadd.xlane.f32.xlu0 %v7988
        %v7990 = vpop.xlane.xlu0 %7989
        %v7991 = vsel %vm7146, %v7817, 0.0
        %7992 = vadd.xlane.f32.xlu0 %v7991
        %v7993 = vpop.xlane.xlu0 %7992
        %v7994 = vsel %vm7146, %v7818, 0.0
        %7995 = vadd.xlane.f32.xlu0 %v7994
        %v7996 = vpop.xlane.xlu0 %7995
        %v7997 = vsel %vm7146, %v7819, 0.0
        %7998 = vadd.xlane.f32.xlu0 %v7997
        %v7999 = vpop.xlane.xlu0 %7998
        %v8000 = vsel %vm7146, %v7820, 0.0
        %8001 = vadd.xlane.f32.xlu0 %v8000
        %v8002 = vpop.xlane.xlu0 %8001
        %v8003 = vsel %vm7146, %v7821, 0.0
        %8004 = vadd.xlane.f32.xlu0 %v8003
        %v8005 = vpop.xlane.xlu0 %8004
        %v8006 = vsel %vm7146, %v7822, 0.0
        %8007 = vadd.xlane.f32.xlu0 %v8006
        %v8008 = vpop.xlane.xlu0 %8007
        %v8009 = vsel %vm7146, %v7823, 0.0
        %8010 = vadd.xlane.f32.xlu0 %v8009
        %v8011 = vpop.xlane.xlu0 %8010
        %v8012 = vsel %vm7146, %v7824, 0.0
        %8013 = vadd.xlane.f32.xlu0 %v8012
        %v8014 = vpop.xlane.xlu0 %8013
        %v8015 = vsel %vm7146, %v7825, 0.0
        %8016 = vadd.xlane.f32.xlu0 %v8015
        %v8017 = vpop.xlane.xlu0 %8016
        %v8018 = vsel %vm7146, %v7826, 0.0
        %8019 = vadd.xlane.f32.xlu0 %v8018
        %v8020 = vpop.xlane.xlu0 %8019
        %v8021 = vsel %vm7146, %v7827, 0.0
        %8022 = vadd.xlane.f32.xlu0 %v8021
        %v8023 = vpop.xlane.xlu0 %8022
        %v8024 = vsel %vm7146, %v7828, 0.0
        %8025 = vadd.xlane.f32.xlu0 %v8024
        %v8026 = vpop.xlane.xlu0 %8025
        %v8027 = vsel %vm7146, %v7829, 0.0
        %8028 = vadd.xlane.f32.xlu0 %v8027
        %v8029 = vpop.xlane.xlu0 %8028
        %v8030 = vsel %vm7146, %v7830, 0.0
        %8031 = vadd.xlane.f32.xlu0 %v8030
        %v8032 = vpop.xlane.xlu0 %8031
        %v8033 = vsel %vm7146, %v7831, 0.0
        %8034 = vadd.xlane.f32.xlu0 %v8033
        %v8035 = vpop.xlane.xlu0 %8034
        %v8036 = vsel %vm7146, %v7832, 0.0
        %8037 = vadd.xlane.f32.xlu0 %v8036
        %v8038 = vpop.xlane.xlu0 %8037
        %v8039 = vsel %vm7146, %v7833, 0.0
        %8040 = vadd.xlane.f32.xlu0 %v8039
        %v8041 = vpop.xlane.xlu0 %8040
        %v8042 = vsel %vm7146, %v7834, 0.0
        %8043 = vadd.xlane.f32.xlu0 %v8042
        %v8044 = vpop.xlane.xlu0 %8043
        %v8045 = vsel %vm7146, %v7835, 0.0
        %8046 = vadd.xlane.f32.xlu0 %v8045
        %v8047 = vpop.xlane.xlu0 %8046
        %v8048 = vsel %vm7146, %v7836, 0.0
        %8049 = vadd.xlane.f32.xlu0 %v8048
        %v8050 = vpop.xlane.xlu0 %8049
        %v8051 = vsel %vm7146, %v7837, 0.0
        %8052 = vadd.xlane.f32.xlu0 %v8051
        %v8053 = vpop.xlane.xlu0 %8052
        %v8054 = vsel %vm7146, %v7838, 0.0
        %8055 = vadd.xlane.f32.xlu0 %v8054
        %v8056 = vpop.xlane.xlu0 %8055
        %v8057 = vsel %vm7146, %v7839, 0.0
        %8058 = vadd.xlane.f32.xlu0 %v8057
        %v8059 = vpop.xlane.xlu0 %8058
        %v8060 = vsel %vm7146, %v7840, 0.0
        %8061 = vadd.xlane.f32.xlu0 %v8060
        %v8062 = vpop.xlane.xlu0 %8061
        %v8063 = vsel %vm7146, %v7841, 0.0
        %8064 = vadd.xlane.f32.xlu0 %v8063
        %v8065 = vpop.xlane.xlu0 %8064
        %v8066 = vsel %vm7146, %v7842, 0.0
        %8067 = vadd.xlane.f32.xlu0 %v8066
        %v8068 = vpop.xlane.xlu0 %8067
        %v8069 = vsel %vm7146, %v7843, 0.0
        %8070 = vadd.xlane.f32.xlu0 %v8069
        %v8071 = vpop.xlane.xlu0 %8070
        %v8072 = vsel %vm7146, %v7844, 0.0
        %8073 = vadd.xlane.f32.xlu0 %v8072
        %v8074 = vpop.xlane.xlu0 %8073
        %v8075 = vsel %vm7146, %v7845, 0.0
        %8076 = vadd.xlane.f32.xlu0 %v8075
        %v8077 = vpop.xlane.xlu0 %8076
        %v8078 = vsel %vm7146, %v7846, 0.0
        %8079 = vadd.xlane.f32.xlu0 %v8078
        %v8080 = vpop.xlane.xlu0 %8079
        %v8081 = vsel %vm7146, %v7847, 0.0
        %8082 = vadd.xlane.f32.xlu0 %v8081
        %v8083 = vpop.xlane.xlu0 %8082
        %v8084 = vsel %vm7146, %v7848, 0.0
        %8085 = vadd.xlane.f32.xlu0 %v8084
        %v8086 = vpop.xlane.xlu0 %8085
        %v8087 = vsel %vm7146, %v7849, 0.0
        %8088 = vadd.xlane.f32.xlu0 %v8087
        %v8089 = vpop.xlane.xlu0 %8088
        %v8090 = vsel %vm7146, %v7850, 0.0
        %8091 = vadd.xlane.f32.xlu0 %v8090
        %v8092 = vpop.xlane.xlu0 %8091
        %v8093 = vsel %vm7146, %v7851, 0.0
        %8094 = vadd.xlane.f32.xlu0 %v8093
        %v8095 = vpop.xlane.xlu0 %8094
        %v8096 = vsel %vm7146, %v7852, 0.0
        %8097 = vadd.xlane.f32.xlu0 %v8096
        %v8098 = vpop.xlane.xlu0 %8097
        %v8099 = vsel %vm7146, %v7853, 0.0
        %8100 = vadd.xlane.f32.xlu0 %v8099
        %v8101 = vpop.xlane.xlu0 %8100
        %v8102 = vsel %vm7146, %v7854, 0.0
        %8103 = vadd.xlane.f32.xlu0 %v8102
        %v8104 = vpop.xlane.xlu0 %8103
        %v8105 = vsel %vm7146, %v7855, 0.0
        %8106 = vadd.xlane.f32.xlu0 %v8105
        %v8107 = vpop.xlane.xlu0 %8106
        %v8108 = vsel %vm7146, %v7856, 0.0
        %8109 = vadd.xlane.f32.xlu0 %v8108
        %v8110 = vpop.xlane.xlu0 %8109
        %v8111 = vsel %vm7146, %v7857, 0.0
        %8112 = vadd.xlane.f32.xlu0 %v8111
        %v8113 = vpop.xlane.xlu0 %8112
        %v8114 = vsel %vm7146, %v7858, 0.0
        %8115 = vadd.xlane.f32.xlu0 %v8114
        %v8116 = vpop.xlane.xlu0 %8115
        %v8117 = vsel %vm7146, %v7859, 0.0
        %8118 = vadd.xlane.f32.xlu0 %v8117
        %v8119 = vpop.xlane.xlu0 %8118
        %v8120 = vsel %vm7146, %v7860, 0.0
        %8121 = vadd.xlane.f32.xlu0 %v8120
        %v8122 = vpop.xlane.xlu0 %8121
        %v8123 = vsel %vm7146, %v7861, 0.0
        %8124 = vadd.xlane.f32.xlu0 %v8123
        %v8125 = vpop.xlane.xlu0 %8124
        %v8126 = vsel %vm7146, %v7862, 0.0
        %8127 = vadd.xlane.f32.xlu0 %v8126
        %v8128 = vpop.xlane.xlu0 %8127
        %v8129 = vsel %vm7146, %v7863, 0.0
        %8130 = vadd.xlane.f32.xlu0 %v8129
        %v8131 = vpop.xlane.xlu0 %8130
        %v8132 = vsel %vm7146, %v7864, 0.0
        %8133 = vadd.xlane.f32.xlu0 %v8132
        %v8134 = vpop.xlane.xlu0 %8133
        %v8135 = vsel %vm7146, %v7865, 0.0
        %8136 = vadd.xlane.f32.xlu0 %v8135
        %v8137 = vpop.xlane.xlu0 %8136
        %v8138 = vsel %vm7146, %v7866, 0.0
        %8139 = vadd.xlane.f32.xlu0 %v8138
        %v8140 = vpop.xlane.xlu0 %8139
        %v8141 = vsel %vm7146, %v7867, 0.0
        %8142 = vadd.xlane.f32.xlu0 %v8141
        %v8143 = vpop.xlane.xlu0 %8142
        %v8144 = vsel %vm7146, %v7868, 0.0
        %8145 = vadd.xlane.f32.xlu0 %v8144
        %v8146 = vpop.xlane.xlu0 %8145
        %v8147 = vsel %vm7146, %v7869, 0.0
        %8148 = vadd.xlane.f32.xlu0 %v8147
        %v8149 = vpop.xlane.xlu0 %8148
        %v8150 = vsel %vm7146, %v7870, 0.0
        %8151 = vadd.xlane.f32.xlu0 %v8150
        %v8152 = vpop.xlane.xlu0 %8151
        %v8153 = vsel %vm7146, %v7871, 0.0
        %8154 = vadd.xlane.f32.xlu0 %v8153
        %v8155 = vpop.xlane.xlu0 %8154
        %v8156 = vsel %vm7146, %v7872, 0.0
        %8157 = vadd.xlane.f32.xlu0 %v8156
        %v8158 = vpop.xlane.xlu0 %8157
        %v8159 = vsel %vm7146, %v7873, 0.0
        %8160 = vadd.xlane.f32.xlu0 %v8159
        %v8161 = vpop.xlane.xlu0 %8160
        %v8162 = vsel %vm7146, %v7874, 0.0
        %8163 = vadd.xlane.f32.xlu0 %v8162
        %v8164 = vpop.xlane.xlu0 %8163
        %v8165 = vsel %vm7146, %v7875, 0.0
        %8166 = vadd.xlane.f32.xlu0 %v8165
        %v8167 = vpop.xlane.xlu0 %8166
        %v8168 = vsel %vm7146, %v7876, 0.0
        %8169 = vadd.xlane.f32.xlu0 %v8168
        %v8170 = vpop.xlane.xlu0 %8169
        %v8171 = vsel %vm7146, %v7877, 0.0
        %8172 = vadd.xlane.f32.xlu0 %v8171
        %v8173 = vpop.xlane.xlu0 %8172
        %v8174 = vsel %vm7146, %v7878, 0.0
        %8175 = vadd.xlane.f32.xlu0 %v8174
        %v8176 = vpop.xlane.xlu0 %8175
        %v8177 = vsel %vm7146, %v7879, 0.0
        %8178 = vadd.xlane.f32.xlu0 %v8177
        %v8179 = vpop.xlane.xlu0 %8178
        %v8180 = vsel %vm7146, %v7880, 0.0
        %8181 = vadd.xlane.f32.xlu0 %v8180
        %v8182 = vpop.xlane.xlu0 %8181
        %v8183 = vsel %vm7146, %v7881, 0.0
        %8184 = vadd.xlane.f32.xlu0 %v8183
        %v8185 = vpop.xlane.xlu0 %8184
        %v8186 = vsel %vm7146, %v7882, 0.0
        %8187 = vadd.xlane.f32.xlu0 %v8186
        %v8188 = vpop.xlane.xlu0 %8187
        %v8189 = vsel %vm7146, %v7883, 0.0
        %8190 = vadd.xlane.f32.xlu0 %v8189
        %v8191 = vpop.xlane.xlu0 %8190
        %v8192 = vsel %vm7146, %v7884, 0.0
        %8193 = vadd.xlane.f32.xlu0 %v8192
        %v8194 = vpop.xlane.xlu0 %8193
        %v8195 = vsel %vm7146, %v7885, 0.0
        %8196 = vadd.xlane.f32.xlu0 %v8195
        %v8197 = vpop.xlane.xlu0 %8196
        %v8198 = vsel %vm7146, %v7886, 0.0
        %8199 = vadd.xlane.f32.xlu0 %v8198
        %v8200 = vpop.xlane.xlu0 %8199
        %v8201 = vsel %vm7146, %v7887, 0.0
        %8202 = vadd.xlane.f32.xlu0 %v8201
        %v8203 = vpop.xlane.xlu0 %8202
        %v8204 = vsel %vm7146, %v7888, 0.0
        %8205 = vadd.xlane.f32.xlu0 %v8204
        %v8206 = vpop.xlane.xlu0 %8205
        %v8207 = vsel %vm7146, %v7889, 0.0
        %8208 = vadd.xlane.f32.xlu0 %v8207
        %v8209 = vpop.xlane.xlu0 %8208
        %v8210 = vsel %vm7146, %v7890, 0.0
        %8211 = vadd.xlane.f32.xlu0 %v8210
        %v8212 = vpop.xlane.xlu0 %8211
        %v8213 = vsel %vm7146, %v7891, 0.0
        %8214 = vadd.xlane.f32.xlu0 %v8213
        %v8215 = vpop.xlane.xlu0 %8214
        %v8216 = vsel %vm7146, %v7892, 0.0
        %8217 = vadd.xlane.f32.xlu0 %v8216
        %v8218 = vpop.xlane.xlu0 %8217
        %v8219 = vsel %vm7146, %v7893, 0.0
        %8220 = vadd.xlane.f32.xlu0 %v8219
        %v8221 = vpop.xlane.xlu0 %8220
        %v8222 = vsel %vm7146, %v7894, 0.0
        %8223 = vadd.xlane.f32.xlu0 %v8222
        %v8224 = vpop.xlane.xlu0 %8223
        %v8225 = vsel %vm7146, %v7895, 0.0
        %8226 = vadd.xlane.f32.xlu0 %v8225
        %v8227 = vpop.xlane.xlu0 %8226
        %v8228 = vsel %vm7146, %v7896, 0.0
        %8229 = vadd.xlane.f32.xlu0 %v8228
        %v8230 = vpop.xlane.xlu0 %8229
        %v8231 = vsel %vm7146, %v7897, 0.0
        %8232 = vadd.xlane.f32.xlu0 %v8231
        %v8233 = vpop.xlane.xlu0 %8232
        %v8234 = vsel %vm7146, %v7898, 0.0
        %8235 = vadd.xlane.f32.xlu0 %v8234
        %v8236 = vpop.xlane.xlu0 %8235
        %v8237 = vsel %vm7146, %v7899, 0.0
        %8238 = vadd.xlane.f32.xlu0 %v8237
        %v8239 = vpop.xlane.xlu0 %8238
        %v8240 = vsel %vm7146, %v7900, 0.0
        %8241 = vadd.xlane.f32.xlu0 %v8240
        %v8242 = vpop.xlane.xlu0 %8241
        %v8243 = vsel %vm7146, %v7901, 0.0
        %8244 = vadd.xlane.f32.xlu0 %v8243
        %v8245 = vpop.xlane.xlu0 %8244
        %v8246 = vsel %vm7146, %v7902, 0.0
        %8247 = vadd.xlane.f32.xlu0 %v8246
        %v8248 = vpop.xlane.xlu0 %8247
        %v8249 = vsel %vm7146, %v7903, 0.0
        %8250 = vadd.xlane.f32.xlu0 %v8249
        %v8251 = vpop.xlane.xlu0 %8250
        %v8252 = vsel %vm7146, %v7904, 0.0
        %8253 = vadd.xlane.f32.xlu0 %v8252
        %v8254 = vpop.xlane.xlu0 %8253
        %v8255 = vsel %vm7146, %v7905, 0.0
        %8256 = vadd.xlane.f32.xlu0 %v8255
        %v8257 = vpop.xlane.xlu0 %8256
        %v8258 = vsel %vm7146, %v7906, 0.0
        %8259 = vadd.xlane.f32.xlu0 %v8258
        %v8260 = vpop.xlane.xlu0 %8259
        %v8261 = vsel %vm7146, %v7907, 0.0
        %8262 = vadd.xlane.f32.xlu0 %v8261
        %v8263 = vpop.xlane.xlu0 %8262
        %v8264 = vsel %vm7146, %v7908, 0.0
        %8265 = vadd.xlane.f32.xlu0 %v8264
        %v8266 = vpop.xlane.xlu0 %8265
        %v8267 = vsel %vm7146, %v7909, 0.0
        %8268 = vadd.xlane.f32.xlu0 %v8267
        %v8269 = vpop.xlane.xlu0 %8268
        %v8270 = vsel %vm7146, %v7910, 0.0
        %8271 = vadd.xlane.f32.xlu0 %v8270
        %v8272 = vpop.xlane.xlu0 %8271
        %v8273 = vsel %vm7146, %v7911, 0.0
        %8274 = vadd.xlane.f32.xlu0 %v8273
        %v8275 = vpop.xlane.xlu0 %8274
        %v8276 = vsel %vm7146, %v7912, 0.0
        %8277 = vadd.xlane.f32.xlu0 %v8276
        %v8278 = vpop.xlane.xlu0 %8277
        %v8279 = vsel %vm7146, %v7913, 0.0
        %8280 = vadd.xlane.f32.xlu0 %v8279
        %v8281 = vpop.xlane.xlu0 %8280
        %v8282 = vsel %vm7146, %v7914, 0.0
        %8283 = vadd.xlane.f32.xlu0 %v8282
        %v8284 = vpop.xlane.xlu0 %8283
        %v8285 = vsel %vm7146, %v7915, 0.0
        %8286 = vadd.xlane.f32.xlu0 %v8285
        %v8287 = vpop.xlane.xlu0 %8286
        %v8288 = vsel %vm7146, %v7916, 0.0
        %8289 = vadd.xlane.f32.xlu0 %v8288
        %v8290 = vpop.xlane.xlu0 %8289
        %v8291 = vsel %vm7146, %v7917, 0.0
        %8292 = vadd.xlane.f32.xlu0 %v8291
        %v8293 = vpop.xlane.xlu0 %8292
        %v8294 = vsel %vm7146, %v7918, 0.0
        %8295 = vadd.xlane.f32.xlu0 %v8294
        %v8296 = vpop.xlane.xlu0 %8295
        %v8297 = vsel %vm7146, %v7919, 0.0
        %8298 = vadd.xlane.f32.xlu0 %v8297
        %v8299 = vpop.xlane.xlu0 %8298
        %v8300 = vsel %vm7146, %v7920, 0.0
        %8301 = vadd.xlane.f32.xlu0 %v8300
        %v8302 = vpop.xlane.xlu0 %8301
        %v8303 = vsel %vm7146, %v7921, 0.0
        %8304 = vadd.xlane.f32.xlu0 %v8303
        %v8305 = vpop.xlane.xlu0 %8304
        %v8306 = vmul.f32 %v7924, %v7537
        %v8307 = vmul.f32 %v7927, %v7537
        %v8308 = vmul.f32 %v7930, %v7537
        %v8309 = vmul.f32 %v7933, %v7537
        %v8310 = vmul.f32 %v7936, %v7537
        %v8311 = vmul.f32 %v7939, %v7537
        %v8312 = vmul.f32 %v7942, %v7537
        %v8313 = vmul.f32 %v7945, %v7537
        %v8314 = vmul.f32 %v7948, %v7537
        %v8315 = vmul.f32 %v7951, %v7537
        %v8316 = vmul.f32 %v7954, %v7537
        %v8317 = vmul.f32 %v7957, %v7537
        %v8318 = vmul.f32 %v7960, %v7537
        %v8319 = vmul.f32 %v7963, %v7537
        %v8320 = vmul.f32 %v7966, %v7537
        %v8321 = vmul.f32 %v7969, %v7537
        %v8322 = vmul.f32 %v7972, %v7537
        %v8323 = vmul.f32 %v7975, %v7537
        %v8324 = vmul.f32 %v7978, %v7537
        %v8325 = vmul.f32 %v7981, %v7537
        %v8326 = vmul.f32 %v7984, %v7537
        %v8327 = vmul.f32 %v7987, %v7537
        %v8328 = vmul.f32 %v7990, %v7537
        %v8329 = vmul.f32 %v7993, %v7537
        %v8330 = vmul.f32 %v7996, %v7537
        %v8331 = vmul.f32 %v7999, %v7537
        %v8332 = vmul.f32 %v8002, %v7537
        %v8333 = vmul.f32 %v8005, %v7537
        %v8334 = vmul.f32 %v8008, %v7537
        %v8335 = vmul.f32 %v8011, %v7537
        %v8336 = vmul.f32 %v8014, %v7537
        %v8337 = vmul.f32 %v8017, %v7537
        %v8338 = vmul.f32 %v8020, %v7537
        %v8339 = vmul.f32 %v8023, %v7537
        %v8340 = vmul.f32 %v8026, %v7537
        %v8341 = vmul.f32 %v8029, %v7537
        %v8342 = vmul.f32 %v8032, %v7537
        %v8343 = vmul.f32 %v8035, %v7537
        %v8344 = vmul.f32 %v8038, %v7537
        %v8345 = vmul.f32 %v8041, %v7537
        %v8346 = vmul.f32 %v8044, %v7537
        %v8347 = vmul.f32 %v8047, %v7537
        %v8348 = vmul.f32 %v8050, %v7537
        %v8349 = vmul.f32 %v8053, %v7537
        %v8350 = vmul.f32 %v8056, %v7537
        %v8351 = vmul.f32 %v8059, %v7537
        %v8352 = vmul.f32 %v8062, %v7537
        %v8353 = vmul.f32 %v8065, %v7537
        %v8354 = vmul.f32 %v8068, %v7537
        %v8355 = vmul.f32 %v8071, %v7537
        %v8356 = vmul.f32 %v8074, %v7537
        %v8357 = vmul.f32 %v8077, %v7537
        %v8358 = vmul.f32 %v8080, %v7537
        %v8359 = vmul.f32 %v8083, %v7537
        %v8360 = vmul.f32 %v8086, %v7537
        %v8361 = vmul.f32 %v8089, %v7537
        %v8362 = vmul.f32 %v8092, %v7537
        %v8363 = vmul.f32 %v8095, %v7537
        %v8364 = vmul.f32 %v8098, %v7537
        %v8365 = vmul.f32 %v8101, %v7537
        %v8366 = vmul.f32 %v8104, %v7537
        %v8367 = vmul.f32 %v8107, %v7537
        %v8368 = vmul.f32 %v8110, %v7537
        %v8369 = vmul.f32 %v8113, %v7537
        %v8370 = vmul.f32 %v8116, %v7537
        %v8371 = vmul.f32 %v8119, %v7537
        %v8372 = vmul.f32 %v8122, %v7537
        %v8373 = vmul.f32 %v8125, %v7537
        %v8374 = vmul.f32 %v8128, %v7537
        %v8375 = vmul.f32 %v8131, %v7537
        %v8376 = vmul.f32 %v8134, %v7537
        %v8377 = vmul.f32 %v8137, %v7537
        %v8378 = vmul.f32 %v8140, %v7537
        %v8379 = vmul.f32 %v8143, %v7537
        %v8380 = vmul.f32 %v8146, %v7537
        %v8381 = vmul.f32 %v8149, %v7537
        %v8382 = vmul.f32 %v8152, %v7537
        %v8383 = vmul.f32 %v8155, %v7537
        %v8384 = vmul.f32 %v8158, %v7537
        %v8385 = vmul.f32 %v8161, %v7537
        %v8386 = vmul.f32 %v8164, %v7537
        %v8387 = vmul.f32 %v8167, %v7537
        %v8388 = vmul.f32 %v8170, %v7537
        %v8389 = vmul.f32 %v8173, %v7537
        %v8390 = vmul.f32 %v8176, %v7537
        %v8391 = vmul.f32 %v8179, %v7537
        %v8392 = vmul.f32 %v8182, %v7537
        %v8393 = vmul.f32 %v8185, %v7537
        %v8394 = vmul.f32 %v8188, %v7537
        %v8395 = vmul.f32 %v8191, %v7537
        %v8396 = vmul.f32 %v8194, %v7537
        %v8397 = vmul.f32 %v8197, %v7537
        %v8398 = vmul.f32 %v8200, %v7537
        %v8399 = vmul.f32 %v8203, %v7537
        %v8400 = vmul.f32 %v8206, %v7537
        %v8401 = vmul.f32 %v8209, %v7537
        %v8402 = vmul.f32 %v8212, %v7537
        %v8403 = vmul.f32 %v8215, %v7537
        %v8404 = vmul.f32 %v8218, %v7537
        %v8405 = vmul.f32 %v8221, %v7537
        %v8406 = vmul.f32 %v8224, %v7537
        %v8407 = vmul.f32 %v8227, %v7537
        %v8408 = vmul.f32 %v8230, %v7537
        %v8409 = vmul.f32 %v8233, %v7537
        %v8410 = vmul.f32 %v8236, %v7537
        %v8411 = vmul.f32 %v8239, %v7537
        %v8412 = vmul.f32 %v8242, %v7537
        %v8413 = vmul.f32 %v8245, %v7537
        %v8414 = vmul.f32 %v8248, %v7537
        %v8415 = vmul.f32 %v8251, %v7537
        %v8416 = vmul.f32 %v8254, %v7537
        %v8417 = vmul.f32 %v8257, %v7537
        %v8418 = vmul.f32 %v8260, %v7537
        %v8419 = vmul.f32 %v8263, %v7537
        %v8420 = vmul.f32 %v8266, %v7537
        %v8421 = vmul.f32 %v8269, %v7537
        %v8422 = vmul.f32 %v8272, %v7537
        %v8423 = vmul.f32 %v8275, %v7537
        %v8424 = vmul.f32 %v8278, %v7537
        %v8425 = vmul.f32 %v8281, %v7537
        %v8426 = vmul.f32 %v8284, %v7537
        %v8427 = vmul.f32 %v8287, %v7537
        %v8428 = vmul.f32 %v8290, %v7537
        %v8429 = vmul.f32 %v8293, %v7537
        %v8430 = vmul.f32 %v8296, %v7537
        %v8431 = vmul.f32 %v8299, %v7537
        %v8432 = vmul.f32 %v8302, %v7537
        %v8433 = vmul.f32 %v8305, %v7537
        %v8434 = vadd.f32 %v8306, 1e-05
        %v8435 = vadd.f32 %v8307, 1e-05
        %v8436 = vadd.f32 %v8308, 1e-05
        %v8437 = vadd.f32 %v8309, 1e-05
        %v8438 = vadd.f32 %v8310, 1e-05
        %v8439 = vadd.f32 %v8311, 1e-05
        %v8440 = vadd.f32 %v8312, 1e-05
        %v8441 = vadd.f32 %v8313, 1e-05
        %v8442 = vadd.f32 %v8314, 1e-05
        %v8443 = vadd.f32 %v8315, 1e-05
        %v8444 = vadd.f32 %v8316, 1e-05
        %v8445 = vadd.f32 %v8317, 1e-05
        %v8446 = vadd.f32 %v8318, 1e-05
        %v8447 = vadd.f32 %v8319, 1e-05
        %v8448 = vadd.f32 %v8320, 1e-05
        %v8449 = vadd.f32 %v8321, 1e-05
        %v8450 = vadd.f32 %v8322, 1e-05
        %v8451 = vadd.f32 %v8323, 1e-05
        %v8452 = vadd.f32 %v8324, 1e-05
        %v8453 = vadd.f32 %v8325, 1e-05
        %v8454 = vadd.f32 %v8326, 1e-05
        %v8455 = vadd.f32 %v8327, 1e-05
        %v8456 = vadd.f32 %v8328, 1e-05
        %v8457 = vadd.f32 %v8329, 1e-05
        %v8458 = vadd.f32 %v8330, 1e-05
        %v8459 = vadd.f32 %v8331, 1e-05
        %v8460 = vadd.f32 %v8332, 1e-05
        %v8461 = vadd.f32 %v8333, 1e-05
        %v8462 = vadd.f32 %v8334, 1e-05
        %v8463 = vadd.f32 %v8335, 1e-05
        %v8464 = vadd.f32 %v8336, 1e-05
        %v8465 = vadd.f32 %v8337, 1e-05
        %v8466 = vadd.f32 %v8338, 1e-05
        %v8467 = vadd.f32 %v8339, 1e-05
        %v8468 = vadd.f32 %v8340, 1e-05
        %v8469 = vadd.f32 %v8341, 1e-05
        %v8470 = vadd.f32 %v8342, 1e-05
        %v8471 = vadd.f32 %v8343, 1e-05
        %v8472 = vadd.f32 %v8344, 1e-05
        %v8473 = vadd.f32 %v8345, 1e-05
        %v8474 = vadd.f32 %v8346, 1e-05
        %v8475 = vadd.f32 %v8347, 1e-05
        %v8476 = vadd.f32 %v8348, 1e-05
        %v8477 = vadd.f32 %v8349, 1e-05
        %v8478 = vadd.f32 %v8350, 1e-05
        %v8479 = vadd.f32 %v8351, 1e-05
        %v8480 = vadd.f32 %v8352, 1e-05
        %v8481 = vadd.f32 %v8353, 1e-05
        %v8482 = vadd.f32 %v8354, 1e-05
        %v8483 = vadd.f32 %v8355, 1e-05
        %v8484 = vadd.f32 %v8356, 1e-05
        %v8485 = vadd.f32 %v8357, 1e-05
        %v8486 = vadd.f32 %v8358, 1e-05
        %v8487 = vadd.f32 %v8359, 1e-05
        %v8488 = vadd.f32 %v8360, 1e-05
        %v8489 = vadd.f32 %v8361, 1e-05
        %v8490 = vadd.f32 %v8362, 1e-05
        %v8491 = vadd.f32 %v8363, 1e-05
        %v8492 = vadd.f32 %v8364, 1e-05
        %v8493 = vadd.f32 %v8365, 1e-05
        %v8494 = vadd.f32 %v8366, 1e-05
        %v8495 = vadd.f32 %v8367, 1e-05
        %v8496 = vadd.f32 %v8368, 1e-05
        %v8497 = vadd.f32 %v8369, 1e-05
        %v8498 = vadd.f32 %v8370, 1e-05
        %v8499 = vadd.f32 %v8371, 1e-05
        %v8500 = vadd.f32 %v8372, 1e-05
        %v8501 = vadd.f32 %v8373, 1e-05
        %v8502 = vadd.f32 %v8374, 1e-05
        %v8503 = vadd.f32 %v8375, 1e-05
        %v8504 = vadd.f32 %v8376, 1e-05
        %v8505 = vadd.f32 %v8377, 1e-05
        %v8506 = vadd.f32 %v8378, 1e-05
        %v8507 = vadd.f32 %v8379, 1e-05
        %v8508 = vadd.f32 %v8380, 1e-05
        %v8509 = vadd.f32 %v8381, 1e-05
        %v8510 = vadd.f32 %v8382, 1e-05
        %v8511 = vadd.f32 %v8383, 1e-05
        %v8512 = vadd.f32 %v8384, 1e-05
        %v8513 = vadd.f32 %v8385, 1e-05
        %v8514 = vadd.f32 %v8386, 1e-05
        %v8515 = vadd.f32 %v8387, 1e-05
        %v8516 = vadd.f32 %v8388, 1e-05
        %v8517 = vadd.f32 %v8389, 1e-05
        %v8518 = vadd.f32 %v8390, 1e-05
        %v8519 = vadd.f32 %v8391, 1e-05
        %v8520 = vadd.f32 %v8392, 1e-05
        %v8521 = vadd.f32 %v8393, 1e-05
        %v8522 = vadd.f32 %v8394, 1e-05
        %v8523 = vadd.f32 %v8395, 1e-05
        %v8524 = vadd.f32 %v8396, 1e-05
        %v8525 = vadd.f32 %v8397, 1e-05
        %v8526 = vadd.f32 %v8398, 1e-05
        %v8527 = vadd.f32 %v8399, 1e-05
        %v8528 = vadd.f32 %v8400, 1e-05
        %v8529 = vadd.f32 %v8401, 1e-05
        %v8530 = vadd.f32 %v8402, 1e-05
        %v8531 = vadd.f32 %v8403, 1e-05
        %v8532 = vadd.f32 %v8404, 1e-05
        %v8533 = vadd.f32 %v8405, 1e-05
        %v8534 = vadd.f32 %v8406, 1e-05
        %v8535 = vadd.f32 %v8407, 1e-05
        %v8536 = vadd.f32 %v8408, 1e-05
        %v8537 = vadd.f32 %v8409, 1e-05
        %v8538 = vadd.f32 %v8410, 1e-05
        %v8539 = vadd.f32 %v8411, 1e-05
        %v8540 = vadd.f32 %v8412, 1e-05
        %v8541 = vadd.f32 %v8413, 1e-05
        %v8542 = vadd.f32 %v8414, 1e-05
        %v8543 = vadd.f32 %v8415, 1e-05
        %v8544 = vadd.f32 %v8416, 1e-05
        %v8545 = vadd.f32 %v8417, 1e-05
        %v8546 = vadd.f32 %v8418, 1e-05
        %v8547 = vadd.f32 %v8419, 1e-05
        %v8548 = vadd.f32 %v8420, 1e-05
        %v8549 = vadd.f32 %v8421, 1e-05
        %v8550 = vadd.f32 %v8422, 1e-05
        %v8551 = vadd.f32 %v8423, 1e-05
        %v8552 = vadd.f32 %v8424, 1e-05
        %v8553 = vadd.f32 %v8425, 1e-05
        %v8554 = vadd.f32 %v8426, 1e-05
        %v8555 = vadd.f32 %v8427, 1e-05
        %v8556 = vadd.f32 %v8428, 1e-05
        %v8557 = vadd.f32 %v8429, 1e-05
        %v8558 = vadd.f32 %v8430, 1e-05
        %v8559 = vadd.f32 %v8431, 1e-05
        %v8560 = vadd.f32 %v8432, 1e-05
        %v8561 = vadd.f32 %v8433, 1e-05
        %v8562 = vrsqrt.pop %v8434
        %v8563 = vmul.f32 %v8562, %v8434
        %v8564 = vmul.f32 %v8563, %v8562
        %v8565 = vmul.f32 0.5, %v8564
        %v8566 = vsub.f32 1.5, %v8565
        %v8567 = vmul.f32 %v8562, %v8566
        %vm8568 = vweird.f32 %v8434
        %vm8569 = vweird.f32 %v8562
        %vm8570 = vmor %vm8568, %vm8569
        %v8571 = vsel %vm8570, %v8562, %v8567
        %v8572 = vrsqrt.pop %v8435
        %v8573 = vmul.f32 %v8572, %v8435
        %v8574 = vmul.f32 %v8573, %v8572
        %v8575 = vmul.f32 0.5, %v8574
        %v8576 = vsub.f32 1.5, %v8575
        %v8577 = vmul.f32 %v8572, %v8576
        %vm8578 = vweird.f32 %v8435
        %vm8579 = vweird.f32 %v8572
        %vm8580 = vmor %vm8578, %vm8579
        %v8581 = vsel %vm8580, %v8572, %v8577
        %v8582 = vrsqrt.pop %v8436
        %v8583 = vmul.f32 %v8582, %v8436
        %v8584 = vmul.f32 %v8583, %v8582
        %v8585 = vmul.f32 0.5, %v8584
        %v8586 = vsub.f32 1.5, %v8585
        %v8587 = vmul.f32 %v8582, %v8586
        %vm8588 = vweird.f32 %v8436
        %vm8589 = vweird.f32 %v8582
        %vm8590 = vmor %vm8588, %vm8589
        %v8591 = vsel %vm8590, %v8582, %v8587
        %v8592 = vrsqrt.pop %v8437
        %v8593 = vmul.f32 %v8592, %v8437
        %v8594 = vmul.f32 %v8593, %v8592
        %v8595 = vmul.f32 0.5, %v8594
        %v8596 = vsub.f32 1.5, %v8595
        %v8597 = vmul.f32 %v8592, %v8596
        %vm8598 = vweird.f32 %v8437
        %vm8599 = vweird.f32 %v8592
        %vm8600 = vmor %vm8598, %vm8599
        %v8601 = vsel %vm8600, %v8592, %v8597
        %v8602 = vrsqrt.pop %v8438
        %v8603 = vmul.f32 %v8602, %v8438
        %v8604 = vmul.f32 %v8603, %v8602
        %v8605 = vmul.f32 0.5, %v8604
        %v8606 = vsub.f32 1.5, %v8605
        %v8607 = vmul.f32 %v8602, %v8606
        %vm8608 = vweird.f32 %v8438
        %vm8609 = vweird.f32 %v8602
        %vm8610 = vmor %vm8608, %vm8609
        %v8611 = vsel %vm8610, %v8602, %v8607
        %v8612 = vrsqrt.pop %v8439
        %v8613 = vmul.f32 %v8612, %v8439
        %v8614 = vmul.f32 %v8613, %v8612
        %v8615 = vmul.f32 0.5, %v8614
        %v8616 = vsub.f32 1.5, %v8615
        %v8617 = vmul.f32 %v8612, %v8616
        %vm8618 = vweird.f32 %v8439
        %vm8619 = vweird.f32 %v8612
        %vm8620 = vmor %vm8618, %vm8619
        %v8621 = vsel %vm8620, %v8612, %v8617
        %v8622 = vrsqrt.pop %v8440
        %v8623 = vmul.f32 %v8622, %v8440
        %v8624 = vmul.f32 %v8623, %v8622
        %v8625 = vmul.f32 0.5, %v8624
        %v8626 = vsub.f32 1.5, %v8625
        %v8627 = vmul.f32 %v8622, %v8626
        %vm8628 = vweird.f32 %v8440
        %vm8629 = vweird.f32 %v8622
        %vm8630 = vmor %vm8628, %vm8629
        %v8631 = vsel %vm8630, %v8622, %v8627
        %v8632 = vrsqrt.pop %v8441
        %v8633 = vmul.f32 %v8632, %v8441
        %v8634 = vmul.f32 %v8633, %v8632
        %v8635 = vmul.f32 0.5, %v8634
        %v8636 = vsub.f32 1.5, %v8635
        %v8637 = vmul.f32 %v8632, %v8636
        %vm8638 = vweird.f32 %v8441
        %vm8639 = vweird.f32 %v8632
        %vm8640 = vmor %vm8638, %vm8639
        %v8641 = vsel %vm8640, %v8632, %v8637
        %v8642 = vrsqrt.pop %v8442
        %v8643 = vmul.f32 %v8642, %v8442
        %v8644 = vmul.f32 %v8643, %v8642
        %v8645 = vmul.f32 0.5, %v8644
        %v8646 = vsub.f32 1.5, %v8645
        %v8647 = vmul.f32 %v8642, %v8646
        %vm8648 = vweird.f32 %v8442
        %vm8649 = vweird.f32 %v8642
        %vm8650 = vmor %vm8648, %vm8649
        %v8651 = vsel %vm8650, %v8642, %v8647
        %v8652 = vrsqrt.pop %v8443
        %v8653 = vmul.f32 %v8652, %v8443
        %v8654 = vmul.f32 %v8653, %v8652
        %v8655 = vmul.f32 0.5, %v8654
        %v8656 = vsub.f32 1.5, %v8655
        %v8657 = vmul.f32 %v8652, %v8656
        %vm8658 = vweird.f32 %v8443
        %vm8659 = vweird.f32 %v8652
        %vm8660 = vmor %vm8658, %vm8659
        %v8661 = vsel %vm8660, %v8652, %v8657
        %v8662 = vrsqrt.pop %v8444
        %v8663 = vmul.f32 %v8662, %v8444
        %v8664 = vmul.f32 %v8663, %v8662
        %v8665 = vmul.f32 0.5, %v8664
        %v8666 = vsub.f32 1.5, %v8665
        %v8667 = vmul.f32 %v8662, %v8666
        %vm8668 = vweird.f32 %v8444
        %vm8669 = vweird.f32 %v8662
        %vm8670 = vmor %vm8668, %vm8669
        %v8671 = vsel %vm8670, %v8662, %v8667
        %v8672 = vrsqrt.pop %v8445
        %v8673 = vmul.f32 %v8672, %v8445
        %v8674 = vmul.f32 %v8673, %v8672
        %v8675 = vmul.f32 0.5, %v8674
        %v8676 = vsub.f32 1.5, %v8675
        %v8677 = vmul.f32 %v8672, %v8676
        %vm8678 = vweird.f32 %v8445
        %vm8679 = vweird.f32 %v8672
        %vm8680 = vmor %vm8678, %vm8679
        %v8681 = vsel %vm8680, %v8672, %v8677
        %v8682 = vrsqrt.pop %v8446
        %v8683 = vmul.f32 %v8682, %v8446
        %v8684 = vmul.f32 %v8683, %v8682
        %v8685 = vmul.f32 0.5, %v8684
        %v8686 = vsub.f32 1.5, %v8685
        %v8687 = vmul.f32 %v8682, %v8686
        %vm8688 = vweird.f32 %v8446
        %vm8689 = vweird.f32 %v8682
        %vm8690 = vmor %vm8688, %vm8689
        %v8691 = vsel %vm8690, %v8682, %v8687
        %v8692 = vrsqrt.pop %v8447
        %v8693 = vmul.f32 %v8692, %v8447
        %v8694 = vmul.f32 %v8693, %v8692
        %v8695 = vmul.f32 0.5, %v8694
        %v8696 = vsub.f32 1.5, %v8695
        %v8697 = vmul.f32 %v8692, %v8696
        %vm8698 = vweird.f32 %v8447
        %vm8699 = vweird.f32 %v8692
        %vm8700 = vmor %vm8698, %vm8699
        %v8701 = vsel %vm8700, %v8692, %v8697
        %v8702 = vrsqrt.pop %v8448
        %v8703 = vmul.f32 %v8702, %v8448
        %v8704 = vmul.f32 %v8703, %v8702
        %v8705 = vmul.f32 0.5, %v8704
        %v8706 = vsub.f32 1.5, %v8705
        %v8707 = vmul.f32 %v8702, %v8706
        %vm8708 = vweird.f32 %v8448
        %vm8709 = vweird.f32 %v8702
        %vm8710 = vmor %vm8708, %vm8709
        %v8711 = vsel %vm8710, %v8702, %v8707
        %v8712 = vrsqrt.pop %v8449
        %v8713 = vmul.f32 %v8712, %v8449
        %v8714 = vmul.f32 %v8713, %v8712
        %v8715 = vmul.f32 0.5, %v8714
        %v8716 = vsub.f32 1.5, %v8715
        %v8717 = vmul.f32 %v8712, %v8716
        %vm8718 = vweird.f32 %v8449
        %vm8719 = vweird.f32 %v8712
        %vm8720 = vmor %vm8718, %vm8719
        %v8721 = vsel %vm8720, %v8712, %v8717
        %v8722 = vrsqrt.pop %v8450
        %v8723 = vmul.f32 %v8722, %v8450
        %v8724 = vmul.f32 %v8723, %v8722
        %v8725 = vmul.f32 0.5, %v8724
        %v8726 = vsub.f32 1.5, %v8725
        %v8727 = vmul.f32 %v8722, %v8726
        %vm8728 = vweird.f32 %v8450
        %vm8729 = vweird.f32 %v8722
        %vm8730 = vmor %vm8728, %vm8729
        %v8731 = vsel %vm8730, %v8722, %v8727
        %v8732 = vrsqrt.pop %v8451
        %v8733 = vmul.f32 %v8732, %v8451
        %v8734 = vmul.f32 %v8733, %v8732
        %v8735 = vmul.f32 0.5, %v8734
        %v8736 = vsub.f32 1.5, %v8735
        %v8737 = vmul.f32 %v8732, %v8736
        %vm8738 = vweird.f32 %v8451
        %vm8739 = vweird.f32 %v8732
        %vm8740 = vmor %vm8738, %vm8739
        %v8741 = vsel %vm8740, %v8732, %v8737
        %v8742 = vrsqrt.pop %v8452
        %v8743 = vmul.f32 %v8742, %v8452
        %v8744 = vmul.f32 %v8743, %v8742
        %v8745 = vmul.f32 0.5, %v8744
        %v8746 = vsub.f32 1.5, %v8745
        %v8747 = vmul.f32 %v8742, %v8746
        %vm8748 = vweird.f32 %v8452
        %vm8749 = vweird.f32 %v8742
        %vm8750 = vmor %vm8748, %vm8749
        %v8751 = vsel %vm8750, %v8742, %v8747
        %v8752 = vrsqrt.pop %v8453
        %v8753 = vmul.f32 %v8752, %v8453
        %v8754 = vmul.f32 %v8753, %v8752
        %v8755 = vmul.f32 0.5, %v8754
        %v8756 = vsub.f32 1.5, %v8755
        %v8757 = vmul.f32 %v8752, %v8756
        %vm8758 = vweird.f32 %v8453
        %vm8759 = vweird.f32 %v8752
        %vm8760 = vmor %vm8758, %vm8759
        %v8761 = vsel %vm8760, %v8752, %v8757
        %v8762 = vrsqrt.pop %v8454
        %v8763 = vmul.f32 %v8762, %v8454
        %v8764 = vmul.f32 %v8763, %v8762
        %v8765 = vmul.f32 0.5, %v8764
        %v8766 = vsub.f32 1.5, %v8765
        %v8767 = vmul.f32 %v8762, %v8766
        %vm8768 = vweird.f32 %v8454
        %vm8769 = vweird.f32 %v8762
        %vm8770 = vmor %vm8768, %vm8769
        %v8771 = vsel %vm8770, %v8762, %v8767
        %v8772 = vrsqrt.pop %v8455
        %v8773 = vmul.f32 %v8772, %v8455
        %v8774 = vmul.f32 %v8773, %v8772
        %v8775 = vmul.f32 0.5, %v8774
        %v8776 = vsub.f32 1.5, %v8775
        %v8777 = vmul.f32 %v8772, %v8776
        %vm8778 = vweird.f32 %v8455
        %vm8779 = vweird.f32 %v8772
        %vm8780 = vmor %vm8778, %vm8779
        %v8781 = vsel %vm8780, %v8772, %v8777
        %v8782 = vrsqrt.pop %v8456
        %v8783 = vmul.f32 %v8782, %v8456
        %v8784 = vmul.f32 %v8783, %v8782
        %v8785 = vmul.f32 0.5, %v8784
        %v8786 = vsub.f32 1.5, %v8785
        %v8787 = vmul.f32 %v8782, %v8786
        %vm8788 = vweird.f32 %v8456
        %vm8789 = vweird.f32 %v8782
        %vm8790 = vmor %vm8788, %vm8789
        %v8791 = vsel %vm8790, %v8782, %v8787
        %v8792 = vrsqrt.pop %v8457
        %v8793 = vmul.f32 %v8792, %v8457
        %v8794 = vmul.f32 %v8793, %v8792
        %v8795 = vmul.f32 0.5, %v8794
        %v8796 = vsub.f32 1.5, %v8795
        %v8797 = vmul.f32 %v8792, %v8796
        %vm8798 = vweird.f32 %v8457
        %vm8799 = vweird.f32 %v8792
        %vm8800 = vmor %vm8798, %vm8799
        %v8801 = vsel %vm8800, %v8792, %v8797
        %v8802 = vrsqrt.pop %v8458
        %v8803 = vmul.f32 %v8802, %v8458
        %v8804 = vmul.f32 %v8803, %v8802
        %v8805 = vmul.f32 0.5, %v8804
        %v8806 = vsub.f32 1.5, %v8805
        %v8807 = vmul.f32 %v8802, %v8806
        %vm8808 = vweird.f32 %v8458
        %vm8809 = vweird.f32 %v8802
        %vm8810 = vmor %vm8808, %vm8809
        %v8811 = vsel %vm8810, %v8802, %v8807
        %v8812 = vrsqrt.pop %v8459
        %v8813 = vmul.f32 %v8812, %v8459
        %v8814 = vmul.f32 %v8813, %v8812
        %v8815 = vmul.f32 0.5, %v8814
        %v8816 = vsub.f32 1.5, %v8815
        %v8817 = vmul.f32 %v8812, %v8816
        %vm8818 = vweird.f32 %v8459
        %vm8819 = vweird.f32 %v8812
        %vm8820 = vmor %vm8818, %vm8819
        %v8821 = vsel %vm8820, %v8812, %v8817
        %v8822 = vrsqrt.pop %v8460
        %v8823 = vmul.f32 %v8822, %v8460
        %v8824 = vmul.f32 %v8823, %v8822
        %v8825 = vmul.f32 0.5, %v8824
        %v8826 = vsub.f32 1.5, %v8825
        %v8827 = vmul.f32 %v8822, %v8826
        %vm8828 = vweird.f32 %v8460
        %vm8829 = vweird.f32 %v8822
        %vm8830 = vmor %vm8828, %vm8829
        %v8831 = vsel %vm8830, %v8822, %v8827
        %v8832 = vrsqrt.pop %v8461
        %v8833 = vmul.f32 %v8832, %v8461
        %v8834 = vmul.f32 %v8833, %v8832
        %v8835 = vmul.f32 0.5, %v8834
        %v8836 = vsub.f32 1.5, %v8835
        %v8837 = vmul.f32 %v8832, %v8836
        %vm8838 = vweird.f32 %v8461
        %vm8839 = vweird.f32 %v8832
        %vm8840 = vmor %vm8838, %vm8839
        %v8841 = vsel %vm8840, %v8832, %v8837
        %v8842 = vrsqrt.pop %v8462
        %v8843 = vmul.f32 %v8842, %v8462
        %v8844 = vmul.f32 %v8843, %v8842
        %v8845 = vmul.f32 0.5, %v8844
        %v8846 = vsub.f32 1.5, %v8845
        %v8847 = vmul.f32 %v8842, %v8846
        %vm8848 = vweird.f32 %v8462
        %vm8849 = vweird.f32 %v8842
        %vm8850 = vmor %vm8848, %vm8849
        %v8851 = vsel %vm8850, %v8842, %v8847
        %v8852 = vrsqrt.pop %v8463
        %v8853 = vmul.f32 %v8852, %v8463
        %v8854 = vmul.f32 %v8853, %v8852
        %v8855 = vmul.f32 0.5, %v8854
        %v8856 = vsub.f32 1.5, %v8855
        %v8857 = vmul.f32 %v8852, %v8856
        %vm8858 = vweird.f32 %v8463
        %vm8859 = vweird.f32 %v8852
        %vm8860 = vmor %vm8858, %vm8859
        %v8861 = vsel %vm8860, %v8852, %v8857
        %v8862 = vrsqrt.pop %v8464
        %v8863 = vmul.f32 %v8862, %v8464
        %v8864 = vmul.f32 %v8863, %v8862
        %v8865 = vmul.f32 0.5, %v8864
        %v8866 = vsub.f32 1.5, %v8865
        %v8867 = vmul.f32 %v8862, %v8866
        %vm8868 = vweird.f32 %v8464
        %vm8869 = vweird.f32 %v8862
        %vm8870 = vmor %vm8868, %vm8869
        %v8871 = vsel %vm8870, %v8862, %v8867
        %v8872 = vrsqrt.pop %v8465
        %v8873 = vmul.f32 %v8872, %v8465
        %v8874 = vmul.f32 %v8873, %v8872
        %v8875 = vmul.f32 0.5, %v8874
        %v8876 = vsub.f32 1.5, %v8875
        %v8877 = vmul.f32 %v8872, %v8876
        %vm8878 = vweird.f32 %v8465
        %vm8879 = vweird.f32 %v8872
        %vm8880 = vmor %vm8878, %vm8879
        %v8881 = vsel %vm8880, %v8872, %v8877
        %v8882 = vrsqrt.pop %v8466
        %v8883 = vmul.f32 %v8882, %v8466
        %v8884 = vmul.f32 %v8883, %v8882
        %v8885 = vmul.f32 0.5, %v8884
        %v8886 = vsub.f32 1.5, %v8885
        %v8887 = vmul.f32 %v8882, %v8886
        %vm8888 = vweird.f32 %v8466
        %vm8889 = vweird.f32 %v8882
        %vm8890 = vmor %vm8888, %vm8889
        %v8891 = vsel %vm8890, %v8882, %v8887
        %v8892 = vrsqrt.pop %v8467
        %v8893 = vmul.f32 %v8892, %v8467
        %v8894 = vmul.f32 %v8893, %v8892
        %v8895 = vmul.f32 0.5, %v8894
        %v8896 = vsub.f32 1.5, %v8895
        %v8897 = vmul.f32 %v8892, %v8896
        %vm8898 = vweird.f32 %v8467
        %vm8899 = vweird.f32 %v8892
        %vm8900 = vmor %vm8898, %vm8899
        %v8901 = vsel %vm8900, %v8892, %v8897
        %v8902 = vrsqrt.pop %v8468
        %v8903 = vmul.f32 %v8902, %v8468
        %v8904 = vmul.f32 %v8903, %v8902
        %v8905 = vmul.f32 0.5, %v8904
        %v8906 = vsub.f32 1.5, %v8905
        %v8907 = vmul.f32 %v8902, %v8906
        %vm8908 = vweird.f32 %v8468
        %vm8909 = vweird.f32 %v8902
        %vm8910 = vmor %vm8908, %vm8909
        %v8911 = vsel %vm8910, %v8902, %v8907
        %v8912 = vrsqrt.pop %v8469
        %v8913 = vmul.f32 %v8912, %v8469
        %v8914 = vmul.f32 %v8913, %v8912
        %v8915 = vmul.f32 0.5, %v8914
        %v8916 = vsub.f32 1.5, %v8915
        %v8917 = vmul.f32 %v8912, %v8916
        %vm8918 = vweird.f32 %v8469
        %vm8919 = vweird.f32 %v8912
        %vm8920 = vmor %vm8918, %vm8919
        %v8921 = vsel %vm8920, %v8912, %v8917
        %v8922 = vrsqrt.pop %v8470
        %v8923 = vmul.f32 %v8922, %v8470
        %v8924 = vmul.f32 %v8923, %v8922
        %v8925 = vmul.f32 0.5, %v8924
        %v8926 = vsub.f32 1.5, %v8925
        %v8927 = vmul.f32 %v8922, %v8926
        %vm8928 = vweird.f32 %v8470
        %vm8929 = vweird.f32 %v8922
        %vm8930 = vmor %vm8928, %vm8929
        %v8931 = vsel %vm8930, %v8922, %v8927
        %v8932 = vrsqrt.pop %v8471
        %v8933 = vmul.f32 %v8932, %v8471
        %v8934 = vmul.f32 %v8933, %v8932
        %v8935 = vmul.f32 0.5, %v8934
        %v8936 = vsub.f32 1.5, %v8935
        %v8937 = vmul.f32 %v8932, %v8936
        %vm8938 = vweird.f32 %v8471
        %vm8939 = vweird.f32 %v8932
        %vm8940 = vmor %vm8938, %vm8939
        %v8941 = vsel %vm8940, %v8932, %v8937
        %v8942 = vrsqrt.pop %v8472
        %v8943 = vmul.f32 %v8942, %v8472
        %v8944 = vmul.f32 %v8943, %v8942
        %v8945 = vmul.f32 0.5, %v8944
        %v8946 = vsub.f32 1.5, %v8945
        %v8947 = vmul.f32 %v8942, %v8946
        %vm8948 = vweird.f32 %v8472
        %vm8949 = vweird.f32 %v8942
        %vm8950 = vmor %vm8948, %vm8949
        %v8951 = vsel %vm8950, %v8942, %v8947
        %v8952 = vrsqrt.pop %v8473
        %v8953 = vmul.f32 %v8952, %v8473
        %v8954 = vmul.f32 %v8953, %v8952
        %v8955 = vmul.f32 0.5, %v8954
        %v8956 = vsub.f32 1.5, %v8955
        %v8957 = vmul.f32 %v8952, %v8956
        %vm8958 = vweird.f32 %v8473
        %vm8959 = vweird.f32 %v8952
        %vm8960 = vmor %vm8958, %vm8959
        %v8961 = vsel %vm8960, %v8952, %v8957
        %v8962 = vrsqrt.pop %v8474
        %v8963 = vmul.f32 %v8962, %v8474
        %v8964 = vmul.f32 %v8963, %v8962
        %v8965 = vmul.f32 0.5, %v8964
        %v8966 = vsub.f32 1.5, %v8965
        %v8967 = vmul.f32 %v8962, %v8966
        %vm8968 = vweird.f32 %v8474
        %vm8969 = vweird.f32 %v8962
        %vm8970 = vmor %vm8968, %vm8969
        %v8971 = vsel %vm8970, %v8962, %v8967
        %v8972 = vrsqrt.pop %v8475
        %v8973 = vmul.f32 %v8972, %v8475
        %v8974 = vmul.f32 %v8973, %v8972
        %v8975 = vmul.f32 0.5, %v8974
        %v8976 = vsub.f32 1.5, %v8975
        %v8977 = vmul.f32 %v8972, %v8976
        %vm8978 = vweird.f32 %v8475
        %vm8979 = vweird.f32 %v8972
        %vm8980 = vmor %vm8978, %vm8979
        %v8981 = vsel %vm8980, %v8972, %v8977
        %v8982 = vrsqrt.pop %v8476
        %v8983 = vmul.f32 %v8982, %v8476
        %v8984 = vmul.f32 %v8983, %v8982
        %v8985 = vmul.f32 0.5, %v8984
        %v8986 = vsub.f32 1.5, %v8985
        %v8987 = vmul.f32 %v8982, %v8986
        %vm8988 = vweird.f32 %v8476
        %vm8989 = vweird.f32 %v8982
        %vm8990 = vmor %vm8988, %vm8989
        %v8991 = vsel %vm8990, %v8982, %v8987
        %v8992 = vrsqrt.pop %v8477
        %v8993 = vmul.f32 %v8992, %v8477
        %v8994 = vmul.f32 %v8993, %v8992
        %v8995 = vmul.f32 0.5, %v8994
        %v8996 = vsub.f32 1.5, %v8995
        %v8997 = vmul.f32 %v8992, %v8996
        %vm8998 = vweird.f32 %v8477
        %vm8999 = vweird.f32 %v8992
        %vm9000 = vmor %vm8998, %vm8999
        %v9001 = vsel %vm9000, %v8992, %v8997
        %v9002 = vrsqrt.pop %v8478
        %v9003 = vmul.f32 %v9002, %v8478
        %v9004 = vmul.f32 %v9003, %v9002
        %v9005 = vmul.f32 0.5, %v9004
        %v9006 = vsub.f32 1.5, %v9005
        %v9007 = vmul.f32 %v9002, %v9006
        %vm9008 = vweird.f32 %v8478
        %vm9009 = vweird.f32 %v9002
        %vm9010 = vmor %vm9008, %vm9009
        %v9011 = vsel %vm9010, %v9002, %v9007
        %v9012 = vrsqrt.pop %v8479
        %v9013 = vmul.f32 %v9012, %v8479
        %v9014 = vmul.f32 %v9013, %v9012
        %v9015 = vmul.f32 0.5, %v9014
        %v9016 = vsub.f32 1.5, %v9015
        %v9017 = vmul.f32 %v9012, %v9016
        %vm9018 = vweird.f32 %v8479
        %vm9019 = vweird.f32 %v9012
        %vm9020 = vmor %vm9018, %vm9019
        %v9021 = vsel %vm9020, %v9012, %v9017
        %v9022 = vrsqrt.pop %v8480
        %v9023 = vmul.f32 %v9022, %v8480
        %v9024 = vmul.f32 %v9023, %v9022
        %v9025 = vmul.f32 0.5, %v9024
        %v9026 = vsub.f32 1.5, %v9025
        %v9027 = vmul.f32 %v9022, %v9026
        %vm9028 = vweird.f32 %v8480
        %vm9029 = vweird.f32 %v9022
        %vm9030 = vmor %vm9028, %vm9029
        %v9031 = vsel %vm9030, %v9022, %v9027
        %v9032 = vrsqrt.pop %v8481
        %v9033 = vmul.f32 %v9032, %v8481
        %v9034 = vmul.f32 %v9033, %v9032
        %v9035 = vmul.f32 0.5, %v9034
        %v9036 = vsub.f32 1.5, %v9035
        %v9037 = vmul.f32 %v9032, %v9036
        %vm9038 = vweird.f32 %v8481
        %vm9039 = vweird.f32 %v9032
        %vm9040 = vmor %vm9038, %vm9039
        %v9041 = vsel %vm9040, %v9032, %v9037
        %v9042 = vrsqrt.pop %v8482
        %v9043 = vmul.f32 %v9042, %v8482
        %v9044 = vmul.f32 %v9043, %v9042
        %v9045 = vmul.f32 0.5, %v9044
        %v9046 = vsub.f32 1.5, %v9045
        %v9047 = vmul.f32 %v9042, %v9046
        %vm9048 = vweird.f32 %v8482
        %vm9049 = vweird.f32 %v9042
        %vm9050 = vmor %vm9048, %vm9049
        %v9051 = vsel %vm9050, %v9042, %v9047
        %v9052 = vrsqrt.pop %v8483
        %v9053 = vmul.f32 %v9052, %v8483
        %v9054 = vmul.f32 %v9053, %v9052
        %v9055 = vmul.f32 0.5, %v9054
        %v9056 = vsub.f32 1.5, %v9055
        %v9057 = vmul.f32 %v9052, %v9056
        %vm9058 = vweird.f32 %v8483
        %vm9059 = vweird.f32 %v9052
        %vm9060 = vmor %vm9058, %vm9059
        %v9061 = vsel %vm9060, %v9052, %v9057
        %v9062 = vrsqrt.pop %v8484
        %v9063 = vmul.f32 %v9062, %v8484
        %v9064 = vmul.f32 %v9063, %v9062
        %v9065 = vmul.f32 0.5, %v9064
        %v9066 = vsub.f32 1.5, %v9065
        %v9067 = vmul.f32 %v9062, %v9066
        %vm9068 = vweird.f32 %v8484
        %vm9069 = vweird.f32 %v9062
        %vm9070 = vmor %vm9068, %vm9069
        %v9071 = vsel %vm9070, %v9062, %v9067
        %v9072 = vrsqrt.pop %v8485
        %v9073 = vmul.f32 %v9072, %v8485
        %v9074 = vmul.f32 %v9073, %v9072
        %v9075 = vmul.f32 0.5, %v9074
        %v9076 = vsub.f32 1.5, %v9075
        %v9077 = vmul.f32 %v9072, %v9076
        %vm9078 = vweird.f32 %v8485
        %vm9079 = vweird.f32 %v9072
        %vm9080 = vmor %vm9078, %vm9079
        %v9081 = vsel %vm9080, %v9072, %v9077
        %v9082 = vrsqrt.pop %v8486
        %v9083 = vmul.f32 %v9082, %v8486
        %v9084 = vmul.f32 %v9083, %v9082
        %v9085 = vmul.f32 0.5, %v9084
        %v9086 = vsub.f32 1.5, %v9085
        %v9087 = vmul.f32 %v9082, %v9086
        %vm9088 = vweird.f32 %v8486
        %vm9089 = vweird.f32 %v9082
        %vm9090 = vmor %vm9088, %vm9089
        %v9091 = vsel %vm9090, %v9082, %v9087
        %v9092 = vrsqrt.pop %v8487
        %v9093 = vmul.f32 %v9092, %v8487
        %v9094 = vmul.f32 %v9093, %v9092
        %v9095 = vmul.f32 0.5, %v9094
        %v9096 = vsub.f32 1.5, %v9095
        %v9097 = vmul.f32 %v9092, %v9096
        %vm9098 = vweird.f32 %v8487
        %vm9099 = vweird.f32 %v9092
        %vm9100 = vmor %vm9098, %vm9099
        %v9101 = vsel %vm9100, %v9092, %v9097
        %v9102 = vrsqrt.pop %v8488
        %v9103 = vmul.f32 %v9102, %v8488
        %v9104 = vmul.f32 %v9103, %v9102
        %v9105 = vmul.f32 0.5, %v9104
        %v9106 = vsub.f32 1.5, %v9105
        %v9107 = vmul.f32 %v9102, %v9106
        %vm9108 = vweird.f32 %v8488
        %vm9109 = vweird.f32 %v9102
        %vm9110 = vmor %vm9108, %vm9109
        %v9111 = vsel %vm9110, %v9102, %v9107
        %v9112 = vrsqrt.pop %v8489
        %v9113 = vmul.f32 %v9112, %v8489
        %v9114 = vmul.f32 %v9113, %v9112
        %v9115 = vmul.f32 0.5, %v9114
        %v9116 = vsub.f32 1.5, %v9115
        %v9117 = vmul.f32 %v9112, %v9116
        %vm9118 = vweird.f32 %v8489
        %vm9119 = vweird.f32 %v9112
        %vm9120 = vmor %vm9118, %vm9119
        %v9121 = vsel %vm9120, %v9112, %v9117
        %v9122 = vrsqrt.pop %v8490
        %v9123 = vmul.f32 %v9122, %v8490
        %v9124 = vmul.f32 %v9123, %v9122
        %v9125 = vmul.f32 0.5, %v9124
        %v9126 = vsub.f32 1.5, %v9125
        %v9127 = vmul.f32 %v9122, %v9126
        %vm9128 = vweird.f32 %v8490
        %vm9129 = vweird.f32 %v9122
        %vm9130 = vmor %vm9128, %vm9129
        %v9131 = vsel %vm9130, %v9122, %v9127
        %v9132 = vrsqrt.pop %v8491
        %v9133 = vmul.f32 %v9132, %v8491
        %v9134 = vmul.f32 %v9133, %v9132
        %v9135 = vmul.f32 0.5, %v9134
        %v9136 = vsub.f32 1.5, %v9135
        %v9137 = vmul.f32 %v9132, %v9136
        %vm9138 = vweird.f32 %v8491
        %vm9139 = vweird.f32 %v9132
        %vm9140 = vmor %vm9138, %vm9139
        %v9141 = vsel %vm9140, %v9132, %v9137
        %v9142 = vrsqrt.pop %v8492
        %v9143 = vmul.f32 %v9142, %v8492
        %v9144 = vmul.f32 %v9143, %v9142
        %v9145 = vmul.f32 0.5, %v9144
        %v9146 = vsub.f32 1.5, %v9145
        %v9147 = vmul.f32 %v9142, %v9146
        %vm9148 = vweird.f32 %v8492
        %vm9149 = vweird.f32 %v9142
        %vm9150 = vmor %vm9148, %vm9149
        %v9151 = vsel %vm9150, %v9142, %v9147
        %v9152 = vrsqrt.pop %v8493
        %v9153 = vmul.f32 %v9152, %v8493
        %v9154 = vmul.f32 %v9153, %v9152
        %v9155 = vmul.f32 0.5, %v9154
        %v9156 = vsub.f32 1.5, %v9155
        %v9157 = vmul.f32 %v9152, %v9156
        %vm9158 = vweird.f32 %v8493
        %vm9159 = vweird.f32 %v9152
        %vm9160 = vmor %vm9158, %vm9159
        %v9161 = vsel %vm9160, %v9152, %v9157
        %v9162 = vrsqrt.pop %v8494
        %v9163 = vmul.f32 %v9162, %v8494
        %v9164 = vmul.f32 %v9163, %v9162
        %v9165 = vmul.f32 0.5, %v9164
        %v9166 = vsub.f32 1.5, %v9165
        %v9167 = vmul.f32 %v9162, %v9166
        %vm9168 = vweird.f32 %v8494
        %vm9169 = vweird.f32 %v9162
        %vm9170 = vmor %vm9168, %vm9169
        %v9171 = vsel %vm9170, %v9162, %v9167
        %v9172 = vrsqrt.pop %v8495
        %v9173 = vmul.f32 %v9172, %v8495
        %v9174 = vmul.f32 %v9173, %v9172
        %v9175 = vmul.f32 0.5, %v9174
        %v9176 = vsub.f32 1.5, %v9175
        %v9177 = vmul.f32 %v9172, %v9176
        %vm9178 = vweird.f32 %v8495
        %vm9179 = vweird.f32 %v9172
        %vm9180 = vmor %vm9178, %vm9179
        %v9181 = vsel %vm9180, %v9172, %v9177
        %v9182 = vrsqrt.pop %v8496
        %v9183 = vmul.f32 %v9182, %v8496
        %v9184 = vmul.f32 %v9183, %v9182
        %v9185 = vmul.f32 0.5, %v9184
        %v9186 = vsub.f32 1.5, %v9185
        %v9187 = vmul.f32 %v9182, %v9186
        %vm9188 = vweird.f32 %v8496
        %vm9189 = vweird.f32 %v9182
        %vm9190 = vmor %vm9188, %vm9189
        %v9191 = vsel %vm9190, %v9182, %v9187
        %v9192 = vrsqrt.pop %v8497
        %v9193 = vmul.f32 %v9192, %v8497
        %v9194 = vmul.f32 %v9193, %v9192
        %v9195 = vmul.f32 0.5, %v9194
        %v9196 = vsub.f32 1.5, %v9195
        %v9197 = vmul.f32 %v9192, %v9196
        %vm9198 = vweird.f32 %v8497
        %vm9199 = vweird.f32 %v9192
        %vm9200 = vmor %vm9198, %vm9199
        %v9201 = vsel %vm9200, %v9192, %v9197
        %v9202 = vrsqrt.pop %v8498
        %v9203 = vmul.f32 %v9202, %v8498
        %v9204 = vmul.f32 %v9203, %v9202
        %v9205 = vmul.f32 0.5, %v9204
        %v9206 = vsub.f32 1.5, %v9205
        %v9207 = vmul.f32 %v9202, %v9206
        %vm9208 = vweird.f32 %v8498
        %vm9209 = vweird.f32 %v9202
        %vm9210 = vmor %vm9208, %vm9209
        %v9211 = vsel %vm9210, %v9202, %v9207
        %v9212 = vrsqrt.pop %v8499
        %v9213 = vmul.f32 %v9212, %v8499
        %v9214 = vmul.f32 %v9213, %v9212
        %v9215 = vmul.f32 0.5, %v9214
        %v9216 = vsub.f32 1.5, %v9215
        %v9217 = vmul.f32 %v9212, %v9216
        %vm9218 = vweird.f32 %v8499
        %vm9219 = vweird.f32 %v9212
        %vm9220 = vmor %vm9218, %vm9219
        %v9221 = vsel %vm9220, %v9212, %v9217
        %v9222 = vrsqrt.pop %v8500
        %v9223 = vmul.f32 %v9222, %v8500
        %v9224 = vmul.f32 %v9223, %v9222
        %v9225 = vmul.f32 0.5, %v9224
        %v9226 = vsub.f32 1.5, %v9225
        %v9227 = vmul.f32 %v9222, %v9226
        %vm9228 = vweird.f32 %v8500
        %vm9229 = vweird.f32 %v9222
        %vm9230 = vmor %vm9228, %vm9229
        %v9231 = vsel %vm9230, %v9222, %v9227
        %v9232 = vrsqrt.pop %v8501
        %v9233 = vmul.f32 %v9232, %v8501
        %v9234 = vmul.f32 %v9233, %v9232
        %v9235 = vmul.f32 0.5, %v9234
        %v9236 = vsub.f32 1.5, %v9235
        %v9237 = vmul.f32 %v9232, %v9236
        %vm9238 = vweird.f32 %v8501
        %vm9239 = vweird.f32 %v9232
        %vm9240 = vmor %vm9238, %vm9239
        %v9241 = vsel %vm9240, %v9232, %v9237
        %v9242 = vrsqrt.pop %v8502
        %v9243 = vmul.f32 %v9242, %v8502
        %v9244 = vmul.f32 %v9243, %v9242
        %v9245 = vmul.f32 0.5, %v9244
        %v9246 = vsub.f32 1.5, %v9245
        %v9247 = vmul.f32 %v9242, %v9246
        %vm9248 = vweird.f32 %v8502
        %vm9249 = vweird.f32 %v9242
        %vm9250 = vmor %vm9248, %vm9249
        %v9251 = vsel %vm9250, %v9242, %v9247
        %v9252 = vrsqrt.pop %v8503
        %v9253 = vmul.f32 %v9252, %v8503
        %v9254 = vmul.f32 %v9253, %v9252
        %v9255 = vmul.f32 0.5, %v9254
        %v9256 = vsub.f32 1.5, %v9255
        %v9257 = vmul.f32 %v9252, %v9256
        %vm9258 = vweird.f32 %v8503
        %vm9259 = vweird.f32 %v9252
        %vm9260 = vmor %vm9258, %vm9259
        %v9261 = vsel %vm9260, %v9252, %v9257
        %v9262 = vrsqrt.pop %v8504
        %v9263 = vmul.f32 %v9262, %v8504
        %v9264 = vmul.f32 %v9263, %v9262
        %v9265 = vmul.f32 0.5, %v9264
        %v9266 = vsub.f32 1.5, %v9265
        %v9267 = vmul.f32 %v9262, %v9266
        %vm9268 = vweird.f32 %v8504
        %vm9269 = vweird.f32 %v9262
        %vm9270 = vmor %vm9268, %vm9269
        %v9271 = vsel %vm9270, %v9262, %v9267
        %v9272 = vrsqrt.pop %v8505
        %v9273 = vmul.f32 %v9272, %v8505
        %v9274 = vmul.f32 %v9273, %v9272
        %v9275 = vmul.f32 0.5, %v9274
        %v9276 = vsub.f32 1.5, %v9275
        %v9277 = vmul.f32 %v9272, %v9276
        %vm9278 = vweird.f32 %v8505
        %vm9279 = vweird.f32 %v9272
        %vm9280 = vmor %vm9278, %vm9279
        %v9281 = vsel %vm9280, %v9272, %v9277
        %v9282 = vrsqrt.pop %v8506
        %v9283 = vmul.f32 %v9282, %v8506
        %v9284 = vmul.f32 %v9283, %v9282
        %v9285 = vmul.f32 0.5, %v9284
        %v9286 = vsub.f32 1.5, %v9285
        %v9287 = vmul.f32 %v9282, %v9286
        %vm9288 = vweird.f32 %v8506
        %vm9289 = vweird.f32 %v9282
        %vm9290 = vmor %vm9288, %vm9289
        %v9291 = vsel %vm9290, %v9282, %v9287
        %v9292 = vrsqrt.pop %v8507
        %v9293 = vmul.f32 %v9292, %v8507
        %v9294 = vmul.f32 %v9293, %v9292
        %v9295 = vmul.f32 0.5, %v9294
        %v9296 = vsub.f32 1.5, %v9295
        %v9297 = vmul.f32 %v9292, %v9296
        %vm9298 = vweird.f32 %v8507
        %vm9299 = vweird.f32 %v9292
        %vm9300 = vmor %vm9298, %vm9299
        %v9301 = vsel %vm9300, %v9292, %v9297
        %v9302 = vrsqrt.pop %v8508
        %v9303 = vmul.f32 %v9302, %v8508
        %v9304 = vmul.f32 %v9303, %v9302
        %v9305 = vmul.f32 0.5, %v9304
        %v9306 = vsub.f32 1.5, %v9305
        %v9307 = vmul.f32 %v9302, %v9306
        %vm9308 = vweird.f32 %v8508
        %vm9309 = vweird.f32 %v9302
        %vm9310 = vmor %vm9308, %vm9309
        %v9311 = vsel %vm9310, %v9302, %v9307
        %v9312 = vrsqrt.pop %v8509
        %v9313 = vmul.f32 %v9312, %v8509
        %v9314 = vmul.f32 %v9313, %v9312
        %v9315 = vmul.f32 0.5, %v9314
        %v9316 = vsub.f32 1.5, %v9315
        %v9317 = vmul.f32 %v9312, %v9316
        %vm9318 = vweird.f32 %v8509
        %vm9319 = vweird.f32 %v9312
        %vm9320 = vmor %vm9318, %vm9319
        %v9321 = vsel %vm9320, %v9312, %v9317
        %v9322 = vrsqrt.pop %v8510
        %v9323 = vmul.f32 %v9322, %v8510
        %v9324 = vmul.f32 %v9323, %v9322
        %v9325 = vmul.f32 0.5, %v9324
        %v9326 = vsub.f32 1.5, %v9325
        %v9327 = vmul.f32 %v9322, %v9326
        %vm9328 = vweird.f32 %v8510
        %vm9329 = vweird.f32 %v9322
        %vm9330 = vmor %vm9328, %vm9329
        %v9331 = vsel %vm9330, %v9322, %v9327
        %v9332 = vrsqrt.pop %v8511
        %v9333 = vmul.f32 %v9332, %v8511
        %v9334 = vmul.f32 %v9333, %v9332
        %v9335 = vmul.f32 0.5, %v9334
        %v9336 = vsub.f32 1.5, %v9335
        %v9337 = vmul.f32 %v9332, %v9336
        %vm9338 = vweird.f32 %v8511
        %vm9339 = vweird.f32 %v9332
        %vm9340 = vmor %vm9338, %vm9339
        %v9341 = vsel %vm9340, %v9332, %v9337
        %v9342 = vrsqrt.pop %v8512
        %v9343 = vmul.f32 %v9342, %v8512
        %v9344 = vmul.f32 %v9343, %v9342
        %v9345 = vmul.f32 0.5, %v9344
        %v9346 = vsub.f32 1.5, %v9345
        %v9347 = vmul.f32 %v9342, %v9346
        %vm9348 = vweird.f32 %v8512
        %vm9349 = vweird.f32 %v9342
        %vm9350 = vmor %vm9348, %vm9349
        %v9351 = vsel %vm9350, %v9342, %v9347
        %v9352 = vrsqrt.pop %v8513
        %v9353 = vmul.f32 %v9352, %v8513
        %v9354 = vmul.f32 %v9353, %v9352
        %v9355 = vmul.f32 0.5, %v9354
        %v9356 = vsub.f32 1.5, %v9355
        %v9357 = vmul.f32 %v9352, %v9356
        %vm9358 = vweird.f32 %v8513
        %vm9359 = vweird.f32 %v9352
        %vm9360 = vmor %vm9358, %vm9359
        %v9361 = vsel %vm9360, %v9352, %v9357
        %v9362 = vrsqrt.pop %v8514
        %v9363 = vmul.f32 %v9362, %v8514
        %v9364 = vmul.f32 %v9363, %v9362
        %v9365 = vmul.f32 0.5, %v9364
        %v9366 = vsub.f32 1.5, %v9365
        %v9367 = vmul.f32 %v9362, %v9366
        %vm9368 = vweird.f32 %v8514
        %vm9369 = vweird.f32 %v9362
        %vm9370 = vmor %vm9368, %vm9369
        %v9371 = vsel %vm9370, %v9362, %v9367
        %v9372 = vrsqrt.pop %v8515
        %v9373 = vmul.f32 %v9372, %v8515
        %v9374 = vmul.f32 %v9373, %v9372
        %v9375 = vmul.f32 0.5, %v9374
        %v9376 = vsub.f32 1.5, %v9375
        %v9377 = vmul.f32 %v9372, %v9376
        %vm9378 = vweird.f32 %v8515
        %vm9379 = vweird.f32 %v9372
        %vm9380 = vmor %vm9378, %vm9379
        %v9381 = vsel %vm9380, %v9372, %v9377
        %v9382 = vrsqrt.pop %v8516
        %v9383 = vmul.f32 %v9382, %v8516
        %v9384 = vmul.f32 %v9383, %v9382
        %v9385 = vmul.f32 0.5, %v9384
        %v9386 = vsub.f32 1.5, %v9385
        %v9387 = vmul.f32 %v9382, %v9386
        %vm9388 = vweird.f32 %v8516
        %vm9389 = vweird.f32 %v9382
        %vm9390 = vmor %vm9388, %vm9389
        %v9391 = vsel %vm9390, %v9382, %v9387
        %v9392 = vrsqrt.pop %v8517
        %v9393 = vmul.f32 %v9392, %v8517
        %v9394 = vmul.f32 %v9393, %v9392
        %v9395 = vmul.f32 0.5, %v9394
        %v9396 = vsub.f32 1.5, %v9395
        %v9397 = vmul.f32 %v9392, %v9396
        %vm9398 = vweird.f32 %v8517
        %vm9399 = vweird.f32 %v9392
        %vm9400 = vmor %vm9398, %vm9399
        %v9401 = vsel %vm9400, %v9392, %v9397
        %v9402 = vrsqrt.pop %v8518
        %v9403 = vmul.f32 %v9402, %v8518
        %v9404 = vmul.f32 %v9403, %v9402
        %v9405 = vmul.f32 0.5, %v9404
        %v9406 = vsub.f32 1.5, %v9405
        %v9407 = vmul.f32 %v9402, %v9406
        %vm9408 = vweird.f32 %v8518
        %vm9409 = vweird.f32 %v9402
        %vm9410 = vmor %vm9408, %vm9409
        %v9411 = vsel %vm9410, %v9402, %v9407
        %v9412 = vrsqrt.pop %v8519
        %v9413 = vmul.f32 %v9412, %v8519
        %v9414 = vmul.f32 %v9413, %v9412
        %v9415 = vmul.f32 0.5, %v9414
        %v9416 = vsub.f32 1.5, %v9415
        %v9417 = vmul.f32 %v9412, %v9416
        %vm9418 = vweird.f32 %v8519
        %vm9419 = vweird.f32 %v9412
        %vm9420 = vmor %vm9418, %vm9419
        %v9421 = vsel %vm9420, %v9412, %v9417
        %v9422 = vrsqrt.pop %v8520
        %v9423 = vmul.f32 %v9422, %v8520
        %v9424 = vmul.f32 %v9423, %v9422
        %v9425 = vmul.f32 0.5, %v9424
        %v9426 = vsub.f32 1.5, %v9425
        %v9427 = vmul.f32 %v9422, %v9426
        %vm9428 = vweird.f32 %v8520
        %vm9429 = vweird.f32 %v9422
        %vm9430 = vmor %vm9428, %vm9429
        %v9431 = vsel %vm9430, %v9422, %v9427
        %v9432 = vrsqrt.pop %v8521
        %v9433 = vmul.f32 %v9432, %v8521
        %v9434 = vmul.f32 %v9433, %v9432
        %v9435 = vmul.f32 0.5, %v9434
        %v9436 = vsub.f32 1.5, %v9435
        %v9437 = vmul.f32 %v9432, %v9436
        %vm9438 = vweird.f32 %v8521
        %vm9439 = vweird.f32 %v9432
        %vm9440 = vmor %vm9438, %vm9439
        %v9441 = vsel %vm9440, %v9432, %v9437
        %v9442 = vrsqrt.pop %v8522
        %v9443 = vmul.f32 %v9442, %v8522
        %v9444 = vmul.f32 %v9443, %v9442
        %v9445 = vmul.f32 0.5, %v9444
        %v9446 = vsub.f32 1.5, %v9445
        %v9447 = vmul.f32 %v9442, %v9446
        %vm9448 = vweird.f32 %v8522
        %vm9449 = vweird.f32 %v9442
        %vm9450 = vmor %vm9448, %vm9449
        %v9451 = vsel %vm9450, %v9442, %v9447
        %v9452 = vrsqrt.pop %v8523
        %v9453 = vmul.f32 %v9452, %v8523
        %v9454 = vmul.f32 %v9453, %v9452
        %v9455 = vmul.f32 0.5, %v9454
        %v9456 = vsub.f32 1.5, %v9455
        %v9457 = vmul.f32 %v9452, %v9456
        %vm9458 = vweird.f32 %v8523
        %vm9459 = vweird.f32 %v9452
        %vm9460 = vmor %vm9458, %vm9459
        %v9461 = vsel %vm9460, %v9452, %v9457
        %v9462 = vrsqrt.pop %v8524
        %v9463 = vmul.f32 %v9462, %v8524
        %v9464 = vmul.f32 %v9463, %v9462
        %v9465 = vmul.f32 0.5, %v9464
        %v9466 = vsub.f32 1.5, %v9465
        %v9467 = vmul.f32 %v9462, %v9466
        %vm9468 = vweird.f32 %v8524
        %vm9469 = vweird.f32 %v9462
        %vm9470 = vmor %vm9468, %vm9469
        %v9471 = vsel %vm9470, %v9462, %v9467
        %v9472 = vrsqrt.pop %v8525
        %v9473 = vmul.f32 %v9472, %v8525
        %v9474 = vmul.f32 %v9473, %v9472
        %v9475 = vmul.f32 0.5, %v9474
        %v9476 = vsub.f32 1.5, %v9475
        %v9477 = vmul.f32 %v9472, %v9476
        %vm9478 = vweird.f32 %v8525
        %vm9479 = vweird.f32 %v9472
        %vm9480 = vmor %vm9478, %vm9479
        %v9481 = vsel %vm9480, %v9472, %v9477
        %v9482 = vrsqrt.pop %v8526
        %v9483 = vmul.f32 %v9482, %v8526
        %v9484 = vmul.f32 %v9483, %v9482
        %v9485 = vmul.f32 0.5, %v9484
        %v9486 = vsub.f32 1.5, %v9485
        %v9487 = vmul.f32 %v9482, %v9486
        %vm9488 = vweird.f32 %v8526
        %vm9489 = vweird.f32 %v9482
        %vm9490 = vmor %vm9488, %vm9489
        %v9491 = vsel %vm9490, %v9482, %v9487
        %v9492 = vrsqrt.pop %v8527
        %v9493 = vmul.f32 %v9492, %v8527
        %v9494 = vmul.f32 %v9493, %v9492
        %v9495 = vmul.f32 0.5, %v9494
        %v9496 = vsub.f32 1.5, %v9495
        %v9497 = vmul.f32 %v9492, %v9496
        %vm9498 = vweird.f32 %v8527
        %vm9499 = vweird.f32 %v9492
        %vm9500 = vmor %vm9498, %vm9499
        %v9501 = vsel %vm9500, %v9492, %v9497
        %v9502 = vrsqrt.pop %v8528
        %v9503 = vmul.f32 %v9502, %v8528
        %v9504 = vmul.f32 %v9503, %v9502
        %v9505 = vmul.f32 0.5, %v9504
        %v9506 = vsub.f32 1.5, %v9505
        %v9507 = vmul.f32 %v9502, %v9506
        %vm9508 = vweird.f32 %v8528
        %vm9509 = vweird.f32 %v9502
        %vm9510 = vmor %vm9508, %vm9509
        %v9511 = vsel %vm9510, %v9502, %v9507
        %v9512 = vrsqrt.pop %v8529
        %v9513 = vmul.f32 %v9512, %v8529
        %v9514 = vmul.f32 %v9513, %v9512
        %v9515 = vmul.f32 0.5, %v9514
        %v9516 = vsub.f32 1.5, %v9515
        %v9517 = vmul.f32 %v9512, %v9516
        %vm9518 = vweird.f32 %v8529
        %vm9519 = vweird.f32 %v9512
        %vm9520 = vmor %vm9518, %vm9519
        %v9521 = vsel %vm9520, %v9512, %v9517
        %v9522 = vrsqrt.pop %v8530
        %v9523 = vmul.f32 %v9522, %v8530
        %v9524 = vmul.f32 %v9523, %v9522
        %v9525 = vmul.f32 0.5, %v9524
        %v9526 = vsub.f32 1.5, %v9525
        %v9527 = vmul.f32 %v9522, %v9526
        %vm9528 = vweird.f32 %v8530
        %vm9529 = vweird.f32 %v9522
        %vm9530 = vmor %vm9528, %vm9529
        %v9531 = vsel %vm9530, %v9522, %v9527
        %v9532 = vrsqrt.pop %v8531
        %v9533 = vmul.f32 %v9532, %v8531
        %v9534 = vmul.f32 %v9533, %v9532
        %v9535 = vmul.f32 0.5, %v9534
        %v9536 = vsub.f32 1.5, %v9535
        %v9537 = vmul.f32 %v9532, %v9536
        %vm9538 = vweird.f32 %v8531
        %vm9539 = vweird.f32 %v9532
        %vm9540 = vmor %vm9538, %vm9539
        %v9541 = vsel %vm9540, %v9532, %v9537
        %v9542 = vrsqrt.pop %v8532
        %v9543 = vmul.f32 %v9542, %v8532
        %v9544 = vmul.f32 %v9543, %v9542
        %v9545 = vmul.f32 0.5, %v9544
        %v9546 = vsub.f32 1.5, %v9545
        %v9547 = vmul.f32 %v9542, %v9546
        %vm9548 = vweird.f32 %v8532
        %vm9549 = vweird.f32 %v9542
        %vm9550 = vmor %vm9548, %vm9549
        %v9551 = vsel %vm9550, %v9542, %v9547
        %v9552 = vrsqrt.pop %v8533
        %v9553 = vmul.f32 %v9552, %v8533
        %v9554 = vmul.f32 %v9553, %v9552
        %v9555 = vmul.f32 0.5, %v9554
        %v9556 = vsub.f32 1.5, %v9555
        %v9557 = vmul.f32 %v9552, %v9556
        %vm9558 = vweird.f32 %v8533
        %vm9559 = vweird.f32 %v9552
        %vm9560 = vmor %vm9558, %vm9559
        %v9561 = vsel %vm9560, %v9552, %v9557
        %v9562 = vrsqrt.pop %v8534
        %v9563 = vmul.f32 %v9562, %v8534
        %v9564 = vmul.f32 %v9563, %v9562
        %v9565 = vmul.f32 0.5, %v9564
        %v9566 = vsub.f32 1.5, %v9565
        %v9567 = vmul.f32 %v9562, %v9566
        %vm9568 = vweird.f32 %v8534
        %vm9569 = vweird.f32 %v9562
        %vm9570 = vmor %vm9568, %vm9569
        %v9571 = vsel %vm9570, %v9562, %v9567
        %v9572 = vrsqrt.pop %v8535
        %v9573 = vmul.f32 %v9572, %v8535
        %v9574 = vmul.f32 %v9573, %v9572
        %v9575 = vmul.f32 0.5, %v9574
        %v9576 = vsub.f32 1.5, %v9575
        %v9577 = vmul.f32 %v9572, %v9576
        %vm9578 = vweird.f32 %v8535
        %vm9579 = vweird.f32 %v9572
        %vm9580 = vmor %vm9578, %vm9579
        %v9581 = vsel %vm9580, %v9572, %v9577
        %v9582 = vrsqrt.pop %v8536
        %v9583 = vmul.f32 %v9582, %v8536
        %v9584 = vmul.f32 %v9583, %v9582
        %v9585 = vmul.f32 0.5, %v9584
        %v9586 = vsub.f32 1.5, %v9585
        %v9587 = vmul.f32 %v9582, %v9586
        %vm9588 = vweird.f32 %v8536
        %vm9589 = vweird.f32 %v9582
        %vm9590 = vmor %vm9588, %vm9589
        %v9591 = vsel %vm9590, %v9582, %v9587
        %v9592 = vrsqrt.pop %v8537
        %v9593 = vmul.f32 %v9592, %v8537
        %v9594 = vmul.f32 %v9593, %v9592
        %v9595 = vmul.f32 0.5, %v9594
        %v9596 = vsub.f32 1.5, %v9595
        %v9597 = vmul.f32 %v9592, %v9596
        %vm9598 = vweird.f32 %v8537
        %vm9599 = vweird.f32 %v9592
        %vm9600 = vmor %vm9598, %vm9599
        %v9601 = vsel %vm9600, %v9592, %v9597
        %v9602 = vrsqrt.pop %v8538
        %v9603 = vmul.f32 %v9602, %v8538
        %v9604 = vmul.f32 %v9603, %v9602
        %v9605 = vmul.f32 0.5, %v9604
        %v9606 = vsub.f32 1.5, %v9605
        %v9607 = vmul.f32 %v9602, %v9606
        %vm9608 = vweird.f32 %v8538
        %vm9609 = vweird.f32 %v9602
        %vm9610 = vmor %vm9608, %vm9609
        %v9611 = vsel %vm9610, %v9602, %v9607
        %v9612 = vrsqrt.pop %v8539
        %v9613 = vmul.f32 %v9612, %v8539
        %v9614 = vmul.f32 %v9613, %v9612
        %v9615 = vmul.f32 0.5, %v9614
        %v9616 = vsub.f32 1.5, %v9615
        %v9617 = vmul.f32 %v9612, %v9616
        %vm9618 = vweird.f32 %v8539
        %vm9619 = vweird.f32 %v9612
        %vm9620 = vmor %vm9618, %vm9619
        %v9621 = vsel %vm9620, %v9612, %v9617
        %v9622 = vrsqrt.pop %v8540
        %v9623 = vmul.f32 %v9622, %v8540
        %v9624 = vmul.f32 %v9623, %v9622
        %v9625 = vmul.f32 0.5, %v9624
        %v9626 = vsub.f32 1.5, %v9625
        %v9627 = vmul.f32 %v9622, %v9626
        %vm9628 = vweird.f32 %v8540
        %vm9629 = vweird.f32 %v9622
        %vm9630 = vmor %vm9628, %vm9629
        %v9631 = vsel %vm9630, %v9622, %v9627
        %v9632 = vrsqrt.pop %v8541
        %v9633 = vmul.f32 %v9632, %v8541
        %v9634 = vmul.f32 %v9633, %v9632
        %v9635 = vmul.f32 0.5, %v9634
        %v9636 = vsub.f32 1.5, %v9635
        %v9637 = vmul.f32 %v9632, %v9636
        %vm9638 = vweird.f32 %v8541
        %vm9639 = vweird.f32 %v9632
        %vm9640 = vmor %vm9638, %vm9639
        %v9641 = vsel %vm9640, %v9632, %v9637
        %v9642 = vrsqrt.pop %v8542
        %v9643 = vmul.f32 %v9642, %v8542
        %v9644 = vmul.f32 %v9643, %v9642
        %v9645 = vmul.f32 0.5, %v9644
        %v9646 = vsub.f32 1.5, %v9645
        %v9647 = vmul.f32 %v9642, %v9646
        %vm9648 = vweird.f32 %v8542
        %vm9649 = vweird.f32 %v9642
        %vm9650 = vmor %vm9648, %vm9649
        %v9651 = vsel %vm9650, %v9642, %v9647
        %v9652 = vrsqrt.pop %v8543
        %v9653 = vmul.f32 %v9652, %v8543
        %v9654 = vmul.f32 %v9653, %v9652
        %v9655 = vmul.f32 0.5, %v9654
        %v9656 = vsub.f32 1.5, %v9655
        %v9657 = vmul.f32 %v9652, %v9656
        %vm9658 = vweird.f32 %v8543
        %vm9659 = vweird.f32 %v9652
        %vm9660 = vmor %vm9658, %vm9659
        %v9661 = vsel %vm9660, %v9652, %v9657
        %v9662 = vrsqrt.pop %v8544
        %v9663 = vmul.f32 %v9662, %v8544
        %v9664 = vmul.f32 %v9663, %v9662
        %v9665 = vmul.f32 0.5, %v9664
        %v9666 = vsub.f32 1.5, %v9665
        %v9667 = vmul.f32 %v9662, %v9666
        %vm9668 = vweird.f32 %v8544
        %vm9669 = vweird.f32 %v9662
        %vm9670 = vmor %vm9668, %vm9669
        %v9671 = vsel %vm9670, %v9662, %v9667
        %v9672 = vrsqrt.pop %v8545
        %v9673 = vmul.f32 %v9672, %v8545
        %v9674 = vmul.f32 %v9673, %v9672
        %v9675 = vmul.f32 0.5, %v9674
        %v9676 = vsub.f32 1.5, %v9675
        %v9677 = vmul.f32 %v9672, %v9676
        %vm9678 = vweird.f32 %v8545
        %vm9679 = vweird.f32 %v9672
        %vm9680 = vmor %vm9678, %vm9679
        %v9681 = vsel %vm9680, %v9672, %v9677
        %v9682 = vrsqrt.pop %v8546
        %v9683 = vmul.f32 %v9682, %v8546
        %v9684 = vmul.f32 %v9683, %v9682
        %v9685 = vmul.f32 0.5, %v9684
        %v9686 = vsub.f32 1.5, %v9685
        %v9687 = vmul.f32 %v9682, %v9686
        %vm9688 = vweird.f32 %v8546
        %vm9689 = vweird.f32 %v9682
        %vm9690 = vmor %vm9688, %vm9689
        %v9691 = vsel %vm9690, %v9682, %v9687
        %v9692 = vrsqrt.pop %v8547
        %v9693 = vmul.f32 %v9692, %v8547
        %v9694 = vmul.f32 %v9693, %v9692
        %v9695 = vmul.f32 0.5, %v9694
        %v9696 = vsub.f32 1.5, %v9695
        %v9697 = vmul.f32 %v9692, %v9696
        %vm9698 = vweird.f32 %v8547
        %vm9699 = vweird.f32 %v9692
        %vm9700 = vmor %vm9698, %vm9699
        %v9701 = vsel %vm9700, %v9692, %v9697
        %v9702 = vrsqrt.pop %v8548
        %v9703 = vmul.f32 %v9702, %v8548
        %v9704 = vmul.f32 %v9703, %v9702
        %v9705 = vmul.f32 0.5, %v9704
        %v9706 = vsub.f32 1.5, %v9705
        %v9707 = vmul.f32 %v9702, %v9706
        %vm9708 = vweird.f32 %v8548
        %vm9709 = vweird.f32 %v9702
        %vm9710 = vmor %vm9708, %vm9709
        %v9711 = vsel %vm9710, %v9702, %v9707
        %v9712 = vrsqrt.pop %v8549
        %v9713 = vmul.f32 %v9712, %v8549
        %v9714 = vmul.f32 %v9713, %v9712
        %v9715 = vmul.f32 0.5, %v9714
        %v9716 = vsub.f32 1.5, %v9715
        %v9717 = vmul.f32 %v9712, %v9716
        %vm9718 = vweird.f32 %v8549
        %vm9719 = vweird.f32 %v9712
        %vm9720 = vmor %vm9718, %vm9719
        %v9721 = vsel %vm9720, %v9712, %v9717
        %v9722 = vrsqrt.pop %v8550
        %v9723 = vmul.f32 %v9722, %v8550
        %v9724 = vmul.f32 %v9723, %v9722
        %v9725 = vmul.f32 0.5, %v9724
        %v9726 = vsub.f32 1.5, %v9725
        %v9727 = vmul.f32 %v9722, %v9726
        %vm9728 = vweird.f32 %v8550
        %vm9729 = vweird.f32 %v9722
        %vm9730 = vmor %vm9728, %vm9729
        %v9731 = vsel %vm9730, %v9722, %v9727
        %v9732 = vrsqrt.pop %v8551
        %v9733 = vmul.f32 %v9732, %v8551
        %v9734 = vmul.f32 %v9733, %v9732
        %v9735 = vmul.f32 0.5, %v9734
        %v9736 = vsub.f32 1.5, %v9735
        %v9737 = vmul.f32 %v9732, %v9736
        %vm9738 = vweird.f32 %v8551
        %vm9739 = vweird.f32 %v9732
        %vm9740 = vmor %vm9738, %vm9739
        %v9741 = vsel %vm9740, %v9732, %v9737
        %v9742 = vrsqrt.pop %v8552
        %v9743 = vmul.f32 %v9742, %v8552
        %v9744 = vmul.f32 %v9743, %v9742
        %v9745 = vmul.f32 0.5, %v9744
        %v9746 = vsub.f32 1.5, %v9745
        %v9747 = vmul.f32 %v9742, %v9746
        %vm9748 = vweird.f32 %v8552
        %vm9749 = vweird.f32 %v9742
        %vm9750 = vmor %vm9748, %vm9749
        %v9751 = vsel %vm9750, %v9742, %v9747
        %v9752 = vrsqrt.pop %v8553
        %v9753 = vmul.f32 %v9752, %v8553
        %v9754 = vmul.f32 %v9753, %v9752
        %v9755 = vmul.f32 0.5, %v9754
        %v9756 = vsub.f32 1.5, %v9755
        %v9757 = vmul.f32 %v9752, %v9756
        %vm9758 = vweird.f32 %v8553
        %vm9759 = vweird.f32 %v9752
        %vm9760 = vmor %vm9758, %vm9759
        %v9761 = vsel %vm9760, %v9752, %v9757
        %v9762 = vrsqrt.pop %v8554
        %v9763 = vmul.f32 %v9762, %v8554
        %v9764 = vmul.f32 %v9763, %v9762
        %v9765 = vmul.f32 0.5, %v9764
        %v9766 = vsub.f32 1.5, %v9765
        %v9767 = vmul.f32 %v9762, %v9766
        %vm9768 = vweird.f32 %v8554
        %vm9769 = vweird.f32 %v9762
        %vm9770 = vmor %vm9768, %vm9769
        %v9771 = vsel %vm9770, %v9762, %v9767
        %v9772 = vrsqrt.pop %v8555
        %v9773 = vmul.f32 %v9772, %v8555
        %v9774 = vmul.f32 %v9773, %v9772
        %v9775 = vmul.f32 0.5, %v9774
        %v9776 = vsub.f32 1.5, %v9775
        %v9777 = vmul.f32 %v9772, %v9776
        %vm9778 = vweird.f32 %v8555
        %vm9779 = vweird.f32 %v9772
        %vm9780 = vmor %vm9778, %vm9779
        %v9781 = vsel %vm9780, %v9772, %v9777
        %v9782 = vrsqrt.pop %v8556
        %v9783 = vmul.f32 %v9782, %v8556
        %v9784 = vmul.f32 %v9783, %v9782
        %v9785 = vmul.f32 0.5, %v9784
        %v9786 = vsub.f32 1.5, %v9785
        %v9787 = vmul.f32 %v9782, %v9786
        %vm9788 = vweird.f32 %v8556
        %vm9789 = vweird.f32 %v9782
        %vm9790 = vmor %vm9788, %vm9789
        %v9791 = vsel %vm9790, %v9782, %v9787
        %v9792 = vrsqrt.pop %v8557
        %v9793 = vmul.f32 %v9792, %v8557
        %v9794 = vmul.f32 %v9793, %v9792
        %v9795 = vmul.f32 0.5, %v9794
        %v9796 = vsub.f32 1.5, %v9795
        %v9797 = vmul.f32 %v9792, %v9796
        %vm9798 = vweird.f32 %v8557
        %vm9799 = vweird.f32 %v9792
        %vm9800 = vmor %vm9798, %vm9799
        %v9801 = vsel %vm9800, %v9792, %v9797
        %v9802 = vrsqrt.pop %v8558
        %v9803 = vmul.f32 %v9802, %v8558
        %v9804 = vmul.f32 %v9803, %v9802
        %v9805 = vmul.f32 0.5, %v9804
        %v9806 = vsub.f32 1.5, %v9805
        %v9807 = vmul.f32 %v9802, %v9806
        %vm9808 = vweird.f32 %v8558
        %vm9809 = vweird.f32 %v9802
        %vm9810 = vmor %vm9808, %vm9809
        %v9811 = vsel %vm9810, %v9802, %v9807
        %v9812 = vrsqrt.pop %v8559
        %v9813 = vmul.f32 %v9812, %v8559
        %v9814 = vmul.f32 %v9813, %v9812
        %v9815 = vmul.f32 0.5, %v9814
        %v9816 = vsub.f32 1.5, %v9815
        %v9817 = vmul.f32 %v9812, %v9816
        %vm9818 = vweird.f32 %v8559
        %vm9819 = vweird.f32 %v9812
        %vm9820 = vmor %vm9818, %vm9819
        %v9821 = vsel %vm9820, %v9812, %v9817
        %v9822 = vrsqrt.pop %v8560
        %v9823 = vmul.f32 %v9822, %v8560
        %v9824 = vmul.f32 %v9823, %v9822
        %v9825 = vmul.f32 0.5, %v9824
        %v9826 = vsub.f32 1.5, %v9825
        %v9827 = vmul.f32 %v9822, %v9826
        %vm9828 = vweird.f32 %v8560
        %vm9829 = vweird.f32 %v9822
        %vm9830 = vmor %vm9828, %vm9829
        %v9831 = vsel %vm9830, %v9822, %v9827
        %v9832 = vrsqrt.pop %v8561
        %v9833 = vmul.f32 %v9832, %v8561
        %v9834 = vmul.f32 %v9833, %v9832
        %v9835 = vmul.f32 0.5, %v9834
        %v9836 = vsub.f32 1.5, %v9835
        %v9837 = vmul.f32 %v9832, %v9836
        %vm9838 = vweird.f32 %v8561
        %vm9839 = vweird.f32 %v9832
        %vm9840 = vmor %vm9838, %vm9839
        %v9841 = vsel %vm9840, %v9832, %v9837
        %v9842 = vmul.f32 %v7666, %v8571
        %v9843 = vmul.f32 %v7667, %v8581
        %v9844 = vmul.f32 %v7668, %v8591
        %v9845 = vmul.f32 %v7669, %v8601
        %v9846 = vmul.f32 %v7670, %v8611
        %v9847 = vmul.f32 %v7671, %v8621
        %v9848 = vmul.f32 %v7672, %v8631
        %v9849 = vmul.f32 %v7673, %v8641
        %v9850 = vmul.f32 %v7674, %v8651
        %v9851 = vmul.f32 %v7675, %v8661
        %v9852 = vmul.f32 %v7676, %v8671
        %v9853 = vmul.f32 %v7677, %v8681
        %v9854 = vmul.f32 %v7678, %v8691
        %v9855 = vmul.f32 %v7679, %v8701
        %v9856 = vmul.f32 %v7680, %v8711
        %v9857 = vmul.f32 %v7681, %v8721
        %v9858 = vmul.f32 %v7682, %v8731
        %v9859 = vmul.f32 %v7683, %v8741
        %v9860 = vmul.f32 %v7684, %v8751
        %v9861 = vmul.f32 %v7685, %v8761
        %v9862 = vmul.f32 %v7686, %v8771
        %v9863 = vmul.f32 %v7687, %v8781
        %v9864 = vmul.f32 %v7688, %v8791
        %v9865 = vmul.f32 %v7689, %v8801
        %v9866 = vmul.f32 %v7690, %v8811
        %v9867 = vmul.f32 %v7691, %v8821
        %v9868 = vmul.f32 %v7692, %v8831
        %v9869 = vmul.f32 %v7693, %v8841
        %v9870 = vmul.f32 %v7694, %v8851
        %v9871 = vmul.f32 %v7695, %v8861
        %v9872 = vmul.f32 %v7696, %v8871
        %v9873 = vmul.f32 %v7697, %v8881
        %v9874 = vmul.f32 %v7698, %v8891
        %v9875 = vmul.f32 %v7699, %v8901
        %v9876 = vmul.f32 %v7700, %v8911
        %v9877 = vmul.f32 %v7701, %v8921
        %v9878 = vmul.f32 %v7702, %v8931
        %v9879 = vmul.f32 %v7703, %v8941
        %v9880 = vmul.f32 %v7704, %v8951
        %v9881 = vmul.f32 %v7705, %v8961
        %v9882 = vmul.f32 %v7706, %v8971
        %v9883 = vmul.f32 %v7707, %v8981
        %v9884 = vmul.f32 %v7708, %v8991
        %v9885 = vmul.f32 %v7709, %v9001
        %v9886 = vmul.f32 %v7710, %v9011
        %v9887 = vmul.f32 %v7711, %v9021
        %v9888 = vmul.f32 %v7712, %v9031
        %v9889 = vmul.f32 %v7713, %v9041
        %v9890 = vmul.f32 %v7714, %v9051
        %v9891 = vmul.f32 %v7715, %v9061
        %v9892 = vmul.f32 %v7716, %v9071
        %v9893 = vmul.f32 %v7717, %v9081
        %v9894 = vmul.f32 %v7718, %v9091
        %v9895 = vmul.f32 %v7719, %v9101
        %v9896 = vmul.f32 %v7720, %v9111
        %v9897 = vmul.f32 %v7721, %v9121
        %v9898 = vmul.f32 %v7722, %v9131
        %v9899 = vmul.f32 %v7723, %v9141
        %v9900 = vmul.f32 %v7724, %v9151
        %v9901 = vmul.f32 %v7725, %v9161
        %v9902 = vmul.f32 %v7726, %v9171
        %v9903 = vmul.f32 %v7727, %v9181
        %v9904 = vmul.f32 %v7728, %v9191
        %v9905 = vmul.f32 %v7729, %v9201
        %v9906 = vmul.f32 %v7730, %v9211
        %v9907 = vmul.f32 %v7731, %v9221
        %v9908 = vmul.f32 %v7732, %v9231
        %v9909 = vmul.f32 %v7733, %v9241
        %v9910 = vmul.f32 %v7734, %v9251
        %v9911 = vmul.f32 %v7735, %v9261
        %v9912 = vmul.f32 %v7736, %v9271
        %v9913 = vmul.f32 %v7737, %v9281
        %v9914 = vmul.f32 %v7738, %v9291
        %v9915 = vmul.f32 %v7739, %v9301
        %v9916 = vmul.f32 %v7740, %v9311
        %v9917 = vmul.f32 %v7741, %v9321
        %v9918 = vmul.f32 %v7742, %v9331
        %v9919 = vmul.f32 %v7743, %v9341
        %v9920 = vmul.f32 %v7744, %v9351
        %v9921 = vmul.f32 %v7745, %v9361
        %v9922 = vmul.f32 %v7746, %v9371
        %v9923 = vmul.f32 %v7747, %v9381
        %v9924 = vmul.f32 %v7748, %v9391
        %v9925 = vmul.f32 %v7749, %v9401
        %v9926 = vmul.f32 %v7750, %v9411
        %v9927 = vmul.f32 %v7751, %v9421
        %v9928 = vmul.f32 %v7752, %v9431
        %v9929 = vmul.f32 %v7753, %v9441
        %v9930 = vmul.f32 %v7754, %v9451
        %v9931 = vmul.f32 %v7755, %v9461
        %v9932 = vmul.f32 %v7756, %v9471
        %v9933 = vmul.f32 %v7757, %v9481
        %v9934 = vmul.f32 %v7758, %v9491
        %v9935 = vmul.f32 %v7759, %v9501
        %v9936 = vmul.f32 %v7760, %v9511
        %v9937 = vmul.f32 %v7761, %v9521
        %v9938 = vmul.f32 %v7762, %v9531
        %v9939 = vmul.f32 %v7763, %v9541
        %v9940 = vmul.f32 %v7764, %v9551
        %v9941 = vmul.f32 %v7765, %v9561
        %v9942 = vmul.f32 %v7766, %v9571
        %v9943 = vmul.f32 %v7767, %v9581
        %v9944 = vmul.f32 %v7768, %v9591
        %v9945 = vmul.f32 %v7769, %v9601
        %v9946 = vmul.f32 %v7770, %v9611
        %v9947 = vmul.f32 %v7771, %v9621
        %v9948 = vmul.f32 %v7772, %v9631
        %v9949 = vmul.f32 %v7773, %v9641
        %v9950 = vmul.f32 %v7774, %v9651
        %v9951 = vmul.f32 %v7775, %v9661
        %v9952 = vmul.f32 %v7776, %v9671
        %v9953 = vmul.f32 %v7777, %v9681
        %v9954 = vmul.f32 %v7778, %v9691
        %v9955 = vmul.f32 %v7779, %v9701
        %v9956 = vmul.f32 %v7780, %v9711
        %v9957 = vmul.f32 %v7781, %v9721
        %v9958 = vmul.f32 %v7782, %v9731
        %v9959 = vmul.f32 %v7783, %v9741
        %v9960 = vmul.f32 %v7784, %v9751
        %v9961 = vmul.f32 %v7785, %v9761
        %v9962 = vmul.f32 %v7786, %v9771
        %v9963 = vmul.f32 %v7787, %v9781
        %v9964 = vmul.f32 %v7788, %v9791
        %v9965 = vmul.f32 %v7789, %v9801
        %v9966 = vmul.f32 %v7790, %v9811
        %v9967 = vmul.f32 %v7791, %v9821
        %v9968 = vmul.f32 %v7792, %v9831
        %v9969 = vmul.f32 %v7793, %v9841
        %v9970 = vld [vmem:[%s2] sm:$0x1]
        %v9972 = vperm.slane %v9970, 0
        %v9974 = vmul.f32 %v9842, %v9972
        %v9975 = vmul.f32 %v9843, %v9972
        %v9976 = vmul.f32 %v9844, %v9972
        %v9977 = vmul.f32 %v9845, %v9972
        %v9978 = vmul.f32 %v9846, %v9972
        %v9979 = vmul.f32 %v9847, %v9972
        %v9980 = vmul.f32 %v9848, %v9972
        %v9981 = vmul.f32 %v9849, %v9972
        %v9982 = vmul.f32 %v9850, %v9972
        %v9983 = vmul.f32 %v9851, %v9972
        %v9984 = vmul.f32 %v9852, %v9972
        %v9985 = vmul.f32 %v9853, %v9972
        %v9986 = vmul.f32 %v9854, %v9972
        %v9987 = vmul.f32 %v9855, %v9972
        %v9988 = vmul.f32 %v9856, %v9972
        %v9989 = vmul.f32 %v9857, %v9972
        %v9990 = vmul.f32 %v9858, %v9972
        %v9991 = vmul.f32 %v9859, %v9972
        %v9992 = vmul.f32 %v9860, %v9972
        %v9993 = vmul.f32 %v9861, %v9972
        %v9994 = vmul.f32 %v9862, %v9972
        %v9995 = vmul.f32 %v9863, %v9972
        %v9996 = vmul.f32 %v9864, %v9972
        %v9997 = vmul.f32 %v9865, %v9972
        %v9998 = vmul.f32 %v9866, %v9972
        %v9999 = vmul.f32 %v9867, %v9972
        %v10000 = vmul.f32 %v9868, %v9972
        %v10001 = vmul.f32 %v9869, %v9972
        %v10002 = vmul.f32 %v9870, %v9972
        %v10003 = vmul.f32 %v9871, %v9972
        %v10004 = vmul.f32 %v9872, %v9972
        %v10005 = vmul.f32 %v9873, %v9972
        %v10006 = vmul.f32 %v9874, %v9972
        %v10007 = vmul.f32 %v9875, %v9972
        %v10008 = vmul.f32 %v9876, %v9972
        %v10009 = vmul.f32 %v9877, %v9972
        %v10010 = vmul.f32 %v9878, %v9972
        %v10011 = vmul.f32 %v9879, %v9972
        %v10012 = vmul.f32 %v9880, %v9972
        %v10013 = vmul.f32 %v9881, %v9972
        %v10014 = vmul.f32 %v9882, %v9972
        %v10015 = vmul.f32 %v9883, %v9972
        %v10016 = vmul.f32 %v9884, %v9972
        %v10017 = vmul.f32 %v9885, %v9972
        %v10018 = vmul.f32 %v9886, %v9972
        %v10019 = vmul.f32 %v9887, %v9972
        %v10020 = vmul.f32 %v9888, %v9972
        %v10021 = vmul.f32 %v9889, %v9972
        %v10022 = vmul.f32 %v9890, %v9972
        %v10023 = vmul.f32 %v9891, %v9972
        %v10024 = vmul.f32 %v9892, %v9972
        %v10025 = vmul.f32 %v9893, %v9972
        %v10026 = vmul.f32 %v9894, %v9972
        %v10027 = vmul.f32 %v9895, %v9972
        %v10028 = vmul.f32 %v9896, %v9972
        %v10029 = vmul.f32 %v9897, %v9972
        %v10030 = vmul.f32 %v9898, %v9972
        %v10031 = vmul.f32 %v9899, %v9972
        %v10032 = vmul.f32 %v9900, %v9972
        %v10033 = vmul.f32 %v9901, %v9972
        %v10034 = vmul.f32 %v9902, %v9972
        %v10035 = vmul.f32 %v9903, %v9972
        %v10036 = vmul.f32 %v9904, %v9972
        %v10037 = vmul.f32 %v9905, %v9972
        %v10038 = vmul.f32 %v9906, %v9972
        %v10039 = vmul.f32 %v9907, %v9972
        %v10040 = vmul.f32 %v9908, %v9972
        %v10041 = vmul.f32 %v9909, %v9972
        %v10042 = vmul.f32 %v9910, %v9972
        %v10043 = vmul.f32 %v9911, %v9972
        %v10044 = vmul.f32 %v9912, %v9972
        %v10045 = vmul.f32 %v9913, %v9972
        %v10046 = vmul.f32 %v9914, %v9972
        %v10047 = vmul.f32 %v9915, %v9972
        %v10048 = vmul.f32 %v9916, %v9972
        %v10049 = vmul.f32 %v9917, %v9972
        %v10050 = vmul.f32 %v9918, %v9972
        %v10051 = vmul.f32 %v9919, %v9972
        %v10052 = vmul.f32 %v9920, %v9972
        %v10053 = vmul.f32 %v9921, %v9972
        %v10054 = vmul.f32 %v9922, %v9972
        %v10055 = vmul.f32 %v9923, %v9972
        %v10056 = vmul.f32 %v9924, %v9972
        %v10057 = vmul.f32 %v9925, %v9972
        %v10058 = vmul.f32 %v9926, %v9972
        %v10059 = vmul.f32 %v9927, %v9972
        %v10060 = vmul.f32 %v9928, %v9972
        %v10061 = vmul.f32 %v9929, %v9972
        %v10062 = vmul.f32 %v9930, %v9972
        %v10063 = vmul.f32 %v9931, %v9972
        %v10064 = vmul.f32 %v9932, %v9972
        %v10065 = vmul.f32 %v9933, %v9972
        %v10066 = vmul.f32 %v9934, %v9972
        %v10067 = vmul.f32 %v9935, %v9972
        %v10068 = vmul.f32 %v9936, %v9972
        %v10069 = vmul.f32 %v9937, %v9972
        %v10070 = vmul.f32 %v9938, %v9972
        %v10071 = vmul.f32 %v9939, %v9972
        %v10072 = vmul.f32 %v9940, %v9972
        %v10073 = vmul.f32 %v9941, %v9972
        %v10074 = vmul.f32 %v9942, %v9972
        %v10075 = vmul.f32 %v9943, %v9972
        %v10076 = vmul.f32 %v9944, %v9972
        %v10077 = vmul.f32 %v9945, %v9972
        %v10078 = vmul.f32 %v9946, %v9972
        %v10079 = vmul.f32 %v9947, %v9972
        %v10080 = vmul.f32 %v9948, %v9972
        %v10081 = vmul.f32 %v9949, %v9972
        %v10082 = vmul.f32 %v9950, %v9972
        %v10083 = vmul.f32 %v9951, %v9972
        %v10084 = vmul.f32 %v9952, %v9972
        %v10085 = vmul.f32 %v9953, %v9972
        %v10086 = vmul.f32 %v9954, %v9972
        %v10087 = vmul.f32 %v9955, %v9972
        %v10088 = vmul.f32 %v9956, %v9972
        %v10089 = vmul.f32 %v9957, %v9972
        %v10090 = vmul.f32 %v9958, %v9972
        %v10091 = vmul.f32 %v9959, %v9972
        %v10092 = vmul.f32 %v9960, %v9972
        %v10093 = vmul.f32 %v9961, %v9972
        %v10094 = vmul.f32 %v9962, %v9972
        %v10095 = vmul.f32 %v9963, %v9972
        %v10096 = vmul.f32 %v9964, %v9972
        %v10097 = vmul.f32 %v9965, %v9972
        %v10098 = vmul.f32 %v9966, %v9972
        %v10099 = vmul.f32 %v9967, %v9972
        %v10100 = vmul.f32 %v9968, %v9972
        %v10101 = vmul.f32 %v9969, %v9972
        %v10102 = vld [vmem:[%s3] sm:$0x1]
        %v10104 = vperm.slane %v10102, 0
        %v10106 = vadd.f32 %v9974, %v10104
        %v10107 = vadd.f32 %v9975, %v10104
        %v10108 = vadd.f32 %v9976, %v10104
        %v10109 = vadd.f32 %v9977, %v10104
        %v10110 = vadd.f32 %v9978, %v10104
        %v10111 = vadd.f32 %v9979, %v10104
        %v10112 = vadd.f32 %v9980, %v10104
        %v10113 = vadd.f32 %v9981, %v10104
        %v10114 = vadd.f32 %v9982, %v10104
        %v10115 = vadd.f32 %v9983, %v10104
        %v10116 = vadd.f32 %v9984, %v10104
        %v10117 = vadd.f32 %v9985, %v10104
        %v10118 = vadd.f32 %v9986, %v10104
        %v10119 = vadd.f32 %v9987, %v10104
        %v10120 = vadd.f32 %v9988, %v10104
        %v10121 = vadd.f32 %v9989, %v10104
        %v10122 = vadd.f32 %v9990, %v10104
        %v10123 = vadd.f32 %v9991, %v10104
        %v10124 = vadd.f32 %v9992, %v10104
        %v10125 = vadd.f32 %v9993, %v10104
        %v10126 = vadd.f32 %v9994, %v10104
        %v10127 = vadd.f32 %v9995, %v10104
        %v10128 = vadd.f32 %v9996, %v10104
        %v10129 = vadd.f32 %v9997, %v10104
        %v10130 = vadd.f32 %v9998, %v10104
        %v10131 = vadd.f32 %v9999, %v10104
        %v10132 = vadd.f32 %v10000, %v10104
        %v10133 = vadd.f32 %v10001, %v10104
        %v10134 = vadd.f32 %v10002, %v10104
        %v10135 = vadd.f32 %v10003, %v10104
        %v10136 = vadd.f32 %v10004, %v10104
        %v10137 = vadd.f32 %v10005, %v10104
        %v10138 = vadd.f32 %v10006, %v10104
        %v10139 = vadd.f32 %v10007, %v10104
        %v10140 = vadd.f32 %v10008, %v10104
        %v10141 = vadd.f32 %v10009, %v10104
        %v10142 = vadd.f32 %v10010, %v10104
        %v10143 = vadd.f32 %v10011, %v10104
        %v10144 = vadd.f32 %v10012, %v10104
        %v10145 = vadd.f32 %v10013, %v10104
        %v10146 = vadd.f32 %v10014, %v10104
        %v10147 = vadd.f32 %v10015, %v10104
        %v10148 = vadd.f32 %v10016, %v10104
        %v10149 = vadd.f32 %v10017, %v10104
        %v10150 = vadd.f32 %v10018, %v10104
        %v10151 = vadd.f32 %v10019, %v10104
        %v10152 = vadd.f32 %v10020, %v10104
        %v10153 = vadd.f32 %v10021, %v10104
        %v10154 = vadd.f32 %v10022, %v10104
        %v10155 = vadd.f32 %v10023, %v10104
        %v10156 = vadd.f32 %v10024, %v10104
        %v10157 = vadd.f32 %v10025, %v10104
        %v10158 = vadd.f32 %v10026, %v10104
        %v10159 = vadd.f32 %v10027, %v10104
        %v10160 = vadd.f32 %v10028, %v10104
        %v10161 = vadd.f32 %v10029, %v10104
        %v10162 = vadd.f32 %v10030, %v10104
        %v10163 = vadd.f32 %v10031, %v10104
        %v10164 = vadd.f32 %v10032, %v10104
        %v10165 = vadd.f32 %v10033, %v10104
        %v10166 = vadd.f32 %v10034, %v10104
        %v10167 = vadd.f32 %v10035, %v10104
        %v10168 = vadd.f32 %v10036, %v10104
        %v10169 = vadd.f32 %v10037, %v10104
        %v10170 = vadd.f32 %v10038, %v10104
        %v10171 = vadd.f32 %v10039, %v10104
        %v10172 = vadd.f32 %v10040, %v10104
        %v10173 = vadd.f32 %v10041, %v10104
        %v10174 = vadd.f32 %v10042, %v10104
        %v10175 = vadd.f32 %v10043, %v10104
        %v10176 = vadd.f32 %v10044, %v10104
        %v10177 = vadd.f32 %v10045, %v10104
        %v10178 = vadd.f32 %v10046, %v10104
        %v10179 = vadd.f32 %v10047, %v10104
        %v10180 = vadd.f32 %v10048, %v10104
        %v10181 = vadd.f32 %v10049, %v10104
        %v10182 = vadd.f32 %v10050, %v10104
        %v10183 = vadd.f32 %v10051, %v10104
        %v10184 = vadd.f32 %v10052, %v10104
        %v10185 = vadd.f32 %v10053, %v10104
        %v10186 = vadd.f32 %v10054, %v10104
        %v10187 = vadd.f32 %v10055, %v10104
        %v10188 = vadd.f32 %v10056, %v10104
        %v10189 = vadd.f32 %v10057, %v10104
        %v10190 = vadd.f32 %v10058, %v10104
        %v10191 = vadd.f32 %v10059, %v10104
        %v10192 = vadd.f32 %v10060, %v10104
        %v10193 = vadd.f32 %v10061, %v10104
        %v10194 = vadd.f32 %v10062, %v10104
        %v10195 = vadd.f32 %v10063, %v10104
        %v10196 = vadd.f32 %v10064, %v10104
        %v10197 = vadd.f32 %v10065, %v10104
        %v10198 = vadd.f32 %v10066, %v10104
        %v10199 = vadd.f32 %v10067, %v10104
        %v10200 = vadd.f32 %v10068, %v10104
        %v10201 = vadd.f32 %v10069, %v10104
        %v10202 = vadd.f32 %v10070, %v10104
        %v10203 = vadd.f32 %v10071, %v10104
        %v10204 = vadd.f32 %v10072, %v10104
        %v10205 = vadd.f32 %v10073, %v10104
        %v10206 = vadd.f32 %v10074, %v10104
        %v10207 = vadd.f32 %v10075, %v10104
        %v10208 = vadd.f32 %v10076, %v10104
        %v10209 = vadd.f32 %v10077, %v10104
        %v10210 = vadd.f32 %v10078, %v10104
        %v10211 = vadd.f32 %v10079, %v10104
        %v10212 = vadd.f32 %v10080, %v10104
        %v10213 = vadd.f32 %v10081, %v10104
        %v10214 = vadd.f32 %v10082, %v10104
        %v10215 = vadd.f32 %v10083, %v10104
        %v10216 = vadd.f32 %v10084, %v10104
        %v10217 = vadd.f32 %v10085, %v10104
        %v10218 = vadd.f32 %v10086, %v10104
        %v10219 = vadd.f32 %v10087, %v10104
        %v10220 = vadd.f32 %v10088, %v10104
        %v10221 = vadd.f32 %v10089, %v10104
        %v10222 = vadd.f32 %v10090, %v10104
        %v10223 = vadd.f32 %v10091, %v10104
        %v10224 = vadd.f32 %v10092, %v10104
        %v10225 = vadd.f32 %v10093, %v10104
        %v10226 = vadd.f32 %v10094, %v10104
        %v10227 = vadd.f32 %v10095, %v10104
        %v10228 = vadd.f32 %v10096, %v10104
        %v10229 = vadd.f32 %v10097, %v10104
        %v10230 = vadd.f32 %v10098, %v10104
        %v10231 = vadd.f32 %v10099, %v10104
        %v10232 = vadd.f32 %v10100, %v10104
        %v10233 = vadd.f32 %v10101, %v10104
        %v10234 = vpack.c.bf16 %v10107, %v10106
        %v10235 = vpack.c.bf16 %v10109, %v10108
        %v10236 = vpack.c.bf16 %v10111, %v10110
        %v10237 = vpack.c.bf16 %v10113, %v10112
        %v10238 = vpack.c.bf16 %v10115, %v10114
        %v10239 = vpack.c.bf16 %v10117, %v10116
        %v10240 = vpack.c.bf16 %v10119, %v10118
        %v10241 = vpack.c.bf16 %v10121, %v10120
        %v10242 = vpack.c.bf16 %v10123, %v10122
        %v10243 = vpack.c.bf16 %v10125, %v10124
        %v10244 = vpack.c.bf16 %v10127, %v10126
        %v10245 = vpack.c.bf16 %v10129, %v10128
        %v10246 = vpack.c.bf16 %v10131, %v10130
        %v10247 = vpack.c.bf16 %v10133, %v10132
        %v10248 = vpack.c.bf16 %v10135, %v10134
        %v10249 = vpack.c.bf16 %v10137, %v10136
        %v10250 = vpack.c.bf16 %v10139, %v10138
        %v10251 = vpack.c.bf16 %v10141, %v10140
        %v10252 = vpack.c.bf16 %v10143, %v10142
        %v10253 = vpack.c.bf16 %v10145, %v10144
        %v10254 = vpack.c.bf16 %v10147, %v10146
        %v10255 = vpack.c.bf16 %v10149, %v10148
        %v10256 = vpack.c.bf16 %v10151, %v10150
        %v10257 = vpack.c.bf16 %v10153, %v10152
        %v10258 = vpack.c.bf16 %v10155, %v10154
        %v10259 = vpack.c.bf16 %v10157, %v10156
        %v10260 = vpack.c.bf16 %v10159, %v10158
        %v10261 = vpack.c.bf16 %v10161, %v10160
        %v10262 = vpack.c.bf16 %v10163, %v10162
        %v10263 = vpack.c.bf16 %v10165, %v10164
        %v10264 = vpack.c.bf16 %v10167, %v10166
        %v10265 = vpack.c.bf16 %v10169, %v10168
        %v10266 = vpack.c.bf16 %v10171, %v10170
        %v10267 = vpack.c.bf16 %v10173, %v10172
        %v10268 = vpack.c.bf16 %v10175, %v10174
        %v10269 = vpack.c.bf16 %v10177, %v10176
        %v10270 = vpack.c.bf16 %v10179, %v10178
        %v10271 = vpack.c.bf16 %v10181, %v10180
        %v10272 = vpack.c.bf16 %v10183, %v10182
        %v10273 = vpack.c.bf16 %v10185, %v10184
        %v10274 = vpack.c.bf16 %v10187, %v10186
        %v10275 = vpack.c.bf16 %v10189, %v10188
        %v10276 = vpack.c.bf16 %v10191, %v10190
        %v10277 = vpack.c.bf16 %v10193, %v10192
        %v10278 = vpack.c.bf16 %v10195, %v10194
        %v10279 = vpack.c.bf16 %v10197, %v10196
        %v10280 = vpack.c.bf16 %v10199, %v10198
        %v10281 = vpack.c.bf16 %v10201, %v10200
        %v10282 = vpack.c.bf16 %v10203, %v10202
        %v10283 = vpack.c.bf16 %v10205, %v10204
        %v10284 = vpack.c.bf16 %v10207, %v10206
        %v10285 = vpack.c.bf16 %v10209, %v10208
        %v10286 = vpack.c.bf16 %v10211, %v10210
        %v10287 = vpack.c.bf16 %v10213, %v10212
        %v10288 = vpack.c.bf16 %v10215, %v10214
        %v10289 = vpack.c.bf16 %v10217, %v10216
        %v10290 = vpack.c.bf16 %v10219, %v10218
        %v10291 = vpack.c.bf16 %v10221, %v10220
        %v10292 = vpack.c.bf16 %v10223, %v10222
        %v10293 = vpack.c.bf16 %v10225, %v10224
        %v10294 = vpack.c.bf16 %v10227, %v10226
        %v10295 = vpack.c.bf16 %v10229, %v10228
        %v10296 = vpack.c.bf16 %v10231, %v10230
        %v10297 = vpack.c.bf16 %v10233, %v10232
        %v10298 = vld [vmem:[%s4] sm:$0xf]
        %v10299 = vld [vmem:[%s4 + $0x4] sm:$0xf]
        %v10300 = vld [vmem:[%s4 + $0x8] sm:$0xf]
        %v10301 = vld [vmem:[%s4 + $0xc] sm:$0xf]
        %v10306 = vunpack.c.l.b16 %v10298
        %v10307 = vunpack.c.l.b16 %v10299
        %v10308 = vunpack.c.l.b16 %v10300
        %v10309 = vunpack.c.l.b16 %v10301
        %v10310 = vpack.c.b16 %v10307, %v10306
        %v10311 = vpack.c.b16 %v10309, %v10308
        %v10315 = vsel %vm7146, %v10234, 0
        %v10318 = vsel %vm7146, %v10235, 0
        %v10321 = vsel %vm7146, %v10236, 0
        %v10324 = vsel %vm7146, %v10237, 0
        %v10327 = vsel %vm7146, %v10238, 0
        %v10330 = vsel %vm7146, %v10239, 0
        %v10333 = vsel %vm7146, %v10240, 0
        %v10336 = vsel %vm7146, %v10241, 0
        %v10339 = vsel %vm7146, %v10242, 0
        %v10342 = vsel %vm7146, %v10243, 0
        %v10345 = vsel %vm7146, %v10244, 0
        %v10348 = vsel %vm7146, %v10245, 0
        %v10351 = vsel %vm7146, %v10246, 0
        %v10354 = vsel %vm7146, %v10247, 0
        %v10357 = vsel %vm7146, %v10248, 0
        %v10360 = vsel %vm7146, %v10249, 0
        %v10363 = vsel %vm7146, %v10250, 0
        %v10366 = vsel %vm7146, %v10251, 0
        %v10369 = vsel %vm7146, %v10252, 0
        %v10372 = vsel %vm7146, %v10253, 0
        %v10375 = vsel %vm7146, %v10254, 0
        %v10378 = vsel %vm7146, %v10255, 0
        %v10381 = vsel %vm7146, %v10256, 0
        %v10384 = vsel %vm7146, %v10257, 0
        %v10387 = vsel %vm7146, %v10258, 0
        %v10390 = vsel %vm7146, %v10259, 0
        %v10393 = vsel %vm7146, %v10260, 0
        %v10396 = vsel %vm7146, %v10261, 0
        %v10399 = vsel %vm7146, %v10262, 0
        %v10402 = vsel %vm7146, %v10263, 0
        %v10405 = vsel %vm7146, %v10264, 0
        %v10408 = vsel %vm7146, %v10265, 0
        %v10411 = vsel %vm7146, %v10266, 0
        %v10414 = vsel %vm7146, %v10267, 0
        %v10417 = vsel %vm7146, %v10268, 0
        %v10420 = vsel %vm7146, %v10269, 0
        %v10423 = vsel %vm7146, %v10270, 0
        %v10426 = vsel %vm7146, %v10271, 0
        %v10429 = vsel %vm7146, %v10272, 0
        %v10432 = vsel %vm7146, %v10273, 0
        %v10435 = vsel %vm7146, %v10274, 0
        %v10438 = vsel %vm7146, %v10275, 0
        %v10441 = vsel %vm7146, %v10276, 0
        %v10444 = vsel %vm7146, %v10277, 0
        %v10447 = vsel %vm7146, %v10278, 0
        %v10450 = vsel %vm7146, %v10279, 0
        %v10453 = vsel %vm7146, %v10280, 0
        %v10456 = vsel %vm7146, %v10281, 0
        %v10459 = vsel %vm7146, %v10282, 0
        %v10462 = vsel %vm7146, %v10283, 0
        %v10465 = vsel %vm7146, %v10284, 0
        %v10468 = vsel %vm7146, %v10285, 0
        %v10471 = vsel %vm7146, %v10286, 0
        %v10474 = vsel %vm7146, %v10287, 0
        %v10477 = vsel %vm7146, %v10288, 0
        %v10480 = vsel %vm7146, %v10289, 0
        %v10483 = vsel %vm7146, %v10290, 0
        %v10486 = vsel %vm7146, %v10291, 0
        %v10489 = vsel %vm7146, %v10292, 0
        %v10492 = vsel %vm7146, %v10293, 0
        %v10495 = vsel %vm7146, %v10294, 0
        %v10498 = vsel %vm7146, %v10295, 0
        %v10501 = vsel %vm7146, %v10296, 0
        %v10504 = vsel %vm7146, %v10297, 0
        %10506 = vmatpush.bf16.msra.mxu0 0
        %10507 = vmatpush.bf16.msra.mxu0 0
        %10508 = vmatpush.bf16.msra.mxu0 0
        %10509 = vmatpush.bf16.msra.mxu0 0
        %10510 = vmatpush.bf16.msra.mxu0 0
        %10511 = vmatpush.bf16.msra.mxu0 0
        %10512 = vmatpush.bf16.msra.mxu0 %v10311
        %10513 = vmatpush.bf16.msra.mxu0 %v10310
        %10514 = vmatmul.bf16.gmra.mxu0 %v10315
        %v10515 = vpop.f32.mrf.mxu0
        %v10516 = vadd.f32 0.0, %v10515
        %v10517 = vpop.f32.mrf.mxu0
        %v10518 = vadd.f32 0.0, %v10517
        %10519 = vmatmul.bf16.gmra.mxu0 %v10318
        %v10520 = vpop.f32.mrf.mxu0
        %v10521 = vadd.f32 0.0, %v10520
        %v10522 = vpop.f32.mrf.mxu0
        %v10523 = vadd.f32 0.0, %v10522
        %10524 = vmatmul.bf16.gmra.mxu0 %v10321
        %v10525 = vpop.f32.mrf.mxu0
        %v10526 = vadd.f32 0.0, %v10525
        %v10527 = vpop.f32.mrf.mxu0
        %v10528 = vadd.f32 0.0, %v10527
        %10529 = vmatmul.bf16.gmra.mxu0 %v10324
        %v10530 = vpop.f32.mrf.mxu0
        %v10531 = vadd.f32 0.0, %v10530
        %v10532 = vpop.f32.mrf.mxu0
        %v10533 = vadd.f32 0.0, %v10532
        %10534 = vmatmul.bf16.gmra.mxu0 %v10327
        %v10535 = vpop.f32.mrf.mxu0
        %v10536 = vadd.f32 0.0, %v10535
        %v10537 = vpop.f32.mrf.mxu0
        %v10538 = vadd.f32 0.0, %v10537
        %10539 = vmatmul.bf16.gmra.mxu0 %v10330
        %v10540 = vpop.f32.mrf.mxu0
        %v10541 = vadd.f32 0.0, %v10540
        %v10542 = vpop.f32.mrf.mxu0
        %v10543 = vadd.f32 0.0, %v10542
        %10544 = vmatmul.bf16.gmra.mxu0 %v10333
        %v10545 = vpop.f32.mrf.mxu0
        %v10546 = vadd.f32 0.0, %v10545
        %v10547 = vpop.f32.mrf.mxu0
        %v10548 = vadd.f32 0.0, %v10547
        %10549 = vmatmul.bf16.gmra.mxu0 %v10336
        %v10550 = vpop.f32.mrf.mxu0
        %v10551 = vadd.f32 0.0, %v10550
        %v10552 = vpop.f32.mrf.mxu0
        %v10553 = vadd.f32 0.0, %v10552
        %10554 = vmatmul.bf16.gmra.mxu0 %v10339
        %v10555 = vpop.f32.mrf.mxu0
        %v10556 = vadd.f32 0.0, %v10555
        %v10557 = vpop.f32.mrf.mxu0
        %v10558 = vadd.f32 0.0, %v10557
        %10559 = vmatmul.bf16.gmra.mxu0 %v10342
        %v10560 = vpop.f32.mrf.mxu0
        %v10561 = vadd.f32 0.0, %v10560
        %v10562 = vpop.f32.mrf.mxu0
        %v10563 = vadd.f32 0.0, %v10562
        %10564 = vmatmul.bf16.gmra.mxu0 %v10345
        %v10565 = vpop.f32.mrf.mxu0
        %v10566 = vadd.f32 0.0, %v10565
        %v10567 = vpop.f32.mrf.mxu0
        %v10568 = vadd.f32 0.0, %v10567
        %10569 = vmatmul.bf16.gmra.mxu0 %v10348
        %v10570 = vpop.f32.mrf.mxu0
        %v10571 = vadd.f32 0.0, %v10570
        %v10572 = vpop.f32.mrf.mxu0
        %v10573 = vadd.f32 0.0, %v10572
        %10574 = vmatmul.bf16.gmra.mxu0 %v10351
        %v10575 = vpop.f32.mrf.mxu0
        %v10576 = vadd.f32 0.0, %v10575
        %v10577 = vpop.f32.mrf.mxu0
        %v10578 = vadd.f32 0.0, %v10577
        %10579 = vmatmul.bf16.gmra.mxu0 %v10354
        %v10580 = vpop.f32.mrf.mxu0
        %v10581 = vadd.f32 0.0, %v10580
        %v10582 = vpop.f32.mrf.mxu0
        %v10583 = vadd.f32 0.0, %v10582
        %10584 = vmatmul.bf16.gmra.mxu0 %v10357
        %v10585 = vpop.f32.mrf.mxu0
        %v10586 = vadd.f32 0.0, %v10585
        %v10587 = vpop.f32.mrf.mxu0
        %v10588 = vadd.f32 0.0, %v10587
        %10589 = vmatmul.bf16.gmra.mxu0 %v10360
        %v10590 = vpop.f32.mrf.mxu0
        %v10591 = vadd.f32 0.0, %v10590
        %v10592 = vpop.f32.mrf.mxu0
        %v10593 = vadd.f32 0.0, %v10592
        %10594 = vmatmul.bf16.gmra.mxu0 %v10363
        %v10595 = vpop.f32.mrf.mxu0
        %v10596 = vadd.f32 0.0, %v10595
        %v10597 = vpop.f32.mrf.mxu0
        %v10598 = vadd.f32 0.0, %v10597
        %10599 = vmatmul.bf16.gmra.mxu0 %v10366
        %v10600 = vpop.f32.mrf.mxu0
        %v10601 = vadd.f32 0.0, %v10600
        %v10602 = vpop.f32.mrf.mxu0
        %v10603 = vadd.f32 0.0, %v10602
        %10604 = vmatmul.bf16.gmra.mxu0 %v10369
        %v10605 = vpop.f32.mrf.mxu0
        %v10606 = vadd.f32 0.0, %v10605
        %v10607 = vpop.f32.mrf.mxu0
        %v10608 = vadd.f32 0.0, %v10607
        %10609 = vmatmul.bf16.gmra.mxu0 %v10372
        %v10610 = vpop.f32.mrf.mxu0
        %v10611 = vadd.f32 0.0, %v10610
        %v10612 = vpop.f32.mrf.mxu0
        %v10613 = vadd.f32 0.0, %v10612
        %10614 = vmatmul.bf16.gmra.mxu0 %v10375
        %v10615 = vpop.f32.mrf.mxu0
        %v10616 = vadd.f32 0.0, %v10615
        %v10617 = vpop.f32.mrf.mxu0
        %v10618 = vadd.f32 0.0, %v10617
        %10619 = vmatmul.bf16.gmra.mxu0 %v10378
        %v10620 = vpop.f32.mrf.mxu0
        %v10621 = vadd.f32 0.0, %v10620
        %v10622 = vpop.f32.mrf.mxu0
        %v10623 = vadd.f32 0.0, %v10622
        %10624 = vmatmul.bf16.gmra.mxu0 %v10381
        %v10625 = vpop.f32.mrf.mxu0
        %v10626 = vadd.f32 0.0, %v10625
        %v10627 = vpop.f32.mrf.mxu0
        %v10628 = vadd.f32 0.0, %v10627
        %10629 = vmatmul.bf16.gmra.mxu0 %v10384
        %v10630 = vpop.f32.mrf.mxu0
        %v10631 = vadd.f32 0.0, %v10630
        %v10632 = vpop.f32.mrf.mxu0
        %v10633 = vadd.f32 0.0, %v10632
        %10634 = vmatmul.bf16.gmra.mxu0 %v10387
        %v10635 = vpop.f32.mrf.mxu0
        %v10636 = vadd.f32 0.0, %v10635
        %v10637 = vpop.f32.mrf.mxu0
        %v10638 = vadd.f32 0.0, %v10637
        %10639 = vmatmul.bf16.gmra.mxu0 %v10390
        %v10640 = vpop.f32.mrf.mxu0
        %v10641 = vadd.f32 0.0, %v10640
        %v10642 = vpop.f32.mrf.mxu0
        %v10643 = vadd.f32 0.0, %v10642
        %10644 = vmatmul.bf16.gmra.mxu0 %v10393
        %v10645 = vpop.f32.mrf.mxu0
        %v10646 = vadd.f32 0.0, %v10645
        %v10647 = vpop.f32.mrf.mxu0
        %v10648 = vadd.f32 0.0, %v10647
        %10649 = vmatmul.bf16.gmra.mxu0 %v10396
        %v10650 = vpop.f32.mrf.mxu0
        %v10651 = vadd.f32 0.0, %v10650
        %v10652 = vpop.f32.mrf.mxu0
        %v10653 = vadd.f32 0.0, %v10652
        %10654 = vmatmul.bf16.gmra.mxu0 %v10399
        %v10655 = vpop.f32.mrf.mxu0
        %v10656 = vadd.f32 0.0, %v10655
        %v10657 = vpop.f32.mrf.mxu0
        %v10658 = vadd.f32 0.0, %v10657
        %10659 = vmatmul.bf16.gmra.mxu0 %v10402
        %v10660 = vpop.f32.mrf.mxu0
        %v10661 = vadd.f32 0.0, %v10660
        %v10662 = vpop.f32.mrf.mxu0
        %v10663 = vadd.f32 0.0, %v10662
        %10664 = vmatmul.bf16.gmra.mxu0 %v10405
        %v10665 = vpop.f32.mrf.mxu0
        %v10666 = vadd.f32 0.0, %v10665
        %v10667 = vpop.f32.mrf.mxu0
        %v10668 = vadd.f32 0.0, %v10667
        %10669 = vmatmul.bf16.gmra.mxu0 %v10408
        %v10670 = vpop.f32.mrf.mxu0
        %v10671 = vadd.f32 0.0, %v10670
        %v10672 = vpop.f32.mrf.mxu0
        %v10673 = vadd.f32 0.0, %v10672
        %10674 = vmatmul.bf16.gmra.mxu0 %v10411
        %v10675 = vpop.f32.mrf.mxu0
        %v10676 = vadd.f32 0.0, %v10675
        %v10677 = vpop.f32.mrf.mxu0
        %v10678 = vadd.f32 0.0, %v10677
        %10679 = vmatmul.bf16.gmra.mxu0 %v10414
        %v10680 = vpop.f32.mrf.mxu0
        %v10681 = vadd.f32 0.0, %v10680
        %v10682 = vpop.f32.mrf.mxu0
        %v10683 = vadd.f32 0.0, %v10682
        %10684 = vmatmul.bf16.gmra.mxu0 %v10417
        %v10685 = vpop.f32.mrf.mxu0
        %v10686 = vadd.f32 0.0, %v10685
        %v10687 = vpop.f32.mrf.mxu0
        %v10688 = vadd.f32 0.0, %v10687
        %10689 = vmatmul.bf16.gmra.mxu0 %v10420
        %v10690 = vpop.f32.mrf.mxu0
        %v10691 = vadd.f32 0.0, %v10690
        %v10692 = vpop.f32.mrf.mxu0
        %v10693 = vadd.f32 0.0, %v10692
        %10694 = vmatmul.bf16.gmra.mxu0 %v10423
        %v10695 = vpop.f32.mrf.mxu0
        %v10696 = vadd.f32 0.0, %v10695
        %v10697 = vpop.f32.mrf.mxu0
        %v10698 = vadd.f32 0.0, %v10697
        %10699 = vmatmul.bf16.gmra.mxu0 %v10426
        %v10700 = vpop.f32.mrf.mxu0
        %v10701 = vadd.f32 0.0, %v10700
        %v10702 = vpop.f32.mrf.mxu0
        %v10703 = vadd.f32 0.0, %v10702
        %10704 = vmatmul.bf16.gmra.mxu0 %v10429
        %v10705 = vpop.f32.mrf.mxu0
        %v10706 = vadd.f32 0.0, %v10705
        %v10707 = vpop.f32.mrf.mxu0
        %v10708 = vadd.f32 0.0, %v10707
        %10709 = vmatmul.bf16.gmra.mxu0 %v10432
        %v10710 = vpop.f32.mrf.mxu0
        %v10711 = vadd.f32 0.0, %v10710
        %v10712 = vpop.f32.mrf.mxu0
        %v10713 = vadd.f32 0.0, %v10712
        %10714 = vmatmul.bf16.gmra.mxu0 %v10435
        %v10715 = vpop.f32.mrf.mxu0
        %v10716 = vadd.f32 0.0, %v10715
        %v10717 = vpop.f32.mrf.mxu0
        %v10718 = vadd.f32 0.0, %v10717
        %10719 = vmatmul.bf16.gmra.mxu0 %v10438
        %v10720 = vpop.f32.mrf.mxu0
        %v10721 = vadd.f32 0.0, %v10720
        %v10722 = vpop.f32.mrf.mxu0
        %v10723 = vadd.f32 0.0, %v10722
        %10724 = vmatmul.bf16.gmra.mxu0 %v10441
        %v10725 = vpop.f32.mrf.mxu0
        %v10726 = vadd.f32 0.0, %v10725
        %v10727 = vpop.f32.mrf.mxu0
        %v10728 = vadd.f32 0.0, %v10727
        %10729 = vmatmul.bf16.gmra.mxu0 %v10444
        %v10730 = vpop.f32.mrf.mxu0
        %v10731 = vadd.f32 0.0, %v10730
        %v10732 = vpop.f32.mrf.mxu0
        %v10733 = vadd.f32 0.0, %v10732
        %10734 = vmatmul.bf16.gmra.mxu0 %v10447
        %v10735 = vpop.f32.mrf.mxu0
        %v10736 = vadd.f32 0.0, %v10735
        %v10737 = vpop.f32.mrf.mxu0
        %v10738 = vadd.f32 0.0, %v10737
        %10739 = vmatmul.bf16.gmra.mxu0 %v10450
        %v10740 = vpop.f32.mrf.mxu0
        %v10741 = vadd.f32 0.0, %v10740
        %v10742 = vpop.f32.mrf.mxu0
        %v10743 = vadd.f32 0.0, %v10742
        %10744 = vmatmul.bf16.gmra.mxu0 %v10453
        %v10745 = vpop.f32.mrf.mxu0
        %v10746 = vadd.f32 0.0, %v10745
        %v10747 = vpop.f32.mrf.mxu0
        %v10748 = vadd.f32 0.0, %v10747
        %10749 = vmatmul.bf16.gmra.mxu0 %v10456
        %v10750 = vpop.f32.mrf.mxu0
        %v10751 = vadd.f32 0.0, %v10750
        %v10752 = vpop.f32.mrf.mxu0
        %v10753 = vadd.f32 0.0, %v10752
        %10754 = vmatmul.bf16.gmra.mxu0 %v10459
        %v10755 = vpop.f32.mrf.mxu0
        %v10756 = vadd.f32 0.0, %v10755
        %v10757 = vpop.f32.mrf.mxu0
        %v10758 = vadd.f32 0.0, %v10757
        %10759 = vmatmul.bf16.gmra.mxu0 %v10462
        %v10760 = vpop.f32.mrf.mxu0
        %v10761 = vadd.f32 0.0, %v10760
        %v10762 = vpop.f32.mrf.mxu0
        %v10763 = vadd.f32 0.0, %v10762
        %10764 = vmatmul.bf16.gmra.mxu0 %v10465
        %v10765 = vpop.f32.mrf.mxu0
        %v10766 = vadd.f32 0.0, %v10765
        %v10767 = vpop.f32.mrf.mxu0
        %v10768 = vadd.f32 0.0, %v10767
        %10769 = vmatmul.bf16.gmra.mxu0 %v10468
        %v10770 = vpop.f32.mrf.mxu0
        %v10771 = vadd.f32 0.0, %v10770
        %v10772 = vpop.f32.mrf.mxu0
        %v10773 = vadd.f32 0.0, %v10772
        %10774 = vmatmul.bf16.gmra.mxu0 %v10471
        %v10775 = vpop.f32.mrf.mxu0
        %v10776 = vadd.f32 0.0, %v10775
        %v10777 = vpop.f32.mrf.mxu0
        %v10778 = vadd.f32 0.0, %v10777
        %10779 = vmatmul.bf16.gmra.mxu0 %v10474
        %v10780 = vpop.f32.mrf.mxu0
        %v10781 = vadd.f32 0.0, %v10780
        %v10782 = vpop.f32.mrf.mxu0
        %v10783 = vadd.f32 0.0, %v10782
        %10784 = vmatmul.bf16.gmra.mxu0 %v10477
        %v10785 = vpop.f32.mrf.mxu0
        %v10786 = vadd.f32 0.0, %v10785
        %v10787 = vpop.f32.mrf.mxu0
        %v10788 = vadd.f32 0.0, %v10787
        %10789 = vmatmul.bf16.gmra.mxu0 %v10480
        %v10790 = vpop.f32.mrf.mxu0
        %v10791 = vadd.f32 0.0, %v10790
        %v10792 = vpop.f32.mrf.mxu0
        %v10793 = vadd.f32 0.0, %v10792
        %10794 = vmatmul.bf16.gmra.mxu0 %v10483
        %v10795 = vpop.f32.mrf.mxu0
        %v10796 = vadd.f32 0.0, %v10795
        %v10797 = vpop.f32.mrf.mxu0
        %v10798 = vadd.f32 0.0, %v10797
        %10799 = vmatmul.bf16.gmra.mxu0 %v10486
        %v10800 = vpop.f32.mrf.mxu0
        %v10801 = vadd.f32 0.0, %v10800
        %v10802 = vpop.f32.mrf.mxu0
        %v10803 = vadd.f32 0.0, %v10802
        %10804 = vmatmul.bf16.gmra.mxu0 %v10489
        %v10805 = vpop.f32.mrf.mxu0
        %v10806 = vadd.f32 0.0, %v10805
        %v10807 = vpop.f32.mrf.mxu0
        %v10808 = vadd.f32 0.0, %v10807
        %10809 = vmatmul.bf16.gmra.mxu0 %v10492
        %v10810 = vpop.f32.mrf.mxu0
        %v10811 = vadd.f32 0.0, %v10810
        %v10812 = vpop.f32.mrf.mxu0
        %v10813 = vadd.f32 0.0, %v10812
        %10814 = vmatmul.bf16.gmra.mxu0 %v10495
        %v10815 = vpop.f32.mrf.mxu0
        %v10816 = vadd.f32 0.0, %v10815
        %v10817 = vpop.f32.mrf.mxu0
        %v10818 = vadd.f32 0.0, %v10817
        %10819 = vmatmul.bf16.gmra.mxu0 %v10498
        %v10820 = vpop.f32.mrf.mxu0
        %v10821 = vadd.f32 0.0, %v10820
        %v10822 = vpop.f32.mrf.mxu0
        %v10823 = vadd.f32 0.0, %v10822
        %10824 = vmatmul.bf16.gmra.mxu0 %v10501
        %v10825 = vpop.f32.mrf.mxu0
        %v10826 = vadd.f32 0.0, %v10825
        %v10827 = vpop.f32.mrf.mxu0
        %v10828 = vadd.f32 0.0, %v10827
        %10829 = vmatmul.bf16.gmra.mxu0 %v10504
        %v10830 = vpop.f32.mrf.mxu0
        %v10831 = vadd.f32 0.0, %v10830
        %v10832 = vpop.f32.mrf.mxu0
        %v10833 = vadd.f32 0.0, %v10832
        %10834 = vdwg.mxu0
        %v10835 = vmax.f32 %v10516, %v10518
        %v10836 = vrot.slane %v10835, 4
        %v10837 = vmax.f32 %v10835, %v10836
        %v10838 = vrot.slane %v10837, 2
        %v10839 = vmax.f32 %v10837, %v10838
        %v10840 = vrot.slane %v10839, 1
        %v10841 = vmax.f32 %v10839, %v10840
        %v10842 = vmax.f32 %v10521, %v10523
        %v10843 = vrot.slane %v10842, 4
        %v10844 = vmax.f32 %v10842, %v10843
        %v10845 = vrot.slane %v10844, 2
        %v10846 = vmax.f32 %v10844, %v10845
        %v10847 = vrot.slane %v10846, 1
        %v10848 = vmax.f32 %v10846, %v10847
        %v10849 = vmax.f32 %v10526, %v10528
        %v10850 = vrot.slane %v10849, 4
        %v10851 = vmax.f32 %v10849, %v10850
        %v10852 = vrot.slane %v10851, 2
        %v10853 = vmax.f32 %v10851, %v10852
        %v10854 = vrot.slane %v10853, 1
        %v10855 = vmax.f32 %v10853, %v10854
        %v10856 = vmax.f32 %v10531, %v10533
        %v10857 = vrot.slane %v10856, 4
        %v10858 = vmax.f32 %v10856, %v10857
        %v10859 = vrot.slane %v10858, 2
        %v10860 = vmax.f32 %v10858, %v10859
        %v10861 = vrot.slane %v10860, 1
        %v10862 = vmax.f32 %v10860, %v10861
        %v10863 = vmax.f32 %v10536, %v10538
        %v10864 = vrot.slane %v10863, 4
        %v10865 = vmax.f32 %v10863, %v10864
        %v10866 = vrot.slane %v10865, 2
        %v10867 = vmax.f32 %v10865, %v10866
        %v10868 = vrot.slane %v10867, 1
        %v10869 = vmax.f32 %v10867, %v10868
        %v10870 = vmax.f32 %v10541, %v10543
        %v10871 = vrot.slane %v10870, 4
        %v10872 = vmax.f32 %v10870, %v10871
        %v10873 = vrot.slane %v10872, 2
        %v10874 = vmax.f32 %v10872, %v10873
        %v10875 = vrot.slane %v10874, 1
        %v10876 = vmax.f32 %v10874, %v10875
        %v10877 = vmax.f32 %v10546, %v10548
        %v10878 = vrot.slane %v10877, 4
        %v10879 = vmax.f32 %v10877, %v10878
        %v10880 = vrot.slane %v10879, 2
        %v10881 = vmax.f32 %v10879, %v10880
        %v10882 = vrot.slane %v10881, 1
        %v10883 = vmax.f32 %v10881, %v10882
        %v10884 = vmax.f32 %v10551, %v10553
        %v10885 = vrot.slane %v10884, 4
        %v10886 = vmax.f32 %v10884, %v10885
        %v10887 = vrot.slane %v10886, 2
        %v10888 = vmax.f32 %v10886, %v10887
        %v10889 = vrot.slane %v10888, 1
        %v10890 = vmax.f32 %v10888, %v10889
        %v10891 = vmax.f32 %v10556, %v10558
        %v10892 = vrot.slane %v10891, 4
        %v10893 = vmax.f32 %v10891, %v10892
        %v10894 = vrot.slane %v10893, 2
        %v10895 = vmax.f32 %v10893, %v10894
        %v10896 = vrot.slane %v10895, 1
        %v10897 = vmax.f32 %v10895, %v10896
        %v10898 = vmax.f32 %v10561, %v10563
        %v10899 = vrot.slane %v10898, 4
        %v10900 = vmax.f32 %v10898, %v10899
        %v10901 = vrot.slane %v10900, 2
        %v10902 = vmax.f32 %v10900, %v10901
        %v10903 = vrot.slane %v10902, 1
        %v10904 = vmax.f32 %v10902, %v10903
        %v10905 = vmax.f32 %v10566, %v10568
        %v10906 = vrot.slane %v10905, 4
        %v10907 = vmax.f32 %v10905, %v10906
        %v10908 = vrot.slane %v10907, 2
        %v10909 = vmax.f32 %v10907, %v10908
        %v10910 = vrot.slane %v10909, 1
        %v10911 = vmax.f32 %v10909, %v10910
        %v10912 = vmax.f32 %v10571, %v10573
        %v10913 = vrot.slane %v10912, 4
        %v10914 = vmax.f32 %v10912, %v10913
        %v10915 = vrot.slane %v10914, 2
        %v10916 = vmax.f32 %v10914, %v10915
        %v10917 = vrot.slane %v10916, 1
        %v10918 = vmax.f32 %v10916, %v10917
        %v10919 = vmax.f32 %v10576, %v10578
        %v10920 = vrot.slane %v10919, 4
        %v10921 = vmax.f32 %v10919, %v10920
        %v10922 = vrot.slane %v10921, 2
        %v10923 = vmax.f32 %v10921, %v10922
        %v10924 = vrot.slane %v10923, 1
        %v10925 = vmax.f32 %v10923, %v10924
        %v10926 = vmax.f32 %v10581, %v10583
        %v10927 = vrot.slane %v10926, 4
        %v10928 = vmax.f32 %v10926, %v10927
        %v10929 = vrot.slane %v10928, 2
        %v10930 = vmax.f32 %v10928, %v10929
        %v10931 = vrot.slane %v10930, 1
        %v10932 = vmax.f32 %v10930, %v10931
        %v10933 = vmax.f32 %v10586, %v10588
        %v10934 = vrot.slane %v10933, 4
        %v10935 = vmax.f32 %v10933, %v10934
        %v10936 = vrot.slane %v10935, 2
        %v10937 = vmax.f32 %v10935, %v10936
        %v10938 = vrot.slane %v10937, 1
        %v10939 = vmax.f32 %v10937, %v10938
        %v10940 = vmax.f32 %v10591, %v10593
        %v10941 = vrot.slane %v10940, 4
        %v10942 = vmax.f32 %v10940, %v10941
        %v10943 = vrot.slane %v10942, 2
        %v10944 = vmax.f32 %v10942, %v10943
        %v10945 = vrot.slane %v10944, 1
        %v10946 = vmax.f32 %v10944, %v10945
        %v10947 = vmax.f32 %v10596, %v10598
        %v10948 = vrot.slane %v10947, 4
        %v10949 = vmax.f32 %v10947, %v10948
        %v10950 = vrot.slane %v10949, 2
        %v10951 = vmax.f32 %v10949, %v10950
        %v10952 = vrot.slane %v10951, 1
        %v10953 = vmax.f32 %v10951, %v10952
        %v10954 = vmax.f32 %v10601, %v10603
        %v10955 = vrot.slane %v10954, 4
        %v10956 = vmax.f32 %v10954, %v10955
        %v10957 = vrot.slane %v10956, 2
        %v10958 = vmax.f32 %v10956, %v10957
        %v10959 = vrot.slane %v10958, 1
        %v10960 = vmax.f32 %v10958, %v10959
        %v10961 = vmax.f32 %v10606, %v10608
        %v10962 = vrot.slane %v10961, 4
        %v10963 = vmax.f32 %v10961, %v10962
        %v10964 = vrot.slane %v10963, 2
        %v10965 = vmax.f32 %v10963, %v10964
        %v10966 = vrot.slane %v10965, 1
        %v10967 = vmax.f32 %v10965, %v10966
        %v10968 = vmax.f32 %v10611, %v10613
        %v10969 = vrot.slane %v10968, 4
        %v10970 = vmax.f32 %v10968, %v10969
        %v10971 = vrot.slane %v10970, 2
        %v10972 = vmax.f32 %v10970, %v10971
        %v10973 = vrot.slane %v10972, 1
        %v10974 = vmax.f32 %v10972, %v10973
        %v10975 = vmax.f32 %v10616, %v10618
        %v10976 = vrot.slane %v10975, 4
        %v10977 = vmax.f32 %v10975, %v10976
        %v10978 = vrot.slane %v10977, 2
        %v10979 = vmax.f32 %v10977, %v10978
        %v10980 = vrot.slane %v10979, 1
        %v10981 = vmax.f32 %v10979, %v10980
        %v10982 = vmax.f32 %v10621, %v10623
        %v10983 = vrot.slane %v10982, 4
        %v10984 = vmax.f32 %v10982, %v10983
        %v10985 = vrot.slane %v10984, 2
        %v10986 = vmax.f32 %v10984, %v10985
        %v10987 = vrot.slane %v10986, 1
        %v10988 = vmax.f32 %v10986, %v10987
        %v10989 = vmax.f32 %v10626, %v10628
        %v10990 = vrot.slane %v10989, 4
        %v10991 = vmax.f32 %v10989, %v10990
        %v10992 = vrot.slane %v10991, 2
        %v10993 = vmax.f32 %v10991, %v10992
        %v10994 = vrot.slane %v10993, 1
        %v10995 = vmax.f32 %v10993, %v10994
        %v10996 = vmax.f32 %v10631, %v10633
        %v10997 = vrot.slane %v10996, 4
        %v10998 = vmax.f32 %v10996, %v10997
        %v10999 = vrot.slane %v10998, 2
        %v11000 = vmax.f32 %v10998, %v10999
        %v11001 = vrot.slane %v11000, 1
        %v11002 = vmax.f32 %v11000, %v11001
        %v11003 = vmax.f32 %v10636, %v10638
        %v11004 = vrot.slane %v11003, 4
        %v11005 = vmax.f32 %v11003, %v11004
        %v11006 = vrot.slane %v11005, 2
        %v11007 = vmax.f32 %v11005, %v11006
        %v11008 = vrot.slane %v11007, 1
        %v11009 = vmax.f32 %v11007, %v11008
        %v11010 = vmax.f32 %v10641, %v10643
        %v11011 = vrot.slane %v11010, 4
        %v11012 = vmax.f32 %v11010, %v11011
        %v11013 = vrot.slane %v11012, 2
        %v11014 = vmax.f32 %v11012, %v11013
        %v11015 = vrot.slane %v11014, 1
        %v11016 = vmax.f32 %v11014, %v11015
        %v11017 = vmax.f32 %v10646, %v10648
        %v11018 = vrot.slane %v11017, 4
        %v11019 = vmax.f32 %v11017, %v11018
        %v11020 = vrot.slane %v11019, 2
        %v11021 = vmax.f32 %v11019, %v11020
        %v11022 = vrot.slane %v11021, 1
        %v11023 = vmax.f32 %v11021, %v11022
        %v11024 = vmax.f32 %v10651, %v10653
        %v11025 = vrot.slane %v11024, 4
        %v11026 = vmax.f32 %v11024, %v11025
        %v11027 = vrot.slane %v11026, 2
        %v11028 = vmax.f32 %v11026, %v11027
        %v11029 = vrot.slane %v11028, 1
        %v11030 = vmax.f32 %v11028, %v11029
        %v11031 = vmax.f32 %v10656, %v10658
        %v11032 = vrot.slane %v11031, 4
        %v11033 = vmax.f32 %v11031, %v11032
        %v11034 = vrot.slane %v11033, 2
        %v11035 = vmax.f32 %v11033, %v11034
        %v11036 = vrot.slane %v11035, 1
        %v11037 = vmax.f32 %v11035, %v11036
        %v11038 = vmax.f32 %v10661, %v10663
        %v11039 = vrot.slane %v11038, 4
        %v11040 = vmax.f32 %v11038, %v11039
        %v11041 = vrot.slane %v11040, 2
        %v11042 = vmax.f32 %v11040, %v11041
        %v11043 = vrot.slane %v11042, 1
        %v11044 = vmax.f32 %v11042, %v11043
        %v11045 = vmax.f32 %v10666, %v10668
        %v11046 = vrot.slane %v11045, 4
        %v11047 = vmax.f32 %v11045, %v11046
        %v11048 = vrot.slane %v11047, 2
        %v11049 = vmax.f32 %v11047, %v11048
        %v11050 = vrot.slane %v11049, 1
        %v11051 = vmax.f32 %v11049, %v11050
        %v11052 = vmax.f32 %v10671, %v10673
        %v11053 = vrot.slane %v11052, 4
        %v11054 = vmax.f32 %v11052, %v11053
        %v11055 = vrot.slane %v11054, 2
        %v11056 = vmax.f32 %v11054, %v11055
        %v11057 = vrot.slane %v11056, 1
        %v11058 = vmax.f32 %v11056, %v11057
        %v11059 = vmax.f32 %v10676, %v10678
        %v11060 = vrot.slane %v11059, 4
        %v11061 = vmax.f32 %v11059, %v11060
        %v11062 = vrot.slane %v11061, 2
        %v11063 = vmax.f32 %v11061, %v11062
        %v11064 = vrot.slane %v11063, 1
        %v11065 = vmax.f32 %v11063, %v11064
        %v11066 = vmax.f32 %v10681, %v10683
        %v11067 = vrot.slane %v11066, 4
        %v11068 = vmax.f32 %v11066, %v11067
        %v11069 = vrot.slane %v11068, 2
        %v11070 = vmax.f32 %v11068, %v11069
        %v11071 = vrot.slane %v11070, 1
        %v11072 = vmax.f32 %v11070, %v11071
        %v11073 = vmax.f32 %v10686, %v10688
        %v11074 = vrot.slane %v11073, 4
        %v11075 = vmax.f32 %v11073, %v11074
        %v11076 = vrot.slane %v11075, 2
        %v11077 = vmax.f32 %v11075, %v11076
        %v11078 = vrot.slane %v11077, 1
        %v11079 = vmax.f32 %v11077, %v11078
        %v11080 = vmax.f32 %v10691, %v10693
        %v11081 = vrot.slane %v11080, 4
        %v11082 = vmax.f32 %v11080, %v11081
        %v11083 = vrot.slane %v11082, 2
        %v11084 = vmax.f32 %v11082, %v11083
        %v11085 = vrot.slane %v11084, 1
        %v11086 = vmax.f32 %v11084, %v11085
        %v11087 = vmax.f32 %v10696, %v10698
        %v11088 = vrot.slane %v11087, 4
        %v11089 = vmax.f32 %v11087, %v11088
        %v11090 = vrot.slane %v11089, 2
        %v11091 = vmax.f32 %v11089, %v11090
        %v11092 = vrot.slane %v11091, 1
        %v11093 = vmax.f32 %v11091, %v11092
        %v11094 = vmax.f32 %v10701, %v10703
        %v11095 = vrot.slane %v11094, 4
        %v11096 = vmax.f32 %v11094, %v11095
        %v11097 = vrot.slane %v11096, 2
        %v11098 = vmax.f32 %v11096, %v11097
        %v11099 = vrot.slane %v11098, 1
        %v11100 = vmax.f32 %v11098, %v11099
        %v11101 = vmax.f32 %v10706, %v10708
        %v11102 = vrot.slane %v11101, 4
        %v11103 = vmax.f32 %v11101, %v11102
        %v11104 = vrot.slane %v11103, 2
        %v11105 = vmax.f32 %v11103, %v11104
        %v11106 = vrot.slane %v11105, 1
        %v11107 = vmax.f32 %v11105, %v11106
        %v11108 = vmax.f32 %v10711, %v10713
        %v11109 = vrot.slane %v11108, 4
        %v11110 = vmax.f32 %v11108, %v11109
        %v11111 = vrot.slane %v11110, 2
        %v11112 = vmax.f32 %v11110, %v11111
        %v11113 = vrot.slane %v11112, 1
        %v11114 = vmax.f32 %v11112, %v11113
        %v11115 = vmax.f32 %v10716, %v10718
        %v11116 = vrot.slane %v11115, 4
        %v11117 = vmax.f32 %v11115, %v11116
        %v11118 = vrot.slane %v11117, 2
        %v11119 = vmax.f32 %v11117, %v11118
        %v11120 = vrot.slane %v11119, 1
        %v11121 = vmax.f32 %v11119, %v11120
        %v11122 = vmax.f32 %v10721, %v10723
        %v11123 = vrot.slane %v11122, 4
        %v11124 = vmax.f32 %v11122, %v11123
        %v11125 = vrot.slane %v11124, 2
        %v11126 = vmax.f32 %v11124, %v11125
        %v11127 = vrot.slane %v11126, 1
        %v11128 = vmax.f32 %v11126, %v11127
        %v11129 = vmax.f32 %v10726, %v10728
        %v11130 = vrot.slane %v11129, 4
        %v11131 = vmax.f32 %v11129, %v11130
        %v11132 = vrot.slane %v11131, 2
        %v11133 = vmax.f32 %v11131, %v11132
        %v11134 = vrot.slane %v11133, 1
        %v11135 = vmax.f32 %v11133, %v11134
        %v11136 = vmax.f32 %v10731, %v10733
        %v11137 = vrot.slane %v11136, 4
        %v11138 = vmax.f32 %v11136, %v11137
        %v11139 = vrot.slane %v11138, 2
        %v11140 = vmax.f32 %v11138, %v11139
        %v11141 = vrot.slane %v11140, 1
        %v11142 = vmax.f32 %v11140, %v11141
        %v11143 = vmax.f32 %v10736, %v10738
        %v11144 = vrot.slane %v11143, 4
        %v11145 = vmax.f32 %v11143, %v11144
        %v11146 = vrot.slane %v11145, 2
        %v11147 = vmax.f32 %v11145, %v11146
        %v11148 = vrot.slane %v11147, 1
        %v11149 = vmax.f32 %v11147, %v11148
        %v11150 = vmax.f32 %v10741, %v10743
        %v11151 = vrot.slane %v11150, 4
        %v11152 = vmax.f32 %v11150, %v11151
        %v11153 = vrot.slane %v11152, 2
        %v11154 = vmax.f32 %v11152, %v11153
        %v11155 = vrot.slane %v11154, 1
        %v11156 = vmax.f32 %v11154, %v11155
        %v11157 = vmax.f32 %v10746, %v10748
        %v11158 = vrot.slane %v11157, 4
        %v11159 = vmax.f32 %v11157, %v11158
        %v11160 = vrot.slane %v11159, 2
        %v11161 = vmax.f32 %v11159, %v11160
        %v11162 = vrot.slane %v11161, 1
        %v11163 = vmax.f32 %v11161, %v11162
        %v11164 = vmax.f32 %v10751, %v10753
        %v11165 = vrot.slane %v11164, 4
        %v11166 = vmax.f32 %v11164, %v11165
        %v11167 = vrot.slane %v11166, 2
        %v11168 = vmax.f32 %v11166, %v11167
        %v11169 = vrot.slane %v11168, 1
        %v11170 = vmax.f32 %v11168, %v11169
        %v11171 = vmax.f32 %v10756, %v10758
        %v11172 = vrot.slane %v11171, 4
        %v11173 = vmax.f32 %v11171, %v11172
        %v11174 = vrot.slane %v11173, 2
        %v11175 = vmax.f32 %v11173, %v11174
        %v11176 = vrot.slane %v11175, 1
        %v11177 = vmax.f32 %v11175, %v11176
        %v11178 = vmax.f32 %v10761, %v10763
        %v11179 = vrot.slane %v11178, 4
        %v11180 = vmax.f32 %v11178, %v11179
        %v11181 = vrot.slane %v11180, 2
        %v11182 = vmax.f32 %v11180, %v11181
        %v11183 = vrot.slane %v11182, 1
        %v11184 = vmax.f32 %v11182, %v11183
        %v11185 = vmax.f32 %v10766, %v10768
        %v11186 = vrot.slane %v11185, 4
        %v11187 = vmax.f32 %v11185, %v11186
        %v11188 = vrot.slane %v11187, 2
        %v11189 = vmax.f32 %v11187, %v11188
        %v11190 = vrot.slane %v11189, 1
        %v11191 = vmax.f32 %v11189, %v11190
        %v11192 = vmax.f32 %v10771, %v10773
        %v11193 = vrot.slane %v11192, 4
        %v11194 = vmax.f32 %v11192, %v11193
        %v11195 = vrot.slane %v11194, 2
        %v11196 = vmax.f32 %v11194, %v11195
        %v11197 = vrot.slane %v11196, 1
        %v11198 = vmax.f32 %v11196, %v11197
        %v11199 = vmax.f32 %v10776, %v10778
        %v11200 = vrot.slane %v11199, 4
        %v11201 = vmax.f32 %v11199, %v11200
        %v11202 = vrot.slane %v11201, 2
        %v11203 = vmax.f32 %v11201, %v11202
        %v11204 = vrot.slane %v11203, 1
        %v11205 = vmax.f32 %v11203, %v11204
        %v11206 = vmax.f32 %v10781, %v10783
        %v11207 = vrot.slane %v11206, 4
        %v11208 = vmax.f32 %v11206, %v11207
        %v11209 = vrot.slane %v11208, 2
        %v11210 = vmax.f32 %v11208, %v11209
        %v11211 = vrot.slane %v11210, 1
        %v11212 = vmax.f32 %v11210, %v11211
        %v11213 = vmax.f32 %v10786, %v10788
        %v11214 = vrot.slane %v11213, 4
        %v11215 = vmax.f32 %v11213, %v11214
        %v11216 = vrot.slane %v11215, 2
        %v11217 = vmax.f32 %v11215, %v11216
        %v11218 = vrot.slane %v11217, 1
        %v11219 = vmax.f32 %v11217, %v11218
        %v11220 = vmax.f32 %v10791, %v10793
        %v11221 = vrot.slane %v11220, 4
        %v11222 = vmax.f32 %v11220, %v11221
        %v11223 = vrot.slane %v11222, 2
        %v11224 = vmax.f32 %v11222, %v11223
        %v11225 = vrot.slane %v11224, 1
        %v11226 = vmax.f32 %v11224, %v11225
        %v11227 = vmax.f32 %v10796, %v10798
        %v11228 = vrot.slane %v11227, 4
        %v11229 = vmax.f32 %v11227, %v11228
        %v11230 = vrot.slane %v11229, 2
        %v11231 = vmax.f32 %v11229, %v11230
        %v11232 = vrot.slane %v11231, 1
        %v11233 = vmax.f32 %v11231, %v11232
        %v11234 = vmax.f32 %v10801, %v10803
        %v11235 = vrot.slane %v11234, 4
        %v11236 = vmax.f32 %v11234, %v11235
        %v11237 = vrot.slane %v11236, 2
        %v11238 = vmax.f32 %v11236, %v11237
        %v11239 = vrot.slane %v11238, 1
        %v11240 = vmax.f32 %v11238, %v11239
        %v11241 = vmax.f32 %v10806, %v10808
        %v11242 = vrot.slane %v11241, 4
        %v11243 = vmax.f32 %v11241, %v11242
        %v11244 = vrot.slane %v11243, 2
        %v11245 = vmax.f32 %v11243, %v11244
        %v11246 = vrot.slane %v11245, 1
        %v11247 = vmax.f32 %v11245, %v11246
        %v11248 = vmax.f32 %v10811, %v10813
        %v11249 = vrot.slane %v11248, 4
        %v11250 = vmax.f32 %v11248, %v11249
        %v11251 = vrot.slane %v11250, 2
        %v11252 = vmax.f32 %v11250, %v11251
        %v11253 = vrot.slane %v11252, 1
        %v11254 = vmax.f32 %v11252, %v11253
        %v11255 = vmax.f32 %v10816, %v10818
        %v11256 = vrot.slane %v11255, 4
        %v11257 = vmax.f32 %v11255, %v11256
        %v11258 = vrot.slane %v11257, 2
        %v11259 = vmax.f32 %v11257, %v11258
        %v11260 = vrot.slane %v11259, 1
        %v11261 = vmax.f32 %v11259, %v11260
        %v11262 = vmax.f32 %v10821, %v10823
        %v11263 = vrot.slane %v11262, 4
        %v11264 = vmax.f32 %v11262, %v11263
        %v11265 = vrot.slane %v11264, 2
        %v11266 = vmax.f32 %v11264, %v11265
        %v11267 = vrot.slane %v11266, 1
        %v11268 = vmax.f32 %v11266, %v11267
        %v11269 = vmax.f32 %v10826, %v10828
        %v11270 = vrot.slane %v11269, 4
        %v11271 = vmax.f32 %v11269, %v11270
        %v11272 = vrot.slane %v11271, 2
        %v11273 = vmax.f32 %v11271, %v11272
        %v11274 = vrot.slane %v11273, 1
        %v11275 = vmax.f32 %v11273, %v11274
        %v11276 = vmax.f32 %v10831, %v10833
        %v11277 = vrot.slane %v11276, 4
        %v11278 = vmax.f32 %v11276, %v11277
        %v11279 = vrot.slane %v11278, 2
        %v11280 = vmax.f32 %v11278, %v11279
        %v11281 = vrot.slane %v11280, 1
        %v11282 = vmax.f32 %v11280, %v11281
        %v11283 = vld [vmem:[%s5] sm:$0x1]
        %v11285 = vperm.slane %v11283, 0
        %v11287 = vadd.f32 %v10841, %v11285
        %v11288 = vadd.f32 %v10848, %v11285
        %v11289 = vadd.f32 %v10855, %v11285
        %v11290 = vadd.f32 %v10862, %v11285
        %v11291 = vadd.f32 %v10869, %v11285
        %v11292 = vadd.f32 %v10876, %v11285
        %v11293 = vadd.f32 %v10883, %v11285
        %v11294 = vadd.f32 %v10890, %v11285
        %v11295 = vadd.f32 %v10897, %v11285
        %v11296 = vadd.f32 %v10904, %v11285
        %v11297 = vadd.f32 %v10911, %v11285
        %v11298 = vadd.f32 %v10918, %v11285
        %v11299 = vadd.f32 %v10925, %v11285
        %v11300 = vadd.f32 %v10932, %v11285
        %v11301 = vadd.f32 %v10939, %v11285
        %v11302 = vadd.f32 %v10946, %v11285
        %v11303 = vadd.f32 %v10953, %v11285
        %v11304 = vadd.f32 %v10960, %v11285
        %v11305 = vadd.f32 %v10967, %v11285
        %v11306 = vadd.f32 %v10974, %v11285
        %v11307 = vadd.f32 %v10981, %v11285
        %v11308 = vadd.f32 %v10988, %v11285
        %v11309 = vadd.f32 %v10995, %v11285
        %v11310 = vadd.f32 %v11002, %v11285
        %v11311 = vadd.f32 %v11009, %v11285
        %v11312 = vadd.f32 %v11016, %v11285
        %v11313 = vadd.f32 %v11023, %v11285
        %v11314 = vadd.f32 %v11030, %v11285
        %v11315 = vadd.f32 %v11037, %v11285
        %v11316 = vadd.f32 %v11044, %v11285
        %v11317 = vadd.f32 %v11051, %v11285
        %v11318 = vadd.f32 %v11058, %v11285
        %v11319 = vadd.f32 %v11065, %v11285
        %v11320 = vadd.f32 %v11072, %v11285
        %v11321 = vadd.f32 %v11079, %v11285
        %v11322 = vadd.f32 %v11086, %v11285
        %v11323 = vadd.f32 %v11093, %v11285
        %v11324 = vadd.f32 %v11100, %v11285
        %v11325 = vadd.f32 %v11107, %v11285
        %v11326 = vadd.f32 %v11114, %v11285
        %v11327 = vadd.f32 %v11121, %v11285
        %v11328 = vadd.f32 %v11128, %v11285
        %v11329 = vadd.f32 %v11135, %v11285
        %v11330 = vadd.f32 %v11142, %v11285
        %v11331 = vadd.f32 %v11149, %v11285
        %v11332 = vadd.f32 %v11156, %v11285
        %v11333 = vadd.f32 %v11163, %v11285
        %v11334 = vadd.f32 %v11170, %v11285
        %v11335 = vadd.f32 %v11177, %v11285
        %v11336 = vadd.f32 %v11184, %v11285
        %v11337 = vadd.f32 %v11191, %v11285
        %v11338 = vadd.f32 %v11198, %v11285
        %v11339 = vadd.f32 %v11205, %v11285
        %v11340 = vadd.f32 %v11212, %v11285
        %v11341 = vadd.f32 %v11219, %v11285
        %v11342 = vadd.f32 %v11226, %v11285
        %v11343 = vadd.f32 %v11233, %v11285
        %v11344 = vadd.f32 %v11240, %v11285
        %v11345 = vadd.f32 %v11247, %v11285
        %v11346 = vadd.f32 %v11254, %v11285
        %v11347 = vadd.f32 %v11261, %v11285
        %v11348 = vadd.f32 %v11268, %v11285
        %v11349 = vadd.f32 %v11275, %v11285
        %v11350 = vadd.f32 %v11282, %v11285
        %v11415 = vrot.slane %v11288, 7
        %vm11416 = vcmask 1041409
        %v11417 = vsel %vm11416, %v11415, %v11287
        %v11418 = vrot.slane %v11289, 6
        %vm11419 = vcmask 1042434
        %v11420 = vsel %vm11419, %v11418, %v11417
        %v11421 = vrot.slane %v11290, 5
        %vm11422 = vcmask 1043459
        %v11423 = vsel %vm11422, %v11421, %v11420
        %v11424 = vrot.slane %v11291, 4
        %vm11425 = vcmask 1044484
        %v11426 = vsel %vm11425, %v11424, %v11423
        %v11427 = vrot.slane %v11292, 3
        %vm11428 = vcmask 1045509
        %v11429 = vsel %vm11428, %v11427, %v11426
        %v11430 = vrot.slane %v11293, 2
        %vm11431 = vcmask 1046534
        %v11432 = vsel %vm11431, %v11430, %v11429
        %v11433 = vrot.slane %v11294, 1
        %vm11434 = vcmask 1047559
        %v11435 = vsel %vm11434, %v11433, %v11432
        %v11436 = vrot.slane %v11296, 7
        %v11437 = vsel %vm11416, %v11436, %v11295
        %v11438 = vrot.slane %v11297, 6
        %v11439 = vsel %vm11419, %v11438, %v11437
        %v11440 = vrot.slane %v11298, 5
        %v11441 = vsel %vm11422, %v11440, %v11439
        %v11442 = vrot.slane %v11299, 4
        %v11443 = vsel %vm11425, %v11442, %v11441
        %v11444 = vrot.slane %v11300, 3
        %v11445 = vsel %vm11428, %v11444, %v11443
        %v11446 = vrot.slane %v11301, 2
        %v11447 = vsel %vm11431, %v11446, %v11445
        %v11448 = vrot.slane %v11302, 1
        %v11449 = vsel %vm11434, %v11448, %v11447
        %v11450 = vrot.slane %v11304, 7
        %v11451 = vsel %vm11416, %v11450, %v11303
        %v11452 = vrot.slane %v11305, 6
        %v11453 = vsel %vm11419, %v11452, %v11451
        %v11454 = vrot.slane %v11306, 5
        %v11455 = vsel %vm11422, %v11454, %v11453
        %v11456 = vrot.slane %v11307, 4
        %v11457 = vsel %vm11425, %v11456, %v11455
        %v11458 = vrot.slane %v11308, 3
        %v11459 = vsel %vm11428, %v11458, %v11457
        %v11460 = vrot.slane %v11309, 2
        %v11461 = vsel %vm11431, %v11460, %v11459
        %v11462 = vrot.slane %v11310, 1
        %v11463 = vsel %vm11434, %v11462, %v11461
        %v11464 = vrot.slane %v11312, 7
        %v11465 = vsel %vm11416, %v11464, %v11311
        %v11466 = vrot.slane %v11313, 6
        %v11467 = vsel %vm11419, %v11466, %v11465
        %v11468 = vrot.slane %v11314, 5
        %v11469 = vsel %vm11422, %v11468, %v11467
        %v11470 = vrot.slane %v11315, 4
        %v11471 = vsel %vm11425, %v11470, %v11469
        %v11472 = vrot.slane %v11316, 3
        %v11473 = vsel %vm11428, %v11472, %v11471
        %v11474 = vrot.slane %v11317, 2
        %v11475 = vsel %vm11431, %v11474, %v11473
        %v11476 = vrot.slane %v11318, 1
        %v11477 = vsel %vm11434, %v11476, %v11475
        %v11478 = vrot.slane %v11320, 7
        %v11479 = vsel %vm11416, %v11478, %v11319
        %v11480 = vrot.slane %v11321, 6
        %v11481 = vsel %vm11419, %v11480, %v11479
        %v11482 = vrot.slane %v11322, 5
        %v11483 = vsel %vm11422, %v11482, %v11481
        %v11484 = vrot.slane %v11323, 4
        %v11485 = vsel %vm11425, %v11484, %v11483
        %v11486 = vrot.slane %v11324, 3
        %v11487 = vsel %vm11428, %v11486, %v11485
        %v11488 = vrot.slane %v11325, 2
        %v11489 = vsel %vm11431, %v11488, %v11487
        %v11490 = vrot.slane %v11326, 1
        %v11491 = vsel %vm11434, %v11490, %v11489
        %v11492 = vrot.slane %v11328, 7
        %v11493 = vsel %vm11416, %v11492, %v11327
        %v11494 = vrot.slane %v11329, 6
        %v11495 = vsel %vm11419, %v11494, %v11493
        %v11496 = vrot.slane %v11330, 5
        %v11497 = vsel %vm11422, %v11496, %v11495
        %v11498 = vrot.slane %v11331, 4
        %v11499 = vsel %vm11425, %v11498, %v11497
        %v11500 = vrot.slane %v11332, 3
        %v11501 = vsel %vm11428, %v11500, %v11499
        %v11502 = vrot.slane %v11333, 2
        %v11503 = vsel %vm11431, %v11502, %v11501
        %v11504 = vrot.slane %v11334, 1
        %v11505 = vsel %vm11434, %v11504, %v11503
        %v11506 = vrot.slane %v11336, 7
        %v11507 = vsel %vm11416, %v11506, %v11335
        %v11508 = vrot.slane %v11337, 6
        %v11509 = vsel %vm11419, %v11508, %v11507
        %v11510 = vrot.slane %v11338, 5
        %v11511 = vsel %vm11422, %v11510, %v11509
        %v11512 = vrot.slane %v11339, 4
        %v11513 = vsel %vm11425, %v11512, %v11511
        %v11514 = vrot.slane %v11340, 3
        %v11515 = vsel %vm11428, %v11514, %v11513
        %v11516 = vrot.slane %v11341, 2
        %v11517 = vsel %vm11431, %v11516, %v11515
        %v11518 = vrot.slane %v11342, 1
        %v11519 = vsel %vm11434, %v11518, %v11517
        %v11520 = vrot.slane %v11344, 7
        %v11521 = vsel %vm11416, %v11520, %v11343
        %v11522 = vrot.slane %v11345, 6
        %v11523 = vsel %vm11419, %v11522, %v11521
        %v11524 = vrot.slane %v11346, 5
        %v11525 = vsel %vm11422, %v11524, %v11523
        %v11526 = vrot.slane %v11347, 4
        %v11527 = vsel %vm11425, %v11526, %v11525
        %v11528 = vrot.slane %v11348, 3
        %v11529 = vsel %vm11428, %v11528, %v11527
        %v11530 = vrot.slane %v11349, 2
        %v11531 = vsel %vm11431, %v11530, %v11529
        %v11532 = vrot.slane %v11350, 1
        %v11533 = vsel %vm11434, %v11532, %v11531
        %11542 = vst [vmem:[%s245] sm:$0xff] %v11435
        %11543 = vst [vmem:[%s245 + $0x8] sm:$0xff] %v11449
        %11544 = vst [vmem:[%s245 + $0x10] sm:$0xff] %v11463
        %11545 = vst [vmem:[%s245 + $0x18] sm:$0xff] %v11477
        %11546 = vst [vmem:[%s245 + $0x20] sm:$0xff] %v11491
        %11547 = vst [vmem:[%s245 + $0x28] sm:$0xff] %v11505
        %11548 = vst [vmem:[%s245 + $0x30] sm:$0xff] %v11519
        %11549 = vst [vmem:[%s245 + $0x38] sm:$0xff] %v11533
        %s11550 = sand.u32 %s159, 1
        %s11551 = scalar_lea.sflag [#allocation3], %s11550
        %s11552 = sand.u32 %s159, 1
        %s11553 = smul.addr %s11552, 64
        %s11554 = scalar_lea.vmem [#allocation2], %s11553
        // Predicated region
        $region45: #{tpu_custom_call.1} parent=43 // pred_check
          %p11555 = pneg %p169
        $region46: #{tpu_custom_call.1} parent=43 // pred_check_branch
          %11557 = sbr.rel (%p11555) target = $region48
        $region47: #{tpu_custom_call.1} parent=43 // pred_region
          %s11558 = smul.u32 8, %s20
          %11560 = vsyncadd %s11551, 0
          %s11561 = smul.addr %s11558, 8
          %s11562 = scalar_lea.hbm %s6, %s11561
          %s11563 = sshll.u32 %s11554, 4
          %s11564 = int_to_ptr.vmem [resolvable:$true] %s11563
          %s11565 = sshll.u32 %s11562, 4
          %s11566 = int_to_ptr.hbm [resolvable:$true] %s11565
          %11571 = dma.vmem_to_hbm [thread:$0]  %s11564, 1024, %s11566, %s11551, 128, 128, 8
        $region48: #{tpu_custom_call.1} parent=43 // pred_fallthru
          _
      $region44: #{tpu_custom_call.1} parent=5 // pred_fallthru
        _
      %p11572 = scmp.le.s32.totalorder 2, %s15
      // Predicated region
      $region49: #{tpu_custom_call.1} parent=5 // pred_check
        %p11573 = pneg %p11572
      $region50: #{tpu_custom_call.1} parent=5 // pred_check_branch
        %11575 = sbr.rel (%p11573) target = $region52
      $region51: #{tpu_custom_call.1} parent=5 // pred_region
        %s11576 = ssub.s32 %s15, 2
        // Predicated region
        $region53: #{tpu_custom_call.1} parent=51 // pred_check
          %p11577 = pneg %p175
        $region54: #{tpu_custom_call.1} parent=51 // pred_check_branch
          %11579 = sbr.rel (%p11577) target = $region56
        $region55: #{tpu_custom_call.1} parent=51 // pred_region
          %s11580 = sand.u32 %s160, 1
          %s11581 = scalar_lea.sflag [#allocation3], %s11580
          %s11582 = sand.u32 %s160, 1
          %s11583 = smul.addr %s11582, 64
          %s11584 = scalar_lea.vmem [#allocation2], %s11583
          %11586 = dma.done %s11581, 1024
        $region56: #{tpu_custom_call.1} parent=51 // pred_fallthru
          _
      $region52: #{tpu_custom_call.1} parent=5 // pred_fallthru
        _
    $region6: #{tpu_custom_call.1} parent=1 // loop_footer
      %s19 = sadd.s32 1, %s15
    $region7: #{tpu_custom_call.1} parent=1 // loop_footer_branch
      %14 = sbr.rel target = $region3
    $region8: #{tpu_custom_call.1} parent=1 // loop_exit
      _
    %11587 = vsyncpa [#allocation3], 1
    %s11588 = scalar_lea.sflag [#allocation3], 1
    %11589 = vsyncpa %s11588, 1

</llo_original>
